<compile_context>
chip_gen: v5e
topology: v5e:2x2
jax: 0.10.0
libtpu: 0.0.40
codegen_flags: <defaults>
</compile_context>

<pallas_src>
import functools

import numpy as np
import jax
import jax.numpy as jnp
from jax.experimental import pallas as pl
from jax.experimental.pallas import tpu as pltpu


# ----------------------------------------------------------------------------
# Anchor generation (deterministic, numpy — identical to the reference code)
# ----------------------------------------------------------------------------
def _whctrs(anchor):
    w = anchor[2] - anchor[0] + 1
    h = anchor[3] - anchor[1] + 1
    x_ctr = anchor[0] + 0.5 * (w - 1)
    y_ctr = anchor[1] + 0.5 * (h - 1)
    return w, h, x_ctr, y_ctr


def _mkanchors(ws, hs, x_ctr, y_ctr):
    ws = ws[:, np.newaxis]
    hs = hs[:, np.newaxis]
    return np.hstack((x_ctr - 0.5 * (ws - 1), y_ctr - 0.5 * (hs - 1),
                      x_ctr + 0.5 * (ws - 1), y_ctr + 0.5 * (hs - 1)))


def _ratio_enum(anchor, ratios):
    w, h, x_ctr, y_ctr = _whctrs(anchor)
    size = w * h
    size_ratios = size / ratios
    ws = np.round(np.sqrt(size_ratios))
    hs = np.round(ws * ratios)
    return _mkanchors(ws, hs, x_ctr, y_ctr)


def _scale_enum(anchor, scales):
    w, h, x_ctr, y_ctr = _whctrs(anchor)
    ws = w * scales
    hs = h * scales
    return _mkanchors(ws, hs, x_ctr, y_ctr)


def generate_anchors(base_size=16, ratios=np.array([0.5, 1, 2]),
                     scales=2 ** np.arange(3, 6)):
    base_anchor = np.array([1, 1, base_size, base_size], dtype=np.float64) - 1
    ratio_anchors = _ratio_enum(base_anchor, ratios)
    anchors = np.vstack([_scale_enum(ratio_anchors[i, :], scales)
                         for i in range(ratio_anchors.shape[0])])
    return anchors.astype(np.float32)


# ----------------------------------------------------------------------------
# Config (stands in for the `cfg` global of the reference repo)
# ----------------------------------------------------------------------------
CFG = {
    "TEST": dict(RPN_PRE_NMS_TOP_N=128, RPN_POST_NMS_TOP_N=32,
                 RPN_NMS_THRESH=0.7, RPN_MIN_SIZE=16),
    "TRAIN": dict(RPN_PRE_NMS_TOP_N=128, RPN_POST_NMS_TOP_N=32,
                  RPN_NMS_THRESH=0.7, RPN_MIN_SIZE=8),
}

_STRIP = 8  # one sublane tile of rows per IoU strip


# ----------------------------------------------------------------------------
# Pallas kernel: fused bbox decode + clip + pairwise IoU + greedy NMS (per image)
# ----------------------------------------------------------------------------
def _decode_nms_kernel(im_info_ref, ad_rows_ref, ad_cols_ref,
                       boxes_ref, keep_ref, *, nms_thresh):
    # ad_rows_ref : (8, KP)  rows 0-3 = anchor x1,y1,x2,y2 ; rows 4-7 = dx,dy,dw,dh
    # ad_cols_ref : (KP, 8)  same data, transposed (column orientation for the IoU strips)
    # boxes_ref   : (4, KP)  decoded + clipped boxes (score-sorted order)
    # keep_ref    : (1, KP)  1.0 = kept by greedy NMS, 0.0 = suppressed
    KP = ad_rows_ref.shape[-1]
    b = pl.program_id(0)
    im_h = im_info_ref[b, 0]
    im_w = im_info_ref[b, 1]

    # ---- row-form decode of all KP boxes: lane-dense (1, KP) planes ----
    ax1 = ad_rows_ref[0:1, :]
    ay1 = ad_rows_ref[1:2, :]
    ax2 = ad_rows_ref[2:3, :]
    ay2 = ad_rows_ref[3:4, :]
    dx = ad_rows_ref[4:5, :]
    dy = ad_rows_ref[5:6, :]
    dw = ad_rows_ref[6:7, :]
    dh = ad_rows_ref[7:8, :]

    w_a = ax2 - ax1 + 1.0
    h_a = ay2 - ay1 + 1.0
    cx_a = ax1 + 0.5 * w_a
    cy_a = ay1 + 0.5 * h_a
    pcx = dx * w_a + cx_a
    pcy = dy * h_a + cy_a
    pw = jnp.exp(dw) * w_a
    ph = jnp.exp(dh) * h_a
    px1 = jnp.clip(pcx - 0.5 * pw, 0.0, im_w - 1.0)     # (1, KP)
    py1 = jnp.clip(pcy - 0.5 * ph, 0.0, im_h - 1.0)
    px2 = jnp.clip(pcx + 0.5 * pw, 0.0, im_w - 1.0)
    py2 = jnp.clip(pcy + 0.5 * ph, 0.0, im_h - 1.0)
    area_r = (px2 - px1 + 1.0) * (py2 - py1 + 1.0)      # (1, KP)

    boxes_ref[0:1, :] = px1
    boxes_ref[1:2, :] = py1
    boxes_ref[2:3, :] = px2
    boxes_ref[3:4, :] = py2

    # ---- greedy NMS ----
    thr = jnp.float32(nms_thresh)
    lane_ids = jax.lax.broadcasted_iota(jnp.int32, (1, KP), 1)
    supp = jnp.zeros((1, KP), jnp.float32)              # 1.0 = suppressed

    S = _STRIP
    for blk in range(KP // S):
        r0 = blk * S

        # Column-oriented params for this strip's boxes: re-decode the 8 boxes from the
        # (KP, 8) layout (one vreg of input, a handful of tiny ops) — no transposes and
        # no big simultaneously-live (K,K) operands anywhere.
        sc = ad_cols_ref[r0:r0 + S, :]                  # (S, 8)
        sax1 = sc[:, 0:1]
        say1 = sc[:, 1:2]
        sax2 = sc[:, 2:3]
        say2 = sc[:, 3:4]
        sdx = sc[:, 4:5]
        sdy = sc[:, 5:6]
        sdw = sc[:, 6:7]
        sdh = sc[:, 7:8]
        sw_a = sax2 - sax1 + 1.0
        sh_a = say2 - say1 + 1.0
        scx = sax1 + 0.5 * sw_a
        scy = say1 + 0.5 * sh_a
        spcx = sdx * sw_a + scx
        spcy = sdy * sh_a + scy
        spw = jnp.exp(sdw) * sw_a
        sph = jnp.exp(sdh) * sh_a
        sx1 = jnp.clip(spcx - 0.5 * spw, 0.0, im_w - 1.0)    # (S, 1)
        sy1 = jnp.clip(spcy - 0.5 * sph, 0.0, im_h - 1.0)
        sx2 = jnp.clip(spcx + 0.5 * spw, 0.0, im_w - 1.0)
        sy2 = jnp.clip(spcy + 0.5 * sph, 0.0, im_h - 1.0)
        area_c = (sx2 - sx1 + 1.0) * (sy2 - sy1 + 1.0)       # (S, 1)

        # "IoU > thresh" strip, multiply-compare form (no divide), with the strict
        # upper-triangle mask folded in at build time.
        xx1 = jnp.maximum(sx1, px1)                     # (S, KP)
        yy1 = jnp.maximum(sy1, py1)
        xx2 = jnp.minimum(sx2, px2)
        yy2 = jnp.minimum(sy2, py2)
        iw = jnp.maximum(xx2 - xx1 + 1.0, 0.0)
        ih = jnp.maximum(yy2 - yy1 + 1.0, 0.0)
        inter = iw * ih
        union = area_c + area_r - inter
        row_ids = r0 + jax.lax.broadcasted_iota(jnp.int32, (S, KP), 0)
        col_ids = jax.lax.broadcasted_iota(jnp.int32, (S, KP), 1)
        over_blk = jnp.where((col_ids > row_ids) & (inter > thr * union), 1.0, 0.0)

        # Serial greedy over this strip's rows (fully unrolled, static slices only;
        # rows live in vregs — no dynamic VMEM loads, no per-step triangle masking).
        for i in range(S):
            idx = r0 + i
            s_i = jnp.max(jnp.where(lane_ids == idx, supp, 0.0))   # is box idx suppressed?
            row = over_blk[i:i + 1, :]                              # what box idx suppresses
            supp = jnp.where(s_i > 0.0, supp, jnp.maximum(supp, row))

    keep_ref[...] = 1.0 - supp


def _proposal_decode_nms(ad_rows, ad_cols, im_info, nms_thresh):
    """ad_rows: (B,8,KP); ad_cols: (B,KP,8); im_info: (B,3) -> boxes (B,4,KP), keep (B,1,KP)."""
    B = ad_rows.shape[0]
    KP = ad_rows.shape[-1]
    grid_spec = pltpu.PrefetchScalarGridSpec(
        num_scalar_prefetch=0,
        grid=(B,),
        in_specs=[
            pl.BlockSpec(memory_space=pltpu.MemorySpace.SMEM),        # im_info
            pl.BlockSpec((None, 8, KP), lambda b: (b, 0, 0)),         # anchors+deltas rows
            pl.BlockSpec((None, KP, 8), lambda b: (b, 0, 0)),         # anchors+deltas cols
        ],
        out_specs=[
            pl.BlockSpec((None, 4, KP), lambda b: (b, 0, 0)),         # decoded boxes
            pl.BlockSpec((None, 1, KP), lambda b: (b, 0, 0)),         # keep mask
        ],
    )
    return pl.pallas_call(
        functools.partial(_decode_nms_kernel, nms_thresh=float(nms_thresh)),
        out_shape=(jax.ShapeDtypeStruct((B, 4, KP), jnp.float32),
                   jax.ShapeDtypeStruct((B, 1, KP), jnp.float32)),
        grid_spec=grid_spec,
        compiler_params=pltpu.CompilerParams(dimension_semantics=("parallel",)),
    )(im_info, ad_rows, ad_cols)


# ----------------------------------------------------------------------------
# ProposalLayer (JAX/Pallas version of the PyTorch module)
# ----------------------------------------------------------------------------
class ProposalLayerPallas:
    def __init__(self, feat_stride, scales, ratios):
        self._feat_stride = feat_stride
        self._anchors = generate_anchors(ratios=np.array(ratios, dtype=np.float64),
                                         scales=np.array(scales, dtype=np.float64))
        self._num_anchors = self._anchors.shape[0]

    def forward(self, rpn_cls_prob, rpn_bbox_pred, im_info, cfg_key):
        cfgk = CFG[cfg_key]
        pre_nms_topN = cfgk["RPN_PRE_NMS_TOP_N"]
        post_nms_topN = cfgk["RPN_POST_NMS_TOP_N"]
        nms_thresh = cfgk["RPN_NMS_THRESH"]
        _ = cfgk["RPN_MIN_SIZE"]  # read but never applied — matches the reference forward()

        A = self._num_anchors
        B = rpn_cls_prob.shape[0]
        H, W = rpn_cls_prob.shape[2], rpn_cls_prob.shape[3]
        HW = H * W
        N = A * HW

        # fg scores in native NCHW box order (n = a*HW + hw) — reshape only, no transpose.
        scores_flat = rpn_cls_prob[:, A:, :, :].reshape(B, N).astype(jnp.float32)

        # ---- 1) top-K by score FIRST: only K boxes are ever decoded / NMS'd ----
        K = pre_nms_topN if (0 < pre_nms_topN < N) else N
        _, order = jax.lax.top_k(scores_flat, K)                          # (B, K)

        # ---- 2) gather anchor params + deltas for just the K selected boxes (tiny) ----
        order = order.astype(jnp.int32)
        a_idx = order // HW
        hw = order - a_idx * HW
        yy = (hw // W).astype(jnp.float32)
        xx = (hw % W).astype(jnp.float32)
        base = jnp.asarray(self._anchors, dtype=jnp.float32)              # (A, 4)
        shift = jnp.stack([xx, yy, xx, yy], axis=-1) * jnp.float32(self._feat_stride)
        anchors_sel = base[a_idx] + shift                                 # (B, K, 4)

        # delta for coord c of box (a, hw) lives at NCHW channel a*4+c, position hw
        deltas_flat = rpn_bbox_pred.reshape(B, 4 * A * HW).astype(jnp.float32)
        coord = jnp.arange(4, dtype=jnp.int32)
        didx = (a_idx[:, :, None] * 4 + coord[None, None, :]) * HW + hw[:, :, None]
        deltas_sel = jnp.take_along_axis(deltas_flat, didx.reshape(B, K * 4),
                                         axis=1).reshape(B, K, 4)         # (B, K, 4)

        # ---- 3) pad to a lane-aligned multiple of 128 (padded boxes are harmless:
        #         the strict-upper-triangle NMS means they can only suppress later,
        #         also-padded, columns which are sliced away) ----
        KP = ((K + 127) // 128) * 128
        if KP != K:
            pad = KP - K
            anchors_sel = jnp.pad(anchors_sel, ((0, 0), (0, pad), (0, 0)))
            deltas_sel = jnp.pad(deltas_sel, ((0, 0), (0, pad), (0, 0)))
        ad_cols = jnp.concatenate([anchors_sel, deltas_sel], axis=2)      # (B, KP, 8)
        ad_rows = jnp.transpose(ad_cols, (0, 2, 1))                       # (B, 8, KP)

        # ---- 4) Pallas: fused bbox decode + clip + greedy NMS ----
        boxes, keep = _proposal_decode_nms(ad_rows, ad_cols,
                                           im_info.astype(jnp.float32), nms_thresh)
        props_sorted_t = boxes[:, :, :K]                                  # (B, 4, K)
        keep_mask = keep[:, 0, :K] > 0.5                                  # (B, K)

        # ---- 5) tiny keep-index compaction + zero-padded output (matches reference) ----
        take = min(post_nms_topN, K)
        idxK = jnp.arange(K, dtype=jnp.int32)
        kept_pos = jnp.where(keep_mask, idxK[None, :], K)                 # unkept -> sentinel K
        kept_sorted = jnp.sort(kept_pos, axis=1)[:, :take]                # kept, in score order
        valid = kept_sorted < K
        gather_idx = jnp.where(valid, kept_sorted, 0)
        props_keep_t = jnp.take_along_axis(props_sorted_t, gather_idx[:, None, :], axis=2)
        props_keep = (jnp.transpose(props_keep_t, (0, 2, 1))
                      * valid[:, :, None].astype(jnp.float32))
        if take < post_nms_topN:
            props_keep = jnp.pad(props_keep, ((0, 0), (0, post_nms_topN - take), (0, 0)))

        batch_col = jnp.broadcast_to(
            jnp.arange(B, dtype=props_keep.dtype)[:, None, None],
            (B, post_nms_topN, 1))
        output = jnp.concatenate([batch_col, props_keep], axis=2)         # (B, post, 5)
        return output


# ----------------------------------------------------------------------------
# Demo
# ----------------------------------------------------------------------------
if __name__ == "__main__":
    key = jax.random.PRNGKey(0)
    B, H, W = 2, 16, 16
    feat_stride = 16
    scales = [8, 16, 32]
    ratios = [0.5, 1, 2]

    layer = ProposalLayerPallas(feat_stride, scales, ratios)
    A = layer._num_anchors  # 9

    k1, k2 = jax.random.split(key)
    # rpn_cls_prob: [B, 2A, H, W] probabilities (values in (0,1))
    rpn_cls_prob = jax.nn.sigmoid(jax.random.normal(k1, (B, 2 * A, H, W), jnp.float32))
    # rpn_bbox_pred: [B, 4A, H, W] regression deltas
    rpn_bbox_pred = 0.1 * jax.random.normal(k2, (B, 4 * A, H, W), jnp.float32)
    # im_info: [B, 3] = [height, width, scale]
    im_info = jnp.array([[H * feat_stride, W * feat_stride, 1.0],
                         [H * feat_stride, W * feat_stride, 1.0]], dtype=jnp.float32)

    out = layer.forward(rpn_cls_prob, rpn_bbox_pred, im_info, "TEST")
    out = jax.block_until_ready(out)

    assert out.shape == (B, CFG["TEST"]["RPN_POST_NMS_TOP_N"], 5)
    assert bool(jnp.all(jnp.isfinite(out)))
    print("KERNEL_OK")
</pallas_src>

<mosaic_0001>
module attributes {stable_mosaic.version = 11 : i64} {
  func.func @_decode_nms_kernel(%arg0: i32, %arg1: memref<2x3xf32, #tpu.memory_space<smem>>, %arg2: memref<1x8x128xf32, #tpu.memory_space<vmem>>, %arg3: memref<1x128x8xf32, #tpu.memory_space<vmem>>, %arg4: memref<1x4x128xf32, #tpu.memory_space<vmem>>, %arg5: memref<1x1x128xf32, #tpu.memory_space<vmem>>) attributes {dimension_semantics = [#tpu.dimension_semantics<parallel>], iteration_bounds = array<i64: 2>, scalar_prefetch = 0 : i64, scratch_operands = 0 : i64, tpu.core_type = #tpu.core_type<tc>, window_params = [{transform_indices = @transform_0, window_bounds = array<i64: 2, 3>}, {transform_indices = @transform_1, window_bounds = array<i64: 1, 8, 128>}, {transform_indices = @transform_2, window_bounds = array<i64: 1, 128, 8>}, {transform_indices = @transform_3, window_bounds = array<i64: 1, 4, 128>}, {transform_indices = @transform_4, window_bounds = array<i64: 1, 1, 128>}]} {
    %0 = arith.index_cast %arg0 : i32 to index
    %c0 = arith.constant 0 : index
    %1 = memref.load %arg1[%0, %c0] : memref<2x3xf32, #tpu.memory_space<smem>>
    %2 = arith.index_cast %arg0 : i32 to index
    %c1 = arith.constant 1 : index
    %3 = memref.load %arg1[%2, %c1] : memref<2x3xf32, #tpu.memory_space<smem>>
    %c0_0 = arith.constant 0 : index
    %c0_1 = arith.constant 0 : index
    %c0_2 = arith.constant 0 : index
    %4 = vector.load %arg2[%c0_0, %c0_1, %c0_2] : memref<1x8x128xf32, #tpu.memory_space<vmem>>, vector<1x1x128xf32>
    %5 = vector.shape_cast %4 : vector<1x1x128xf32> to vector<1x128xf32>
    %c0_3 = arith.constant 0 : index
    %c1_4 = arith.constant 1 : index
    %c0_5 = arith.constant 0 : index
    %6 = vector.load %arg2[%c0_3, %c1_4, %c0_5] : memref<1x8x128xf32, #tpu.memory_space<vmem>>, vector<1x1x128xf32>
    %7 = vector.shape_cast %6 : vector<1x1x128xf32> to vector<1x128xf32>
    %c0_6 = arith.constant 0 : index
    %c2 = arith.constant 2 : index
    %c0_7 = arith.constant 0 : index
    %8 = vector.load %arg2[%c0_6, %c2, %c0_7] : memref<1x8x128xf32, #tpu.memory_space<vmem>>, vector<1x1x128xf32>
    %9 = vector.shape_cast %8 : vector<1x1x128xf32> to vector<1x128xf32>
    %c0_8 = arith.constant 0 : index
    %c3 = arith.constant 3 : index
    %c0_9 = arith.constant 0 : index
    %10 = vector.load %arg2[%c0_8, %c3, %c0_9] : memref<1x8x128xf32, #tpu.memory_space<vmem>>, vector<1x1x128xf32>
    %11 = vector.shape_cast %10 : vector<1x1x128xf32> to vector<1x128xf32>
    %c0_10 = arith.constant 0 : index
    %c4 = arith.constant 4 : index
    %c0_11 = arith.constant 0 : index
    %12 = vector.load %arg2[%c0_10, %c4, %c0_11] : memref<1x8x128xf32, #tpu.memory_space<vmem>>, vector<1x1x128xf32>
    %13 = vector.shape_cast %12 : vector<1x1x128xf32> to vector<1x128xf32>
    %c0_12 = arith.constant 0 : index
    %c5 = arith.constant 5 : index
    %c0_13 = arith.constant 0 : index
    %14 = vector.load %arg2[%c0_12, %c5, %c0_13] : memref<1x8x128xf32, #tpu.memory_space<vmem>>, vector<1x1x128xf32>
    %15 = vector.shape_cast %14 : vector<1x1x128xf32> to vector<1x128xf32>
    %c0_14 = arith.constant 0 : index
    %c6 = arith.constant 6 : index
    %c0_15 = arith.constant 0 : index
    %16 = vector.load %arg2[%c0_14, %c6, %c0_15] : memref<1x8x128xf32, #tpu.memory_space<vmem>>, vector<1x1x128xf32>
    %17 = vector.shape_cast %16 : vector<1x1x128xf32> to vector<1x128xf32>
    %c0_16 = arith.constant 0 : index
    %c7 = arith.constant 7 : index
    %c0_17 = arith.constant 0 : index
    %18 = vector.load %arg2[%c0_16, %c7, %c0_17] : memref<1x8x128xf32, #tpu.memory_space<vmem>>, vector<1x1x128xf32>
    %19 = vector.shape_cast %18 : vector<1x1x128xf32> to vector<1x128xf32>
    %20 = arith.subf %9, %5 : vector<1x128xf32>
    %cst = arith.constant 1.000000e+00 : f32
    %21 = vector.broadcast %cst : f32 to vector<1x128xf32>
    %22 = arith.addf %20, %21 : vector<1x128xf32>
    %23 = arith.subf %11, %7 : vector<1x128xf32>
    %cst_18 = arith.constant 1.000000e+00 : f32
    %24 = vector.broadcast %cst_18 : f32 to vector<1x128xf32>
    %25 = arith.addf %23, %24 : vector<1x128xf32>
    %cst_19 = arith.constant 5.000000e-01 : f32
    %26 = vector.broadcast %cst_19 : f32 to vector<1x128xf32>
    %27 = arith.mulf %26, %22 : vector<1x128xf32>
    %28 = arith.addf %5, %27 : vector<1x128xf32>
    %cst_20 = arith.constant 5.000000e-01 : f32
    %29 = vector.broadcast %cst_20 : f32 to vector<1x128xf32>
    %30 = arith.mulf %29, %25 : vector<1x128xf32>
    %31 = arith.addf %7, %30 : vector<1x128xf32>
    %32 = arith.mulf %13, %22 : vector<1x128xf32>
    %33 = arith.addf %32, %28 : vector<1x128xf32>
    %34 = arith.mulf %15, %25 : vector<1x128xf32>
    %35 = arith.addf %34, %31 : vector<1x128xf32>
    %36 = math.exp %17 : vector<1x128xf32>
    %37 = arith.mulf %36, %22 : vector<1x128xf32>
    %38 = math.exp %19 : vector<1x128xf32>
    %39 = arith.mulf %38, %25 : vector<1x128xf32>
    %cst_21 = arith.constant 5.000000e-01 : f32
    %40 = vector.broadcast %cst_21 : f32 to vector<1x128xf32>
    %41 = arith.mulf %40, %37 : vector<1x128xf32>
    %42 = arith.subf %33, %41 : vector<1x128xf32>
    %cst_22 = arith.constant 1.000000e+00 : f32
    %43 = arith.subf %3, %cst_22 : f32
    %cst_23 = arith.constant 0.000000e+00 : f32
    %44 = vector.broadcast %cst_23 : f32 to vector<1x128xf32>
    %45 = arith.maximumf %44, %42 : vector<1x128xf32>
    %46 = vector.broadcast %43 : f32 to vector<1x128xf32>
    %47 = arith.minimumf %46, %45 : vector<1x128xf32>
    %cst_24 = arith.constant 5.000000e-01 : f32
    %48 = vector.broadcast %cst_24 : f32 to vector<1x128xf32>
    %49 = arith.mulf %48, %39 : vector<1x128xf32>
    %50 = arith.subf %35, %49 : vector<1x128xf32>
    %cst_25 = arith.constant 1.000000e+00 : f32
    %51 = arith.subf %1, %cst_25 : f32
    %cst_26 = arith.constant 0.000000e+00 : f32
    %52 = vector.broadcast %cst_26 : f32 to vector<1x128xf32>
    %53 = arith.maximumf %52, %50 : vector<1x128xf32>
    %54 = vector.broadcast %51 : f32 to vector<1x128xf32>
    %55 = arith.minimumf %54, %53 : vector<1x128xf32>
    %cst_27 = arith.constant 5.000000e-01 : f32
    %56 = vector.broadcast %cst_27 : f32 to vector<1x128xf32>
    %57 = arith.mulf %56, %37 : vector<1x128xf32>
    %58 = arith.addf %33, %57 : vector<1x128xf32>
    %cst_28 = arith.constant 1.000000e+00 : f32
    %59 = arith.subf %3, %cst_28 : f32
    %cst_29 = arith.constant 0.000000e+00 : f32
    %60 = vector.broadcast %cst_29 : f32 to vector<1x128xf32>
    %61 = arith.maximumf %60, %58 : vector<1x128xf32>
    %62 = vector.broadcast %59 : f32 to vector<1x128xf32>
    %63 = arith.minimumf %62, %61 : vector<1x128xf32>
    %cst_30 = arith.constant 5.000000e-01 : f32
    %64 = vector.broadcast %cst_30 : f32 to vector<1x128xf32>
    %65 = arith.mulf %64, %39 : vector<1x128xf32>
    %66 = arith.addf %35, %65 : vector<1x128xf32>
    %cst_31 = arith.constant 1.000000e+00 : f32
    %67 = arith.subf %1, %cst_31 : f32
    %cst_32 = arith.constant 0.000000e+00 : f32
    %68 = vector.broadcast %cst_32 : f32 to vector<1x128xf32>
    %69 = arith.maximumf %68, %66 : vector<1x128xf32>
    %70 = vector.broadcast %67 : f32 to vector<1x128xf32>
    %71 = arith.minimumf %70, %69 : vector<1x128xf32>
    %72 = arith.subf %63, %47 : vector<1x128xf32>
    %cst_33 = arith.constant 1.000000e+00 : f32
    %73 = vector.broadcast %cst_33 : f32 to vector<1x128xf32>
    %74 = arith.addf %72, %73 : vector<1x128xf32>
    %75 = arith.subf %71, %55 : vector<1x128xf32>
    %cst_34 = arith.constant 1.000000e+00 : f32
    %76 = vector.broadcast %cst_34 : f32 to vector<1x128xf32>
    %77 = arith.addf %75, %76 : vector<1x128xf32>
    %78 = arith.mulf %74, %77 : vector<1x128xf32>
    %c0_35 = arith.constant 0 : index
    %c0_36 = arith.constant 0 : index
    %c0_37 = arith.constant 0 : index
    %79 = vector.load %arg4[%c0_35, %c0_36, %c0_37] : memref<1x4x128xf32, #tpu.memory_space<vmem>>, vector<1x1x128xf32>
    %80 = vector.shape_cast %79 : vector<1x1x128xf32> to vector<1x128xf32>
    %81 = vector.shape_cast %47 : vector<1x128xf32> to vector<1x1x128xf32>
    tpu.vector_store %arg4[%c0_35, %c0_36, %c0_37], %81 {strides = array<i32>} : memref<1x4x128xf32, #tpu.memory_space<vmem>>, vector<1x1x128xf32>,
    %c0_38 = arith.constant 0 : index
    %c1_39 = arith.constant 1 : index
    %c0_40 = arith.constant 0 : index
    %82 = vector.load %arg4[%c0_38, %c1_39, %c0_40] : memref<1x4x128xf32, #tpu.memory_space<vmem>>, vector<1x1x128xf32>
    %83 = vector.shape_cast %82 : vector<1x1x128xf32> to vector<1x128xf32>
    %84 = vector.shape_cast %55 : vector<1x128xf32> to vector<1x1x128xf32>
    tpu.vector_store %arg4[%c0_38, %c1_39, %c0_40], %84 {strides = array<i32>} : memref<1x4x128xf32, #tpu.memory_space<vmem>>, vector<1x1x128xf32>,
    %c0_41 = arith.constant 0 : index
    %c2_42 = arith.constant 2 : index
    %c0_43 = arith.constant 0 : index
    %85 = vector.load %arg4[%c0_41, %c2_42, %c0_43] : memref<1x4x128xf32, #tpu.memory_space<vmem>>, vector<1x1x128xf32>
    %86 = vector.shape_cast %85 : vector<1x1x128xf32> to vector<1x128xf32>
    %87 = vector.shape_cast %63 : vector<1x128xf32> to vector<1x1x128xf32>
    tpu.vector_store %arg4[%c0_41, %c2_42, %c0_43], %87 {strides = array<i32>} : memref<1x4x128xf32, #tpu.memory_space<vmem>>, vector<1x1x128xf32>,
    %c0_44 = arith.constant 0 : index
    %c3_45 = arith.constant 3 : index
    %c0_46 = arith.constant 0 : index
    %88 = vector.load %arg4[%c0_44, %c3_45, %c0_46] : memref<1x4x128xf32, #tpu.memory_space<vmem>>, vector<1x1x128xf32>
    %89 = vector.shape_cast %88 : vector<1x1x128xf32> to vector<1x128xf32>
    %90 = vector.shape_cast %71 : vector<1x128xf32> to vector<1x1x128xf32>
    tpu.vector_store %arg4[%c0_44, %c3_45, %c0_46], %90 {strides = array<i32>} : memref<1x4x128xf32, #tpu.memory_space<vmem>>, vector<1x1x128xf32>,
    %91 = tpu.iota {dimensions = array<i32: 1>} : vector<1x128xi32>
    %cst_47 = arith.constant 0.000000e+00 : f32
    %92 = vector.broadcast %cst_47 : f32 to vector<1x128xf32>
    %c0_48 = arith.constant 0 : index
    %c0_49 = arith.constant 0 : index
    %c0_50 = arith.constant 0 : index
    %93 = vector.load %arg3[%c0_48, %c0_49, %c0_50] : memref<1x128x8xf32, #tpu.memory_space<vmem>>, vector<1x8x8xf32>
    %94 = vector.shape_cast %93 : vector<1x8x8xf32> to vector<8x8xf32>
    %95 = vector.extract_strided_slice %94 {offsets = [0, 0], sizes = [8, 1], strides = [1, 1]} : vector<8x8xf32> to vector<8x1xf32>
    %96 = vector.extract_strided_slice %94 {offsets = [0, 1], sizes = [8, 1], strides = [1, 1]} : vector<8x8xf32> to vector<8x1xf32>
    %97 = vector.extract_strided_slice %94 {offsets = [0, 2], sizes = [8, 1], strides = [1, 1]} : vector<8x8xf32> to vector<8x1xf32>
    %98 = vector.extract_strided_slice %94 {offsets = [0, 3], sizes = [8, 1], strides = [1, 1]} : vector<8x8xf32> to vector<8x1xf32>
    %99 = vector.extract_strided_slice %94 {offsets = [0, 4], sizes = [8, 1], strides = [1, 1]} : vector<8x8xf32> to vector<8x1xf32>
    %100 = vector.extract_strided_slice %94 {offsets = [0, 5], sizes = [8, 1], strides = [1, 1]} : vector<8x8xf32> to vector<8x1xf32>
    %101 = vector.extract_strided_slice %94 {offsets = [0, 6], sizes = [8, 1], strides = [1, 1]} : vector<8x8xf32> to vector<8x1xf32>
    %102 = vector.extract_strided_slice %94 {offsets = [0, 7], sizes = [8, 1], strides = [1, 1]} : vector<8x8xf32> to vector<8x1xf32>
    %103 = arith.subf %97, %95 : vector<8x1xf32>
    %cst_51 = arith.constant 1.000000e+00 : f32
    %104 = vector.broadcast %cst_51 : f32 to vector<8x1xf32>
    %105 = arith.addf %103, %104 : vector<8x1xf32>
    %106 = arith.subf %98, %96 : vector<8x1xf32>
    %cst_52 = arith.constant 1.000000e+00 : f32
    %107 = vector.broadcast %cst_52 : f32 to vector<8x1xf32>
    %108 = arith.addf %106, %107 : vector<8x1xf32>
    %cst_53 = arith.constant 5.000000e-01 : f32
    %109 = vector.broadcast %cst_53 : f32 to vector<8x1xf32>
    %110 = arith.mulf %109, %105 : vector<8x1xf32>
    %111 = arith.addf %95, %110 : vector<8x1xf32>
    %cst_54 = arith.constant 5.000000e-01 : f32
    %112 = vector.broadcast %cst_54 : f32 to vector<8x1xf32>
    %113 = arith.mulf %112, %108 : vector<8x1xf32>
    %114 = arith.addf %96, %113 : vector<8x1xf32>
    %115 = arith.mulf %99, %105 : vector<8x1xf32>
    %116 = arith.addf %115, %111 : vector<8x1xf32>
    %117 = arith.mulf %100, %108 : vector<8x1xf32>
    %118 = arith.addf %117, %114 : vector<8x1xf32>
    %119 = math.exp %101 : vector<8x1xf32>
    %120 = arith.mulf %119, %105 : vector<8x1xf32>
    %121 = math.exp %102 : vector<8x1xf32>
    %122 = arith.mulf %121, %108 : vector<8x1xf32>
    %cst_55 = arith.constant 5.000000e-01 : f32
    %123 = vector.broadcast %cst_55 : f32 to vector<8x1xf32>
    %124 = arith.mulf %123, %120 : vector<8x1xf32>
    %125 = arith.subf %116, %124 : vector<8x1xf32>
    %cst_56 = arith.constant 1.000000e+00 : f32
    %126 = arith.subf %3, %cst_56 : f32
    %cst_57 = arith.constant 0.000000e+00 : f32
    %127 = vector.broadcast %cst_57 : f32 to vector<8x1xf32>
    %128 = arith.maximumf %127, %125 : vector<8x1xf32>
    %129 = vector.broadcast %126 : f32 to vector<8x1xf32>
    %130 = arith.minimumf %129, %128 : vector<8x1xf32>
    %cst_58 = arith.constant 5.000000e-01 : f32
    %131 = vector.broadcast %cst_58 : f32 to vector<8x1xf32>
    %132 = arith.mulf %131, %122 : vector<8x1xf32>
    %133 = arith.subf %118, %132 : vector<8x1xf32>
    %cst_59 = arith.constant 1.000000e+00 : f32
    %134 = arith.subf %1, %cst_59 : f32
    %cst_60 = arith.constant 0.000000e+00 : f32
    %135 = vector.broadcast %cst_60 : f32 to vector<8x1xf32>
    %136 = arith.maximumf %135, %133 : vector<8x1xf32>
    %137 = vector.broadcast %134 : f32 to vector<8x1xf32>
    %138 = arith.minimumf %137, %136 : vector<8x1xf32>
    %cst_61 = arith.constant 5.000000e-01 : f32
    %139 = vector.broadcast %cst_61 : f32 to vector<8x1xf32>
    %140 = arith.mulf %139, %120 : vector<8x1xf32>
    %141 = arith.addf %116, %140 : vector<8x1xf32>
    %cst_62 = arith.constant 1.000000e+00 : f32
    %142 = arith.subf %3, %cst_62 : f32
    %cst_63 = arith.constant 0.000000e+00 : f32
    %143 = vector.broadcast %cst_63 : f32 to vector<8x1xf32>
    %144 = arith.maximumf %143, %141 : vector<8x1xf32>
    %145 = vector.broadcast %142 : f32 to vector<8x1xf32>
    %146 = arith.minimumf %145, %144 : vector<8x1xf32>
    %cst_64 = arith.constant 5.000000e-01 : f32
    %147 = vector.broadcast %cst_64 : f32 to vector<8x1xf32>
    %148 = arith.mulf %147, %122 : vector<8x1xf32>
    %149 = arith.addf %118, %148 : vector<8x1xf32>
    %cst_65 = arith.constant 1.000000e+00 : f32
    %150 = arith.subf %1, %cst_65 : f32
    %cst_66 = arith.constant 0.000000e+00 : f32
    %151 = vector.broadcast %cst_66 : f32 to vector<8x1xf32>
    %152 = arith.maximumf %151, %149 : vector<8x1xf32>
    %153 = vector.broadcast %150 : f32 to vector<8x1xf32>
    %154 = arith.minimumf %153, %152 : vector<8x1xf32>
    %155 = arith.subf %146, %130 : vector<8x1xf32>
    %cst_67 = arith.constant 1.000000e+00 : f32
    %156 = vector.broadcast %cst_67 : f32 to vector<8x1xf32>
    %157 = arith.addf %155, %156 : vector<8x1xf32>
    %158 = arith.subf %154, %138 : vector<8x1xf32>
    %cst_68 = arith.constant 1.000000e+00 : f32
    %159 = vector.broadcast %cst_68 : f32 to vector<8x1xf32>
    %160 = arith.addf %158, %159 : vector<8x1xf32>
    %161 = arith.mulf %157, %160 : vector<8x1xf32>
    %162 = vector.broadcast %130 : vector<8x1xf32> to vector<8x128xf32>
    %163 = vector.broadcast %47 : vector<1x128xf32> to vector<8x128xf32>
    %164 = arith.maximumf %162, %163 : vector<8x128xf32>
    %165 = vector.broadcast %138 : vector<8x1xf32> to vector<8x128xf32>
    %166 = vector.broadcast %55 : vector<1x128xf32> to vector<8x128xf32>
    %167 = arith.maximumf %165, %166 : vector<8x128xf32>
    %168 = vector.broadcast %146 : vector<8x1xf32> to vector<8x128xf32>
    %169 = vector.broadcast %63 : vector<1x128xf32> to vector<8x128xf32>
    %170 = arith.minimumf %168, %169 : vector<8x128xf32>
    %171 = vector.broadcast %154 : vector<8x1xf32> to vector<8x128xf32>
    %172 = vector.broadcast %71 : vector<1x128xf32> to vector<8x128xf32>
    %173 = arith.minimumf %171, %172 : vector<8x128xf32>
    %174 = arith.subf %170, %164 : vector<8x128xf32>
    %cst_69 = arith.constant 1.000000e+00 : f32
    %175 = vector.broadcast %cst_69 : f32 to vector<8x128xf32>
    %176 = arith.addf %174, %175 : vector<8x128xf32>
    %cst_70 = arith.constant 0.000000e+00 : f32
    %177 = vector.broadcast %cst_70 : f32 to vector<8x128xf32>
    %178 = arith.maximumf %176, %177 : vector<8x128xf32>
    %179 = arith.subf %173, %167 : vector<8x128xf32>
    %cst_71 = arith.constant 1.000000e+00 : f32
    %180 = vector.broadcast %cst_71 : f32 to vector<8x128xf32>
    %181 = arith.addf %179, %180 : vector<8x128xf32>
    %cst_72 = arith.constant 0.000000e+00 : f32
    %182 = vector.broadcast %cst_72 : f32 to vector<8x128xf32>
    %183 = arith.maximumf %181, %182 : vector<8x128xf32>
    %184 = arith.mulf %178, %183 : vector<8x128xf32>
    %185 = vector.broadcast %161 : vector<8x1xf32> to vector<8x128xf32>
    %186 = vector.broadcast %78 : vector<1x128xf32> to vector<8x128xf32>
    %187 = arith.addf %185, %186 : vector<8x128xf32>
    %188 = arith.subf %187, %184 : vector<8x128xf32>
    %189 = tpu.iota {dimensions = array<i32: 0>} : vector<8x128xi32>
    %c0_i32 = arith.constant 0 : i32
    %190 = vector.broadcast %c0_i32 : i32 to vector<8x128xi32>
    %191 = arith.addi %190, %189 : vector<8x128xi32>
    %192 = tpu.iota {dimensions = array<i32: 1>} : vector<8x128xi32>
    %193 = arith.cmpi sgt, %192, %191 : vector<8x128xi32>
    %cst_73 = arith.constant 0.699999988 : f32
    %194 = vector.broadcast %cst_73 : f32 to vector<8x128xf32>
    %195 = arith.mulf %194, %188 : vector<8x128xf32>
    %196 = arith.cmpf ogt, %184, %195 : vector<8x128xf32>
    %197 = arith.andi %193, %196 : vector<8x128xi1>
    %cst_74 = arith.constant 1.000000e+00 : f32
    %cst_75 = arith.constant 0.000000e+00 : f32
    %198 = vector.broadcast %cst_74 : f32 to vector<8x128xf32>
    %199 = vector.broadcast %cst_75 : f32 to vector<8x128xf32>
    %200 = arith.select %197, %198, %199 : vector<8x128xi1>, vector<8x128xf32>
    %c0_i32_76 = arith.constant 0 : i32
    %201 = vector.broadcast %c0_i32_76 : i32 to vector<1x128xi32>
    %202 = arith.cmpi eq, %91, %201 : vector<1x128xi32>
    %cst_77 = arith.constant 0.000000e+00 : f32
    %203 = vector.broadcast %cst_77 : f32 to vector<1x128xf32>
    %204 = arith.select %202, %92, %203 : vector<1x128xi1>, vector<1x128xf32>
    %205 = vector.shape_cast %204 : vector<1x128xf32> to vector<1x1x128xf32>
    %cst_78 = arith.constant dense<0xFF800000> : vector<1xf32>
    %206 = vector.multi_reduction <maximumf>, %205, %cst_78 [1, 2] : vector<1x1x128xf32> to vector<1xf32>
    %207 = vector.shape_cast %206 : vector<1xf32> to vector<1x1x1xf32>
    %208 = vector.extract %207[0, 0, 0] : f32 from vector<1x1x1xf32>
    %209 = vector.extract_strided_slice %200 {offsets = [0, 0], sizes = [1, 128], strides = [1, 1]} : vector<8x128xf32> to vector<1x128xf32>
    %cst_79 = arith.constant 0.000000e+00 : f32
    %210 = arith.cmpf ogt, %208, %cst_79 : f32
    %211 = arith.maximumf %92, %209 : vector<1x128xf32>
    %212 = arith.select %210, %92, %211 : vector<1x128xf32>
    %c1_i32 = arith.constant 1 : i32
    %213 = vector.broadcast %c1_i32 : i32 to vector<1x128xi32>
    %214 = arith.cmpi eq, %91, %213 : vector<1x128xi32>
    %cst_80 = arith.constant 0.000000e+00 : f32
    %215 = vector.broadcast %cst_80 : f32 to vector<1x128xf32>
    %216 = arith.select %214, %212, %215 : vector<1x128xi1>, vector<1x128xf32>
    %217 = vector.shape_cast %216 : vector<1x128xf32> to vector<1x1x128xf32>
    %cst_81 = arith.constant dense<0xFF800000> : vector<1xf32>
    %218 = vector.multi_reduction <maximumf>, %217, %cst_81 [1, 2] : vector<1x1x128xf32> to vector<1xf32>
    %219 = vector.shape_cast %218 : vector<1xf32> to vector<1x1x1xf32>
    %220 = vector.extract %219[0, 0, 0] : f32 from vector<1x1x1xf32>
    %221 = vector.extract_strided_slice %200 {offsets = [1, 0], sizes = [1, 128], strides = [1, 1]} : vector<8x128xf32> to vector<1x128xf32>
    %cst_82 = arith.constant 0.000000e+00 : f32
    %222 = arith.cmpf ogt, %220, %cst_82 : f32
    %223 = arith.maximumf %212, %221 : vector<1x128xf32>
    %224 = arith.select %222, %212, %223 : vector<1x128xf32>
    %c2_i32 = arith.constant 2 : i32
    %225 = vector.broadcast %c2_i32 : i32 to vector<1x128xi32>
    %226 = arith.cmpi eq, %91, %225 : vector<1x128xi32>
    %cst_83 = arith.constant 0.000000e+00 : f32
    %227 = vector.broadcast %cst_83 : f32 to vector<1x128xf32>
    %228 = arith.select %226, %224, %227 : vector<1x128xi1>, vector<1x128xf32>
    %229 = vector.shape_cast %228 : vector<1x128xf32> to vector<1x1x128xf32>
    %cst_84 = arith.constant dense<0xFF800000> : vector<1xf32>
    %230 = vector.multi_reduction <maximumf>, %229, %cst_84 [1, 2] : vector<1x1x128xf32> to vector<1xf32>
    %231 = vector.shape_cast %230 : vector<1xf32> to vector<1x1x1xf32>
    %232 = vector.extract %231[0, 0, 0] : f32 from vector<1x1x1xf32>
    %233 = vector.extract_strided_slice %200 {offsets = [2, 0], sizes = [1, 128], strides = [1, 1]} : vector<8x128xf32> to vector<1x128xf32>
    %cst_85 = arith.constant 0.000000e+00 : f32
    %234 = arith.cmpf ogt, %232, %cst_85 : f32
    %235 = arith.maximumf %224, %233 : vector<1x128xf32>
    %236 = arith.select %234, %224, %235 : vector<1x128xf32>
    %c3_i32 = arith.constant 3 : i32
    %237 = vector.broadcast %c3_i32 : i32 to vector<1x128xi32>
    %238 = arith.cmpi eq, %91, %237 : vector<1x128xi32>
    %cst_86 = arith.constant 0.000000e+00 : f32
    %239 = vector.broadcast %cst_86 : f32 to vector<1x128xf32>
    %240 = arith.select %238, %236, %239 : vector<1x128xi1>, vector<1x128xf32>
    %241 = vector.shape_cast %240 : vector<1x128xf32> to vector<1x1x128xf32>
    %cst_87 = arith.constant dense<0xFF800000> : vector<1xf32>
    %242 = vector.multi_reduction <maximumf>, %241, %cst_87 [1, 2] : vector<1x1x128xf32> to vector<1xf32>
    %243 = vector.shape_cast %242 : vector<1xf32> to vector<1x1x1xf32>
    %244 = vector.extract %243[0, 0, 0] : f32 from vector<1x1x1xf32>
    %245 = vector.extract_strided_slice %200 {offsets = [3, 0], sizes = [1, 128], strides = [1, 1]} : vector<8x128xf32> to vector<1x128xf32>
    %cst_88 = arith.constant 0.000000e+00 : f32
    %246 = arith.cmpf ogt, %244, %cst_88 : f32
    %247 = arith.maximumf %236, %245 : vector<1x128xf32>
    %248 = arith.select %246, %236, %247 : vector<1x128xf32>
    %c4_i32 = arith.constant 4 : i32
    %249 = vector.broadcast %c4_i32 : i32 to vector<1x128xi32>
    %250 = arith.cmpi eq, %91, %249 : vector<1x128xi32>
    %cst_89 = arith.constant 0.000000e+00 : f32
    %251 = vector.broadcast %cst_89 : f32 to vector<1x128xf32>
    %252 = arith.select %250, %248, %251 : vector<1x128xi1>, vector<1x128xf32>
    %253 = vector.shape_cast %252 : vector<1x128xf32> to vector<1x1x128xf32>
    %cst_90 = arith.constant dense<0xFF800000> : vector<1xf32>
    %254 = vector.multi_reduction <maximumf>, %253, %cst_90 [1, 2] : vector<1x1x128xf32> to vector<1xf32>
    %255 = vector.shape_cast %254 : vector<1xf32> to vector<1x1x1xf32>
    %256 = vector.extract %255[0, 0, 0] : f32 from vector<1x1x1xf32>
    %257 = vector.extract_strided_slice %200 {offsets = [4, 0], sizes = [1, 128], strides = [1, 1]} : vector<8x128xf32> to vector<1x128xf32>
    %cst_91 = arith.constant 0.000000e+00 : f32
    %258 = arith.cmpf ogt, %256, %cst_91 : f32
    %259 = arith.maximumf %248, %257 : vector<1x128xf32>
    %260 = arith.select %258, %248, %259 : vector<1x128xf32>
    %c5_i32 = arith.constant 5 : i32
    %261 = vector.broadcast %c5_i32 : i32 to vector<1x128xi32>
    %262 = arith.cmpi eq, %91, %261 : vector<1x128xi32>
    %cst_92 = arith.constant 0.000000e+00 : f32
    %263 = vector.broadcast %cst_92 : f32 to vector<1x128xf32>
    %264 = arith.select %262, %260, %263 : vector<1x128xi1>, vector<1x128xf32>
    %265 = vector.shape_cast %264 : vector<1x128xf32> to vector<1x1x128xf32>
    %cst_93 = arith.constant dense<0xFF800000> : vector<1xf32>
    %266 = vector.multi_reduction <maximumf>, %265, %cst_93 [1, 2] : vector<1x1x128xf32> to vector<1xf32>
    %267 = vector.shape_cast %266 : vector<1xf32> to vector<1x1x1xf32>
    %268 = vector.extract %267[0, 0, 0] : f32 from vector<1x1x1xf32>
    %269 = vector.extract_strided_slice %200 {offsets = [5, 0], sizes = [1, 128], strides = [1, 1]} : vector<8x128xf32> to vector<1x128xf32>
    %cst_94 = arith.constant 0.000000e+00 : f32
    %270 = arith.cmpf ogt, %268, %cst_94 : f32
    %271 = arith.maximumf %260, %269 : vector<1x128xf32>
    %272 = arith.select %270, %260, %271 : vector<1x128xf32>
    %c6_i32 = arith.constant 6 : i32
    %273 = vector.broadcast %c6_i32 : i32 to vector<1x128xi32>
    %274 = arith.cmpi eq, %91, %273 : vector<1x128xi32>
    %cst_95 = arith.constant 0.000000e+00 : f32
    %275 = vector.broadcast %cst_95 : f32 to vector<1x128xf32>
    %276 = arith.select %274, %272, %275 : vector<1x128xi1>, vector<1x128xf32>
    %277 = vector.shape_cast %276 : vector<1x128xf32> to vector<1x1x128xf32>
    %cst_96 = arith.constant dense<0xFF800000> : vector<1xf32>
    %278 = vector.multi_reduction <maximumf>, %277, %cst_96 [1, 2] : vector<1x1x128xf32> to vector<1xf32>
    %279 = vector.shape_cast %278 : vector<1xf32> to vector<1x1x1xf32>
    %280 = vector.extract %279[0, 0, 0] : f32 from vector<1x1x1xf32>
    %281 = vector.extract_strided_slice %200 {offsets = [6, 0], sizes = [1, 128], strides = [1, 1]} : vector<8x128xf32> to vector<1x128xf32>
    %cst_97 = arith.constant 0.000000e+00 : f32
    %282 = arith.cmpf ogt, %280, %cst_97 : f32
    %283 = arith.maximumf %272, %281 : vector<1x128xf32>
    %284 = arith.select %282, %272, %283 : vector<1x128xf32>
    %c7_i32 = arith.constant 7 : i32
    %285 = vector.broadcast %c7_i32 : i32 to vector<1x128xi32>
    %286 = arith.cmpi eq, %91, %285 : vector<1x128xi32>
    %cst_98 = arith.constant 0.000000e+00 : f32
    %287 = vector.broadcast %cst_98 : f32 to vector<1x128xf32>
    %288 = arith.select %286, %284, %287 : vector<1x128xi1>, vector<1x128xf32>
    %289 = vector.shape_cast %288 : vector<1x128xf32> to vector<1x1x128xf32>
    %cst_99 = arith.constant dense<0xFF800000> : vector<1xf32>
    %290 = vector.multi_reduction <maximumf>, %289, %cst_99 [1, 2] : vector<1x1x128xf32> to vector<1xf32>
    %291 = vector.shape_cast %290 : vector<1xf32> to vector<1x1x1xf32>
    %292 = vector.extract %291[0, 0, 0] : f32 from vector<1x1x1xf32>
    %293 = vector.extract_strided_slice %200 {offsets = [7, 0], sizes = [1, 128], strides = [1, 1]} : vector<8x128xf32> to vector<1x128xf32>
    %cst_100 = arith.constant 0.000000e+00 : f32
    %294 = arith.cmpf ogt, %292, %cst_100 : f32
    %295 = arith.maximumf %284, %293 : vector<1x128xf32>
    %296 = arith.select %294, %284, %295 : vector<1x128xf32>
    %c0_101 = arith.constant 0 : index
    %c8 = arith.constant 8 : index
    %c0_102 = arith.constant 0 : index
    %297 = vector.load %arg3[%c0_101, %c8, %c0_102] : memref<1x128x8xf32, #tpu.memory_space<vmem>>, vector<1x8x8xf32>
    %298 = vector.shape_cast %297 : vector<1x8x8xf32> to vector<8x8xf32>
    %299 = vector.extract_strided_slice %298 {offsets = [0, 0], sizes = [8, 1], strides = [1, 1]} : vector<8x8xf32> to vector<8x1xf32>
    %300 = vector.extract_strided_slice %298 {offsets = [0, 1], sizes = [8, 1], strides = [1, 1]} : vector<8x8xf32> to vector<8x1xf32>
    %301 = vector.extract_strided_slice %298 {offsets = [0, 2], sizes = [8, 1], strides = [1, 1]} : vector<8x8xf32> to vector<8x1xf32>
    %302 = vector.extract_strided_slice %298 {offsets = [0, 3], sizes = [8, 1], strides = [1, 1]} : vector<8x8xf32> to vector<8x1xf32>
    %303 = vector.extract_strided_slice %298 {offsets = [0, 4], sizes = [8, 1], strides = [1, 1]} : vector<8x8xf32> to vector<8x1xf32>
    %304 = vector.extract_strided_slice %298 {offsets = [0, 5], sizes = [8, 1], strides = [1, 1]} : vector<8x8xf32> to vector<8x1xf32>
    %305 = vector.extract_strided_slice %298 {offsets = [0, 6], sizes = [8, 1], strides = [1, 1]} : vector<8x8xf32> to vector<8x1xf32>
    %306 = vector.extract_strided_slice %298 {offsets = [0, 7], sizes = [8, 1], strides = [1, 1]} : vector<8x8xf32> to vector<8x1xf32>
    %307 = arith.subf %301, %299 : vector<8x1xf32>
    %cst_103 = arith.constant 1.000000e+00 : f32
    %308 = vector.broadcast %cst_103 : f32 to vector<8x1xf32>
    %309 = arith.addf %307, %308 : vector<8x1xf32>
    %310 = arith.subf %302, %300 : vector<8x1xf32>
    %cst_104 = arith.constant 1.000000e+00 : f32
    %311 = vector.broadcast %cst_104 : f32 to vector<8x1xf32>
    %312 = arith.addf %310, %311 : vector<8x1xf32>
    %cst_105 = arith.constant 5.000000e-01 : f32
    %313 = vector.broadcast %cst_105 : f32 to vector<8x1xf32>
    %314 = arith.mulf %313, %309 : vector<8x1xf32>
    %315 = arith.addf %299, %314 : vector<8x1xf32>
    %cst_106 = arith.constant 5.000000e-01 : f32
    %316 = vector.broadcast %cst_106 : f32 to vector<8x1xf32>
    %317 = arith.mulf %316, %312 : vector<8x1xf32>
    %318 = arith.addf %300, %317 : vector<8x1xf32>
    %319 = arith.mulf %303, %309 : vector<8x1xf32>
    %320 = arith.addf %319, %315 : vector<8x1xf32>
    %321 = arith.mulf %304, %312 : vector<8x1xf32>
    %322 = arith.addf %321, %318 : vector<8x1xf32>
    %323 = math.exp %305 : vector<8x1xf32>
    %324 = arith.mulf %323, %309 : vector<8x1xf32>
    %325 = math.exp %306 : vector<8x1xf32>
    %326 = arith.mulf %325, %312 : vector<8x1xf32>
    %cst_107 = arith.constant 5.000000e-01 : f32
    %327 = vector.broadcast %cst_107 : f32 to vector<8x1xf32>
    %328 = arith.mulf %327, %324 : vector<8x1xf32>
    %329 = arith.subf %320, %328 : vector<8x1xf32>
    %cst_108 = arith.constant 1.000000e+00 : f32
    %330 = arith.subf %3, %cst_108 : f32
    %cst_109 = arith.constant 0.000000e+00 : f32
    %331 = vector.broadcast %cst_109 : f32 to vector<8x1xf32>
    %332 = arith.maximumf %331, %329 : vector<8x1xf32>
    %333 = vector.broadcast %330 : f32 to vector<8x1xf32>
    %334 = arith.minimumf %333, %332 : vector<8x1xf32>
    %cst_110 = arith.constant 5.000000e-01 : f32
    %335 = vector.broadcast %cst_110 : f32 to vector<8x1xf32>
    %336 = arith.mulf %335, %326 : vector<8x1xf32>
    %337 = arith.subf %322, %336 : vector<8x1xf32>
    %cst_111 = arith.constant 1.000000e+00 : f32
    %338 = arith.subf %1, %cst_111 : f32
    %cst_112 = arith.constant 0.000000e+00 : f32
    %339 = vector.broadcast %cst_112 : f32 to vector<8x1xf32>
    %340 = arith.maximumf %339, %337 : vector<8x1xf32>
    %341 = vector.broadcast %338 : f32 to vector<8x1xf32>
    %342 = arith.minimumf %341, %340 : vector<8x1xf32>
    %cst_113 = arith.constant 5.000000e-01 : f32
    %343 = vector.broadcast %cst_113 : f32 to vector<8x1xf32>
    %344 = arith.mulf %343, %324 : vector<8x1xf32>
    %345 = arith.addf %320, %344 : vector<8x1xf32>
    %cst_114 = arith.constant 1.000000e+00 : f32
    %346 = arith.subf %3, %cst_114 : f32
    %cst_115 = arith.constant 0.000000e+00 : f32
    %347 = vector.broadcast %cst_115 : f32 to vector<8x1xf32>
    %348 = arith.maximumf %347, %345 : vector<8x1xf32>
    %349 = vector.broadcast %346 : f32 to vector<8x1xf32>
    %350 = arith.minimumf %349, %348 : vector<8x1xf32>
    %cst_116 = arith.constant 5.000000e-01 : f32
    %351 = vector.broadcast %cst_116 : f32 to vector<8x1xf32>
    %352 = arith.mulf %351, %326 : vector<8x1xf32>
    %353 = arith.addf %322, %352 : vector<8x1xf32>
    %cst_117 = arith.constant 1.000000e+00 : f32
    %354 = arith.subf %1, %cst_117 : f32
    %cst_118 = arith.constant 0.000000e+00 : f32
    %355 = vector.broadcast %cst_118 : f32 to vector<8x1xf32>
    %356 = arith.maximumf %355, %353 : vector<8x1xf32>
    %357 = vector.broadcast %354 : f32 to vector<8x1xf32>
    %358 = arith.minimumf %357, %356 : vector<8x1xf32>
    %359 = arith.subf %350, %334 : vector<8x1xf32>
    %cst_119 = arith.constant 1.000000e+00 : f32
    %360 = vector.broadcast %cst_119 : f32 to vector<8x1xf32>
    %361 = arith.addf %359, %360 : vector<8x1xf32>
    %362 = arith.subf %358, %342 : vector<8x1xf32>
    %cst_120 = arith.constant 1.000000e+00 : f32
    %363 = vector.broadcast %cst_120 : f32 to vector<8x1xf32>
    %364 = arith.addf %362, %363 : vector<8x1xf32>
    %365 = arith.mulf %361, %364 : vector<8x1xf32>
    %366 = vector.broadcast %334 : vector<8x1xf32> to vector<8x128xf32>
    %367 = vector.broadcast %47 : vector<1x128xf32> to vector<8x128xf32>
    %368 = arith.maximumf %366, %367 : vector<8x128xf32>
    %369 = vector.broadcast %342 : vector<8x1xf32> to vector<8x128xf32>
    %370 = vector.broadcast %55 : vector<1x128xf32> to vector<8x128xf32>
    %371 = arith.maximumf %369, %370 : vector<8x128xf32>
    %372 = vector.broadcast %350 : vector<8x1xf32> to vector<8x128xf32>
    %373 = vector.broadcast %63 : vector<1x128xf32> to vector<8x128xf32>
    %374 = arith.minimumf %372, %373 : vector<8x128xf32>
    %375 = vector.broadcast %358 : vector<8x1xf32> to vector<8x128xf32>
    %376 = vector.broadcast %71 : vector<1x128xf32> to vector<8x128xf32>
    %377 = arith.minimumf %375, %376 : vector<8x128xf32>
    %378 = arith.subf %374, %368 : vector<8x128xf32>
    %cst_121 = arith.constant 1.000000e+00 : f32
    %379 = vector.broadcast %cst_121 : f32 to vector<8x128xf32>
    %380 = arith.addf %378, %379 : vector<8x128xf32>
    %cst_122 = arith.constant 0.000000e+00 : f32
    %381 = vector.broadcast %cst_122 : f32 to vector<8x128xf32>
    %382 = arith.maximumf %380, %381 : vector<8x128xf32>
    %383 = arith.subf %377, %371 : vector<8x128xf32>
    %cst_123 = arith.constant 1.000000e+00 : f32
    %384 = vector.broadcast %cst_123 : f32 to vector<8x128xf32>
    %385 = arith.addf %383, %384 : vector<8x128xf32>
    %cst_124 = arith.constant 0.000000e+00 : f32
    %386 = vector.broadcast %cst_124 : f32 to vector<8x128xf32>
    %387 = arith.maximumf %385, %386 : vector<8x128xf32>
    %388 = arith.mulf %382, %387 : vector<8x128xf32>
    %389 = vector.broadcast %365 : vector<8x1xf32> to vector<8x128xf32>
    %390 = vector.broadcast %78 : vector<1x128xf32> to vector<8x128xf32>
    %391 = arith.addf %389, %390 : vector<8x128xf32>
    %392 = arith.subf %391, %388 : vector<8x128xf32>
    %393 = tpu.iota {dimensions = array<i32: 0>} : vector<8x128xi32>
    %c8_i32 = arith.constant 8 : i32
    %394 = vector.broadcast %c8_i32 : i32 to vector<8x128xi32>
    %395 = arith.addi %394, %393 : vector<8x128xi32>
    %396 = tpu.iota {dimensions = array<i32: 1>} : vector<8x128xi32>
    %397 = arith.cmpi sgt, %396, %395 : vector<8x128xi32>
    %cst_125 = arith.constant 0.699999988 : f32
    %398 = vector.broadcast %cst_125 : f32 to vector<8x128xf32>
    %399 = arith.mulf %398, %392 : vector<8x128xf32>
    %400 = arith.cmpf ogt, %388, %399 : vector<8x128xf32>
    %401 = arith.andi %397, %400 : vector<8x128xi1>
    %cst_126 = arith.constant 1.000000e+00 : f32
    %cst_127 = arith.constant 0.000000e+00 : f32
    %402 = vector.broadcast %cst_126 : f32 to vector<8x128xf32>
    %403 = vector.broadcast %cst_127 : f32 to vector<8x128xf32>
    %404 = arith.select %401, %402, %403 : vector<8x128xi1>, vector<8x128xf32>
    %c8_i32_128 = arith.constant 8 : i32
    %405 = vector.broadcast %c8_i32_128 : i32 to vector<1x128xi32>
    %406 = arith.cmpi eq, %91, %405 : vector<1x128xi32>
    %cst_129 = arith.constant 0.000000e+00 : f32
    %407 = vector.broadcast %cst_129 : f32 to vector<1x128xf32>
    %408 = arith.select %406, %296, %407 : vector<1x128xi1>, vector<1x128xf32>
    %409 = vector.shape_cast %408 : vector<1x128xf32> to vector<1x1x128xf32>
    %cst_130 = arith.constant dense<0xFF800000> : vector<1xf32>
    %410 = vector.multi_reduction <maximumf>, %409, %cst_130 [1, 2] : vector<1x1x128xf32> to vector<1xf32>
    %411 = vector.shape_cast %410 : vector<1xf32> to vector<1x1x1xf32>
    %412 = vector.extract %411[0, 0, 0] : f32 from vector<1x1x1xf32>
    %413 = vector.extract_strided_slice %404 {offsets = [0, 0], sizes = [1, 128], strides = [1, 1]} : vector<8x128xf32> to vector<1x128xf32>
    %cst_131 = arith.constant 0.000000e+00 : f32
    %414 = arith.cmpf ogt, %412, %cst_131 : f32
    %415 = arith.maximumf %296, %413 : vector<1x128xf32>
    %416 = arith.select %414, %296, %415 : vector<1x128xf32>
    %c9_i32 = arith.constant 9 : i32
    %417 = vector.broadcast %c9_i32 : i32 to vector<1x128xi32>
    %418 = arith.cmpi eq, %91, %417 : vector<1x128xi32>
    %cst_132 = arith.constant 0.000000e+00 : f32
    %419 = vector.broadcast %cst_132 : f32 to vector<1x128xf32>
    %420 = arith.select %418, %416, %419 : vector<1x128xi1>, vector<1x128xf32>
    %421 = vector.shape_cast %420 : vector<1x128xf32> to vector<1x1x128xf32>
    %cst_133 = arith.constant dense<0xFF800000> : vector<1xf32>
    %422 = vector.multi_reduction <maximumf>, %421, %cst_133 [1, 2] : vector<1x1x128xf32> to vector<1xf32>
    %423 = vector.shape_cast %422 : vector<1xf32> to vector<1x1x1xf32>
    %424 = vector.extract %423[0, 0, 0] : f32 from vector<1x1x1xf32>
    %425 = vector.extract_strided_slice %404 {offsets = [1, 0], sizes = [1, 128], strides = [1, 1]} : vector<8x128xf32> to vector<1x128xf32>
    %cst_134 = arith.constant 0.000000e+00 : f32
    %426 = arith.cmpf ogt, %424, %cst_134 : f32
    %427 = arith.maximumf %416, %425 : vector<1x128xf32>
    %428 = arith.select %426, %416, %427 : vector<1x128xf32>
    %c10_i32 = arith.constant 10 : i32
    %429 = vector.broadcast %c10_i32 : i32 to vector<1x128xi32>
    %430 = arith.cmpi eq, %91, %429 : vector<1x128xi32>
    %cst_135 = arith.constant 0.000000e+00 : f32
    %431 = vector.broadcast %cst_135 : f32 to vector<1x128xf32>
    %432 = arith.select %430, %428, %431 : vector<1x128xi1>, vector<1x128xf32>
    %433 = vector.shape_cast %432 : vector<1x128xf32> to vector<1x1x128xf32>
    %cst_136 = arith.constant dense<0xFF800000> : vector<1xf32>
    %434 = vector.multi_reduction <maximumf>, %433, %cst_136 [1, 2] : vector<1x1x128xf32> to vector<1xf32>
    %435 = vector.shape_cast %434 : vector<1xf32> to vector<1x1x1xf32>
    %436 = vector.extract %435[0, 0, 0] : f32 from vector<1x1x1xf32>
    %437 = vector.extract_strided_slice %404 {offsets = [2, 0], sizes = [1, 128], strides = [1, 1]} : vector<8x128xf32> to vector<1x128xf32>
    %cst_137 = arith.constant 0.000000e+00 : f32
    %438 = arith.cmpf ogt, %436, %cst_137 : f32
    %439 = arith.maximumf %428, %437 : vector<1x128xf32>
    %440 = arith.select %438, %428, %439 : vector<1x128xf32>
    %c11_i32 = arith.constant 11 : i32
    %441 = vector.broadcast %c11_i32 : i32 to vector<1x128xi32>
    %442 = arith.cmpi eq, %91, %441 : vector<1x128xi32>
    %cst_138 = arith.constant 0.000000e+00 : f32
    %443 = vector.broadcast %cst_138 : f32 to vector<1x128xf32>
    %444 = arith.select %442, %440, %443 : vector<1x128xi1>, vector<1x128xf32>
    %445 = vector.shape_cast %444 : vector<1x128xf32> to vector<1x1x128xf32>
    %cst_139 = arith.constant dense<0xFF800000> : vector<1xf32>
    %446 = vector.multi_reduction <maximumf>, %445, %cst_139 [1, 2] : vector<1x1x128xf32> to vector<1xf32>
    %447 = vector.shape_cast %446 : vector<1xf32> to vector<1x1x1xf32>
    %448 = vector.extract %447[0, 0, 0] : f32 from vector<1x1x1xf32>
    %449 = vector.extract_strided_slice %404 {offsets = [3, 0], sizes = [1, 128], strides = [1, 1]} : vector<8x128xf32> to vector<1x128xf32>
    %cst_140 = arith.constant 0.000000e+00 : f32
    %450 = arith.cmpf ogt, %448, %cst_140 : f32
    %451 = arith.maximumf %440, %449 : vector<1x128xf32>
    %452 = arith.select %450, %440, %451 : vector<1x128xf32>
    %c12_i32 = arith.constant 12 : i32
    %453 = vector.broadcast %c12_i32 : i32 to vector<1x128xi32>
    %454 = arith.cmpi eq, %91, %453 : vector<1x128xi32>
    %cst_141 = arith.constant 0.000000e+00 : f32
    %455 = vector.broadcast %cst_141 : f32 to vector<1x128xf32>
    %456 = arith.select %454, %452, %455 : vector<1x128xi1>, vector<1x128xf32>
    %457 = vector.shape_cast %456 : vector<1x128xf32> to vector<1x1x128xf32>
    %cst_142 = arith.constant dense<0xFF800000> : vector<1xf32>
    %458 = vector.multi_reduction <maximumf>, %457, %cst_142 [1, 2] : vector<1x1x128xf32> to vector<1xf32>
    %459 = vector.shape_cast %458 : vector<1xf32> to vector<1x1x1xf32>
    %460 = vector.extract %459[0, 0, 0] : f32 from vector<1x1x1xf32>
    %461 = vector.extract_strided_slice %404 {offsets = [4, 0], sizes = [1, 128], strides = [1, 1]} : vector<8x128xf32> to vector<1x128xf32>
    %cst_143 = arith.constant 0.000000e+00 : f32
    %462 = arith.cmpf ogt, %460, %cst_143 : f32
    %463 = arith.maximumf %452, %461 : vector<1x128xf32>
    %464 = arith.select %462, %452, %463 : vector<1x128xf32>
    %c13_i32 = arith.constant 13 : i32
    %465 = vector.broadcast %c13_i32 : i32 to vector<1x128xi32>
    %466 = arith.cmpi eq, %91, %465 : vector<1x128xi32>
    %cst_144 = arith.constant 0.000000e+00 : f32
    %467 = vector.broadcast %cst_144 : f32 to vector<1x128xf32>
    %468 = arith.select %466, %464, %467 : vector<1x128xi1>, vector<1x128xf32>
    %469 = vector.shape_cast %468 : vector<1x128xf32> to vector<1x1x128xf32>
    %cst_145 = arith.constant dense<0xFF800000> : vector<1xf32>
    %470 = vector.multi_reduction <maximumf>, %469, %cst_145 [1, 2] : vector<1x1x128xf32> to vector<1xf32>
    %471 = vector.shape_cast %470 : vector<1xf32> to vector<1x1x1xf32>
    %472 = vector.extract %471[0, 0, 0] : f32 from vector<1x1x1xf32>
    %473 = vector.extract_strided_slice %404 {offsets = [5, 0], sizes = [1, 128], strides = [1, 1]} : vector<8x128xf32> to vector<1x128xf32>
    %cst_146 = arith.constant 0.000000e+00 : f32
    %474 = arith.cmpf ogt, %472, %cst_146 : f32
    %475 = arith.maximumf %464, %473 : vector<1x128xf32>
    %476 = arith.select %474, %464, %475 : vector<1x128xf32>
    %c14_i32 = arith.constant 14 : i32
    %477 = vector.broadcast %c14_i32 : i32 to vector<1x128xi32>
    %478 = arith.cmpi eq, %91, %477 : vector<1x128xi32>
    %cst_147 = arith.constant 0.000000e+00 : f32
    %479 = vector.broadcast %cst_147 : f32 to vector<1x128xf32>
    %480 = arith.select %478, %476, %479 : vector<1x128xi1>, vector<1x128xf32>
    %481 = vector.shape_cast %480 : vector<1x128xf32> to vector<1x1x128xf32>
    %cst_148 = arith.constant dense<0xFF800000> : vector<1xf32>
    %482 = vector.multi_reduction <maximumf>, %481, %cst_148 [1, 2] : vector<1x1x128xf32> to vector<1xf32>
    %483 = vector.shape_cast %482 : vector<1xf32> to vector<1x1x1xf32>
    %484 = vector.extract %483[0, 0, 0] : f32 from vector<1x1x1xf32>
    %485 = vector.extract_strided_slice %404 {offsets = [6, 0], sizes = [1, 128], strides = [1, 1]} : vector<8x128xf32> to vector<1x128xf32>
    %cst_149 = arith.constant 0.000000e+00 : f32
    %486 = arith.cmpf ogt, %484, %cst_149 : f32
    %487 = arith.maximumf %476, %485 : vector<1x128xf32>
    %488 = arith.select %486, %476, %487 : vector<1x128xf32>
    %c15_i32 = arith.constant 15 : i32
    %489 = vector.broadcast %c15_i32 : i32 to vector<1x128xi32>
    %490 = arith.cmpi eq, %91, %489 : vector<1x128xi32>
    %cst_150 = arith.constant 0.000000e+00 : f32
    %491 = vector.broadcast %cst_150 : f32 to vector<1x128xf32>
    %492 = arith.select %490, %488, %491 : vector<1x128xi1>, vector<1x128xf32>
    %493 = vector.shape_cast %492 : vector<1x128xf32> to vector<1x1x128xf32>
    %cst_151 = arith.constant dense<0xFF800000> : vector<1xf32>
    %494 = vector.multi_reduction <maximumf>, %493, %cst_151 [1, 2] : vector<1x1x128xf32> to vector<1xf32>
    %495 = vector.shape_cast %494 : vector<1xf32> to vector<1x1x1xf32>
    %496 = vector.extract %495[0, 0, 0] : f32 from vector<1x1x1xf32>
    %497 = vector.extract_strided_slice %404 {offsets = [7, 0], sizes = [1, 128], strides = [1, 1]} : vector<8x128xf32> to vector<1x128xf32>
    %cst_152 = arith.constant 0.000000e+00 : f32
    %498 = arith.cmpf ogt, %496, %cst_152 : f32
    %499 = arith.maximumf %488, %497 : vector<1x128xf32>
    %500 = arith.select %498, %488, %499 : vector<1x128xf32>
    %c0_153 = arith.constant 0 : index
    %c16 = arith.constant 16 : index
    %c0_154 = arith.constant 0 : index
    %501 = vector.load %arg3[%c0_153, %c16, %c0_154] : memref<1x128x8xf32, #tpu.memory_space<vmem>>, vector<1x8x8xf32>
    %502 = vector.shape_cast %501 : vector<1x8x8xf32> to vector<8x8xf32>
    %503 = vector.extract_strided_slice %502 {offsets = [0, 0], sizes = [8, 1], strides = [1, 1]} : vector<8x8xf32> to vector<8x1xf32>
    %504 = vector.extract_strided_slice %502 {offsets = [0, 1], sizes = [8, 1], strides = [1, 1]} : vector<8x8xf32> to vector<8x1xf32>
    %505 = vector.extract_strided_slice %502 {offsets = [0, 2], sizes = [8, 1], strides = [1, 1]} : vector<8x8xf32> to vector<8x1xf32>
    %506 = vector.extract_strided_slice %502 {offsets = [0, 3], sizes = [8, 1], strides = [1, 1]} : vector<8x8xf32> to vector<8x1xf32>
    %507 = vector.extract_strided_slice %502 {offsets = [0, 4], sizes = [8, 1], strides = [1, 1]} : vector<8x8xf32> to vector<8x1xf32>
    %508 = vector.extract_strided_slice %502 {offsets = [0, 5], sizes = [8, 1], strides = [1, 1]} : vector<8x8xf32> to vector<8x1xf32>
    %509 = vector.extract_strided_slice %502 {offsets = [0, 6], sizes = [8, 1], strides = [1, 1]} : vector<8x8xf32> to vector<8x1xf32>
    %510 = vector.extract_strided_slice %502 {offsets = [0, 7], sizes = [8, 1], strides = [1, 1]} : vector<8x8xf32> to vector<8x1xf32>
    %511 = arith.subf %505, %503 : vector<8x1xf32>
    %cst_155 = arith.constant 1.000000e+00 : f32
    %512 = vector.broadcast %cst_155 : f32 to vector<8x1xf32>
    %513 = arith.addf %511, %512 : vector<8x1xf32>
    %514 = arith.subf %506, %504 : vector<8x1xf32>
    %cst_156 = arith.constant 1.000000e+00 : f32
    %515 = vector.broadcast %cst_156 : f32 to vector<8x1xf32>
    %516 = arith.addf %514, %515 : vector<8x1xf32>
    %cst_157 = arith.constant 5.000000e-01 : f32
    %517 = vector.broadcast %cst_157 : f32 to vector<8x1xf32>
    %518 = arith.mulf %517, %513 : vector<8x1xf32>
    %519 = arith.addf %503, %518 : vector<8x1xf32>
    %cst_158 = arith.constant 5.000000e-01 : f32
    %520 = vector.broadcast %cst_158 : f32 to vector<8x1xf32>
    %521 = arith.mulf %520, %516 : vector<8x1xf32>
    %522 = arith.addf %504, %521 : vector<8x1xf32>
    %523 = arith.mulf %507, %513 : vector<8x1xf32>
    %524 = arith.addf %523, %519 : vector<8x1xf32>
    %525 = arith.mulf %508, %516 : vector<8x1xf32>
    %526 = arith.addf %525, %522 : vector<8x1xf32>
    %527 = math.exp %509 : vector<8x1xf32>
    %528 = arith.mulf %527, %513 : vector<8x1xf32>
    %529 = math.exp %510 : vector<8x1xf32>
    %530 = arith.mulf %529, %516 : vector<8x1xf32>
    %cst_159 = arith.constant 5.000000e-01 : f32
    %531 = vector.broadcast %cst_159 : f32 to vector<8x1xf32>
    %532 = arith.mulf %531, %528 : vector<8x1xf32>
    %533 = arith.subf %524, %532 : vector<8x1xf32>
    %cst_160 = arith.constant 1.000000e+00 : f32
    %534 = arith.subf %3, %cst_160 : f32
    %cst_161 = arith.constant 0.000000e+00 : f32
    %535 = vector.broadcast %cst_161 : f32 to vector<8x1xf32>
    %536 = arith.maximumf %535, %533 : vector<8x1xf32>
    %537 = vector.broadcast %534 : f32 to vector<8x1xf32>
    %538 = arith.minimumf %537, %536 : vector<8x1xf32>
    %cst_162 = arith.constant 5.000000e-01 : f32
    %539 = vector.broadcast %cst_162 : f32 to vector<8x1xf32>
    %540 = arith.mulf %539, %530 : vector<8x1xf32>
    %541 = arith.subf %526, %540 : vector<8x1xf32>
    %cst_163 = arith.constant 1.000000e+00 : f32
    %542 = arith.subf %1, %cst_163 : f32
    %cst_164 = arith.constant 0.000000e+00 : f32
    %543 = vector.broadcast %cst_164 : f32 to vector<8x1xf32>
    %544 = arith.maximumf %543, %541 : vector<8x1xf32>
    %545 = vector.broadcast %542 : f32 to vector<8x1xf32>
    %546 = arith.minimumf %545, %544 : vector<8x1xf32>
    %cst_165 = arith.constant 5.000000e-01 : f32
    %547 = vector.broadcast %cst_165 : f32 to vector<8x1xf32>
    %548 = arith.mulf %547, %528 : vector<8x1xf32>
    %549 = arith.addf %524, %548 : vector<8x1xf32>
    %cst_166 = arith.constant 1.000000e+00 : f32
    %550 = arith.subf %3, %cst_166 : f32
    %cst_167 = arith.constant 0.000000e+00 : f32
    %551 = vector.broadcast %cst_167 : f32 to vector<8x1xf32>
    %552 = arith.maximumf %551, %549 : vector<8x1xf32>
    %553 = vector.broadcast %550 : f32 to vector<8x1xf32>
    %554 = arith.minimumf %553, %552 : vector<8x1xf32>
    %cst_168 = arith.constant 5.000000e-01 : f32
    %555 = vector.broadcast %cst_168 : f32 to vector<8x1xf32>
    %556 = arith.mulf %555, %530 : vector<8x1xf32>
    %557 = arith.addf %526, %556 : vector<8x1xf32>
    %cst_169 = arith.constant 1.000000e+00 : f32
    %558 = arith.subf %1, %cst_169 : f32
    %cst_170 = arith.constant 0.000000e+00 : f32
    %559 = vector.broadcast %cst_170 : f32 to vector<8x1xf32>
    %560 = arith.maximumf %559, %557 : vector<8x1xf32>
    %561 = vector.broadcast %558 : f32 to vector<8x1xf32>
    %562 = arith.minimumf %561, %560 : vector<8x1xf32>
    %563 = arith.subf %554, %538 : vector<8x1xf32>
    %cst_171 = arith.constant 1.000000e+00 : f32
    %564 = vector.broadcast %cst_171 : f32 to vector<8x1xf32>
    %565 = arith.addf %563, %564 : vector<8x1xf32>
    %566 = arith.subf %562, %546 : vector<8x1xf32>
    %cst_172 = arith.constant 1.000000e+00 : f32
    %567 = vector.broadcast %cst_172 : f32 to vector<8x1xf32>
    %568 = arith.addf %566, %567 : vector<8x1xf32>
    %569 = arith.mulf %565, %568 : vector<8x1xf32>
    %570 = vector.broadcast %538 : vector<8x1xf32> to vector<8x128xf32>
    %571 = vector.broadcast %47 : vector<1x128xf32> to vector<8x128xf32>
    %572 = arith.maximumf %570, %571 : vector<8x128xf32>
    %573 = vector.broadcast %546 : vector<8x1xf32> to vector<8x128xf32>
    %574 = vector.broadcast %55 : vector<1x128xf32> to vector<8x128xf32>
    %575 = arith.maximumf %573, %574 : vector<8x128xf32>
    %576 = vector.broadcast %554 : vector<8x1xf32> to vector<8x128xf32>
    %577 = vector.broadcast %63 : vector<1x128xf32> to vector<8x128xf32>
    %578 = arith.minimumf %576, %577 : vector<8x128xf32>
    %579 = vector.broadcast %562 : vector<8x1xf32> to vector<8x128xf32>
    %580 = vector.broadcast %71 : vector<1x128xf32> to vector<8x128xf32>
    %581 = arith.minimumf %579, %580 : vector<8x128xf32>
    %582 = arith.subf %578, %572 : vector<8x128xf32>
    %cst_173 = arith.constant 1.000000e+00 : f32
    %583 = vector.broadcast %cst_173 : f32 to vector<8x128xf32>
    %584 = arith.addf %582, %583 : vector<8x128xf32>
    %cst_174 = arith.constant 0.000000e+00 : f32
    %585 = vector.broadcast %cst_174 : f32 to vector<8x128xf32>
    %586 = arith.maximumf %584, %585 : vector<8x128xf32>
    %587 = arith.subf %581, %575 : vector<8x128xf32>
    %cst_175 = arith.constant 1.000000e+00 : f32
    %588 = vector.broadcast %cst_175 : f32 to vector<8x128xf32>
    %589 = arith.addf %587, %588 : vector<8x128xf32>
    %cst_176 = arith.constant 0.000000e+00 : f32
    %590 = vector.broadcast %cst_176 : f32 to vector<8x128xf32>
    %591 = arith.maximumf %589, %590 : vector<8x128xf32>
    %592 = arith.mulf %586, %591 : vector<8x128xf32>
    %593 = vector.broadcast %569 : vector<8x1xf32> to vector<8x128xf32>
    %594 = vector.broadcast %78 : vector<1x128xf32> to vector<8x128xf32>
    %595 = arith.addf %593, %594 : vector<8x128xf32>
    %596 = arith.subf %595, %592 : vector<8x128xf32>
    %597 = tpu.iota {dimensions = array<i32: 0>} : vector<8x128xi32>
    %c16_i32 = arith.constant 16 : i32
    %598 = vector.broadcast %c16_i32 : i32 to vector<8x128xi32>
    %599 = arith.addi %598, %597 : vector<8x128xi32>
    %600 = tpu.iota {dimensions = array<i32: 1>} : vector<8x128xi32>
    %601 = arith.cmpi sgt, %600, %599 : vector<8x128xi32>
    %cst_177 = arith.constant 0.699999988 : f32
    %602 = vector.broadcast %cst_177 : f32 to vector<8x128xf32>
    %603 = arith.mulf %602, %596 : vector<8x128xf32>
    %604 = arith.cmpf ogt, %592, %603 : vector<8x128xf32>
    %605 = arith.andi %601, %604 : vector<8x128xi1>
    %cst_178 = arith.constant 1.000000e+00 : f32
    %cst_179 = arith.constant 0.000000e+00 : f32
    %606 = vector.broadcast %cst_178 : f32 to vector<8x128xf32>
    %607 = vector.broadcast %cst_179 : f32 to vector<8x128xf32>
    %608 = arith.select %605, %606, %607 : vector<8x128xi1>, vector<8x128xf32>
    %c16_i32_180 = arith.constant 16 : i32
    %609 = vector.broadcast %c16_i32_180 : i32 to vector<1x128xi32>
    %610 = arith.cmpi eq, %91, %609 : vector<1x128xi32>
    %cst_181 = arith.constant 0.000000e+00 : f32
    %611 = vector.broadcast %cst_181 : f32 to vector<1x128xf32>
    %612 = arith.select %610, %500, %611 : vector<1x128xi1>, vector<1x128xf32>
    %613 = vector.shape_cast %612 : vector<1x128xf32> to vector<1x1x128xf32>
    %cst_182 = arith.constant dense<0xFF800000> : vector<1xf32>
    %614 = vector.multi_reduction <maximumf>, %613, %cst_182 [1, 2] : vector<1x1x128xf32> to vector<1xf32>
    %615 = vector.shape_cast %614 : vector<1xf32> to vector<1x1x1xf32>
    %616 = vector.extract %615[0, 0, 0] : f32 from vector<1x1x1xf32>
    %617 = vector.extract_strided_slice %608 {offsets = [0, 0], sizes = [1, 128], strides = [1, 1]} : vector<8x128xf32> to vector<1x128xf32>
    %cst_183 = arith.constant 0.000000e+00 : f32
    %618 = arith.cmpf ogt, %616, %cst_183 : f32
    %619 = arith.maximumf %500, %617 : vector<1x128xf32>
    %620 = arith.select %618, %500, %619 : vector<1x128xf32>
    %c17_i32 = arith.constant 17 : i32
    %621 = vector.broadcast %c17_i32 : i32 to vector<1x128xi32>
    %622 = arith.cmpi eq, %91, %621 : vector<1x128xi32>
    %cst_184 = arith.constant 0.000000e+00 : f32
    %623 = vector.broadcast %cst_184 : f32 to vector<1x128xf32>
    %624 = arith.select %622, %620, %623 : vector<1x128xi1>, vector<1x128xf32>
    %625 = vector.shape_cast %624 : vector<1x128xf32> to vector<1x1x128xf32>
    %cst_185 = arith.constant dense<0xFF800000> : vector<1xf32>
    %626 = vector.multi_reduction <maximumf>, %625, %cst_185 [1, 2] : vector<1x1x128xf32> to vector<1xf32>
    %627 = vector.shape_cast %626 : vector<1xf32> to vector<1x1x1xf32>
    %628 = vector.extract %627[0, 0, 0] : f32 from vector<1x1x1xf32>
    %629 = vector.extract_strided_slice %608 {offsets = [1, 0], sizes = [1, 128], strides = [1, 1]} : vector<8x128xf32> to vector<1x128xf32>
    %cst_186 = arith.constant 0.000000e+00 : f32
    %630 = arith.cmpf ogt, %628, %cst_186 : f32
    %631 = arith.maximumf %620, %629 : vector<1x128xf32>
    %632 = arith.select %630, %620, %631 : vector<1x128xf32>
    %c18_i32 = arith.constant 18 : i32
    %633 = vector.broadcast %c18_i32 : i32 to vector<1x128xi32>
    %634 = arith.cmpi eq, %91, %633 : vector<1x128xi32>
    %cst_187 = arith.constant 0.000000e+00 : f32
    %635 = vector.broadcast %cst_187 : f32 to vector<1x128xf32>
    %636 = arith.select %634, %632, %635 : vector<1x128xi1>, vector<1x128xf32>
    %637 = vector.shape_cast %636 : vector<1x128xf32> to vector<1x1x128xf32>
    %cst_188 = arith.constant dense<0xFF800000> : vector<1xf32>
    %638 = vector.multi_reduction <maximumf>, %637, %cst_188 [1, 2] : vector<1x1x128xf32> to vector<1xf32>
    %639 = vector.shape_cast %638 : vector<1xf32> to vector<1x1x1xf32>
    %640 = vector.extract %639[0, 0, 0] : f32 from vector<1x1x1xf32>
    %641 = vector.extract_strided_slice %608 {offsets = [2, 0], sizes = [1, 128], strides = [1, 1]} : vector<8x128xf32> to vector<1x128xf32>
    %cst_189 = arith.constant 0.000000e+00 : f32
    %642 = arith.cmpf ogt, %640, %cst_189 : f32
    %643 = arith.maximumf %632, %641 : vector<1x128xf32>
    %644 = arith.select %642, %632, %643 : vector<1x128xf32>
    %c19_i32 = arith.constant 19 : i32
    %645 = vector.broadcast %c19_i32 : i32 to vector<1x128xi32>
    %646 = arith.cmpi eq, %91, %645 : vector<1x128xi32>
    %cst_190 = arith.constant 0.000000e+00 : f32
    %647 = vector.broadcast %cst_190 : f32 to vector<1x128xf32>
    %648 = arith.select %646, %644, %647 : vector<1x128xi1>, vector<1x128xf32>
    %649 = vector.shape_cast %648 : vector<1x128xf32> to vector<1x1x128xf32>
    %cst_191 = arith.constant dense<0xFF800000> : vector<1xf32>
    %650 = vector.multi_reduction <maximumf>, %649, %cst_191 [1, 2] : vector<1x1x128xf32> to vector<1xf32>
    %651 = vector.shape_cast %650 : vector<1xf32> to vector<1x1x1xf32>
    %652 = vector.extract %651[0, 0, 0] : f32 from vector<1x1x1xf32>
    %653 = vector.extract_strided_slice %608 {offsets = [3, 0], sizes = [1, 128], strides = [1, 1]} : vector<8x128xf32> to vector<1x128xf32>
    %cst_192 = arith.constant 0.000000e+00 : f32
    %654 = arith.cmpf ogt, %652, %cst_192 : f32
    %655 = arith.maximumf %644, %653 : vector<1x128xf32>
    %656 = arith.select %654, %644, %655 : vector<1x128xf32>
    %c20_i32 = arith.constant 20 : i32
    %657 = vector.broadcast %c20_i32 : i32 to vector<1x128xi32>
    %658 = arith.cmpi eq, %91, %657 : vector<1x128xi32>
    %cst_193 = arith.constant 0.000000e+00 : f32
    %659 = vector.broadcast %cst_193 : f32 to vector<1x128xf32>
    %660 = arith.select %658, %656, %659 : vector<1x128xi1>, vector<1x128xf32>
    %661 = vector.shape_cast %660 : vector<1x128xf32> to vector<1x1x128xf32>
    %cst_194 = arith.constant dense<0xFF800000> : vector<1xf32>
    %662 = vector.multi_reduction <maximumf>, %661, %cst_194 [1, 2] : vector<1x1x128xf32> to vector<1xf32>
    %663 = vector.shape_cast %662 : vector<1xf32> to vector<1x1x1xf32>
    %664 = vector.extract %663[0, 0, 0] : f32 from vector<1x1x1xf32>
    %665 = vector.extract_strided_slice %608 {offsets = [4, 0], sizes = [1, 128], strides = [1, 1]} : vector<8x128xf32> to vector<1x128xf32>
    %cst_195 = arith.constant 0.000000e+00 : f32
    %666 = arith.cmpf ogt, %664, %cst_195 : f32
    %667 = arith.maximumf %656, %665 : vector<1x128xf32>
    %668 = arith.select %666, %656, %667 : vector<1x128xf32>
    %c21_i32 = arith.constant 21 : i32
    %669 = vector.broadcast %c21_i32 : i32 to vector<1x128xi32>
    %670 = arith.cmpi eq, %91, %669 : vector<1x128xi32>
    %cst_196 = arith.constant 0.000000e+00 : f32
    %671 = vector.broadcast %cst_196 : f32 to vector<1x128xf32>
    %672 = arith.select %670, %668, %671 : vector<1x128xi1>, vector<1x128xf32>
    %673 = vector.shape_cast %672 : vector<1x128xf32> to vector<1x1x128xf32>
    %cst_197 = arith.constant dense<0xFF800000> : vector<1xf32>
    %674 = vector.multi_reduction <maximumf>, %673, %cst_197 [1, 2] : vector<1x1x128xf32> to vector<1xf32>
    %675 = vector.shape_cast %674 : vector<1xf32> to vector<1x1x1xf32>
    %676 = vector.extract %675[0, 0, 0] : f32 from vector<1x1x1xf32>
    %677 = vector.extract_strided_slice %608 {offsets = [5, 0], sizes = [1, 128], strides = [1, 1]} : vector<8x128xf32> to vector<1x128xf32>
    %cst_198 = arith.constant 0.000000e+00 : f32
    %678 = arith.cmpf ogt, %676, %cst_198 : f32
    %679 = arith.maximumf %668, %677 : vector<1x128xf32>
    %680 = arith.select %678, %668, %679 : vector<1x128xf32>
    %c22_i32 = arith.constant 22 : i32
    %681 = vector.broadcast %c22_i32 : i32 to vector<1x128xi32>
    %682 = arith.cmpi eq, %91, %681 : vector<1x128xi32>
    %cst_199 = arith.constant 0.000000e+00 : f32
    %683 = vector.broadcast %cst_199 : f32 to vector<1x128xf32>
    %684 = arith.select %682, %680, %683 : vector<1x128xi1>, vector<1x128xf32>
    %685 = vector.shape_cast %684 : vector<1x128xf32> to vector<1x1x128xf32>
    %cst_200 = arith.constant dense<0xFF800000> : vector<1xf32>
    %686 = vector.multi_reduction <maximumf>, %685, %cst_200 [1, 2] : vector<1x1x128xf32> to vector<1xf32>
    %687 = vector.shape_cast %686 : vector<1xf32> to vector<1x1x1xf32>
    %688 = vector.extract %687[0, 0, 0] : f32 from vector<1x1x1xf32>
    %689 = vector.extract_strided_slice %608 {offsets = [6, 0], sizes = [1, 128], strides = [1, 1]} : vector<8x128xf32> to vector<1x128xf32>
    %cst_201 = arith.constant 0.000000e+00 : f32
    %690 = arith.cmpf ogt, %688, %cst_201 : f32
    %691 = arith.maximumf %680, %689 : vector<1x128xf32>
    %692 = arith.select %690, %680, %691 : vector<1x128xf32>
    %c23_i32 = arith.constant 23 : i32
    %693 = vector.broadcast %c23_i32 : i32 to vector<1x128xi32>
    %694 = arith.cmpi eq, %91, %693 : vector<1x128xi32>
    %cst_202 = arith.constant 0.000000e+00 : f32
    %695 = vector.broadcast %cst_202 : f32 to vector<1x128xf32>
    %696 = arith.select %694, %692, %695 : vector<1x128xi1>, vector<1x128xf32>
    %697 = vector.shape_cast %696 : vector<1x128xf32> to vector<1x1x128xf32>
    %cst_203 = arith.constant dense<0xFF800000> : vector<1xf32>
    %698 = vector.multi_reduction <maximumf>, %697, %cst_203 [1, 2] : vector<1x1x128xf32> to vector<1xf32>
    %699 = vector.shape_cast %698 : vector<1xf32> to vector<1x1x1xf32>
    %700 = vector.extract %699[0, 0, 0] : f32 from vector<1x1x1xf32>
    %701 = vector.extract_strided_slice %608 {offsets = [7, 0], sizes = [1, 128], strides = [1, 1]} : vector<8x128xf32> to vector<1x128xf32>
    %cst_204 = arith.constant 0.000000e+00 : f32
    %702 = arith.cmpf ogt, %700, %cst_204 : f32
    %703 = arith.maximumf %692, %701 : vector<1x128xf32>
    %704 = arith.select %702, %692, %703 : vector<1x128xf32>
    %c0_205 = arith.constant 0 : index
    %c24 = arith.constant 24 : index
    %c0_206 = arith.constant 0 : index
    %705 = vector.load %arg3[%c0_205, %c24, %c0_206] : memref<1x128x8xf32, #tpu.memory_space<vmem>>, vector<1x8x8xf32>
    %706 = vector.shape_cast %705 : vector<1x8x8xf32> to vector<8x8xf32>
    %707 = vector.extract_strided_slice %706 {offsets = [0, 0], sizes = [8, 1], strides = [1, 1]} : vector<8x8xf32> to vector<8x1xf32>
    %708 = vector.extract_strided_slice %706 {offsets = [0, 1], sizes = [8, 1], strides = [1, 1]} : vector<8x8xf32> to vector<8x1xf32>
    %709 = vector.extract_strided_slice %706 {offsets = [0, 2], sizes = [8, 1], strides = [1, 1]} : vector<8x8xf32> to vector<8x1xf32>
    %710 = vector.extract_strided_slice %706 {offsets = [0, 3], sizes = [8, 1], strides = [1, 1]} : vector<8x8xf32> to vector<8x1xf32>
    %711 = vector.extract_strided_slice %706 {offsets = [0, 4], sizes = [8, 1], strides = [1, 1]} : vector<8x8xf32> to vector<8x1xf32>
    %712 = vector.extract_strided_slice %706 {offsets = [0, 5], sizes = [8, 1], strides = [1, 1]} : vector<8x8xf32> to vector<8x1xf32>
    %713 = vector.extract_strided_slice %706 {offsets = [0, 6], sizes = [8, 1], strides = [1, 1]} : vector<8x8xf32> to vector<8x1xf32>
    %714 = vector.extract_strided_slice %706 {offsets = [0, 7], sizes = [8, 1], strides = [1, 1]} : vector<8x8xf32> to vector<8x1xf32>
    %715 = arith.subf %709, %707 : vector<8x1xf32>
    %cst_207 = arith.constant 1.000000e+00 : f32
    %716 = vector.broadcast %cst_207 : f32 to vector<8x1xf32>
    %717 = arith.addf %715, %716 : vector<8x1xf32>
    %718 = arith.subf %710, %708 : vector<8x1xf32>
    %cst_208 = arith.constant 1.000000e+00 : f32
    %719 = vector.broadcast %cst_208 : f32 to vector<8x1xf32>
    %720 = arith.addf %718, %719 : vector<8x1xf32>
    %cst_209 = arith.constant 5.000000e-01 : f32
    %721 = vector.broadcast %cst_209 : f32 to vector<8x1xf32>
    %722 = arith.mulf %721, %717 : vector<8x1xf32>
    %723 = arith.addf %707, %722 : vector<8x1xf32>
    %cst_210 = arith.constant 5.000000e-01 : f32
    %724 = vector.broadcast %cst_210 : f32 to vector<8x1xf32>
    %725 = arith.mulf %724, %720 : vector<8x1xf32>
    %726 = arith.addf %708, %725 : vector<8x1xf32>
    %727 = arith.mulf %711, %717 : vector<8x1xf32>
    %728 = arith.addf %727, %723 : vector<8x1xf32>
    %729 = arith.mulf %712, %720 : vector<8x1xf32>
    %730 = arith.addf %729, %726 : vector<8x1xf32>
    %731 = math.exp %713 : vector<8x1xf32>
    %732 = arith.mulf %731, %717 : vector<8x1xf32>
    %733 = math.exp %714 : vector<8x1xf32>
    %734 = arith.mulf %733, %720 : vector<8x1xf32>
    %cst_211 = arith.constant 5.000000e-01 : f32
    %735 = vector.broadcast %cst_211 : f32 to vector<8x1xf32>
    %736 = arith.mulf %735, %732 : vector<8x1xf32>
    %737 = arith.subf %728, %736 : vector<8x1xf32>
    %cst_212 = arith.constant 1.000000e+00 : f32
    %738 = arith.subf %3, %cst_212 : f32
    %cst_213 = arith.constant 0.000000e+00 : f32
    %739 = vector.broadcast %cst_213 : f32 to vector<8x1xf32>
    %740 = arith.maximumf %739, %737 : vector<8x1xf32>
    %741 = vector.broadcast %738 : f32 to vector<8x1xf32>
    %742 = arith.minimumf %741, %740 : vector<8x1xf32>
    %cst_214 = arith.constant 5.000000e-01 : f32
    %743 = vector.broadcast %cst_214 : f32 to vector<8x1xf32>
    %744 = arith.mulf %743, %734 : vector<8x1xf32>
    %745 = arith.subf %730, %744 : vector<8x1xf32>
    %cst_215 = arith.constant 1.000000e+00 : f32
    %746 = arith.subf %1, %cst_215 : f32
    %cst_216 = arith.constant 0.000000e+00 : f32
    %747 = vector.broadcast %cst_216 : f32 to vector<8x1xf32>
    %748 = arith.maximumf %747, %745 : vector<8x1xf32>
    %749 = vector.broadcast %746 : f32 to vector<8x1xf32>
    %750 = arith.minimumf %749, %748 : vector<8x1xf32>
    %cst_217 = arith.constant 5.000000e-01 : f32
    %751 = vector.broadcast %cst_217 : f32 to vector<8x1xf32>
    %752 = arith.mulf %751, %732 : vector<8x1xf32>
    %753 = arith.addf %728, %752 : vector<8x1xf32>
    %cst_218 = arith.constant 1.000000e+00 : f32
    %754 = arith.subf %3, %cst_218 : f32
    %cst_219 = arith.constant 0.000000e+00 : f32
    %755 = vector.broadcast %cst_219 : f32 to vector<8x1xf32>
    %756 = arith.maximumf %755, %753 : vector<8x1xf32>
    %757 = vector.broadcast %754 : f32 to vector<8x1xf32>
    %758 = arith.minimumf %757, %756 : vector<8x1xf32>
    %cst_220 = arith.constant 5.000000e-01 : f32
    %759 = vector.broadcast %cst_220 : f32 to vector<8x1xf32>
    %760 = arith.mulf %759, %734 : vector<8x1xf32>
    %761 = arith.addf %730, %760 : vector<8x1xf32>
    %cst_221 = arith.constant 1.000000e+00 : f32
    %762 = arith.subf %1, %cst_221 : f32
    %cst_222 = arith.constant 0.000000e+00 : f32
    %763 = vector.broadcast %cst_222 : f32 to vector<8x1xf32>
    %764 = arith.maximumf %763, %761 : vector<8x1xf32>
    %765 = vector.broadcast %762 : f32 to vector<8x1xf32>
    %766 = arith.minimumf %765, %764 : vector<8x1xf32>
    %767 = arith.subf %758, %742 : vector<8x1xf32>
    %cst_223 = arith.constant 1.000000e+00 : f32
    %768 = vector.broadcast %cst_223 : f32 to vector<8x1xf32>
    %769 = arith.addf %767, %768 : vector<8x1xf32>
    %770 = arith.subf %766, %750 : vector<8x1xf32>
    %cst_224 = arith.constant 1.000000e+00 : f32
    %771 = vector.broadcast %cst_224 : f32 to vector<8x1xf32>
    %772 = arith.addf %770, %771 : vector<8x1xf32>
    %773 = arith.mulf %769, %772 : vector<8x1xf32>
    %774 = vector.broadcast %742 : vector<8x1xf32> to vector<8x128xf32>
    %775 = vector.broadcast %47 : vector<1x128xf32> to vector<8x128xf32>
    %776 = arith.maximumf %774, %775 : vector<8x128xf32>
    %777 = vector.broadcast %750 : vector<8x1xf32> to vector<8x128xf32>
    %778 = vector.broadcast %55 : vector<1x128xf32> to vector<8x128xf32>
    %779 = arith.maximumf %777, %778 : vector<8x128xf32>
    %780 = vector.broadcast %758 : vector<8x1xf32> to vector<8x128xf32>
    %781 = vector.broadcast %63 : vector<1x128xf32> to vector<8x128xf32>
    %782 = arith.minimumf %780, %781 : vector<8x128xf32>
    %783 = vector.broadcast %766 : vector<8x1xf32> to vector<8x128xf32>
    %784 = vector.broadcast %71 : vector<1x128xf32> to vector<8x128xf32>
    %785 = arith.minimumf %783, %784 : vector<8x128xf32>
    %786 = arith.subf %782, %776 : vector<8x128xf32>
    %cst_225 = arith.constant 1.000000e+00 : f32
    %787 = vector.broadcast %cst_225 : f32 to vector<8x128xf32>
    %788 = arith.addf %786, %787 : vector<8x128xf32>
    %cst_226 = arith.constant 0.000000e+00 : f32
    %789 = vector.broadcast %cst_226 : f32 to vector<8x128xf32>
    %790 = arith.maximumf %788, %789 : vector<8x128xf32>
    %791 = arith.subf %785, %779 : vector<8x128xf32>
    %cst_227 = arith.constant 1.000000e+00 : f32
    %792 = vector.broadcast %cst_227 : f32 to vector<8x128xf32>
    %793 = arith.addf %791, %792 : vector<8x128xf32>
    %cst_228 = arith.constant 0.000000e+00 : f32
    %794 = vector.broadcast %cst_228 : f32 to vector<8x128xf32>
    %795 = arith.maximumf %793, %794 : vector<8x128xf32>
    %796 = arith.mulf %790, %795 : vector<8x128xf32>
    %797 = vector.broadcast %773 : vector<8x1xf32> to vector<8x128xf32>
    %798 = vector.broadcast %78 : vector<1x128xf32> to vector<8x128xf32>
    %799 = arith.addf %797, %798 : vector<8x128xf32>
    %800 = arith.subf %799, %796 : vector<8x128xf32>
    %801 = tpu.iota {dimensions = array<i32: 0>} : vector<8x128xi32>
    %c24_i32 = arith.constant 24 : i32
    %802 = vector.broadcast %c24_i32 : i32 to vector<8x128xi32>
    %803 = arith.addi %802, %801 : vector<8x128xi32>
    %804 = tpu.iota {dimensions = array<i32: 1>} : vector<8x128xi32>
    %805 = arith.cmpi sgt, %804, %803 : vector<8x128xi32>
    %cst_229 = arith.constant 0.699999988 : f32
    %806 = vector.broadcast %cst_229 : f32 to vector<8x128xf32>
    %807 = arith.mulf %806, %800 : vector<8x128xf32>
    %808 = arith.cmpf ogt, %796, %807 : vector<8x128xf32>
    %809 = arith.andi %805, %808 : vector<8x128xi1>
    %cst_230 = arith.constant 1.000000e+00 : f32
    %cst_231 = arith.constant 0.000000e+00 : f32
    %810 = vector.broadcast %cst_230 : f32 to vector<8x128xf32>
    %811 = vector.broadcast %cst_231 : f32 to vector<8x128xf32>
    %812 = arith.select %809, %810, %811 : vector<8x128xi1>, vector<8x128xf32>
    %c24_i32_232 = arith.constant 24 : i32
    %813 = vector.broadcast %c24_i32_232 : i32 to vector<1x128xi32>
    %814 = arith.cmpi eq, %91, %813 : vector<1x128xi32>
    %cst_233 = arith.constant 0.000000e+00 : f32
    %815 = vector.broadcast %cst_233 : f32 to vector<1x128xf32>
    %816 = arith.select %814, %704, %815 : vector<1x128xi1>, vector<1x128xf32>
    %817 = vector.shape_cast %816 : vector<1x128xf32> to vector<1x1x128xf32>
    %cst_234 = arith.constant dense<0xFF800000> : vector<1xf32>
    %818 = vector.multi_reduction <maximumf>, %817, %cst_234 [1, 2] : vector<1x1x128xf32> to vector<1xf32>
    %819 = vector.shape_cast %818 : vector<1xf32> to vector<1x1x1xf32>
    %820 = vector.extract %819[0, 0, 0] : f32 from vector<1x1x1xf32>
    %821 = vector.extract_strided_slice %812 {offsets = [0, 0], sizes = [1, 128], strides = [1, 1]} : vector<8x128xf32> to vector<1x128xf32>
    %cst_235 = arith.constant 0.000000e+00 : f32
    %822 = arith.cmpf ogt, %820, %cst_235 : f32
    %823 = arith.maximumf %704, %821 : vector<1x128xf32>
    %824 = arith.select %822, %704, %823 : vector<1x128xf32>
    %c25_i32 = arith.constant 25 : i32
    %825 = vector.broadcast %c25_i32 : i32 to vector<1x128xi32>
    %826 = arith.cmpi eq, %91, %825 : vector<1x128xi32>
    %cst_236 = arith.constant 0.000000e+00 : f32
    %827 = vector.broadcast %cst_236 : f32 to vector<1x128xf32>
    %828 = arith.select %826, %824, %827 : vector<1x128xi1>, vector<1x128xf32>
    %829 = vector.shape_cast %828 : vector<1x128xf32> to vector<1x1x128xf32>
    %cst_237 = arith.constant dense<0xFF800000> : vector<1xf32>
    %830 = vector.multi_reduction <maximumf>, %829, %cst_237 [1, 2] : vector<1x1x128xf32> to vector<1xf32>
    %831 = vector.shape_cast %830 : vector<1xf32> to vector<1x1x1xf32>
    %832 = vector.extract %831[0, 0, 0] : f32 from vector<1x1x1xf32>
    %833 = vector.extract_strided_slice %812 {offsets = [1, 0], sizes = [1, 128], strides = [1, 1]} : vector<8x128xf32> to vector<1x128xf32>
    %cst_238 = arith.constant 0.000000e+00 : f32
    %834 = arith.cmpf ogt, %832, %cst_238 : f32
    %835 = arith.maximumf %824, %833 : vector<1x128xf32>
    %836 = arith.select %834, %824, %835 : vector<1x128xf32>
    %c26_i32 = arith.constant 26 : i32
    %837 = vector.broadcast %c26_i32 : i32 to vector<1x128xi32>
    %838 = arith.cmpi eq, %91, %837 : vector<1x128xi32>
    %cst_239 = arith.constant 0.000000e+00 : f32
    %839 = vector.broadcast %cst_239 : f32 to vector<1x128xf32>
    %840 = arith.select %838, %836, %839 : vector<1x128xi1>, vector<1x128xf32>
    %841 = vector.shape_cast %840 : vector<1x128xf32> to vector<1x1x128xf32>
    %cst_240 = arith.constant dense<0xFF800000> : vector<1xf32>
    %842 = vector.multi_reduction <maximumf>, %841, %cst_240 [1, 2] : vector<1x1x128xf32> to vector<1xf32>
    %843 = vector.shape_cast %842 : vector<1xf32> to vector<1x1x1xf32>
    %844 = vector.extract %843[0, 0, 0] : f32 from vector<1x1x1xf32>
    %845 = vector.extract_strided_slice %812 {offsets = [2, 0], sizes = [1, 128], strides = [1, 1]} : vector<8x128xf32> to vector<1x128xf32>
    %cst_241 = arith.constant 0.000000e+00 : f32
    %846 = arith.cmpf ogt, %844, %cst_241 : f32
    %847 = arith.maximumf %836, %845 : vector<1x128xf32>
    %848 = arith.select %846, %836, %847 : vector<1x128xf32>
    %c27_i32 = arith.constant 27 : i32
    %849 = vector.broadcast %c27_i32 : i32 to vector<1x128xi32>
    %850 = arith.cmpi eq, %91, %849 : vector<1x128xi32>
    %cst_242 = arith.constant 0.000000e+00 : f32
    %851 = vector.broadcast %cst_242 : f32 to vector<1x128xf32>
    %852 = arith.select %850, %848, %851 : vector<1x128xi1>, vector<1x128xf32>
    %853 = vector.shape_cast %852 : vector<1x128xf32> to vector<1x1x128xf32>
    %cst_243 = arith.constant dense<0xFF800000> : vector<1xf32>
    %854 = vector.multi_reduction <maximumf>, %853, %cst_243 [1, 2] : vector<1x1x128xf32> to vector<1xf32>
    %855 = vector.shape_cast %854 : vector<1xf32> to vector<1x1x1xf32>
    %856 = vector.extract %855[0, 0, 0] : f32 from vector<1x1x1xf32>
    %857 = vector.extract_strided_slice %812 {offsets = [3, 0], sizes = [1, 128], strides = [1, 1]} : vector<8x128xf32> to vector<1x128xf32>
    %cst_244 = arith.constant 0.000000e+00 : f32
    %858 = arith.cmpf ogt, %856, %cst_244 : f32
    %859 = arith.maximumf %848, %857 : vector<1x128xf32>
    %860 = arith.select %858, %848, %859 : vector<1x128xf32>
    %c28_i32 = arith.constant 28 : i32
    %861 = vector.broadcast %c28_i32 : i32 to vector<1x128xi32>
    %862 = arith.cmpi eq, %91, %861 : vector<1x128xi32>
    %cst_245 = arith.constant 0.000000e+00 : f32
    %863 = vector.broadcast %cst_245 : f32 to vector<1x128xf32>
    %864 = arith.select %862, %860, %863 : vector<1x128xi1>, vector<1x128xf32>
    %865 = vector.shape_cast %864 : vector<1x128xf32> to vector<1x1x128xf32>
    %cst_246 = arith.constant dense<0xFF800000> : vector<1xf32>
    %866 = vector.multi_reduction <maximumf>, %865, %cst_246 [1, 2] : vector<1x1x128xf32> to vector<1xf32>
    %867 = vector.shape_cast %866 : vector<1xf32> to vector<1x1x1xf32>
    %868 = vector.extract %867[0, 0, 0] : f32 from vector<1x1x1xf32>
    %869 = vector.extract_strided_slice %812 {offsets = [4, 0], sizes = [1, 128], strides = [1, 1]} : vector<8x128xf32> to vector<1x128xf32>
    %cst_247 = arith.constant 0.000000e+00 : f32
    %870 = arith.cmpf ogt, %868, %cst_247 : f32
    %871 = arith.maximumf %860, %869 : vector<1x128xf32>
    %872 = arith.select %870, %860, %871 : vector<1x128xf32>
    %c29_i32 = arith.constant 29 : i32
    %873 = vector.broadcast %c29_i32 : i32 to vector<1x128xi32>
    %874 = arith.cmpi eq, %91, %873 : vector<1x128xi32>
    %cst_248 = arith.constant 0.000000e+00 : f32
    %875 = vector.broadcast %cst_248 : f32 to vector<1x128xf32>
    %876 = arith.select %874, %872, %875 : vector<1x128xi1>, vector<1x128xf32>
    %877 = vector.shape_cast %876 : vector<1x128xf32> to vector<1x1x128xf32>
    %cst_249 = arith.constant dense<0xFF800000> : vector<1xf32>
    %878 = vector.multi_reduction <maximumf>, %877, %cst_249 [1, 2] : vector<1x1x128xf32> to vector<1xf32>
    %879 = vector.shape_cast %878 : vector<1xf32> to vector<1x1x1xf32>
    %880 = vector.extract %879[0, 0, 0] : f32 from vector<1x1x1xf32>
    %881 = vector.extract_strided_slice %812 {offsets = [5, 0], sizes = [1, 128], strides = [1, 1]} : vector<8x128xf32> to vector<1x128xf32>
    %cst_250 = arith.constant 0.000000e+00 : f32
    %882 = arith.cmpf ogt, %880, %cst_250 : f32
    %883 = arith.maximumf %872, %881 : vector<1x128xf32>
    %884 = arith.select %882, %872, %883 : vector<1x128xf32>
    %c30_i32 = arith.constant 30 : i32
    %885 = vector.broadcast %c30_i32 : i32 to vector<1x128xi32>
    %886 = arith.cmpi eq, %91, %885 : vector<1x128xi32>
    %cst_251 = arith.constant 0.000000e+00 : f32
    %887 = vector.broadcast %cst_251 : f32 to vector<1x128xf32>
    %888 = arith.select %886, %884, %887 : vector<1x128xi1>, vector<1x128xf32>
    %889 = vector.shape_cast %888 : vector<1x128xf32> to vector<1x1x128xf32>
    %cst_252 = arith.constant dense<0xFF800000> : vector<1xf32>
    %890 = vector.multi_reduction <maximumf>, %889, %cst_252 [1, 2] : vector<1x1x128xf32> to vector<1xf32>
    %891 = vector.shape_cast %890 : vector<1xf32> to vector<1x1x1xf32>
    %892 = vector.extract %891[0, 0, 0] : f32 from vector<1x1x1xf32>
    %893 = vector.extract_strided_slice %812 {offsets = [6, 0], sizes = [1, 128], strides = [1, 1]} : vector<8x128xf32> to vector<1x128xf32>
    %cst_253 = arith.constant 0.000000e+00 : f32
    %894 = arith.cmpf ogt, %892, %cst_253 : f32
    %895 = arith.maximumf %884, %893 : vector<1x128xf32>
    %896 = arith.select %894, %884, %895 : vector<1x128xf32>
    %c31_i32 = arith.constant 31 : i32
    %897 = vector.broadcast %c31_i32 : i32 to vector<1x128xi32>
    %898 = arith.cmpi eq, %91, %897 : vector<1x128xi32>
    %cst_254 = arith.constant 0.000000e+00 : f32
    %899 = vector.broadcast %cst_254 : f32 to vector<1x128xf32>
    %900 = arith.select %898, %896, %899 : vector<1x128xi1>, vector<1x128xf32>
    %901 = vector.shape_cast %900 : vector<1x128xf32> to vector<1x1x128xf32>
    %cst_255 = arith.constant dense<0xFF800000> : vector<1xf32>
    %902 = vector.multi_reduction <maximumf>, %901, %cst_255 [1, 2] : vector<1x1x128xf32> to vector<1xf32>
    %903 = vector.shape_cast %902 : vector<1xf32> to vector<1x1x1xf32>
    %904 = vector.extract %903[0, 0, 0] : f32 from vector<1x1x1xf32>
    %905 = vector.extract_strided_slice %812 {offsets = [7, 0], sizes = [1, 128], strides = [1, 1]} : vector<8x128xf32> to vector<1x128xf32>
    %cst_256 = arith.constant 0.000000e+00 : f32
    %906 = arith.cmpf ogt, %904, %cst_256 : f32
    %907 = arith.maximumf %896, %905 : vector<1x128xf32>
    %908 = arith.select %906, %896, %907 : vector<1x128xf32>
    %c0_257 = arith.constant 0 : index
    %c32 = arith.constant 32 : index
    %c0_258 = arith.constant 0 : index
    %909 = vector.load %arg3[%c0_257, %c32, %c0_258] : memref<1x128x8xf32, #tpu.memory_space<vmem>>, vector<1x8x8xf32>
    %910 = vector.shape_cast %909 : vector<1x8x8xf32> to vector<8x8xf32>
    %911 = vector.extract_strided_slice %910 {offsets = [0, 0], sizes = [8, 1], strides = [1, 1]} : vector<8x8xf32> to vector<8x1xf32>
    %912 = vector.extract_strided_slice %910 {offsets = [0, 1], sizes = [8, 1], strides = [1, 1]} : vector<8x8xf32> to vector<8x1xf32>
    %913 = vector.extract_strided_slice %910 {offsets = [0, 2], sizes = [8, 1], strides = [1, 1]} : vector<8x8xf32> to vector<8x1xf32>
    %914 = vector.extract_strided_slice %910 {offsets = [0, 3], sizes = [8, 1], strides = [1, 1]} : vector<8x8xf32> to vector<8x1xf32>
    %915 = vector.extract_strided_slice %910 {offsets = [0, 4], sizes = [8, 1], strides = [1, 1]} : vector<8x8xf32> to vector<8x1xf32>
    %916 = vector.extract_strided_slice %910 {offsets = [0, 5], sizes = [8, 1], strides = [1, 1]} : vector<8x8xf32> to vector<8x1xf32>
    %917 = vector.extract_strided_slice %910 {offsets = [0, 6], sizes = [8, 1], strides = [1, 1]} : vector<8x8xf32> to vector<8x1xf32>
    %918 = vector.extract_strided_slice %910 {offsets = [0, 7], sizes = [8, 1], strides = [1, 1]} : vector<8x8xf32> to vector<8x1xf32>
    %919 = arith.subf %913, %911 : vector<8x1xf32>
    %cst_259 = arith.constant 1.000000e+00 : f32
    %920 = vector.broadcast %cst_259 : f32 to vector<8x1xf32>
    %921 = arith.addf %919, %920 : vector<8x1xf32>
    %922 = arith.subf %914, %912 : vector<8x1xf32>
    %cst_260 = arith.constant 1.000000e+00 : f32
    %923 = vector.broadcast %cst_260 : f32 to vector<8x1xf32>
    %924 = arith.addf %922, %923 : vector<8x1xf32>
    %cst_261 = arith.constant 5.000000e-01 : f32
    %925 = vector.broadcast %cst_261 : f32 to vector<8x1xf32>
    %926 = arith.mulf %925, %921 : vector<8x1xf32>
    %927 = arith.addf %911, %926 : vector<8x1xf32>
    %cst_262 = arith.constant 5.000000e-01 : f32
    %928 = vector.broadcast %cst_262 : f32 to vector<8x1xf32>
    %929 = arith.mulf %928, %924 : vector<8x1xf32>
    %930 = arith.addf %912, %929 : vector<8x1xf32>
    %931 = arith.mulf %915, %921 : vector<8x1xf32>
    %932 = arith.addf %931, %927 : vector<8x1xf32>
    %933 = arith.mulf %916, %924 : vector<8x1xf32>
    %934 = arith.addf %933, %930 : vector<8x1xf32>
    %935 = math.exp %917 : vector<8x1xf32>
    %936 = arith.mulf %935, %921 : vector<8x1xf32>
    %937 = math.exp %918 : vector<8x1xf32>
    %938 = arith.mulf %937, %924 : vector<8x1xf32>
    %cst_263 = arith.constant 5.000000e-01 : f32
    %939 = vector.broadcast %cst_263 : f32 to vector<8x1xf32>
    %940 = arith.mulf %939, %936 : vector<8x1xf32>
    %941 = arith.subf %932, %940 : vector<8x1xf32>
    %cst_264 = arith.constant 1.000000e+00 : f32
    %942 = arith.subf %3, %cst_264 : f32
    %cst_265 = arith.constant 0.000000e+00 : f32
    %943 = vector.broadcast %cst_265 : f32 to vector<8x1xf32>
    %944 = arith.maximumf %943, %941 : vector<8x1xf32>
    %945 = vector.broadcast %942 : f32 to vector<8x1xf32>
    %946 = arith.minimumf %945, %944 : vector<8x1xf32>
    %cst_266 = arith.constant 5.000000e-01 : f32
    %947 = vector.broadcast %cst_266 : f32 to vector<8x1xf32>
    %948 = arith.mulf %947, %938 : vector<8x1xf32>
    %949 = arith.subf %934, %948 : vector<8x1xf32>
    %cst_267 = arith.constant 1.000000e+00 : f32
    %950 = arith.subf %1, %cst_267 : f32
    %cst_268 = arith.constant 0.000000e+00 : f32
    %951 = vector.broadcast %cst_268 : f32 to vector<8x1xf32>
    %952 = arith.maximumf %951, %949 : vector<8x1xf32>
    %953 = vector.broadcast %950 : f32 to vector<8x1xf32>
    %954 = arith.minimumf %953, %952 : vector<8x1xf32>
    %cst_269 = arith.constant 5.000000e-01 : f32
    %955 = vector.broadcast %cst_269 : f32 to vector<8x1xf32>
    %956 = arith.mulf %955, %936 : vector<8x1xf32>
    %957 = arith.addf %932, %956 : vector<8x1xf32>
    %cst_270 = arith.constant 1.000000e+00 : f32
    %958 = arith.subf %3, %cst_270 : f32
    %cst_271 = arith.constant 0.000000e+00 : f32
    %959 = vector.broadcast %cst_271 : f32 to vector<8x1xf32>
    %960 = arith.maximumf %959, %957 : vector<8x1xf32>
    %961 = vector.broadcast %958 : f32 to vector<8x1xf32>
    %962 = arith.minimumf %961, %960 : vector<8x1xf32>
    %cst_272 = arith.constant 5.000000e-01 : f32
    %963 = vector.broadcast %cst_272 : f32 to vector<8x1xf32>
    %964 = arith.mulf %963, %938 : vector<8x1xf32>
    %965 = arith.addf %934, %964 : vector<8x1xf32>
    %cst_273 = arith.constant 1.000000e+00 : f32
    %966 = arith.subf %1, %cst_273 : f32
    %cst_274 = arith.constant 0.000000e+00 : f32
    %967 = vector.broadcast %cst_274 : f32 to vector<8x1xf32>
    %968 = arith.maximumf %967, %965 : vector<8x1xf32>
    %969 = vector.broadcast %966 : f32 to vector<8x1xf32>
    %970 = arith.minimumf %969, %968 : vector<8x1xf32>
    %971 = arith.subf %962, %946 : vector<8x1xf32>
    %cst_275 = arith.constant 1.000000e+00 : f32
    %972 = vector.broadcast %cst_275 : f32 to vector<8x1xf32>
    %973 = arith.addf %971, %972 : vector<8x1xf32>
    %974 = arith.subf %970, %954 : vector<8x1xf32>
    %cst_276 = arith.constant 1.000000e+00 : f32
    %975 = vector.broadcast %cst_276 : f32 to vector<8x1xf32>
    %976 = arith.addf %974, %975 : vector<8x1xf32>
    %977 = arith.mulf %973, %976 : vector<8x1xf32>
    %978 = vector.broadcast %946 : vector<8x1xf32> to vector<8x128xf32>
    %979 = vector.broadcast %47 : vector<1x128xf32> to vector<8x128xf32>
    %980 = arith.maximumf %978, %979 : vector<8x128xf32>
    %981 = vector.broadcast %954 : vector<8x1xf32> to vector<8x128xf32>
    %982 = vector.broadcast %55 : vector<1x128xf32> to vector<8x128xf32>
    %983 = arith.maximumf %981, %982 : vector<8x128xf32>
    %984 = vector.broadcast %962 : vector<8x1xf32> to vector<8x128xf32>
    %985 = vector.broadcast %63 : vector<1x128xf32> to vector<8x128xf32>
    %986 = arith.minimumf %984, %985 : vector<8x128xf32>
    %987 = vector.broadcast %970 : vector<8x1xf32> to vector<8x128xf32>
    %988 = vector.broadcast %71 : vector<1x128xf32> to vector<8x128xf32>
    %989 = arith.minimumf %987, %988 : vector<8x128xf32>
    %990 = arith.subf %986, %980 : vector<8x128xf32>
    %cst_277 = arith.constant 1.000000e+00 : f32
    %991 = vector.broadcast %cst_277 : f32 to vector<8x128xf32>
    %992 = arith.addf %990, %991 : vector<8x128xf32>
    %cst_278 = arith.constant 0.000000e+00 : f32
    %993 = vector.broadcast %cst_278 : f32 to vector<8x128xf32>
    %994 = arith.maximumf %992, %993 : vector<8x128xf32>
    %995 = arith.subf %989, %983 : vector<8x128xf32>
    %cst_279 = arith.constant 1.000000e+00 : f32
    %996 = vector.broadcast %cst_279 : f32 to vector<8x128xf32>
    %997 = arith.addf %995, %996 : vector<8x128xf32>
    %cst_280 = arith.constant 0.000000e+00 : f32
    %998 = vector.broadcast %cst_280 : f32 to vector<8x128xf32>
    %999 = arith.maximumf %997, %998 : vector<8x128xf32>
    %1000 = arith.mulf %994, %999 : vector<8x128xf32>
    %1001 = vector.broadcast %977 : vector<8x1xf32> to vector<8x128xf32>
    %1002 = vector.broadcast %78 : vector<1x128xf32> to vector<8x128xf32>
    %1003 = arith.addf %1001, %1002 : vector<8x128xf32>
    %1004 = arith.subf %1003, %1000 : vector<8x128xf32>
    %1005 = tpu.iota {dimensions = array<i32: 0>} : vector<8x128xi32>
    %c32_i32 = arith.constant 32 : i32
    %1006 = vector.broadcast %c32_i32 : i32 to vector<8x128xi32>
    %1007 = arith.addi %1006, %1005 : vector<8x128xi32>
    %1008 = tpu.iota {dimensions = array<i32: 1>} : vector<8x128xi32>
    %1009 = arith.cmpi sgt, %1008, %1007 : vector<8x128xi32>
    %cst_281 = arith.constant 0.699999988 : f32
    %1010 = vector.broadcast %cst_281 : f32 to vector<8x128xf32>
    %1011 = arith.mulf %1010, %1004 : vector<8x128xf32>
    %1012 = arith.cmpf ogt, %1000, %1011 : vector<8x128xf32>
    %1013 = arith.andi %1009, %1012 : vector<8x128xi1>
    %cst_282 = arith.constant 1.000000e+00 : f32
    %cst_283 = arith.constant 0.000000e+00 : f32
    %1014 = vector.broadcast %cst_282 : f32 to vector<8x128xf32>
    %1015 = vector.broadcast %cst_283 : f32 to vector<8x128xf32>
    %1016 = arith.select %1013, %1014, %1015 : vector<8x128xi1>, vector<8x128xf32>
    %c32_i32_284 = arith.constant 32 : i32
    %1017 = vector.broadcast %c32_i32_284 : i32 to vector<1x128xi32>
    %1018 = arith.cmpi eq, %91, %1017 : vector<1x128xi32>
    %cst_285 = arith.constant 0.000000e+00 : f32
    %1019 = vector.broadcast %cst_285 : f32 to vector<1x128xf32>
    %1020 = arith.select %1018, %908, %1019 : vector<1x128xi1>, vector<1x128xf32>
    %1021 = vector.shape_cast %1020 : vector<1x128xf32> to vector<1x1x128xf32>
    %cst_286 = arith.constant dense<0xFF800000> : vector<1xf32>
    %1022 = vector.multi_reduction <maximumf>, %1021, %cst_286 [1, 2] : vector<1x1x128xf32> to vector<1xf32>
    %1023 = vector.shape_cast %1022 : vector<1xf32> to vector<1x1x1xf32>
    %1024 = vector.extract %1023[0, 0, 0] : f32 from vector<1x1x1xf32>
    %1025 = vector.extract_strided_slice %1016 {offsets = [0, 0], sizes = [1, 128], strides = [1, 1]} : vector<8x128xf32> to vector<1x128xf32>
    %cst_287 = arith.constant 0.000000e+00 : f32
    %1026 = arith.cmpf ogt, %1024, %cst_287 : f32
    %1027 = arith.maximumf %908, %1025 : vector<1x128xf32>
    %1028 = arith.select %1026, %908, %1027 : vector<1x128xf32>
    %c33_i32 = arith.constant 33 : i32
    %1029 = vector.broadcast %c33_i32 : i32 to vector<1x128xi32>
    %1030 = arith.cmpi eq, %91, %1029 : vector<1x128xi32>
    %cst_288 = arith.constant 0.000000e+00 : f32
    %1031 = vector.broadcast %cst_288 : f32 to vector<1x128xf32>
    %1032 = arith.select %1030, %1028, %1031 : vector<1x128xi1>, vector<1x128xf32>
    %1033 = vector.shape_cast %1032 : vector<1x128xf32> to vector<1x1x128xf32>
    %cst_289 = arith.constant dense<0xFF800000> : vector<1xf32>
    %1034 = vector.multi_reduction <maximumf>, %1033, %cst_289 [1, 2] : vector<1x1x128xf32> to vector<1xf32>
    %1035 = vector.shape_cast %1034 : vector<1xf32> to vector<1x1x1xf32>
    %1036 = vector.extract %1035[0, 0, 0] : f32 from vector<1x1x1xf32>
    %1037 = vector.extract_strided_slice %1016 {offsets = [1, 0], sizes = [1, 128], strides = [1, 1]} : vector<8x128xf32> to vector<1x128xf32>
    %cst_290 = arith.constant 0.000000e+00 : f32
    %1038 = arith.cmpf ogt, %1036, %cst_290 : f32
    %1039 = arith.maximumf %1028, %1037 : vector<1x128xf32>
    %1040 = arith.select %1038, %1028, %1039 : vector<1x128xf32>
    %c34_i32 = arith.constant 34 : i32
    %1041 = vector.broadcast %c34_i32 : i32 to vector<1x128xi32>
    %1042 = arith.cmpi eq, %91, %1041 : vector<1x128xi32>
    %cst_291 = arith.constant 0.000000e+00 : f32
    %1043 = vector.broadcast %cst_291 : f32 to vector<1x128xf32>
    %1044 = arith.select %1042, %1040, %1043 : vector<1x128xi1>, vector<1x128xf32>
    %1045 = vector.shape_cast %1044 : vector<1x128xf32> to vector<1x1x128xf32>
    %cst_292 = arith.constant dense<0xFF800000> : vector<1xf32>
    %1046 = vector.multi_reduction <maximumf>, %1045, %cst_292 [1, 2] : vector<1x1x128xf32> to vector<1xf32>
    %1047 = vector.shape_cast %1046 : vector<1xf32> to vector<1x1x1xf32>
    %1048 = vector.extract %1047[0, 0, 0] : f32 from vector<1x1x1xf32>
    %1049 = vector.extract_strided_slice %1016 {offsets = [2, 0], sizes = [1, 128], strides = [1, 1]} : vector<8x128xf32> to vector<1x128xf32>
    %cst_293 = arith.constant 0.000000e+00 : f32
    %1050 = arith.cmpf ogt, %1048, %cst_293 : f32
    %1051 = arith.maximumf %1040, %1049 : vector<1x128xf32>
    %1052 = arith.select %1050, %1040, %1051 : vector<1x128xf32>
    %c35_i32 = arith.constant 35 : i32
    %1053 = vector.broadcast %c35_i32 : i32 to vector<1x128xi32>
    %1054 = arith.cmpi eq, %91, %1053 : vector<1x128xi32>
    %cst_294 = arith.constant 0.000000e+00 : f32
    %1055 = vector.broadcast %cst_294 : f32 to vector<1x128xf32>
    %1056 = arith.select %1054, %1052, %1055 : vector<1x128xi1>, vector<1x128xf32>
    %1057 = vector.shape_cast %1056 : vector<1x128xf32> to vector<1x1x128xf32>
    %cst_295 = arith.constant dense<0xFF800000> : vector<1xf32>
    %1058 = vector.multi_reduction <maximumf>, %1057, %cst_295 [1, 2] : vector<1x1x128xf32> to vector<1xf32>
    %1059 = vector.shape_cast %1058 : vector<1xf32> to vector<1x1x1xf32>
    %1060 = vector.extract %1059[0, 0, 0] : f32 from vector<1x1x1xf32>
    %1061 = vector.extract_strided_slice %1016 {offsets = [3, 0], sizes = [1, 128], strides = [1, 1]} : vector<8x128xf32> to vector<1x128xf32>
    %cst_296 = arith.constant 0.000000e+00 : f32
    %1062 = arith.cmpf ogt, %1060, %cst_296 : f32
    %1063 = arith.maximumf %1052, %1061 : vector<1x128xf32>
    %1064 = arith.select %1062, %1052, %1063 : vector<1x128xf32>
    %c36_i32 = arith.constant 36 : i32
    %1065 = vector.broadcast %c36_i32 : i32 to vector<1x128xi32>
    %1066 = arith.cmpi eq, %91, %1065 : vector<1x128xi32>
    %cst_297 = arith.constant 0.000000e+00 : f32
    %1067 = vector.broadcast %cst_297 : f32 to vector<1x128xf32>
    %1068 = arith.select %1066, %1064, %1067 : vector<1x128xi1>, vector<1x128xf32>
    %1069 = vector.shape_cast %1068 : vector<1x128xf32> to vector<1x1x128xf32>
    %cst_298 = arith.constant dense<0xFF800000> : vector<1xf32>
    %1070 = vector.multi_reduction <maximumf>, %1069, %cst_298 [1, 2] : vector<1x1x128xf32> to vector<1xf32>
    %1071 = vector.shape_cast %1070 : vector<1xf32> to vector<1x1x1xf32>
    %1072 = vector.extract %1071[0, 0, 0] : f32 from vector<1x1x1xf32>
    %1073 = vector.extract_strided_slice %1016 {offsets = [4, 0], sizes = [1, 128], strides = [1, 1]} : vector<8x128xf32> to vector<1x128xf32>
    %cst_299 = arith.constant 0.000000e+00 : f32
    %1074 = arith.cmpf ogt, %1072, %cst_299 : f32
    %1075 = arith.maximumf %1064, %1073 : vector<1x128xf32>
    %1076 = arith.select %1074, %1064, %1075 : vector<1x128xf32>
    %c37_i32 = arith.constant 37 : i32
    %1077 = vector.broadcast %c37_i32 : i32 to vector<1x128xi32>
    %1078 = arith.cmpi eq, %91, %1077 : vector<1x128xi32>
    %cst_300 = arith.constant 0.000000e+00 : f32
    %1079 = vector.broadcast %cst_300 : f32 to vector<1x128xf32>
    %1080 = arith.select %1078, %1076, %1079 : vector<1x128xi1>, vector<1x128xf32>
    %1081 = vector.shape_cast %1080 : vector<1x128xf32> to vector<1x1x128xf32>
    %cst_301 = arith.constant dense<0xFF800000> : vector<1xf32>
    %1082 = vector.multi_reduction <maximumf>, %1081, %cst_301 [1, 2] : vector<1x1x128xf32> to vector<1xf32>
    %1083 = vector.shape_cast %1082 : vector<1xf32> to vector<1x1x1xf32>
    %1084 = vector.extract %1083[0, 0, 0] : f32 from vector<1x1x1xf32>
    %1085 = vector.extract_strided_slice %1016 {offsets = [5, 0], sizes = [1, 128], strides = [1, 1]} : vector<8x128xf32> to vector<1x128xf32>
    %cst_302 = arith.constant 0.000000e+00 : f32
    %1086 = arith.cmpf ogt, %1084, %cst_302 : f32
    %1087 = arith.maximumf %1076, %1085 : vector<1x128xf32>
    %1088 = arith.select %1086, %1076, %1087 : vector<1x128xf32>
    %c38_i32 = arith.constant 38 : i32
    %1089 = vector.broadcast %c38_i32 : i32 to vector<1x128xi32>
    %1090 = arith.cmpi eq, %91, %1089 : vector<1x128xi32>
    %cst_303 = arith.constant 0.000000e+00 : f32
    %1091 = vector.broadcast %cst_303 : f32 to vector<1x128xf32>
    %1092 = arith.select %1090, %1088, %1091 : vector<1x128xi1>, vector<1x128xf32>
    %1093 = vector.shape_cast %1092 : vector<1x128xf32> to vector<1x1x128xf32>
    %cst_304 = arith.constant dense<0xFF800000> : vector<1xf32>
    %1094 = vector.multi_reduction <maximumf>, %1093, %cst_304 [1, 2] : vector<1x1x128xf32> to vector<1xf32>
    %1095 = vector.shape_cast %1094 : vector<1xf32> to vector<1x1x1xf32>
    %1096 = vector.extract %1095[0, 0, 0] : f32 from vector<1x1x1xf32>
    %1097 = vector.extract_strided_slice %1016 {offsets = [6, 0], sizes = [1, 128], strides = [1, 1]} : vector<8x128xf32> to vector<1x128xf32>
    %cst_305 = arith.constant 0.000000e+00 : f32
    %1098 = arith.cmpf ogt, %1096, %cst_305 : f32
    %1099 = arith.maximumf %1088, %1097 : vector<1x128xf32>
    %1100 = arith.select %1098, %1088, %1099 : vector<1x128xf32>
    %c39_i32 = arith.constant 39 : i32
    %1101 = vector.broadcast %c39_i32 : i32 to vector<1x128xi32>
    %1102 = arith.cmpi eq, %91, %1101 : vector<1x128xi32>
    %cst_306 = arith.constant 0.000000e+00 : f32
    %1103 = vector.broadcast %cst_306 : f32 to vector<1x128xf32>
    %1104 = arith.select %1102, %1100, %1103 : vector<1x128xi1>, vector<1x128xf32>
    %1105 = vector.shape_cast %1104 : vector<1x128xf32> to vector<1x1x128xf32>
    %cst_307 = arith.constant dense<0xFF800000> : vector<1xf32>
    %1106 = vector.multi_reduction <maximumf>, %1105, %cst_307 [1, 2] : vector<1x1x128xf32> to vector<1xf32>
    %1107 = vector.shape_cast %1106 : vector<1xf32> to vector<1x1x1xf32>
    %1108 = vector.extract %1107[0, 0, 0] : f32 from vector<1x1x1xf32>
    %1109 = vector.extract_strided_slice %1016 {offsets = [7, 0], sizes = [1, 128], strides = [1, 1]} : vector<8x128xf32> to vector<1x128xf32>
    %cst_308 = arith.constant 0.000000e+00 : f32
    %1110 = arith.cmpf ogt, %1108, %cst_308 : f32
    %1111 = arith.maximumf %1100, %1109 : vector<1x128xf32>
    %1112 = arith.select %1110, %1100, %1111 : vector<1x128xf32>
    %c0_309 = arith.constant 0 : index
    %c40 = arith.constant 40 : index
    %c0_310 = arith.constant 0 : index
    %1113 = vector.load %arg3[%c0_309, %c40, %c0_310] : memref<1x128x8xf32, #tpu.memory_space<vmem>>, vector<1x8x8xf32>
    %1114 = vector.shape_cast %1113 : vector<1x8x8xf32> to vector<8x8xf32>
    %1115 = vector.extract_strided_slice %1114 {offsets = [0, 0], sizes = [8, 1], strides = [1, 1]} : vector<8x8xf32> to vector<8x1xf32>
    %1116 = vector.extract_strided_slice %1114 {offsets = [0, 1], sizes = [8, 1], strides = [1, 1]} : vector<8x8xf32> to vector<8x1xf32>
    %1117 = vector.extract_strided_slice %1114 {offsets = [0, 2], sizes = [8, 1], strides = [1, 1]} : vector<8x8xf32> to vector<8x1xf32>
    %1118 = vector.extract_strided_slice %1114 {offsets = [0, 3], sizes = [8, 1], strides = [1, 1]} : vector<8x8xf32> to vector<8x1xf32>
    %1119 = vector.extract_strided_slice %1114 {offsets = [0, 4], sizes = [8, 1], strides = [1, 1]} : vector<8x8xf32> to vector<8x1xf32>
    %1120 = vector.extract_strided_slice %1114 {offsets = [0, 5], sizes = [8, 1], strides = [1, 1]} : vector<8x8xf32> to vector<8x1xf32>
    %1121 = vector.extract_strided_slice %1114 {offsets = [0, 6], sizes = [8, 1], strides = [1, 1]} : vector<8x8xf32> to vector<8x1xf32>
    %1122 = vector.extract_strided_slice %1114 {offsets = [0, 7], sizes = [8, 1], strides = [1, 1]} : vector<8x8xf32> to vector<8x1xf32>
    %1123 = arith.subf %1117, %1115 : vector<8x1xf32>
    %cst_311 = arith.constant 1.000000e+00 : f32
    %1124 = vector.broadcast %cst_311 : f32 to vector<8x1xf32>
    %1125 = arith.addf %1123, %1124 : vector<8x1xf32>
    %1126 = arith.subf %1118, %1116 : vector<8x1xf32>
    %cst_312 = arith.constant 1.000000e+00 : f32
    %1127 = vector.broadcast %cst_312 : f32 to vector<8x1xf32>
    %1128 = arith.addf %1126, %1127 : vector<8x1xf32>
    %cst_313 = arith.constant 5.000000e-01 : f32
    %1129 = vector.broadcast %cst_313 : f32 to vector<8x1xf32>
    %1130 = arith.mulf %1129, %1125 : vector<8x1xf32>
    %1131 = arith.addf %1115, %1130 : vector<8x1xf32>
    %cst_314 = arith.constant 5.000000e-01 : f32
    %1132 = vector.broadcast %cst_314 : f32 to vector<8x1xf32>
    %1133 = arith.mulf %1132, %1128 : vector<8x1xf32>
    %1134 = arith.addf %1116, %1133 : vector<8x1xf32>
    %1135 = arith.mulf %1119, %1125 : vector<8x1xf32>
    %1136 = arith.addf %1135, %1131 : vector<8x1xf32>
    %1137 = arith.mulf %1120, %1128 : vector<8x1xf32>
    %1138 = arith.addf %1137, %1134 : vector<8x1xf32>
    %1139 = math.exp %1121 : vector<8x1xf32>
    %1140 = arith.mulf %1139, %1125 : vector<8x1xf32>
    %1141 = math.exp %1122 : vector<8x1xf32>
    %1142 = arith.mulf %1141, %1128 : vector<8x1xf32>
    %cst_315 = arith.constant 5.000000e-01 : f32
    %1143 = vector.broadcast %cst_315 : f32 to vector<8x1xf32>
    %1144 = arith.mulf %1143, %1140 : vector<8x1xf32>
    %1145 = arith.subf %1136, %1144 : vector<8x1xf32>
    %cst_316 = arith.constant 1.000000e+00 : f32
    %1146 = arith.subf %3, %cst_316 : f32
    %cst_317 = arith.constant 0.000000e+00 : f32
    %1147 = vector.broadcast %cst_317 : f32 to vector<8x1xf32>
    %1148 = arith.maximumf %1147, %1145 : vector<8x1xf32>
    %1149 = vector.broadcast %1146 : f32 to vector<8x1xf32>
    %1150 = arith.minimumf %1149, %1148 : vector<8x1xf32>
    %cst_318 = arith.constant 5.000000e-01 : f32
    %1151 = vector.broadcast %cst_318 : f32 to vector<8x1xf32>
    %1152 = arith.mulf %1151, %1142 : vector<8x1xf32>
    %1153 = arith.subf %1138, %1152 : vector<8x1xf32>
    %cst_319 = arith.constant 1.000000e+00 : f32
    %1154 = arith.subf %1, %cst_319 : f32
    %cst_320 = arith.constant 0.000000e+00 : f32
    %1155 = vector.broadcast %cst_320 : f32 to vector<8x1xf32>
    %1156 = arith.maximumf %1155, %1153 : vector<8x1xf32>
    %1157 = vector.broadcast %1154 : f32 to vector<8x1xf32>
    %1158 = arith.minimumf %1157, %1156 : vector<8x1xf32>
    %cst_321 = arith.constant 5.000000e-01 : f32
    %1159 = vector.broadcast %cst_321 : f32 to vector<8x1xf32>
    %1160 = arith.mulf %1159, %1140 : vector<8x1xf32>
    %1161 = arith.addf %1136, %1160 : vector<8x1xf32>
    %cst_322 = arith.constant 1.000000e+00 : f32
    %1162 = arith.subf %3, %cst_322 : f32
    %cst_323 = arith.constant 0.000000e+00 : f32
    %1163 = vector.broadcast %cst_323 : f32 to vector<8x1xf32>
    %1164 = arith.maximumf %1163, %1161 : vector<8x1xf32>
    %1165 = vector.broadcast %1162 : f32 to vector<8x1xf32>
    %1166 = arith.minimumf %1165, %1164 : vector<8x1xf32>
    %cst_324 = arith.constant 5.000000e-01 : f32
    %1167 = vector.broadcast %cst_324 : f32 to vector<8x1xf32>
    %1168 = arith.mulf %1167, %1142 : vector<8x1xf32>
    %1169 = arith.addf %1138, %1168 : vector<8x1xf32>
    %cst_325 = arith.constant 1.000000e+00 : f32
    %1170 = arith.subf %1, %cst_325 : f32
    %cst_326 = arith.constant 0.000000e+00 : f32
    %1171 = vector.broadcast %cst_326 : f32 to vector<8x1xf32>
    %1172 = arith.maximumf %1171, %1169 : vector<8x1xf32>
    %1173 = vector.broadcast %1170 : f32 to vector<8x1xf32>
    %1174 = arith.minimumf %1173, %1172 : vector<8x1xf32>
    %1175 = arith.subf %1166, %1150 : vector<8x1xf32>
    %cst_327 = arith.constant 1.000000e+00 : f32
    %1176 = vector.broadcast %cst_327 : f32 to vector<8x1xf32>
    %1177 = arith.addf %1175, %1176 : vector<8x1xf32>
    %1178 = arith.subf %1174, %1158 : vector<8x1xf32>
    %cst_328 = arith.constant 1.000000e+00 : f32
    %1179 = vector.broadcast %cst_328 : f32 to vector<8x1xf32>
    %1180 = arith.addf %1178, %1179 : vector<8x1xf32>
    %1181 = arith.mulf %1177, %1180 : vector<8x1xf32>
    %1182 = vector.broadcast %1150 : vector<8x1xf32> to vector<8x128xf32>
    %1183 = vector.broadcast %47 : vector<1x128xf32> to vector<8x128xf32>
    %1184 = arith.maximumf %1182, %1183 : vector<8x128xf32>
    %1185 = vector.broadcast %1158 : vector<8x1xf32> to vector<8x128xf32>
    %1186 = vector.broadcast %55 : vector<1x128xf32> to vector<8x128xf32>
    %1187 = arith.maximumf %1185, %1186 : vector<8x128xf32>
    %1188 = vector.broadcast %1166 : vector<8x1xf32> to vector<8x128xf32>
    %1189 = vector.broadcast %63 : vector<1x128xf32> to vector<8x128xf32>
    %1190 = arith.minimumf %1188, %1189 : vector<8x128xf32>
    %1191 = vector.broadcast %1174 : vector<8x1xf32> to vector<8x128xf32>
    %1192 = vector.broadcast %71 : vector<1x128xf32> to vector<8x128xf32>
    %1193 = arith.minimumf %1191, %1192 : vector<8x128xf32>
    %1194 = arith.subf %1190, %1184 : vector<8x128xf32>
    %cst_329 = arith.constant 1.000000e+00 : f32
    %1195 = vector.broadcast %cst_329 : f32 to vector<8x128xf32>
    %1196 = arith.addf %1194, %1195 : vector<8x128xf32>
    %cst_330 = arith.constant 0.000000e+00 : f32
    %1197 = vector.broadcast %cst_330 : f32 to vector<8x128xf32>
    %1198 = arith.maximumf %1196, %1197 : vector<8x128xf32>
    %1199 = arith.subf %1193, %1187 : vector<8x128xf32>
    %cst_331 = arith.constant 1.000000e+00 : f32
    %1200 = vector.broadcast %cst_331 : f32 to vector<8x128xf32>
    %1201 = arith.addf %1199, %1200 : vector<8x128xf32>
    %cst_332 = arith.constant 0.000000e+00 : f32
    %1202 = vector.broadcast %cst_332 : f32 to vector<8x128xf32>
    %1203 = arith.maximumf %1201, %1202 : vector<8x128xf32>
    %1204 = arith.mulf %1198, %1203 : vector<8x128xf32>
    %1205 = vector.broadcast %1181 : vector<8x1xf32> to vector<8x128xf32>
    %1206 = vector.broadcast %78 : vector<1x128xf32> to vector<8x128xf32>
    %1207 = arith.addf %1205, %1206 : vector<8x128xf32>
    %1208 = arith.subf %1207, %1204 : vector<8x128xf32>
    %1209 = tpu.iota {dimensions = array<i32: 0>} : vector<8x128xi32>
    %c40_i32 = arith.constant 40 : i32
    %1210 = vector.broadcast %c40_i32 : i32 to vector<8x128xi32>
    %1211 = arith.addi %1210, %1209 : vector<8x128xi32>
    %1212 = tpu.iota {dimensions = array<i32: 1>} : vector<8x128xi32>
    %1213 = arith.cmpi sgt, %1212, %1211 : vector<8x128xi32>
    %cst_333 = arith.constant 0.699999988 : f32
    %1214 = vector.broadcast %cst_333 : f32 to vector<8x128xf32>
    %1215 = arith.mulf %1214, %1208 : vector<8x128xf32>
    %1216 = arith.cmpf ogt, %1204, %1215 : vector<8x128xf32>
    %1217 = arith.andi %1213, %1216 : vector<8x128xi1>
    %cst_334 = arith.constant 1.000000e+00 : f32
    %cst_335 = arith.constant 0.000000e+00 : f32
    %1218 = vector.broadcast %cst_334 : f32 to vector<8x128xf32>
    %1219 = vector.broadcast %cst_335 : f32 to vector<8x128xf32>
    %1220 = arith.select %1217, %1218, %1219 : vector<8x128xi1>, vector<8x128xf32>
    %c40_i32_336 = arith.constant 40 : i32
    %1221 = vector.broadcast %c40_i32_336 : i32 to vector<1x128xi32>
    %1222 = arith.cmpi eq, %91, %1221 : vector<1x128xi32>
    %cst_337 = arith.constant 0.000000e+00 : f32
    %1223 = vector.broadcast %cst_337 : f32 to vector<1x128xf32>
    %1224 = arith.select %1222, %1112, %1223 : vector<1x128xi1>, vector<1x128xf32>
    %1225 = vector.shape_cast %1224 : vector<1x128xf32> to vector<1x1x128xf32>
    %cst_338 = arith.constant dense<0xFF800000> : vector<1xf32>
    %1226 = vector.multi_reduction <maximumf>, %1225, %cst_338 [1, 2] : vector<1x1x128xf32> to vector<1xf32>
    %1227 = vector.shape_cast %1226 : vector<1xf32> to vector<1x1x1xf32>
    %1228 = vector.extract %1227[0, 0, 0] : f32 from vector<1x1x1xf32>
    %1229 = vector.extract_strided_slice %1220 {offsets = [0, 0], sizes = [1, 128], strides = [1, 1]} : vector<8x128xf32> to vector<1x128xf32>
    %cst_339 = arith.constant 0.000000e+00 : f32
    %1230 = arith.cmpf ogt, %1228, %cst_339 : f32
    %1231 = arith.maximumf %1112, %1229 : vector<1x128xf32>
    %1232 = arith.select %1230, %1112, %1231 : vector<1x128xf32>
    %c41_i32 = arith.constant 41 : i32
    %1233 = vector.broadcast %c41_i32 : i32 to vector<1x128xi32>
    %1234 = arith.cmpi eq, %91, %1233 : vector<1x128xi32>
    %cst_340 = arith.constant 0.000000e+00 : f32
    %1235 = vector.broadcast %cst_340 : f32 to vector<1x128xf32>
    %1236 = arith.select %1234, %1232, %1235 : vector<1x128xi1>, vector<1x128xf32>
    %1237 = vector.shape_cast %1236 : vector<1x128xf32> to vector<1x1x128xf32>
    %cst_341 = arith.constant dense<0xFF800000> : vector<1xf32>
    %1238 = vector.multi_reduction <maximumf>, %1237, %cst_341 [1, 2] : vector<1x1x128xf32> to vector<1xf32>
    %1239 = vector.shape_cast %1238 : vector<1xf32> to vector<1x1x1xf32>
    %1240 = vector.extract %1239[0, 0, 0] : f32 from vector<1x1x1xf32>
    %1241 = vector.extract_strided_slice %1220 {offsets = [1, 0], sizes = [1, 128], strides = [1, 1]} : vector<8x128xf32> to vector<1x128xf32>
    %cst_342 = arith.constant 0.000000e+00 : f32
    %1242 = arith.cmpf ogt, %1240, %cst_342 : f32
    %1243 = arith.maximumf %1232, %1241 : vector<1x128xf32>
    %1244 = arith.select %1242, %1232, %1243 : vector<1x128xf32>
    %c42_i32 = arith.constant 42 : i32
    %1245 = vector.broadcast %c42_i32 : i32 to vector<1x128xi32>
    %1246 = arith.cmpi eq, %91, %1245 : vector<1x128xi32>
    %cst_343 = arith.constant 0.000000e+00 : f32
    %1247 = vector.broadcast %cst_343 : f32 to vector<1x128xf32>
    %1248 = arith.select %1246, %1244, %1247 : vector<1x128xi1>, vector<1x128xf32>
    %1249 = vector.shape_cast %1248 : vector<1x128xf32> to vector<1x1x128xf32>
    %cst_344 = arith.constant dense<0xFF800000> : vector<1xf32>
    %1250 = vector.multi_reduction <maximumf>, %1249, %cst_344 [1, 2] : vector<1x1x128xf32> to vector<1xf32>
    %1251 = vector.shape_cast %1250 : vector<1xf32> to vector<1x1x1xf32>
    %1252 = vector.extract %1251[0, 0, 0] : f32 from vector<1x1x1xf32>
    %1253 = vector.extract_strided_slice %1220 {offsets = [2, 0], sizes = [1, 128], strides = [1, 1]} : vector<8x128xf32> to vector<1x128xf32>
    %cst_345 = arith.constant 0.000000e+00 : f32
    %1254 = arith.cmpf ogt, %1252, %cst_345 : f32
    %1255 = arith.maximumf %1244, %1253 : vector<1x128xf32>
    %1256 = arith.select %1254, %1244, %1255 : vector<1x128xf32>
    %c43_i32 = arith.constant 43 : i32
    %1257 = vector.broadcast %c43_i32 : i32 to vector<1x128xi32>
    %1258 = arith.cmpi eq, %91, %1257 : vector<1x128xi32>
    %cst_346 = arith.constant 0.000000e+00 : f32
    %1259 = vector.broadcast %cst_346 : f32 to vector<1x128xf32>
    %1260 = arith.select %1258, %1256, %1259 : vector<1x128xi1>, vector<1x128xf32>
    %1261 = vector.shape_cast %1260 : vector<1x128xf32> to vector<1x1x128xf32>
    %cst_347 = arith.constant dense<0xFF800000> : vector<1xf32>
    %1262 = vector.multi_reduction <maximumf>, %1261, %cst_347 [1, 2] : vector<1x1x128xf32> to vector<1xf32>
    %1263 = vector.shape_cast %1262 : vector<1xf32> to vector<1x1x1xf32>
    %1264 = vector.extract %1263[0, 0, 0] : f32 from vector<1x1x1xf32>
    %1265 = vector.extract_strided_slice %1220 {offsets = [3, 0], sizes = [1, 128], strides = [1, 1]} : vector<8x128xf32> to vector<1x128xf32>
    %cst_348 = arith.constant 0.000000e+00 : f32
    %1266 = arith.cmpf ogt, %1264, %cst_348 : f32
    %1267 = arith.maximumf %1256, %1265 : vector<1x128xf32>
    %1268 = arith.select %1266, %1256, %1267 : vector<1x128xf32>
    %c44_i32 = arith.constant 44 : i32
    %1269 = vector.broadcast %c44_i32 : i32 to vector<1x128xi32>
    %1270 = arith.cmpi eq, %91, %1269 : vector<1x128xi32>
    %cst_349 = arith.constant 0.000000e+00 : f32
    %1271 = vector.broadcast %cst_349 : f32 to vector<1x128xf32>
    %1272 = arith.select %1270, %1268, %1271 : vector<1x128xi1>, vector<1x128xf32>
    %1273 = vector.shape_cast %1272 : vector<1x128xf32> to vector<1x1x128xf32>
    %cst_350 = arith.constant dense<0xFF800000> : vector<1xf32>
    %1274 = vector.multi_reduction <maximumf>, %1273, %cst_350 [1, 2] : vector<1x1x128xf32> to vector<1xf32>
    %1275 = vector.shape_cast %1274 : vector<1xf32> to vector<1x1x1xf32>
    %1276 = vector.extract %1275[0, 0, 0] : f32 from vector<1x1x1xf32>
    %1277 = vector.extract_strided_slice %1220 {offsets = [4, 0], sizes = [1, 128], strides = [1, 1]} : vector<8x128xf32> to vector<1x128xf32>
    %cst_351 = arith.constant 0.000000e+00 : f32
    %1278 = arith.cmpf ogt, %1276, %cst_351 : f32
    %1279 = arith.maximumf %1268, %1277 : vector<1x128xf32>
    %1280 = arith.select %1278, %1268, %1279 : vector<1x128xf32>
    %c45_i32 = arith.constant 45 : i32
    %1281 = vector.broadcast %c45_i32 : i32 to vector<1x128xi32>
    %1282 = arith.cmpi eq, %91, %1281 : vector<1x128xi32>
    %cst_352 = arith.constant 0.000000e+00 : f32
    %1283 = vector.broadcast %cst_352 : f32 to vector<1x128xf32>
    %1284 = arith.select %1282, %1280, %1283 : vector<1x128xi1>, vector<1x128xf32>
    %1285 = vector.shape_cast %1284 : vector<1x128xf32> to vector<1x1x128xf32>
    %cst_353 = arith.constant dense<0xFF800000> : vector<1xf32>
    %1286 = vector.multi_reduction <maximumf>, %1285, %cst_353 [1, 2] : vector<1x1x128xf32> to vector<1xf32>
    %1287 = vector.shape_cast %1286 : vector<1xf32> to vector<1x1x1xf32>
    %1288 = vector.extract %1287[0, 0, 0] : f32 from vector<1x1x1xf32>
    %1289 = vector.extract_strided_slice %1220 {offsets = [5, 0], sizes = [1, 128], strides = [1, 1]} : vector<8x128xf32> to vector<1x128xf32>
    %cst_354 = arith.constant 0.000000e+00 : f32
    %1290 = arith.cmpf ogt, %1288, %cst_354 : f32
    %1291 = arith.maximumf %1280, %1289 : vector<1x128xf32>
    %1292 = arith.select %1290, %1280, %1291 : vector<1x128xf32>
    %c46_i32 = arith.constant 46 : i32
    %1293 = vector.broadcast %c46_i32 : i32 to vector<1x128xi32>
    %1294 = arith.cmpi eq, %91, %1293 : vector<1x128xi32>
    %cst_355 = arith.constant 0.000000e+00 : f32
    %1295 = vector.broadcast %cst_355 : f32 to vector<1x128xf32>
    %1296 = arith.select %1294, %1292, %1295 : vector<1x128xi1>, vector<1x128xf32>
    %1297 = vector.shape_cast %1296 : vector<1x128xf32> to vector<1x1x128xf32>
    %cst_356 = arith.constant dense<0xFF800000> : vector<1xf32>
    %1298 = vector.multi_reduction <maximumf>, %1297, %cst_356 [1, 2] : vector<1x1x128xf32> to vector<1xf32>
    %1299 = vector.shape_cast %1298 : vector<1xf32> to vector<1x1x1xf32>
    %1300 = vector.extract %1299[0, 0, 0] : f32 from vector<1x1x1xf32>
    %1301 = vector.extract_strided_slice %1220 {offsets = [6, 0], sizes = [1, 128], strides = [1, 1]} : vector<8x128xf32> to vector<1x128xf32>
    %cst_357 = arith.constant 0.000000e+00 : f32
    %1302 = arith.cmpf ogt, %1300, %cst_357 : f32
    %1303 = arith.maximumf %1292, %1301 : vector<1x128xf32>
    %1304 = arith.select %1302, %1292, %1303 : vector<1x128xf32>
    %c47_i32 = arith.constant 47 : i32
    %1305 = vector.broadcast %c47_i32 : i32 to vector<1x128xi32>
    %1306 = arith.cmpi eq, %91, %1305 : vector<1x128xi32>
    %cst_358 = arith.constant 0.000000e+00 : f32
    %1307 = vector.broadcast %cst_358 : f32 to vector<1x128xf32>
    %1308 = arith.select %1306, %1304, %1307 : vector<1x128xi1>, vector<1x128xf32>
    %1309 = vector.shape_cast %1308 : vector<1x128xf32> to vector<1x1x128xf32>
    %cst_359 = arith.constant dense<0xFF800000> : vector<1xf32>
    %1310 = vector.multi_reduction <maximumf>, %1309, %cst_359 [1, 2] : vector<1x1x128xf32> to vector<1xf32>
    %1311 = vector.shape_cast %1310 : vector<1xf32> to vector<1x1x1xf32>
    %1312 = vector.extract %1311[0, 0, 0] : f32 from vector<1x1x1xf32>
    %1313 = vector.extract_strided_slice %1220 {offsets = [7, 0], sizes = [1, 128], strides = [1, 1]} : vector<8x128xf32> to vector<1x128xf32>
    %cst_360 = arith.constant 0.000000e+00 : f32
    %1314 = arith.cmpf ogt, %1312, %cst_360 : f32
    %1315 = arith.maximumf %1304, %1313 : vector<1x128xf32>
    %1316 = arith.select %1314, %1304, %1315 : vector<1x128xf32>
    %c0_361 = arith.constant 0 : index
    %c48 = arith.constant 48 : index
    %c0_362 = arith.constant 0 : index
    %1317 = vector.load %arg3[%c0_361, %c48, %c0_362] : memref<1x128x8xf32, #tpu.memory_space<vmem>>, vector<1x8x8xf32>
    %1318 = vector.shape_cast %1317 : vector<1x8x8xf32> to vector<8x8xf32>
    %1319 = vector.extract_strided_slice %1318 {offsets = [0, 0], sizes = [8, 1], strides = [1, 1]} : vector<8x8xf32> to vector<8x1xf32>
    %1320 = vector.extract_strided_slice %1318 {offsets = [0, 1], sizes = [8, 1], strides = [1, 1]} : vector<8x8xf32> to vector<8x1xf32>
    %1321 = vector.extract_strided_slice %1318 {offsets = [0, 2], sizes = [8, 1], strides = [1, 1]} : vector<8x8xf32> to vector<8x1xf32>
    %1322 = vector.extract_strided_slice %1318 {offsets = [0, 3], sizes = [8, 1], strides = [1, 1]} : vector<8x8xf32> to vector<8x1xf32>
    %1323 = vector.extract_strided_slice %1318 {offsets = [0, 4], sizes = [8, 1], strides = [1, 1]} : vector<8x8xf32> to vector<8x1xf32>
    %1324 = vector.extract_strided_slice %1318 {offsets = [0, 5], sizes = [8, 1], strides = [1, 1]} : vector<8x8xf32> to vector<8x1xf32>
    %1325 = vector.extract_strided_slice %1318 {offsets = [0, 6], sizes = [8, 1], strides = [1, 1]} : vector<8x8xf32> to vector<8x1xf32>
    %1326 = vector.extract_strided_slice %1318 {offsets = [0, 7], sizes = [8, 1], strides = [1, 1]} : vector<8x8xf32> to vector<8x1xf32>
    %1327 = arith.subf %1321, %1319 : vector<8x1xf32>
    %cst_363 = arith.constant 1.000000e+00 : f32
    %1328 = vector.broadcast %cst_363 : f32 to vector<8x1xf32>
    %1329 = arith.addf %1327, %1328 : vector<8x1xf32>
    %1330 = arith.subf %1322, %1320 : vector<8x1xf32>
    %cst_364 = arith.constant 1.000000e+00 : f32
    %1331 = vector.broadcast %cst_364 : f32 to vector<8x1xf32>
    %1332 = arith.addf %1330, %1331 : vector<8x1xf32>
    %cst_365 = arith.constant 5.000000e-01 : f32
    %1333 = vector.broadcast %cst_365 : f32 to vector<8x1xf32>
    %1334 = arith.mulf %1333, %1329 : vector<8x1xf32>
    %1335 = arith.addf %1319, %1334 : vector<8x1xf32>
    %cst_366 = arith.constant 5.000000e-01 : f32
    %1336 = vector.broadcast %cst_366 : f32 to vector<8x1xf32>
    %1337 = arith.mulf %1336, %1332 : vector<8x1xf32>
    %1338 = arith.addf %1320, %1337 : vector<8x1xf32>
    %1339 = arith.mulf %1323, %1329 : vector<8x1xf32>
    %1340 = arith.addf %1339, %1335 : vector<8x1xf32>
    %1341 = arith.mulf %1324, %1332 : vector<8x1xf32>
    %1342 = arith.addf %1341, %1338 : vector<8x1xf32>
    %1343 = math.exp %1325 : vector<8x1xf32>
    %1344 = arith.mulf %1343, %1329 : vector<8x1xf32>
    %1345 = math.exp %1326 : vector<8x1xf32>
    %1346 = arith.mulf %1345, %1332 : vector<8x1xf32>
    %cst_367 = arith.constant 5.000000e-01 : f32
    %1347 = vector.broadcast %cst_367 : f32 to vector<8x1xf32>
    %1348 = arith.mulf %1347, %1344 : vector<8x1xf32>
    %1349 = arith.subf %1340, %1348 : vector<8x1xf32>
    %cst_368 = arith.constant 1.000000e+00 : f32
    %1350 = arith.subf %3, %cst_368 : f32
    %cst_369 = arith.constant 0.000000e+00 : f32
    %1351 = vector.broadcast %cst_369 : f32 to vector<8x1xf32>
    %1352 = arith.maximumf %1351, %1349 : vector<8x1xf32>
    %1353 = vector.broadcast %1350 : f32 to vector<8x1xf32>
    %1354 = arith.minimumf %1353, %1352 : vector<8x1xf32>
    %cst_370 = arith.constant 5.000000e-01 : f32
    %1355 = vector.broadcast %cst_370 : f32 to vector<8x1xf32>
    %1356 = arith.mulf %1355, %1346 : vector<8x1xf32>
    %1357 = arith.subf %1342, %1356 : vector<8x1xf32>
    %cst_371 = arith.constant 1.000000e+00 : f32
    %1358 = arith.subf %1, %cst_371 : f32
    %cst_372 = arith.constant 0.000000e+00 : f32
    %1359 = vector.broadcast %cst_372 : f32 to vector<8x1xf32>
    %1360 = arith.maximumf %1359, %1357 : vector<8x1xf32>
    %1361 = vector.broadcast %1358 : f32 to vector<8x1xf32>
    %1362 = arith.minimumf %1361, %1360 : vector<8x1xf32>
    %cst_373 = arith.constant 5.000000e-01 : f32
    %1363 = vector.broadcast %cst_373 : f32 to vector<8x1xf32>
    %1364 = arith.mulf %1363, %1344 : vector<8x1xf32>
    %1365 = arith.addf %1340, %1364 : vector<8x1xf32>
    %cst_374 = arith.constant 1.000000e+00 : f32
    %1366 = arith.subf %3, %cst_374 : f32
    %cst_375 = arith.constant 0.000000e+00 : f32
    %1367 = vector.broadcast %cst_375 : f32 to vector<8x1xf32>
    %1368 = arith.maximumf %1367, %1365 : vector<8x1xf32>
    %1369 = vector.broadcast %1366 : f32 to vector<8x1xf32>
    %1370 = arith.minimumf %1369, %1368 : vector<8x1xf32>
    %cst_376 = arith.constant 5.000000e-01 : f32
    %1371 = vector.broadcast %cst_376 : f32 to vector<8x1xf32>
    %1372 = arith.mulf %1371, %1346 : vector<8x1xf32>
    %1373 = arith.addf %1342, %1372 : vector<8x1xf32>
    %cst_377 = arith.constant 1.000000e+00 : f32
    %1374 = arith.subf %1, %cst_377 : f32
    %cst_378 = arith.constant 0.000000e+00 : f32
    %1375 = vector.broadcast %cst_378 : f32 to vector<8x1xf32>
    %1376 = arith.maximumf %1375, %1373 : vector<8x1xf32>
    %1377 = vector.broadcast %1374 : f32 to vector<8x1xf32>
    %1378 = arith.minimumf %1377, %1376 : vector<8x1xf32>
    %1379 = arith.subf %1370, %1354 : vector<8x1xf32>
    %cst_379 = arith.constant 1.000000e+00 : f32
    %1380 = vector.broadcast %cst_379 : f32 to vector<8x1xf32>
    %1381 = arith.addf %1379, %1380 : vector<8x1xf32>
    %1382 = arith.subf %1378, %1362 : vector<8x1xf32>
    %cst_380 = arith.constant 1.000000e+00 : f32
    %1383 = vector.broadcast %cst_380 : f32 to vector<8x1xf32>
    %1384 = arith.addf %1382, %1383 : vector<8x1xf32>
    %1385 = arith.mulf %1381, %1384 : vector<8x1xf32>
    %1386 = vector.broadcast %1354 : vector<8x1xf32> to vector<8x128xf32>
    %1387 = vector.broadcast %47 : vector<1x128xf32> to vector<8x128xf32>
    %1388 = arith.maximumf %1386, %1387 : vector<8x128xf32>
    %1389 = vector.broadcast %1362 : vector<8x1xf32> to vector<8x128xf32>
    %1390 = vector.broadcast %55 : vector<1x128xf32> to vector<8x128xf32>
    %1391 = arith.maximumf %1389, %1390 : vector<8x128xf32>
    %1392 = vector.broadcast %1370 : vector<8x1xf32> to vector<8x128xf32>
    %1393 = vector.broadcast %63 : vector<1x128xf32> to vector<8x128xf32>
    %1394 = arith.minimumf %1392, %1393 : vector<8x128xf32>
    %1395 = vector.broadcast %1378 : vector<8x1xf32> to vector<8x128xf32>
    %1396 = vector.broadcast %71 : vector<1x128xf32> to vector<8x128xf32>
    %1397 = arith.minimumf %1395, %1396 : vector<8x128xf32>
    %1398 = arith.subf %1394, %1388 : vector<8x128xf32>
    %cst_381 = arith.constant 1.000000e+00 : f32
    %1399 = vector.broadcast %cst_381 : f32 to vector<8x128xf32>
    %1400 = arith.addf %1398, %1399 : vector<8x128xf32>
    %cst_382 = arith.constant 0.000000e+00 : f32
    %1401 = vector.broadcast %cst_382 : f32 to vector<8x128xf32>
    %1402 = arith.maximumf %1400, %1401 : vector<8x128xf32>
    %1403 = arith.subf %1397, %1391 : vector<8x128xf32>
    %cst_383 = arith.constant 1.000000e+00 : f32
    %1404 = vector.broadcast %cst_383 : f32 to vector<8x128xf32>
    %1405 = arith.addf %1403, %1404 : vector<8x128xf32>
    %cst_384 = arith.constant 0.000000e+00 : f32
    %1406 = vector.broadcast %cst_384 : f32 to vector<8x128xf32>
    %1407 = arith.maximumf %1405, %1406 : vector<8x128xf32>
    %1408 = arith.mulf %1402, %1407 : vector<8x128xf32>
    %1409 = vector.broadcast %1385 : vector<8x1xf32> to vector<8x128xf32>
    %1410 = vector.broadcast %78 : vector<1x128xf32> to vector<8x128xf32>
    %1411 = arith.addf %1409, %1410 : vector<8x128xf32>
    %1412 = arith.subf %1411, %1408 : vector<8x128xf32>
    %1413 = tpu.iota {dimensions = array<i32: 0>} : vector<8x128xi32>
    %c48_i32 = arith.constant 48 : i32
    %1414 = vector.broadcast %c48_i32 : i32 to vector<8x128xi32>
    %1415 = arith.addi %1414, %1413 : vector<8x128xi32>
    %1416 = tpu.iota {dimensions = array<i32: 1>} : vector<8x128xi32>
    %1417 = arith.cmpi sgt, %1416, %1415 : vector<8x128xi32>
    %cst_385 = arith.constant 0.699999988 : f32
    %1418 = vector.broadcast %cst_385 : f32 to vector<8x128xf32>
    %1419 = arith.mulf %1418, %1412 : vector<8x128xf32>
    %1420 = arith.cmpf ogt, %1408, %1419 : vector<8x128xf32>
    %1421 = arith.andi %1417, %1420 : vector<8x128xi1>
    %cst_386 = arith.constant 1.000000e+00 : f32
    %cst_387 = arith.constant 0.000000e+00 : f32
    %1422 = vector.broadcast %cst_386 : f32 to vector<8x128xf32>
    %1423 = vector.broadcast %cst_387 : f32 to vector<8x128xf32>
    %1424 = arith.select %1421, %1422, %1423 : vector<8x128xi1>, vector<8x128xf32>
    %c48_i32_388 = arith.constant 48 : i32
    %1425 = vector.broadcast %c48_i32_388 : i32 to vector<1x128xi32>
    %1426 = arith.cmpi eq, %91, %1425 : vector<1x128xi32>
    %cst_389 = arith.constant 0.000000e+00 : f32
    %1427 = vector.broadcast %cst_389 : f32 to vector<1x128xf32>
    %1428 = arith.select %1426, %1316, %1427 : vector<1x128xi1>, vector<1x128xf32>
    %1429 = vector.shape_cast %1428 : vector<1x128xf32> to vector<1x1x128xf32>
    %cst_390 = arith.constant dense<0xFF800000> : vector<1xf32>
    %1430 = vector.multi_reduction <maximumf>, %1429, %cst_390 [1, 2] : vector<1x1x128xf32> to vector<1xf32>
    %1431 = vector.shape_cast %1430 : vector<1xf32> to vector<1x1x1xf32>
    %1432 = vector.extract %1431[0, 0, 0] : f32 from vector<1x1x1xf32>
    %1433 = vector.extract_strided_slice %1424 {offsets = [0, 0], sizes = [1, 128], strides = [1, 1]} : vector<8x128xf32> to vector<1x128xf32>
    %cst_391 = arith.constant 0.000000e+00 : f32
    %1434 = arith.cmpf ogt, %1432, %cst_391 : f32
    %1435 = arith.maximumf %1316, %1433 : vector<1x128xf32>
    %1436 = arith.select %1434, %1316, %1435 : vector<1x128xf32>
    %c49_i32 = arith.constant 49 : i32
    %1437 = vector.broadcast %c49_i32 : i32 to vector<1x128xi32>
    %1438 = arith.cmpi eq, %91, %1437 : vector<1x128xi32>
    %cst_392 = arith.constant 0.000000e+00 : f32
    %1439 = vector.broadcast %cst_392 : f32 to vector<1x128xf32>
    %1440 = arith.select %1438, %1436, %1439 : vector<1x128xi1>, vector<1x128xf32>
    %1441 = vector.shape_cast %1440 : vector<1x128xf32> to vector<1x1x128xf32>
    %cst_393 = arith.constant dense<0xFF800000> : vector<1xf32>
    %1442 = vector.multi_reduction <maximumf>, %1441, %cst_393 [1, 2] : vector<1x1x128xf32> to vector<1xf32>
    %1443 = vector.shape_cast %1442 : vector<1xf32> to vector<1x1x1xf32>
    %1444 = vector.extract %1443[0, 0, 0] : f32 from vector<1x1x1xf32>
    %1445 = vector.extract_strided_slice %1424 {offsets = [1, 0], sizes = [1, 128], strides = [1, 1]} : vector<8x128xf32> to vector<1x128xf32>
    %cst_394 = arith.constant 0.000000e+00 : f32
    %1446 = arith.cmpf ogt, %1444, %cst_394 : f32
    %1447 = arith.maximumf %1436, %1445 : vector<1x128xf32>
    %1448 = arith.select %1446, %1436, %1447 : vector<1x128xf32>
    %c50_i32 = arith.constant 50 : i32
    %1449 = vector.broadcast %c50_i32 : i32 to vector<1x128xi32>
    %1450 = arith.cmpi eq, %91, %1449 : vector<1x128xi32>
    %cst_395 = arith.constant 0.000000e+00 : f32
    %1451 = vector.broadcast %cst_395 : f32 to vector<1x128xf32>
    %1452 = arith.select %1450, %1448, %1451 : vector<1x128xi1>, vector<1x128xf32>
    %1453 = vector.shape_cast %1452 : vector<1x128xf32> to vector<1x1x128xf32>
    %cst_396 = arith.constant dense<0xFF800000> : vector<1xf32>
    %1454 = vector.multi_reduction <maximumf>, %1453, %cst_396 [1, 2] : vector<1x1x128xf32> to vector<1xf32>
    %1455 = vector.shape_cast %1454 : vector<1xf32> to vector<1x1x1xf32>
    %1456 = vector.extract %1455[0, 0, 0] : f32 from vector<1x1x1xf32>
    %1457 = vector.extract_strided_slice %1424 {offsets = [2, 0], sizes = [1, 128], strides = [1, 1]} : vector<8x128xf32> to vector<1x128xf32>
    %cst_397 = arith.constant 0.000000e+00 : f32
    %1458 = arith.cmpf ogt, %1456, %cst_397 : f32
    %1459 = arith.maximumf %1448, %1457 : vector<1x128xf32>
    %1460 = arith.select %1458, %1448, %1459 : vector<1x128xf32>
    %c51_i32 = arith.constant 51 : i32
    %1461 = vector.broadcast %c51_i32 : i32 to vector<1x128xi32>
    %1462 = arith.cmpi eq, %91, %1461 : vector<1x128xi32>
    %cst_398 = arith.constant 0.000000e+00 : f32
    %1463 = vector.broadcast %cst_398 : f32 to vector<1x128xf32>
    %1464 = arith.select %1462, %1460, %1463 : vector<1x128xi1>, vector<1x128xf32>
    %1465 = vector.shape_cast %1464 : vector<1x128xf32> to vector<1x1x128xf32>
    %cst_399 = arith.constant dense<0xFF800000> : vector<1xf32>
    %1466 = vector.multi_reduction <maximumf>, %1465, %cst_399 [1, 2] : vector<1x1x128xf32> to vector<1xf32>
    %1467 = vector.shape_cast %1466 : vector<1xf32> to vector<1x1x1xf32>
    %1468 = vector.extract %1467[0, 0, 0] : f32 from vector<1x1x1xf32>
    %1469 = vector.extract_strided_slice %1424 {offsets = [3, 0], sizes = [1, 128], strides = [1, 1]} : vector<8x128xf32> to vector<1x128xf32>
    %cst_400 = arith.constant 0.000000e+00 : f32
    %1470 = arith.cmpf ogt, %1468, %cst_400 : f32
    %1471 = arith.maximumf %1460, %1469 : vector<1x128xf32>
    %1472 = arith.select %1470, %1460, %1471 : vector<1x128xf32>
    %c52_i32 = arith.constant 52 : i32
    %1473 = vector.broadcast %c52_i32 : i32 to vector<1x128xi32>
    %1474 = arith.cmpi eq, %91, %1473 : vector<1x128xi32>
    %cst_401 = arith.constant 0.000000e+00 : f32
    %1475 = vector.broadcast %cst_401 : f32 to vector<1x128xf32>
    %1476 = arith.select %1474, %1472, %1475 : vector<1x128xi1>, vector<1x128xf32>
    %1477 = vector.shape_cast %1476 : vector<1x128xf32> to vector<1x1x128xf32>
    %cst_402 = arith.constant dense<0xFF800000> : vector<1xf32>
    %1478 = vector.multi_reduction <maximumf>, %1477, %cst_402 [1, 2] : vector<1x1x128xf32> to vector<1xf32>
    %1479 = vector.shape_cast %1478 : vector<1xf32> to vector<1x1x1xf32>
    %1480 = vector.extract %1479[0, 0, 0] : f32 from vector<1x1x1xf32>
    %1481 = vector.extract_strided_slice %1424 {offsets = [4, 0], sizes = [1, 128], strides = [1, 1]} : vector<8x128xf32> to vector<1x128xf32>
    %cst_403 = arith.constant 0.000000e+00 : f32
    %1482 = arith.cmpf ogt, %1480, %cst_403 : f32
    %1483 = arith.maximumf %1472, %1481 : vector<1x128xf32>
    %1484 = arith.select %1482, %1472, %1483 : vector<1x128xf32>
    %c53_i32 = arith.constant 53 : i32
    %1485 = vector.broadcast %c53_i32 : i32 to vector<1x128xi32>
    %1486 = arith.cmpi eq, %91, %1485 : vector<1x128xi32>
    %cst_404 = arith.constant 0.000000e+00 : f32
    %1487 = vector.broadcast %cst_404 : f32 to vector<1x128xf32>
    %1488 = arith.select %1486, %1484, %1487 : vector<1x128xi1>, vector<1x128xf32>
    %1489 = vector.shape_cast %1488 : vector<1x128xf32> to vector<1x1x128xf32>
    %cst_405 = arith.constant dense<0xFF800000> : vector<1xf32>
    %1490 = vector.multi_reduction <maximumf>, %1489, %cst_405 [1, 2] : vector<1x1x128xf32> to vector<1xf32>
    %1491 = vector.shape_cast %1490 : vector<1xf32> to vector<1x1x1xf32>
    %1492 = vector.extract %1491[0, 0, 0] : f32 from vector<1x1x1xf32>
    %1493 = vector.extract_strided_slice %1424 {offsets = [5, 0], sizes = [1, 128], strides = [1, 1]} : vector<8x128xf32> to vector<1x128xf32>
    %cst_406 = arith.constant 0.000000e+00 : f32
    %1494 = arith.cmpf ogt, %1492, %cst_406 : f32
    %1495 = arith.maximumf %1484, %1493 : vector<1x128xf32>
    %1496 = arith.select %1494, %1484, %1495 : vector<1x128xf32>
    %c54_i32 = arith.constant 54 : i32
    %1497 = vector.broadcast %c54_i32 : i32 to vector<1x128xi32>
    %1498 = arith.cmpi eq, %91, %1497 : vector<1x128xi32>
    %cst_407 = arith.constant 0.000000e+00 : f32
    %1499 = vector.broadcast %cst_407 : f32 to vector<1x128xf32>
    %1500 = arith.select %1498, %1496, %1499 : vector<1x128xi1>, vector<1x128xf32>
    %1501 = vector.shape_cast %1500 : vector<1x128xf32> to vector<1x1x128xf32>
    %cst_408 = arith.constant dense<0xFF800000> : vector<1xf32>
    %1502 = vector.multi_reduction <maximumf>, %1501, %cst_408 [1, 2] : vector<1x1x128xf32> to vector<1xf32>
    %1503 = vector.shape_cast %1502 : vector<1xf32> to vector<1x1x1xf32>
    %1504 = vector.extract %1503[0, 0, 0] : f32 from vector<1x1x1xf32>
    %1505 = vector.extract_strided_slice %1424 {offsets = [6, 0], sizes = [1, 128], strides = [1, 1]} : vector<8x128xf32> to vector<1x128xf32>
    %cst_409 = arith.constant 0.000000e+00 : f32
    %1506 = arith.cmpf ogt, %1504, %cst_409 : f32
    %1507 = arith.maximumf %1496, %1505 : vector<1x128xf32>
    %1508 = arith.select %1506, %1496, %1507 : vector<1x128xf32>
    %c55_i32 = arith.constant 55 : i32
    %1509 = vector.broadcast %c55_i32 : i32 to vector<1x128xi32>
    %1510 = arith.cmpi eq, %91, %1509 : vector<1x128xi32>
    %cst_410 = arith.constant 0.000000e+00 : f32
    %1511 = vector.broadcast %cst_410 : f32 to vector<1x128xf32>
    %1512 = arith.select %1510, %1508, %1511 : vector<1x128xi1>, vector<1x128xf32>
    %1513 = vector.shape_cast %1512 : vector<1x128xf32> to vector<1x1x128xf32>
    %cst_411 = arith.constant dense<0xFF800000> : vector<1xf32>
    %1514 = vector.multi_reduction <maximumf>, %1513, %cst_411 [1, 2] : vector<1x1x128xf32> to vector<1xf32>
    %1515 = vector.shape_cast %1514 : vector<1xf32> to vector<1x1x1xf32>
    %1516 = vector.extract %1515[0, 0, 0] : f32 from vector<1x1x1xf32>
    %1517 = vector.extract_strided_slice %1424 {offsets = [7, 0], sizes = [1, 128], strides = [1, 1]} : vector<8x128xf32> to vector<1x128xf32>
    %cst_412 = arith.constant 0.000000e+00 : f32
    %1518 = arith.cmpf ogt, %1516, %cst_412 : f32
    %1519 = arith.maximumf %1508, %1517 : vector<1x128xf32>
    %1520 = arith.select %1518, %1508, %1519 : vector<1x128xf32>
    %c0_413 = arith.constant 0 : index
    %c56 = arith.constant 56 : index
    %c0_414 = arith.constant 0 : index
    %1521 = vector.load %arg3[%c0_413, %c56, %c0_414] : memref<1x128x8xf32, #tpu.memory_space<vmem>>, vector<1x8x8xf32>
    %1522 = vector.shape_cast %1521 : vector<1x8x8xf32> to vector<8x8xf32>
    %1523 = vector.extract_strided_slice %1522 {offsets = [0, 0], sizes = [8, 1], strides = [1, 1]} : vector<8x8xf32> to vector<8x1xf32>
    %1524 = vector.extract_strided_slice %1522 {offsets = [0, 1], sizes = [8, 1], strides = [1, 1]} : vector<8x8xf32> to vector<8x1xf32>
    %1525 = vector.extract_strided_slice %1522 {offsets = [0, 2], sizes = [8, 1], strides = [1, 1]} : vector<8x8xf32> to vector<8x1xf32>
    %1526 = vector.extract_strided_slice %1522 {offsets = [0, 3], sizes = [8, 1], strides = [1, 1]} : vector<8x8xf32> to vector<8x1xf32>
    %1527 = vector.extract_strided_slice %1522 {offsets = [0, 4], sizes = [8, 1], strides = [1, 1]} : vector<8x8xf32> to vector<8x1xf32>
    %1528 = vector.extract_strided_slice %1522 {offsets = [0, 5], sizes = [8, 1], strides = [1, 1]} : vector<8x8xf32> to vector<8x1xf32>
    %1529 = vector.extract_strided_slice %1522 {offsets = [0, 6], sizes = [8, 1], strides = [1, 1]} : vector<8x8xf32> to vector<8x1xf32>
    %1530 = vector.extract_strided_slice %1522 {offsets = [0, 7], sizes = [8, 1], strides = [1, 1]} : vector<8x8xf32> to vector<8x1xf32>
    %1531 = arith.subf %1525, %1523 : vector<8x1xf32>
    %cst_415 = arith.constant 1.000000e+00 : f32
    %1532 = vector.broadcast %cst_415 : f32 to vector<8x1xf32>
    %1533 = arith.addf %1531, %1532 : vector<8x1xf32>
    %1534 = arith.subf %1526, %1524 : vector<8x1xf32>
    %cst_416 = arith.constant 1.000000e+00 : f32
    %1535 = vector.broadcast %cst_416 : f32 to vector<8x1xf32>
    %1536 = arith.addf %1534, %1535 : vector<8x1xf32>
    %cst_417 = arith.constant 5.000000e-01 : f32
    %1537 = vector.broadcast %cst_417 : f32 to vector<8x1xf32>
    %1538 = arith.mulf %1537, %1533 : vector<8x1xf32>
    %1539 = arith.addf %1523, %1538 : vector<8x1xf32>
    %cst_418 = arith.constant 5.000000e-01 : f32
    %1540 = vector.broadcast %cst_418 : f32 to vector<8x1xf32>
    %1541 = arith.mulf %1540, %1536 : vector<8x1xf32>
    %1542 = arith.addf %1524, %1541 : vector<8x1xf32>
    %1543 = arith.mulf %1527, %1533 : vector<8x1xf32>
    %1544 = arith.addf %1543, %1539 : vector<8x1xf32>
    %1545 = arith.mulf %1528, %1536 : vector<8x1xf32>
    %1546 = arith.addf %1545, %1542 : vector<8x1xf32>
    %1547 = math.exp %1529 : vector<8x1xf32>
    %1548 = arith.mulf %1547, %1533 : vector<8x1xf32>
    %1549 = math.exp %1530 : vector<8x1xf32>
    %1550 = arith.mulf %1549, %1536 : vector<8x1xf32>
    %cst_419 = arith.constant 5.000000e-01 : f32
    %1551 = vector.broadcast %cst_419 : f32 to vector<8x1xf32>
    %1552 = arith.mulf %1551, %1548 : vector<8x1xf32>
    %1553 = arith.subf %1544, %1552 : vector<8x1xf32>
    %cst_420 = arith.constant 1.000000e+00 : f32
    %1554 = arith.subf %3, %cst_420 : f32
    %cst_421 = arith.constant 0.000000e+00 : f32
    %1555 = vector.broadcast %cst_421 : f32 to vector<8x1xf32>
    %1556 = arith.maximumf %1555, %1553 : vector<8x1xf32>
    %1557 = vector.broadcast %1554 : f32 to vector<8x1xf32>
    %1558 = arith.minimumf %1557, %1556 : vector<8x1xf32>
    %cst_422 = arith.constant 5.000000e-01 : f32
    %1559 = vector.broadcast %cst_422 : f32 to vector<8x1xf32>
    %1560 = arith.mulf %1559, %1550 : vector<8x1xf32>
    %1561 = arith.subf %1546, %1560 : vector<8x1xf32>
    %cst_423 = arith.constant 1.000000e+00 : f32
    %1562 = arith.subf %1, %cst_423 : f32
    %cst_424 = arith.constant 0.000000e+00 : f32
    %1563 = vector.broadcast %cst_424 : f32 to vector<8x1xf32>
    %1564 = arith.maximumf %1563, %1561 : vector<8x1xf32>
    %1565 = vector.broadcast %1562 : f32 to vector<8x1xf32>
    %1566 = arith.minimumf %1565, %1564 : vector<8x1xf32>
    %cst_425 = arith.constant 5.000000e-01 : f32
    %1567 = vector.broadcast %cst_425 : f32 to vector<8x1xf32>
    %1568 = arith.mulf %1567, %1548 : vector<8x1xf32>
    %1569 = arith.addf %1544, %1568 : vector<8x1xf32>
    %cst_426 = arith.constant 1.000000e+00 : f32
    %1570 = arith.subf %3, %cst_426 : f32
    %cst_427 = arith.constant 0.000000e+00 : f32
    %1571 = vector.broadcast %cst_427 : f32 to vector<8x1xf32>
    %1572 = arith.maximumf %1571, %1569 : vector<8x1xf32>
    %1573 = vector.broadcast %1570 : f32 to vector<8x1xf32>
    %1574 = arith.minimumf %1573, %1572 : vector<8x1xf32>
    %cst_428 = arith.constant 5.000000e-01 : f32
    %1575 = vector.broadcast %cst_428 : f32 to vector<8x1xf32>
    %1576 = arith.mulf %1575, %1550 : vector<8x1xf32>
    %1577 = arith.addf %1546, %1576 : vector<8x1xf32>
    %cst_429 = arith.constant 1.000000e+00 : f32
    %1578 = arith.subf %1, %cst_429 : f32
    %cst_430 = arith.constant 0.000000e+00 : f32
    %1579 = vector.broadcast %cst_430 : f32 to vector<8x1xf32>
    %1580 = arith.maximumf %1579, %1577 : vector<8x1xf32>
    %1581 = vector.broadcast %1578 : f32 to vector<8x1xf32>
    %1582 = arith.minimumf %1581, %1580 : vector<8x1xf32>
    %1583 = arith.subf %1574, %1558 : vector<8x1xf32>
    %cst_431 = arith.constant 1.000000e+00 : f32
    %1584 = vector.broadcast %cst_431 : f32 to vector<8x1xf32>
    %1585 = arith.addf %1583, %1584 : vector<8x1xf32>
    %1586 = arith.subf %1582, %1566 : vector<8x1xf32>
    %cst_432 = arith.constant 1.000000e+00 : f32
    %1587 = vector.broadcast %cst_432 : f32 to vector<8x1xf32>
    %1588 = arith.addf %1586, %1587 : vector<8x1xf32>
    %1589 = arith.mulf %1585, %1588 : vector<8x1xf32>
    %1590 = vector.broadcast %1558 : vector<8x1xf32> to vector<8x128xf32>
    %1591 = vector.broadcast %47 : vector<1x128xf32> to vector<8x128xf32>
    %1592 = arith.maximumf %1590, %1591 : vector<8x128xf32>
    %1593 = vector.broadcast %1566 : vector<8x1xf32> to vector<8x128xf32>
    %1594 = vector.broadcast %55 : vector<1x128xf32> to vector<8x128xf32>
    %1595 = arith.maximumf %1593, %1594 : vector<8x128xf32>
    %1596 = vector.broadcast %1574 : vector<8x1xf32> to vector<8x128xf32>
    %1597 = vector.broadcast %63 : vector<1x128xf32> to vector<8x128xf32>
    %1598 = arith.minimumf %1596, %1597 : vector<8x128xf32>
    %1599 = vector.broadcast %1582 : vector<8x1xf32> to vector<8x128xf32>
    %1600 = vector.broadcast %71 : vector<1x128xf32> to vector<8x128xf32>
    %1601 = arith.minimumf %1599, %1600 : vector<8x128xf32>
    %1602 = arith.subf %1598, %1592 : vector<8x128xf32>
    %cst_433 = arith.constant 1.000000e+00 : f32
    %1603 = vector.broadcast %cst_433 : f32 to vector<8x128xf32>
    %1604 = arith.addf %1602, %1603 : vector<8x128xf32>
    %cst_434 = arith.constant 0.000000e+00 : f32
    %1605 = vector.broadcast %cst_434 : f32 to vector<8x128xf32>
    %1606 = arith.maximumf %1604, %1605 : vector<8x128xf32>
    %1607 = arith.subf %1601, %1595 : vector<8x128xf32>
    %cst_435 = arith.constant 1.000000e+00 : f32
    %1608 = vector.broadcast %cst_435 : f32 to vector<8x128xf32>
    %1609 = arith.addf %1607, %1608 : vector<8x128xf32>
    %cst_436 = arith.constant 0.000000e+00 : f32
    %1610 = vector.broadcast %cst_436 : f32 to vector<8x128xf32>
    %1611 = arith.maximumf %1609, %1610 : vector<8x128xf32>
    %1612 = arith.mulf %1606, %1611 : vector<8x128xf32>
    %1613 = vector.broadcast %1589 : vector<8x1xf32> to vector<8x128xf32>
    %1614 = vector.broadcast %78 : vector<1x128xf32> to vector<8x128xf32>
    %1615 = arith.addf %1613, %1614 : vector<8x128xf32>
    %1616 = arith.subf %1615, %1612 : vector<8x128xf32>
    %1617 = tpu.iota {dimensions = array<i32: 0>} : vector<8x128xi32>
    %c56_i32 = arith.constant 56 : i32
    %1618 = vector.broadcast %c56_i32 : i32 to vector<8x128xi32>
    %1619 = arith.addi %1618, %1617 : vector<8x128xi32>
    %1620 = tpu.iota {dimensions = array<i32: 1>} : vector<8x128xi32>
    %1621 = arith.cmpi sgt, %1620, %1619 : vector<8x128xi32>
    %cst_437 = arith.constant 0.699999988 : f32
    %1622 = vector.broadcast %cst_437 : f32 to vector<8x128xf32>
    %1623 = arith.mulf %1622, %1616 : vector<8x128xf32>
    %1624 = arith.cmpf ogt, %1612, %1623 : vector<8x128xf32>
    %1625 = arith.andi %1621, %1624 : vector<8x128xi1>
    %cst_438 = arith.constant 1.000000e+00 : f32
    %cst_439 = arith.constant 0.000000e+00 : f32
    %1626 = vector.broadcast %cst_438 : f32 to vector<8x128xf32>
    %1627 = vector.broadcast %cst_439 : f32 to vector<8x128xf32>
    %1628 = arith.select %1625, %1626, %1627 : vector<8x128xi1>, vector<8x128xf32>
    %c56_i32_440 = arith.constant 56 : i32
    %1629 = vector.broadcast %c56_i32_440 : i32 to vector<1x128xi32>
    %1630 = arith.cmpi eq, %91, %1629 : vector<1x128xi32>
    %cst_441 = arith.constant 0.000000e+00 : f32
    %1631 = vector.broadcast %cst_441 : f32 to vector<1x128xf32>
    %1632 = arith.select %1630, %1520, %1631 : vector<1x128xi1>, vector<1x128xf32>
    %1633 = vector.shape_cast %1632 : vector<1x128xf32> to vector<1x1x128xf32>
    %cst_442 = arith.constant dense<0xFF800000> : vector<1xf32>
    %1634 = vector.multi_reduction <maximumf>, %1633, %cst_442 [1, 2] : vector<1x1x128xf32> to vector<1xf32>
    %1635 = vector.shape_cast %1634 : vector<1xf32> to vector<1x1x1xf32>
    %1636 = vector.extract %1635[0, 0, 0] : f32 from vector<1x1x1xf32>
    %1637 = vector.extract_strided_slice %1628 {offsets = [0, 0], sizes = [1, 128], strides = [1, 1]} : vector<8x128xf32> to vector<1x128xf32>
    %cst_443 = arith.constant 0.000000e+00 : f32
    %1638 = arith.cmpf ogt, %1636, %cst_443 : f32
    %1639 = arith.maximumf %1520, %1637 : vector<1x128xf32>
    %1640 = arith.select %1638, %1520, %1639 : vector<1x128xf32>
    %c57_i32 = arith.constant 57 : i32
    %1641 = vector.broadcast %c57_i32 : i32 to vector<1x128xi32>
    %1642 = arith.cmpi eq, %91, %1641 : vector<1x128xi32>
    %cst_444 = arith.constant 0.000000e+00 : f32
    %1643 = vector.broadcast %cst_444 : f32 to vector<1x128xf32>
    %1644 = arith.select %1642, %1640, %1643 : vector<1x128xi1>, vector<1x128xf32>
    %1645 = vector.shape_cast %1644 : vector<1x128xf32> to vector<1x1x128xf32>
    %cst_445 = arith.constant dense<0xFF800000> : vector<1xf32>
    %1646 = vector.multi_reduction <maximumf>, %1645, %cst_445 [1, 2] : vector<1x1x128xf32> to vector<1xf32>
    %1647 = vector.shape_cast %1646 : vector<1xf32> to vector<1x1x1xf32>
    %1648 = vector.extract %1647[0, 0, 0] : f32 from vector<1x1x1xf32>
    %1649 = vector.extract_strided_slice %1628 {offsets = [1, 0], sizes = [1, 128], strides = [1, 1]} : vector<8x128xf32> to vector<1x128xf32>
    %cst_446 = arith.constant 0.000000e+00 : f32
    %1650 = arith.cmpf ogt, %1648, %cst_446 : f32
    %1651 = arith.maximumf %1640, %1649 : vector<1x128xf32>
    %1652 = arith.select %1650, %1640, %1651 : vector<1x128xf32>
    %c58_i32 = arith.constant 58 : i32
    %1653 = vector.broadcast %c58_i32 : i32 to vector<1x128xi32>
    %1654 = arith.cmpi eq, %91, %1653 : vector<1x128xi32>
    %cst_447 = arith.constant 0.000000e+00 : f32
    %1655 = vector.broadcast %cst_447 : f32 to vector<1x128xf32>
    %1656 = arith.select %1654, %1652, %1655 : vector<1x128xi1>, vector<1x128xf32>
    %1657 = vector.shape_cast %1656 : vector<1x128xf32> to vector<1x1x128xf32>
    %cst_448 = arith.constant dense<0xFF800000> : vector<1xf32>
    %1658 = vector.multi_reduction <maximumf>, %1657, %cst_448 [1, 2] : vector<1x1x128xf32> to vector<1xf32>
    %1659 = vector.shape_cast %1658 : vector<1xf32> to vector<1x1x1xf32>
    %1660 = vector.extract %1659[0, 0, 0] : f32 from vector<1x1x1xf32>
    %1661 = vector.extract_strided_slice %1628 {offsets = [2, 0], sizes = [1, 128], strides = [1, 1]} : vector<8x128xf32> to vector<1x128xf32>
    %cst_449 = arith.constant 0.000000e+00 : f32
    %1662 = arith.cmpf ogt, %1660, %cst_449 : f32
    %1663 = arith.maximumf %1652, %1661 : vector<1x128xf32>
    %1664 = arith.select %1662, %1652, %1663 : vector<1x128xf32>
    %c59_i32 = arith.constant 59 : i32
    %1665 = vector.broadcast %c59_i32 : i32 to vector<1x128xi32>
    %1666 = arith.cmpi eq, %91, %1665 : vector<1x128xi32>
    %cst_450 = arith.constant 0.000000e+00 : f32
    %1667 = vector.broadcast %cst_450 : f32 to vector<1x128xf32>
    %1668 = arith.select %1666, %1664, %1667 : vector<1x128xi1>, vector<1x128xf32>
    %1669 = vector.shape_cast %1668 : vector<1x128xf32> to vector<1x1x128xf32>
    %cst_451 = arith.constant dense<0xFF800000> : vector<1xf32>
    %1670 = vector.multi_reduction <maximumf>, %1669, %cst_451 [1, 2] : vector<1x1x128xf32> to vector<1xf32>
    %1671 = vector.shape_cast %1670 : vector<1xf32> to vector<1x1x1xf32>
    %1672 = vector.extract %1671[0, 0, 0] : f32 from vector<1x1x1xf32>
    %1673 = vector.extract_strided_slice %1628 {offsets = [3, 0], sizes = [1, 128], strides = [1, 1]} : vector<8x128xf32> to vector<1x128xf32>
    %cst_452 = arith.constant 0.000000e+00 : f32
    %1674 = arith.cmpf ogt, %1672, %cst_452 : f32
    %1675 = arith.maximumf %1664, %1673 : vector<1x128xf32>
    %1676 = arith.select %1674, %1664, %1675 : vector<1x128xf32>
    %c60_i32 = arith.constant 60 : i32
    %1677 = vector.broadcast %c60_i32 : i32 to vector<1x128xi32>
    %1678 = arith.cmpi eq, %91, %1677 : vector<1x128xi32>
    %cst_453 = arith.constant 0.000000e+00 : f32
    %1679 = vector.broadcast %cst_453 : f32 to vector<1x128xf32>
    %1680 = arith.select %1678, %1676, %1679 : vector<1x128xi1>, vector<1x128xf32>
    %1681 = vector.shape_cast %1680 : vector<1x128xf32> to vector<1x1x128xf32>
    %cst_454 = arith.constant dense<0xFF800000> : vector<1xf32>
    %1682 = vector.multi_reduction <maximumf>, %1681, %cst_454 [1, 2] : vector<1x1x128xf32> to vector<1xf32>
    %1683 = vector.shape_cast %1682 : vector<1xf32> to vector<1x1x1xf32>
    %1684 = vector.extract %1683[0, 0, 0] : f32 from vector<1x1x1xf32>
    %1685 = vector.extract_strided_slice %1628 {offsets = [4, 0], sizes = [1, 128], strides = [1, 1]} : vector<8x128xf32> to vector<1x128xf32>
    %cst_455 = arith.constant 0.000000e+00 : f32
    %1686 = arith.cmpf ogt, %1684, %cst_455 : f32
    %1687 = arith.maximumf %1676, %1685 : vector<1x128xf32>
    %1688 = arith.select %1686, %1676, %1687 : vector<1x128xf32>
    %c61_i32 = arith.constant 61 : i32
    %1689 = vector.broadcast %c61_i32 : i32 to vector<1x128xi32>
    %1690 = arith.cmpi eq, %91, %1689 : vector<1x128xi32>
    %cst_456 = arith.constant 0.000000e+00 : f32
    %1691 = vector.broadcast %cst_456 : f32 to vector<1x128xf32>
    %1692 = arith.select %1690, %1688, %1691 : vector<1x128xi1>, vector<1x128xf32>
    %1693 = vector.shape_cast %1692 : vector<1x128xf32> to vector<1x1x128xf32>
    %cst_457 = arith.constant dense<0xFF800000> : vector<1xf32>
    %1694 = vector.multi_reduction <maximumf>, %1693, %cst_457 [1, 2] : vector<1x1x128xf32> to vector<1xf32>
    %1695 = vector.shape_cast %1694 : vector<1xf32> to vector<1x1x1xf32>
    %1696 = vector.extract %1695[0, 0, 0] : f32 from vector<1x1x1xf32>
    %1697 = vector.extract_strided_slice %1628 {offsets = [5, 0], sizes = [1, 128], strides = [1, 1]} : vector<8x128xf32> to vector<1x128xf32>
    %cst_458 = arith.constant 0.000000e+00 : f32
    %1698 = arith.cmpf ogt, %1696, %cst_458 : f32
    %1699 = arith.maximumf %1688, %1697 : vector<1x128xf32>
    %1700 = arith.select %1698, %1688, %1699 : vector<1x128xf32>
    %c62_i32 = arith.constant 62 : i32
    %1701 = vector.broadcast %c62_i32 : i32 to vector<1x128xi32>
    %1702 = arith.cmpi eq, %91, %1701 : vector<1x128xi32>
    %cst_459 = arith.constant 0.000000e+00 : f32
    %1703 = vector.broadcast %cst_459 : f32 to vector<1x128xf32>
    %1704 = arith.select %1702, %1700, %1703 : vector<1x128xi1>, vector<1x128xf32>
    %1705 = vector.shape_cast %1704 : vector<1x128xf32> to vector<1x1x128xf32>
    %cst_460 = arith.constant dense<0xFF800000> : vector<1xf32>
    %1706 = vector.multi_reduction <maximumf>, %1705, %cst_460 [1, 2] : vector<1x1x128xf32> to vector<1xf32>
    %1707 = vector.shape_cast %1706 : vector<1xf32> to vector<1x1x1xf32>
    %1708 = vector.extract %1707[0, 0, 0] : f32 from vector<1x1x1xf32>
    %1709 = vector.extract_strided_slice %1628 {offsets = [6, 0], sizes = [1, 128], strides = [1, 1]} : vector<8x128xf32> to vector<1x128xf32>
    %cst_461 = arith.constant 0.000000e+00 : f32
    %1710 = arith.cmpf ogt, %1708, %cst_461 : f32
    %1711 = arith.maximumf %1700, %1709 : vector<1x128xf32>
    %1712 = arith.select %1710, %1700, %1711 : vector<1x128xf32>
    %c63_i32 = arith.constant 63 : i32
    %1713 = vector.broadcast %c63_i32 : i32 to vector<1x128xi32>
    %1714 = arith.cmpi eq, %91, %1713 : vector<1x128xi32>
    %cst_462 = arith.constant 0.000000e+00 : f32
    %1715 = vector.broadcast %cst_462 : f32 to vector<1x128xf32>
    %1716 = arith.select %1714, %1712, %1715 : vector<1x128xi1>, vector<1x128xf32>
    %1717 = vector.shape_cast %1716 : vector<1x128xf32> to vector<1x1x128xf32>
    %cst_463 = arith.constant dense<0xFF800000> : vector<1xf32>
    %1718 = vector.multi_reduction <maximumf>, %1717, %cst_463 [1, 2] : vector<1x1x128xf32> to vector<1xf32>
    %1719 = vector.shape_cast %1718 : vector<1xf32> to vector<1x1x1xf32>
    %1720 = vector.extract %1719[0, 0, 0] : f32 from vector<1x1x1xf32>
    %1721 = vector.extract_strided_slice %1628 {offsets = [7, 0], sizes = [1, 128], strides = [1, 1]} : vector<8x128xf32> to vector<1x128xf32>
    %cst_464 = arith.constant 0.000000e+00 : f32
    %1722 = arith.cmpf ogt, %1720, %cst_464 : f32
    %1723 = arith.maximumf %1712, %1721 : vector<1x128xf32>
    %1724 = arith.select %1722, %1712, %1723 : vector<1x128xf32>
    %c0_465 = arith.constant 0 : index
    %c64 = arith.constant 64 : index
    %c0_466 = arith.constant 0 : index
    %1725 = vector.load %arg3[%c0_465, %c64, %c0_466] : memref<1x128x8xf32, #tpu.memory_space<vmem>>, vector<1x8x8xf32>
    %1726 = vector.shape_cast %1725 : vector<1x8x8xf32> to vector<8x8xf32>
    %1727 = vector.extract_strided_slice %1726 {offsets = [0, 0], sizes = [8, 1], strides = [1, 1]} : vector<8x8xf32> to vector<8x1xf32>
    %1728 = vector.extract_strided_slice %1726 {offsets = [0, 1], sizes = [8, 1], strides = [1, 1]} : vector<8x8xf32> to vector<8x1xf32>
    %1729 = vector.extract_strided_slice %1726 {offsets = [0, 2], sizes = [8, 1], strides = [1, 1]} : vector<8x8xf32> to vector<8x1xf32>
    %1730 = vector.extract_strided_slice %1726 {offsets = [0, 3], sizes = [8, 1], strides = [1, 1]} : vector<8x8xf32> to vector<8x1xf32>
    %1731 = vector.extract_strided_slice %1726 {offsets = [0, 4], sizes = [8, 1], strides = [1, 1]} : vector<8x8xf32> to vector<8x1xf32>
    %1732 = vector.extract_strided_slice %1726 {offsets = [0, 5], sizes = [8, 1], strides = [1, 1]} : vector<8x8xf32> to vector<8x1xf32>
    %1733 = vector.extract_strided_slice %1726 {offsets = [0, 6], sizes = [8, 1], strides = [1, 1]} : vector<8x8xf32> to vector<8x1xf32>
    %1734 = vector.extract_strided_slice %1726 {offsets = [0, 7], sizes = [8, 1], strides = [1, 1]} : vector<8x8xf32> to vector<8x1xf32>
    %1735 = arith.subf %1729, %1727 : vector<8x1xf32>
    %cst_467 = arith.constant 1.000000e+00 : f32
    %1736 = vector.broadcast %cst_467 : f32 to vector<8x1xf32>
    %1737 = arith.addf %1735, %1736 : vector<8x1xf32>
    %1738 = arith.subf %1730, %1728 : vector<8x1xf32>
    %cst_468 = arith.constant 1.000000e+00 : f32
    %1739 = vector.broadcast %cst_468 : f32 to vector<8x1xf32>
    %1740 = arith.addf %1738, %1739 : vector<8x1xf32>
    %cst_469 = arith.constant 5.000000e-01 : f32
    %1741 = vector.broadcast %cst_469 : f32 to vector<8x1xf32>
    %1742 = arith.mulf %1741, %1737 : vector<8x1xf32>
    %1743 = arith.addf %1727, %1742 : vector<8x1xf32>
    %cst_470 = arith.constant 5.000000e-01 : f32
    %1744 = vector.broadcast %cst_470 : f32 to vector<8x1xf32>
    %1745 = arith.mulf %1744, %1740 : vector<8x1xf32>
    %1746 = arith.addf %1728, %1745 : vector<8x1xf32>
    %1747 = arith.mulf %1731, %1737 : vector<8x1xf32>
    %1748 = arith.addf %1747, %1743 : vector<8x1xf32>
    %1749 = arith.mulf %1732, %1740 : vector<8x1xf32>
    %1750 = arith.addf %1749, %1746 : vector<8x1xf32>
    %1751 = math.exp %1733 : vector<8x1xf32>
    %1752 = arith.mulf %1751, %1737 : vector<8x1xf32>
    %1753 = math.exp %1734 : vector<8x1xf32>
    %1754 = arith.mulf %1753, %1740 : vector<8x1xf32>
    %cst_471 = arith.constant 5.000000e-01 : f32
    %1755 = vector.broadcast %cst_471 : f32 to vector<8x1xf32>
    %1756 = arith.mulf %1755, %1752 : vector<8x1xf32>
    %1757 = arith.subf %1748, %1756 : vector<8x1xf32>
    %cst_472 = arith.constant 1.000000e+00 : f32
    %1758 = arith.subf %3, %cst_472 : f32
    %cst_473 = arith.constant 0.000000e+00 : f32
    %1759 = vector.broadcast %cst_473 : f32 to vector<8x1xf32>
    %1760 = arith.maximumf %1759, %1757 : vector<8x1xf32>
    %1761 = vector.broadcast %1758 : f32 to vector<8x1xf32>
    %1762 = arith.minimumf %1761, %1760 : vector<8x1xf32>
    %cst_474 = arith.constant 5.000000e-01 : f32
    %1763 = vector.broadcast %cst_474 : f32 to vector<8x1xf32>
    %1764 = arith.mulf %1763, %1754 : vector<8x1xf32>
    %1765 = arith.subf %1750, %1764 : vector<8x1xf32>
    %cst_475 = arith.constant 1.000000e+00 : f32
    %1766 = arith.subf %1, %cst_475 : f32
    %cst_476 = arith.constant 0.000000e+00 : f32
    %1767 = vector.broadcast %cst_476 : f32 to vector<8x1xf32>
    %1768 = arith.maximumf %1767, %1765 : vector<8x1xf32>
    %1769 = vector.broadcast %1766 : f32 to vector<8x1xf32>
    %1770 = arith.minimumf %1769, %1768 : vector<8x1xf32>
    %cst_477 = arith.constant 5.000000e-01 : f32
    %1771 = vector.broadcast %cst_477 : f32 to vector<8x1xf32>
    %1772 = arith.mulf %1771, %1752 : vector<8x1xf32>
    %1773 = arith.addf %1748, %1772 : vector<8x1xf32>
    %cst_478 = arith.constant 1.000000e+00 : f32
    %1774 = arith.subf %3, %cst_478 : f32
    %cst_479 = arith.constant 0.000000e+00 : f32
    %1775 = vector.broadcast %cst_479 : f32 to vector<8x1xf32>
    %1776 = arith.maximumf %1775, %1773 : vector<8x1xf32>
    %1777 = vector.broadcast %1774 : f32 to vector<8x1xf32>
    %1778 = arith.minimumf %1777, %1776 : vector<8x1xf32>
    %cst_480 = arith.constant 5.000000e-01 : f32
    %1779 = vector.broadcast %cst_480 : f32 to vector<8x1xf32>
    %1780 = arith.mulf %1779, %1754 : vector<8x1xf32>
    %1781 = arith.addf %1750, %1780 : vector<8x1xf32>
    %cst_481 = arith.constant 1.000000e+00 : f32
    %1782 = arith.subf %1, %cst_481 : f32
    %cst_482 = arith.constant 0.000000e+00 : f32
    %1783 = vector.broadcast %cst_482 : f32 to vector<8x1xf32>
    %1784 = arith.maximumf %1783, %1781 : vector<8x1xf32>
    %1785 = vector.broadcast %1782 : f32 to vector<8x1xf32>
    %1786 = arith.minimumf %1785, %1784 : vector<8x1xf32>
    %1787 = arith.subf %1778, %1762 : vector<8x1xf32>
    %cst_483 = arith.constant 1.000000e+00 : f32
    %1788 = vector.broadcast %cst_483 : f32 to vector<8x1xf32>
    %1789 = arith.addf %1787, %1788 : vector<8x1xf32>
    %1790 = arith.subf %1786, %1770 : vector<8x1xf32>
    %cst_484 = arith.constant 1.000000e+00 : f32
    %1791 = vector.broadcast %cst_484 : f32 to vector<8x1xf32>
    %1792 = arith.addf %1790, %1791 : vector<8x1xf32>
    %1793 = arith.mulf %1789, %1792 : vector<8x1xf32>
    %1794 = vector.broadcast %1762 : vector<8x1xf32> to vector<8x128xf32>
    %1795 = vector.broadcast %47 : vector<1x128xf32> to vector<8x128xf32>
    %1796 = arith.maximumf %1794, %1795 : vector<8x128xf32>
    %1797 = vector.broadcast %1770 : vector<8x1xf32> to vector<8x128xf32>
    %1798 = vector.broadcast %55 : vector<1x128xf32> to vector<8x128xf32>
    %1799 = arith.maximumf %1797, %1798 : vector<8x128xf32>
    %1800 = vector.broadcast %1778 : vector<8x1xf32> to vector<8x128xf32>
    %1801 = vector.broadcast %63 : vector<1x128xf32> to vector<8x128xf32>
    %1802 = arith.minimumf %1800, %1801 : vector<8x128xf32>
    %1803 = vector.broadcast %1786 : vector<8x1xf32> to vector<8x128xf32>
    %1804 = vector.broadcast %71 : vector<1x128xf32> to vector<8x128xf32>
    %1805 = arith.minimumf %1803, %1804 : vector<8x128xf32>
    %1806 = arith.subf %1802, %1796 : vector<8x128xf32>
    %cst_485 = arith.constant 1.000000e+00 : f32
    %1807 = vector.broadcast %cst_485 : f32 to vector<8x128xf32>
    %1808 = arith.addf %1806, %1807 : vector<8x128xf32>
    %cst_486 = arith.constant 0.000000e+00 : f32
    %1809 = vector.broadcast %cst_486 : f32 to vector<8x128xf32>
    %1810 = arith.maximumf %1808, %1809 : vector<8x128xf32>
    %1811 = arith.subf %1805, %1799 : vector<8x128xf32>
    %cst_487 = arith.constant 1.000000e+00 : f32
    %1812 = vector.broadcast %cst_487 : f32 to vector<8x128xf32>
    %1813 = arith.addf %1811, %1812 : vector<8x128xf32>
    %cst_488 = arith.constant 0.000000e+00 : f32
    %1814 = vector.broadcast %cst_488 : f32 to vector<8x128xf32>
    %1815 = arith.maximumf %1813, %1814 : vector<8x128xf32>
    %1816 = arith.mulf %1810, %1815 : vector<8x128xf32>
    %1817 = vector.broadcast %1793 : vector<8x1xf32> to vector<8x128xf32>
    %1818 = vector.broadcast %78 : vector<1x128xf32> to vector<8x128xf32>
    %1819 = arith.addf %1817, %1818 : vector<8x128xf32>
    %1820 = arith.subf %1819, %1816 : vector<8x128xf32>
    %1821 = tpu.iota {dimensions = array<i32: 0>} : vector<8x128xi32>
    %c64_i32 = arith.constant 64 : i32
    %1822 = vector.broadcast %c64_i32 : i32 to vector<8x128xi32>
    %1823 = arith.addi %1822, %1821 : vector<8x128xi32>
    %1824 = tpu.iota {dimensions = array<i32: 1>} : vector<8x128xi32>
    %1825 = arith.cmpi sgt, %1824, %1823 : vector<8x128xi32>
    %cst_489 = arith.constant 0.699999988 : f32
    %1826 = vector.broadcast %cst_489 : f32 to vector<8x128xf32>
    %1827 = arith.mulf %1826, %1820 : vector<8x128xf32>
    %1828 = arith.cmpf ogt, %1816, %1827 : vector<8x128xf32>
    %1829 = arith.andi %1825, %1828 : vector<8x128xi1>
    %cst_490 = arith.constant 1.000000e+00 : f32
    %cst_491 = arith.constant 0.000000e+00 : f32
    %1830 = vector.broadcast %cst_490 : f32 to vector<8x128xf32>
    %1831 = vector.broadcast %cst_491 : f32 to vector<8x128xf32>
    %1832 = arith.select %1829, %1830, %1831 : vector<8x128xi1>, vector<8x128xf32>
    %c64_i32_492 = arith.constant 64 : i32
    %1833 = vector.broadcast %c64_i32_492 : i32 to vector<1x128xi32>
    %1834 = arith.cmpi eq, %91, %1833 : vector<1x128xi32>
    %cst_493 = arith.constant 0.000000e+00 : f32
    %1835 = vector.broadcast %cst_493 : f32 to vector<1x128xf32>
    %1836 = arith.select %1834, %1724, %1835 : vector<1x128xi1>, vector<1x128xf32>
    %1837 = vector.shape_cast %1836 : vector<1x128xf32> to vector<1x1x128xf32>
    %cst_494 = arith.constant dense<0xFF800000> : vector<1xf32>
    %1838 = vector.multi_reduction <maximumf>, %1837, %cst_494 [1, 2] : vector<1x1x128xf32> to vector<1xf32>
    %1839 = vector.shape_cast %1838 : vector<1xf32> to vector<1x1x1xf32>
    %1840 = vector.extract %1839[0, 0, 0] : f32 from vector<1x1x1xf32>
    %1841 = vector.extract_strided_slice %1832 {offsets = [0, 0], sizes = [1, 128], strides = [1, 1]} : vector<8x128xf32> to vector<1x128xf32>
    %cst_495 = arith.constant 0.000000e+00 : f32
    %1842 = arith.cmpf ogt, %1840, %cst_495 : f32
    %1843 = arith.maximumf %1724, %1841 : vector<1x128xf32>
    %1844 = arith.select %1842, %1724, %1843 : vector<1x128xf32>
    %c65_i32 = arith.constant 65 : i32
    %1845 = vector.broadcast %c65_i32 : i32 to vector<1x128xi32>
    %1846 = arith.cmpi eq, %91, %1845 : vector<1x128xi32>
    %cst_496 = arith.constant 0.000000e+00 : f32
    %1847 = vector.broadcast %cst_496 : f32 to vector<1x128xf32>
    %1848 = arith.select %1846, %1844, %1847 : vector<1x128xi1>, vector<1x128xf32>
    %1849 = vector.shape_cast %1848 : vector<1x128xf32> to vector<1x1x128xf32>
    %cst_497 = arith.constant dense<0xFF800000> : vector<1xf32>
    %1850 = vector.multi_reduction <maximumf>, %1849, %cst_497 [1, 2] : vector<1x1x128xf32> to vector<1xf32>
    %1851 = vector.shape_cast %1850 : vector<1xf32> to vector<1x1x1xf32>
    %1852 = vector.extract %1851[0, 0, 0] : f32 from vector<1x1x1xf32>
    %1853 = vector.extract_strided_slice %1832 {offsets = [1, 0], sizes = [1, 128], strides = [1, 1]} : vector<8x128xf32> to vector<1x128xf32>
    %cst_498 = arith.constant 0.000000e+00 : f32
    %1854 = arith.cmpf ogt, %1852, %cst_498 : f32
    %1855 = arith.maximumf %1844, %1853 : vector<1x128xf32>
    %1856 = arith.select %1854, %1844, %1855 : vector<1x128xf32>
    %c66_i32 = arith.constant 66 : i32
    %1857 = vector.broadcast %c66_i32 : i32 to vector<1x128xi32>
    %1858 = arith.cmpi eq, %91, %1857 : vector<1x128xi32>
    %cst_499 = arith.constant 0.000000e+00 : f32
    %1859 = vector.broadcast %cst_499 : f32 to vector<1x128xf32>
    %1860 = arith.select %1858, %1856, %1859 : vector<1x128xi1>, vector<1x128xf32>
    %1861 = vector.shape_cast %1860 : vector<1x128xf32> to vector<1x1x128xf32>
    %cst_500 = arith.constant dense<0xFF800000> : vector<1xf32>
    %1862 = vector.multi_reduction <maximumf>, %1861, %cst_500 [1, 2] : vector<1x1x128xf32> to vector<1xf32>
    %1863 = vector.shape_cast %1862 : vector<1xf32> to vector<1x1x1xf32>
    %1864 = vector.extract %1863[0, 0, 0] : f32 from vector<1x1x1xf32>
    %1865 = vector.extract_strided_slice %1832 {offsets = [2, 0], sizes = [1, 128], strides = [1, 1]} : vector<8x128xf32> to vector<1x128xf32>
    %cst_501 = arith.constant 0.000000e+00 : f32
    %1866 = arith.cmpf ogt, %1864, %cst_501 : f32
    %1867 = arith.maximumf %1856, %1865 : vector<1x128xf32>
    %1868 = arith.select %1866, %1856, %1867 : vector<1x128xf32>
    %c67_i32 = arith.constant 67 : i32
    %1869 = vector.broadcast %c67_i32 : i32 to vector<1x128xi32>
    %1870 = arith.cmpi eq, %91, %1869 : vector<1x128xi32>
    %cst_502 = arith.constant 0.000000e+00 : f32
    %1871 = vector.broadcast %cst_502 : f32 to vector<1x128xf32>
    %1872 = arith.select %1870, %1868, %1871 : vector<1x128xi1>, vector<1x128xf32>
    %1873 = vector.shape_cast %1872 : vector<1x128xf32> to vector<1x1x128xf32>
    %cst_503 = arith.constant dense<0xFF800000> : vector<1xf32>
    %1874 = vector.multi_reduction <maximumf>, %1873, %cst_503 [1, 2] : vector<1x1x128xf32> to vector<1xf32>
    %1875 = vector.shape_cast %1874 : vector<1xf32> to vector<1x1x1xf32>
    %1876 = vector.extract %1875[0, 0, 0] : f32 from vector<1x1x1xf32>
    %1877 = vector.extract_strided_slice %1832 {offsets = [3, 0], sizes = [1, 128], strides = [1, 1]} : vector<8x128xf32> to vector<1x128xf32>
    %cst_504 = arith.constant 0.000000e+00 : f32
    %1878 = arith.cmpf ogt, %1876, %cst_504 : f32
    %1879 = arith.maximumf %1868, %1877 : vector<1x128xf32>
    %1880 = arith.select %1878, %1868, %1879 : vector<1x128xf32>
    %c68_i32 = arith.constant 68 : i32
    %1881 = vector.broadcast %c68_i32 : i32 to vector<1x128xi32>
    %1882 = arith.cmpi eq, %91, %1881 : vector<1x128xi32>
    %cst_505 = arith.constant 0.000000e+00 : f32
    %1883 = vector.broadcast %cst_505 : f32 to vector<1x128xf32>
    %1884 = arith.select %1882, %1880, %1883 : vector<1x128xi1>, vector<1x128xf32>
    %1885 = vector.shape_cast %1884 : vector<1x128xf32> to vector<1x1x128xf32>
    %cst_506 = arith.constant dense<0xFF800000> : vector<1xf32>
    %1886 = vector.multi_reduction <maximumf>, %1885, %cst_506 [1, 2] : vector<1x1x128xf32> to vector<1xf32>
    %1887 = vector.shape_cast %1886 : vector<1xf32> to vector<1x1x1xf32>
    %1888 = vector.extract %1887[0, 0, 0] : f32 from vector<1x1x1xf32>
    %1889 = vector.extract_strided_slice %1832 {offsets = [4, 0], sizes = [1, 128], strides = [1, 1]} : vector<8x128xf32> to vector<1x128xf32>
    %cst_507 = arith.constant 0.000000e+00 : f32
    %1890 = arith.cmpf ogt, %1888, %cst_507 : f32
    %1891 = arith.maximumf %1880, %1889 : vector<1x128xf32>
    %1892 = arith.select %1890, %1880, %1891 : vector<1x128xf32>
    %c69_i32 = arith.constant 69 : i32
    %1893 = vector.broadcast %c69_i32 : i32 to vector<1x128xi32>
    %1894 = arith.cmpi eq, %91, %1893 : vector<1x128xi32>
    %cst_508 = arith.constant 0.000000e+00 : f32
    %1895 = vector.broadcast %cst_508 : f32 to vector<1x128xf32>
    %1896 = arith.select %1894, %1892, %1895 : vector<1x128xi1>, vector<1x128xf32>
    %1897 = vector.shape_cast %1896 : vector<1x128xf32> to vector<1x1x128xf32>
    %cst_509 = arith.constant dense<0xFF800000> : vector<1xf32>
    %1898 = vector.multi_reduction <maximumf>, %1897, %cst_509 [1, 2] : vector<1x1x128xf32> to vector<1xf32>
    %1899 = vector.shape_cast %1898 : vector<1xf32> to vector<1x1x1xf32>
    %1900 = vector.extract %1899[0, 0, 0] : f32 from vector<1x1x1xf32>
    %1901 = vector.extract_strided_slice %1832 {offsets = [5, 0], sizes = [1, 128], strides = [1, 1]} : vector<8x128xf32> to vector<1x128xf32>
    %cst_510 = arith.constant 0.000000e+00 : f32
    %1902 = arith.cmpf ogt, %1900, %cst_510 : f32
    %1903 = arith.maximumf %1892, %1901 : vector<1x128xf32>
    %1904 = arith.select %1902, %1892, %1903 : vector<1x128xf32>
    %c70_i32 = arith.constant 70 : i32
    %1905 = vector.broadcast %c70_i32 : i32 to vector<1x128xi32>
    %1906 = arith.cmpi eq, %91, %1905 : vector<1x128xi32>
    %cst_511 = arith.constant 0.000000e+00 : f32
    %1907 = vector.broadcast %cst_511 : f32 to vector<1x128xf32>
    %1908 = arith.select %1906, %1904, %1907 : vector<1x128xi1>, vector<1x128xf32>
    %1909 = vector.shape_cast %1908 : vector<1x128xf32> to vector<1x1x128xf32>
    %cst_512 = arith.constant dense<0xFF800000> : vector<1xf32>
    %1910 = vector.multi_reduction <maximumf>, %1909, %cst_512 [1, 2] : vector<1x1x128xf32> to vector<1xf32>
    %1911 = vector.shape_cast %1910 : vector<1xf32> to vector<1x1x1xf32>
    %1912 = vector.extract %1911[0, 0, 0] : f32 from vector<1x1x1xf32>
    %1913 = vector.extract_strided_slice %1832 {offsets = [6, 0], sizes = [1, 128], strides = [1, 1]} : vector<8x128xf32> to vector<1x128xf32>
    %cst_513 = arith.constant 0.000000e+00 : f32
    %1914 = arith.cmpf ogt, %1912, %cst_513 : f32
    %1915 = arith.maximumf %1904, %1913 : vector<1x128xf32>
    %1916 = arith.select %1914, %1904, %1915 : vector<1x128xf32>
    %c71_i32 = arith.constant 71 : i32
    %1917 = vector.broadcast %c71_i32 : i32 to vector<1x128xi32>
    %1918 = arith.cmpi eq, %91, %1917 : vector<1x128xi32>
    %cst_514 = arith.constant 0.000000e+00 : f32
    %1919 = vector.broadcast %cst_514 : f32 to vector<1x128xf32>
    %1920 = arith.select %1918, %1916, %1919 : vector<1x128xi1>, vector<1x128xf32>
    %1921 = vector.shape_cast %1920 : vector<1x128xf32> to vector<1x1x128xf32>
    %cst_515 = arith.constant dense<0xFF800000> : vector<1xf32>
    %1922 = vector.multi_reduction <maximumf>, %1921, %cst_515 [1, 2] : vector<1x1x128xf32> to vector<1xf32>
    %1923 = vector.shape_cast %1922 : vector<1xf32> to vector<1x1x1xf32>
    %1924 = vector.extract %1923[0, 0, 0] : f32 from vector<1x1x1xf32>
    %1925 = vector.extract_strided_slice %1832 {offsets = [7, 0], sizes = [1, 128], strides = [1, 1]} : vector<8x128xf32> to vector<1x128xf32>
    %cst_516 = arith.constant 0.000000e+00 : f32
    %1926 = arith.cmpf ogt, %1924, %cst_516 : f32
    %1927 = arith.maximumf %1916, %1925 : vector<1x128xf32>
    %1928 = arith.select %1926, %1916, %1927 : vector<1x128xf32>
    %c0_517 = arith.constant 0 : index
    %c72 = arith.constant 72 : index
    %c0_518 = arith.constant 0 : index
    %1929 = vector.load %arg3[%c0_517, %c72, %c0_518] : memref<1x128x8xf32, #tpu.memory_space<vmem>>, vector<1x8x8xf32>
    %1930 = vector.shape_cast %1929 : vector<1x8x8xf32> to vector<8x8xf32>
    %1931 = vector.extract_strided_slice %1930 {offsets = [0, 0], sizes = [8, 1], strides = [1, 1]} : vector<8x8xf32> to vector<8x1xf32>
    %1932 = vector.extract_strided_slice %1930 {offsets = [0, 1], sizes = [8, 1], strides = [1, 1]} : vector<8x8xf32> to vector<8x1xf32>
    %1933 = vector.extract_strided_slice %1930 {offsets = [0, 2], sizes = [8, 1], strides = [1, 1]} : vector<8x8xf32> to vector<8x1xf32>
    %1934 = vector.extract_strided_slice %1930 {offsets = [0, 3], sizes = [8, 1], strides = [1, 1]} : vector<8x8xf32> to vector<8x1xf32>
    %1935 = vector.extract_strided_slice %1930 {offsets = [0, 4], sizes = [8, 1], strides = [1, 1]} : vector<8x8xf32> to vector<8x1xf32>
    %1936 = vector.extract_strided_slice %1930 {offsets = [0, 5], sizes = [8, 1], strides = [1, 1]} : vector<8x8xf32> to vector<8x1xf32>
    %1937 = vector.extract_strided_slice %1930 {offsets = [0, 6], sizes = [8, 1], strides = [1, 1]} : vector<8x8xf32> to vector<8x1xf32>
    %1938 = vector.extract_strided_slice %1930 {offsets = [0, 7], sizes = [8, 1], strides = [1, 1]} : vector<8x8xf32> to vector<8x1xf32>
    %1939 = arith.subf %1933, %1931 : vector<8x1xf32>
    %cst_519 = arith.constant 1.000000e+00 : f32
    %1940 = vector.broadcast %cst_519 : f32 to vector<8x1xf32>
    %1941 = arith.addf %1939, %1940 : vector<8x1xf32>
    %1942 = arith.subf %1934, %1932 : vector<8x1xf32>
    %cst_520 = arith.constant 1.000000e+00 : f32
    %1943 = vector.broadcast %cst_520 : f32 to vector<8x1xf32>
    %1944 = arith.addf %1942, %1943 : vector<8x1xf32>
    %cst_521 = arith.constant 5.000000e-01 : f32
    %1945 = vector.broadcast %cst_521 : f32 to vector<8x1xf32>
    %1946 = arith.mulf %1945, %1941 : vector<8x1xf32>
    %1947 = arith.addf %1931, %1946 : vector<8x1xf32>
    %cst_522 = arith.constant 5.000000e-01 : f32
    %1948 = vector.broadcast %cst_522 : f32 to vector<8x1xf32>
    %1949 = arith.mulf %1948, %1944 : vector<8x1xf32>
    %1950 = arith.addf %1932, %1949 : vector<8x1xf32>
    %1951 = arith.mulf %1935, %1941 : vector<8x1xf32>
    %1952 = arith.addf %1951, %1947 : vector<8x1xf32>
    %1953 = arith.mulf %1936, %1944 : vector<8x1xf32>
    %1954 = arith.addf %1953, %1950 : vector<8x1xf32>
    %1955 = math.exp %1937 : vector<8x1xf32>
    %1956 = arith.mulf %1955, %1941 : vector<8x1xf32>
    %1957 = math.exp %1938 : vector<8x1xf32>
    %1958 = arith.mulf %1957, %1944 : vector<8x1xf32>
    %cst_523 = arith.constant 5.000000e-01 : f32
    %1959 = vector.broadcast %cst_523 : f32 to vector<8x1xf32>
    %1960 = arith.mulf %1959, %1956 : vector<8x1xf32>
    %1961 = arith.subf %1952, %1960 : vector<8x1xf32>
    %cst_524 = arith.constant 1.000000e+00 : f32
    %1962 = arith.subf %3, %cst_524 : f32
    %cst_525 = arith.constant 0.000000e+00 : f32
    %1963 = vector.broadcast %cst_525 : f32 to vector<8x1xf32>
    %1964 = arith.maximumf %1963, %1961 : vector<8x1xf32>
    %1965 = vector.broadcast %1962 : f32 to vector<8x1xf32>
    %1966 = arith.minimumf %1965, %1964 : vector<8x1xf32>
    %cst_526 = arith.constant 5.000000e-01 : f32
    %1967 = vector.broadcast %cst_526 : f32 to vector<8x1xf32>
    %1968 = arith.mulf %1967, %1958 : vector<8x1xf32>
    %1969 = arith.subf %1954, %1968 : vector<8x1xf32>
    %cst_527 = arith.constant 1.000000e+00 : f32
    %1970 = arith.subf %1, %cst_527 : f32
    %cst_528 = arith.constant 0.000000e+00 : f32
    %1971 = vector.broadcast %cst_528 : f32 to vector<8x1xf32>
    %1972 = arith.maximumf %1971, %1969 : vector<8x1xf32>
    %1973 = vector.broadcast %1970 : f32 to vector<8x1xf32>
    %1974 = arith.minimumf %1973, %1972 : vector<8x1xf32>
    %cst_529 = arith.constant 5.000000e-01 : f32
    %1975 = vector.broadcast %cst_529 : f32 to vector<8x1xf32>
    %1976 = arith.mulf %1975, %1956 : vector<8x1xf32>
    %1977 = arith.addf %1952, %1976 : vector<8x1xf32>
    %cst_530 = arith.constant 1.000000e+00 : f32
    %1978 = arith.subf %3, %cst_530 : f32
    %cst_531 = arith.constant 0.000000e+00 : f32
    %1979 = vector.broadcast %cst_531 : f32 to vector<8x1xf32>
    %1980 = arith.maximumf %1979, %1977 : vector<8x1xf32>
    %1981 = vector.broadcast %1978 : f32 to vector<8x1xf32>
    %1982 = arith.minimumf %1981, %1980 : vector<8x1xf32>
    %cst_532 = arith.constant 5.000000e-01 : f32
    %1983 = vector.broadcast %cst_532 : f32 to vector<8x1xf32>
    %1984 = arith.mulf %1983, %1958 : vector<8x1xf32>
    %1985 = arith.addf %1954, %1984 : vector<8x1xf32>
    %cst_533 = arith.constant 1.000000e+00 : f32
    %1986 = arith.subf %1, %cst_533 : f32
    %cst_534 = arith.constant 0.000000e+00 : f32
    %1987 = vector.broadcast %cst_534 : f32 to vector<8x1xf32>
    %1988 = arith.maximumf %1987, %1985 : vector<8x1xf32>
    %1989 = vector.broadcast %1986 : f32 to vector<8x1xf32>
    %1990 = arith.minimumf %1989, %1988 : vector<8x1xf32>
    %1991 = arith.subf %1982, %1966 : vector<8x1xf32>
    %cst_535 = arith.constant 1.000000e+00 : f32
    %1992 = vector.broadcast %cst_535 : f32 to vector<8x1xf32>
    %1993 = arith.addf %1991, %1992 : vector<8x1xf32>
    %1994 = arith.subf %1990, %1974 : vector<8x1xf32>
    %cst_536 = arith.constant 1.000000e+00 : f32
    %1995 = vector.broadcast %cst_536 : f32 to vector<8x1xf32>
    %1996 = arith.addf %1994, %1995 : vector<8x1xf32>
    %1997 = arith.mulf %1993, %1996 : vector<8x1xf32>
    %1998 = vector.broadcast %1966 : vector<8x1xf32> to vector<8x128xf32>
    %1999 = vector.broadcast %47 : vector<1x128xf32> to vector<8x128xf32>
    %2000 = arith.maximumf %1998, %1999 : vector<8x128xf32>
    %2001 = vector.broadcast %1974 : vector<8x1xf32> to vector<8x128xf32>
    %2002 = vector.broadcast %55 : vector<1x128xf32> to vector<8x128xf32>
    %2003 = arith.maximumf %2001, %2002 : vector<8x128xf32>
    %2004 = vector.broadcast %1982 : vector<8x1xf32> to vector<8x128xf32>
    %2005 = vector.broadcast %63 : vector<1x128xf32> to vector<8x128xf32>
    %2006 = arith.minimumf %2004, %2005 : vector<8x128xf32>
    %2007 = vector.broadcast %1990 : vector<8x1xf32> to vector<8x128xf32>
    %2008 = vector.broadcast %71 : vector<1x128xf32> to vector<8x128xf32>
    %2009 = arith.minimumf %2007, %2008 : vector<8x128xf32>
    %2010 = arith.subf %2006, %2000 : vector<8x128xf32>
    %cst_537 = arith.constant 1.000000e+00 : f32
    %2011 = vector.broadcast %cst_537 : f32 to vector<8x128xf32>
    %2012 = arith.addf %2010, %2011 : vector<8x128xf32>
    %cst_538 = arith.constant 0.000000e+00 : f32
    %2013 = vector.broadcast %cst_538 : f32 to vector<8x128xf32>
    %2014 = arith.maximumf %2012, %2013 : vector<8x128xf32>
    %2015 = arith.subf %2009, %2003 : vector<8x128xf32>
    %cst_539 = arith.constant 1.000000e+00 : f32
    %2016 = vector.broadcast %cst_539 : f32 to vector<8x128xf32>
    %2017 = arith.addf %2015, %2016 : vector<8x128xf32>
    %cst_540 = arith.constant 0.000000e+00 : f32
    %2018 = vector.broadcast %cst_540 : f32 to vector<8x128xf32>
    %2019 = arith.maximumf %2017, %2018 : vector<8x128xf32>
    %2020 = arith.mulf %2014, %2019 : vector<8x128xf32>
    %2021 = vector.broadcast %1997 : vector<8x1xf32> to vector<8x128xf32>
    %2022 = vector.broadcast %78 : vector<1x128xf32> to vector<8x128xf32>
    %2023 = arith.addf %2021, %2022 : vector<8x128xf32>
    %2024 = arith.subf %2023, %2020 : vector<8x128xf32>
    %2025 = tpu.iota {dimensions = array<i32: 0>} : vector<8x128xi32>
    %c72_i32 = arith.constant 72 : i32
    %2026 = vector.broadcast %c72_i32 : i32 to vector<8x128xi32>
    %2027 = arith.addi %2026, %2025 : vector<8x128xi32>
    %2028 = tpu.iota {dimensions = array<i32: 1>} : vector<8x128xi32>
    %2029 = arith.cmpi sgt, %2028, %2027 : vector<8x128xi32>
    %cst_541 = arith.constant 0.699999988 : f32
    %2030 = vector.broadcast %cst_541 : f32 to vector<8x128xf32>
    %2031 = arith.mulf %2030, %2024 : vector<8x128xf32>
    %2032 = arith.cmpf ogt, %2020, %2031 : vector<8x128xf32>
    %2033 = arith.andi %2029, %2032 : vector<8x128xi1>
    %cst_542 = arith.constant 1.000000e+00 : f32
    %cst_543 = arith.constant 0.000000e+00 : f32
    %2034 = vector.broadcast %cst_542 : f32 to vector<8x128xf32>
    %2035 = vector.broadcast %cst_543 : f32 to vector<8x128xf32>
    %2036 = arith.select %2033, %2034, %2035 : vector<8x128xi1>, vector<8x128xf32>
    %c72_i32_544 = arith.constant 72 : i32
    %2037 = vector.broadcast %c72_i32_544 : i32 to vector<1x128xi32>
    %2038 = arith.cmpi eq, %91, %2037 : vector<1x128xi32>
    %cst_545 = arith.constant 0.000000e+00 : f32
    %2039 = vector.broadcast %cst_545 : f32 to vector<1x128xf32>
    %2040 = arith.select %2038, %1928, %2039 : vector<1x128xi1>, vector<1x128xf32>
    %2041 = vector.shape_cast %2040 : vector<1x128xf32> to vector<1x1x128xf32>
    %cst_546 = arith.constant dense<0xFF800000> : vector<1xf32>
    %2042 = vector.multi_reduction <maximumf>, %2041, %cst_546 [1, 2] : vector<1x1x128xf32> to vector<1xf32>
    %2043 = vector.shape_cast %2042 : vector<1xf32> to vector<1x1x1xf32>
    %2044 = vector.extract %2043[0, 0, 0] : f32 from vector<1x1x1xf32>
    %2045 = vector.extract_strided_slice %2036 {offsets = [0, 0], sizes = [1, 128], strides = [1, 1]} : vector<8x128xf32> to vector<1x128xf32>
    %cst_547 = arith.constant 0.000000e+00 : f32
    %2046 = arith.cmpf ogt, %2044, %cst_547 : f32
    %2047 = arith.maximumf %1928, %2045 : vector<1x128xf32>
    %2048 = arith.select %2046, %1928, %2047 : vector<1x128xf32>
    %c73_i32 = arith.constant 73 : i32
    %2049 = vector.broadcast %c73_i32 : i32 to vector<1x128xi32>
    %2050 = arith.cmpi eq, %91, %2049 : vector<1x128xi32>
    %cst_548 = arith.constant 0.000000e+00 : f32
    %2051 = vector.broadcast %cst_548 : f32 to vector<1x128xf32>
    %2052 = arith.select %2050, %2048, %2051 : vector<1x128xi1>, vector<1x128xf32>
    %2053 = vector.shape_cast %2052 : vector<1x128xf32> to vector<1x1x128xf32>
    %cst_549 = arith.constant dense<0xFF800000> : vector<1xf32>
    %2054 = vector.multi_reduction <maximumf>, %2053, %cst_549 [1, 2] : vector<1x1x128xf32> to vector<1xf32>
    %2055 = vector.shape_cast %2054 : vector<1xf32> to vector<1x1x1xf32>
    %2056 = vector.extract %2055[0, 0, 0] : f32 from vector<1x1x1xf32>
    %2057 = vector.extract_strided_slice %2036 {offsets = [1, 0], sizes = [1, 128], strides = [1, 1]} : vector<8x128xf32> to vector<1x128xf32>
    %cst_550 = arith.constant 0.000000e+00 : f32
    %2058 = arith.cmpf ogt, %2056, %cst_550 : f32
    %2059 = arith.maximumf %2048, %2057 : vector<1x128xf32>
    %2060 = arith.select %2058, %2048, %2059 : vector<1x128xf32>
    %c74_i32 = arith.constant 74 : i32
    %2061 = vector.broadcast %c74_i32 : i32 to vector<1x128xi32>
    %2062 = arith.cmpi eq, %91, %2061 : vector<1x128xi32>
    %cst_551 = arith.constant 0.000000e+00 : f32
    %2063 = vector.broadcast %cst_551 : f32 to vector<1x128xf32>
    %2064 = arith.select %2062, %2060, %2063 : vector<1x128xi1>, vector<1x128xf32>
    %2065 = vector.shape_cast %2064 : vector<1x128xf32> to vector<1x1x128xf32>
    %cst_552 = arith.constant dense<0xFF800000> : vector<1xf32>
    %2066 = vector.multi_reduction <maximumf>, %2065, %cst_552 [1, 2] : vector<1x1x128xf32> to vector<1xf32>
    %2067 = vector.shape_cast %2066 : vector<1xf32> to vector<1x1x1xf32>
    %2068 = vector.extract %2067[0, 0, 0] : f32 from vector<1x1x1xf32>
    %2069 = vector.extract_strided_slice %2036 {offsets = [2, 0], sizes = [1, 128], strides = [1, 1]} : vector<8x128xf32> to vector<1x128xf32>
    %cst_553 = arith.constant 0.000000e+00 : f32
    %2070 = arith.cmpf ogt, %2068, %cst_553 : f32
    %2071 = arith.maximumf %2060, %2069 : vector<1x128xf32>
    %2072 = arith.select %2070, %2060, %2071 : vector<1x128xf32>
    %c75_i32 = arith.constant 75 : i32
    %2073 = vector.broadcast %c75_i32 : i32 to vector<1x128xi32>
    %2074 = arith.cmpi eq, %91, %2073 : vector<1x128xi32>
    %cst_554 = arith.constant 0.000000e+00 : f32
    %2075 = vector.broadcast %cst_554 : f32 to vector<1x128xf32>
    %2076 = arith.select %2074, %2072, %2075 : vector<1x128xi1>, vector<1x128xf32>
    %2077 = vector.shape_cast %2076 : vector<1x128xf32> to vector<1x1x128xf32>
    %cst_555 = arith.constant dense<0xFF800000> : vector<1xf32>
    %2078 = vector.multi_reduction <maximumf>, %2077, %cst_555 [1, 2] : vector<1x1x128xf32> to vector<1xf32>
    %2079 = vector.shape_cast %2078 : vector<1xf32> to vector<1x1x1xf32>
    %2080 = vector.extract %2079[0, 0, 0] : f32 from vector<1x1x1xf32>
    %2081 = vector.extract_strided_slice %2036 {offsets = [3, 0], sizes = [1, 128], strides = [1, 1]} : vector<8x128xf32> to vector<1x128xf32>
    %cst_556 = arith.constant 0.000000e+00 : f32
    %2082 = arith.cmpf ogt, %2080, %cst_556 : f32
    %2083 = arith.maximumf %2072, %2081 : vector<1x128xf32>
    %2084 = arith.select %2082, %2072, %2083 : vector<1x128xf32>
    %c76_i32 = arith.constant 76 : i32
    %2085 = vector.broadcast %c76_i32 : i32 to vector<1x128xi32>
    %2086 = arith.cmpi eq, %91, %2085 : vector<1x128xi32>
    %cst_557 = arith.constant 0.000000e+00 : f32
    %2087 = vector.broadcast %cst_557 : f32 to vector<1x128xf32>
    %2088 = arith.select %2086, %2084, %2087 : vector<1x128xi1>, vector<1x128xf32>
    %2089 = vector.shape_cast %2088 : vector<1x128xf32> to vector<1x1x128xf32>
    %cst_558 = arith.constant dense<0xFF800000> : vector<1xf32>
    %2090 = vector.multi_reduction <maximumf>, %2089, %cst_558 [1, 2] : vector<1x1x128xf32> to vector<1xf32>
    %2091 = vector.shape_cast %2090 : vector<1xf32> to vector<1x1x1xf32>
    %2092 = vector.extract %2091[0, 0, 0] : f32 from vector<1x1x1xf32>
    %2093 = vector.extract_strided_slice %2036 {offsets = [4, 0], sizes = [1, 128], strides = [1, 1]} : vector<8x128xf32> to vector<1x128xf32>
    %cst_559 = arith.constant 0.000000e+00 : f32
    %2094 = arith.cmpf ogt, %2092, %cst_559 : f32
    %2095 = arith.maximumf %2084, %2093 : vector<1x128xf32>
    %2096 = arith.select %2094, %2084, %2095 : vector<1x128xf32>
    %c77_i32 = arith.constant 77 : i32
    %2097 = vector.broadcast %c77_i32 : i32 to vector<1x128xi32>
    %2098 = arith.cmpi eq, %91, %2097 : vector<1x128xi32>
    %cst_560 = arith.constant 0.000000e+00 : f32
    %2099 = vector.broadcast %cst_560 : f32 to vector<1x128xf32>
    %2100 = arith.select %2098, %2096, %2099 : vector<1x128xi1>, vector<1x128xf32>
    %2101 = vector.shape_cast %2100 : vector<1x128xf32> to vector<1x1x128xf32>
    %cst_561 = arith.constant dense<0xFF800000> : vector<1xf32>
    %2102 = vector.multi_reduction <maximumf>, %2101, %cst_561 [1, 2] : vector<1x1x128xf32> to vector<1xf32>
    %2103 = vector.shape_cast %2102 : vector<1xf32> to vector<1x1x1xf32>
    %2104 = vector.extract %2103[0, 0, 0] : f32 from vector<1x1x1xf32>
    %2105 = vector.extract_strided_slice %2036 {offsets = [5, 0], sizes = [1, 128], strides = [1, 1]} : vector<8x128xf32> to vector<1x128xf32>
    %cst_562 = arith.constant 0.000000e+00 : f32
    %2106 = arith.cmpf ogt, %2104, %cst_562 : f32
    %2107 = arith.maximumf %2096, %2105 : vector<1x128xf32>
    %2108 = arith.select %2106, %2096, %2107 : vector<1x128xf32>
    %c78_i32 = arith.constant 78 : i32
    %2109 = vector.broadcast %c78_i32 : i32 to vector<1x128xi32>
    %2110 = arith.cmpi eq, %91, %2109 : vector<1x128xi32>
    %cst_563 = arith.constant 0.000000e+00 : f32
    %2111 = vector.broadcast %cst_563 : f32 to vector<1x128xf32>
    %2112 = arith.select %2110, %2108, %2111 : vector<1x128xi1>, vector<1x128xf32>
    %2113 = vector.shape_cast %2112 : vector<1x128xf32> to vector<1x1x128xf32>
    %cst_564 = arith.constant dense<0xFF800000> : vector<1xf32>
    %2114 = vector.multi_reduction <maximumf>, %2113, %cst_564 [1, 2] : vector<1x1x128xf32> to vector<1xf32>
    %2115 = vector.shape_cast %2114 : vector<1xf32> to vector<1x1x1xf32>
    %2116 = vector.extract %2115[0, 0, 0] : f32 from vector<1x1x1xf32>
    %2117 = vector.extract_strided_slice %2036 {offsets = [6, 0], sizes = [1, 128], strides = [1, 1]} : vector<8x128xf32> to vector<1x128xf32>
    %cst_565 = arith.constant 0.000000e+00 : f32
    %2118 = arith.cmpf ogt, %2116, %cst_565 : f32
    %2119 = arith.maximumf %2108, %2117 : vector<1x128xf32>
    %2120 = arith.select %2118, %2108, %2119 : vector<1x128xf32>
    %c79_i32 = arith.constant 79 : i32
    %2121 = vector.broadcast %c79_i32 : i32 to vector<1x128xi32>
    %2122 = arith.cmpi eq, %91, %2121 : vector<1x128xi32>
    %cst_566 = arith.constant 0.000000e+00 : f32
    %2123 = vector.broadcast %cst_566 : f32 to vector<1x128xf32>
    %2124 = arith.select %2122, %2120, %2123 : vector<1x128xi1>, vector<1x128xf32>
    %2125 = vector.shape_cast %2124 : vector<1x128xf32> to vector<1x1x128xf32>
    %cst_567 = arith.constant dense<0xFF800000> : vector<1xf32>
    %2126 = vector.multi_reduction <maximumf>, %2125, %cst_567 [1, 2] : vector<1x1x128xf32> to vector<1xf32>
    %2127 = vector.shape_cast %2126 : vector<1xf32> to vector<1x1x1xf32>
    %2128 = vector.extract %2127[0, 0, 0] : f32 from vector<1x1x1xf32>
    %2129 = vector.extract_strided_slice %2036 {offsets = [7, 0], sizes = [1, 128], strides = [1, 1]} : vector<8x128xf32> to vector<1x128xf32>
    %cst_568 = arith.constant 0.000000e+00 : f32
    %2130 = arith.cmpf ogt, %2128, %cst_568 : f32
    %2131 = arith.maximumf %2120, %2129 : vector<1x128xf32>
    %2132 = arith.select %2130, %2120, %2131 : vector<1x128xf32>
    %c0_569 = arith.constant 0 : index
    %c80 = arith.constant 80 : index
    %c0_570 = arith.constant 0 : index
    %2133 = vector.load %arg3[%c0_569, %c80, %c0_570] : memref<1x128x8xf32, #tpu.memory_space<vmem>>, vector<1x8x8xf32>
    %2134 = vector.shape_cast %2133 : vector<1x8x8xf32> to vector<8x8xf32>
    %2135 = vector.extract_strided_slice %2134 {offsets = [0, 0], sizes = [8, 1], strides = [1, 1]} : vector<8x8xf32> to vector<8x1xf32>
    %2136 = vector.extract_strided_slice %2134 {offsets = [0, 1], sizes = [8, 1], strides = [1, 1]} : vector<8x8xf32> to vector<8x1xf32>
    %2137 = vector.extract_strided_slice %2134 {offsets = [0, 2], sizes = [8, 1], strides = [1, 1]} : vector<8x8xf32> to vector<8x1xf32>
    %2138 = vector.extract_strided_slice %2134 {offsets = [0, 3], sizes = [8, 1], strides = [1, 1]} : vector<8x8xf32> to vector<8x1xf32>
    %2139 = vector.extract_strided_slice %2134 {offsets = [0, 4], sizes = [8, 1], strides = [1, 1]} : vector<8x8xf32> to vector<8x1xf32>
    %2140 = vector.extract_strided_slice %2134 {offsets = [0, 5], sizes = [8, 1], strides = [1, 1]} : vector<8x8xf32> to vector<8x1xf32>
    %2141 = vector.extract_strided_slice %2134 {offsets = [0, 6], sizes = [8, 1], strides = [1, 1]} : vector<8x8xf32> to vector<8x1xf32>
    %2142 = vector.extract_strided_slice %2134 {offsets = [0, 7], sizes = [8, 1], strides = [1, 1]} : vector<8x8xf32> to vector<8x1xf32>
    %2143 = arith.subf %2137, %2135 : vector<8x1xf32>
    %cst_571 = arith.constant 1.000000e+00 : f32
    %2144 = vector.broadcast %cst_571 : f32 to vector<8x1xf32>
    %2145 = arith.addf %2143, %2144 : vector<8x1xf32>
    %2146 = arith.subf %2138, %2136 : vector<8x1xf32>
    %cst_572 = arith.constant 1.000000e+00 : f32
    %2147 = vector.broadcast %cst_572 : f32 to vector<8x1xf32>
    %2148 = arith.addf %2146, %2147 : vector<8x1xf32>
    %cst_573 = arith.constant 5.000000e-01 : f32
    %2149 = vector.broadcast %cst_573 : f32 to vector<8x1xf32>
    %2150 = arith.mulf %2149, %2145 : vector<8x1xf32>
    %2151 = arith.addf %2135, %2150 : vector<8x1xf32>
    %cst_574 = arith.constant 5.000000e-01 : f32
    %2152 = vector.broadcast %cst_574 : f32 to vector<8x1xf32>
    %2153 = arith.mulf %2152, %2148 : vector<8x1xf32>
    %2154 = arith.addf %2136, %2153 : vector<8x1xf32>
    %2155 = arith.mulf %2139, %2145 : vector<8x1xf32>
    %2156 = arith.addf %2155, %2151 : vector<8x1xf32>
    %2157 = arith.mulf %2140, %2148 : vector<8x1xf32>
    %2158 = arith.addf %2157, %2154 : vector<8x1xf32>
    %2159 = math.exp %2141 : vector<8x1xf32>
    %2160 = arith.mulf %2159, %2145 : vector<8x1xf32>
    %2161 = math.exp %2142 : vector<8x1xf32>
    %2162 = arith.mulf %2161, %2148 : vector<8x1xf32>
    %cst_575 = arith.constant 5.000000e-01 : f32
    %2163 = vector.broadcast %cst_575 : f32 to vector<8x1xf32>
    %2164 = arith.mulf %2163, %2160 : vector<8x1xf32>
    %2165 = arith.subf %2156, %2164 : vector<8x1xf32>
    %cst_576 = arith.constant 1.000000e+00 : f32
    %2166 = arith.subf %3, %cst_576 : f32
    %cst_577 = arith.constant 0.000000e+00 : f32
    %2167 = vector.broadcast %cst_577 : f32 to vector<8x1xf32>
    %2168 = arith.maximumf %2167, %2165 : vector<8x1xf32>
    %2169 = vector.broadcast %2166 : f32 to vector<8x1xf32>
    %2170 = arith.minimumf %2169, %2168 : vector<8x1xf32>
    %cst_578 = arith.constant 5.000000e-01 : f32
    %2171 = vector.broadcast %cst_578 : f32 to vector<8x1xf32>
    %2172 = arith.mulf %2171, %2162 : vector<8x1xf32>
    %2173 = arith.subf %2158, %2172 : vector<8x1xf32>
    %cst_579 = arith.constant 1.000000e+00 : f32
    %2174 = arith.subf %1, %cst_579 : f32
    %cst_580 = arith.constant 0.000000e+00 : f32
    %2175 = vector.broadcast %cst_580 : f32 to vector<8x1xf32>
    %2176 = arith.maximumf %2175, %2173 : vector<8x1xf32>
    %2177 = vector.broadcast %2174 : f32 to vector<8x1xf32>
    %2178 = arith.minimumf %2177, %2176 : vector<8x1xf32>
    %cst_581 = arith.constant 5.000000e-01 : f32
    %2179 = vector.broadcast %cst_581 : f32 to vector<8x1xf32>
    %2180 = arith.mulf %2179, %2160 : vector<8x1xf32>
    %2181 = arith.addf %2156, %2180 : vector<8x1xf32>
    %cst_582 = arith.constant 1.000000e+00 : f32
    %2182 = arith.subf %3, %cst_582 : f32
    %cst_583 = arith.constant 0.000000e+00 : f32
    %2183 = vector.broadcast %cst_583 : f32 to vector<8x1xf32>
    %2184 = arith.maximumf %2183, %2181 : vector<8x1xf32>
    %2185 = vector.broadcast %2182 : f32 to vector<8x1xf32>
    %2186 = arith.minimumf %2185, %2184 : vector<8x1xf32>
    %cst_584 = arith.constant 5.000000e-01 : f32
    %2187 = vector.broadcast %cst_584 : f32 to vector<8x1xf32>
    %2188 = arith.mulf %2187, %2162 : vector<8x1xf32>
    %2189 = arith.addf %2158, %2188 : vector<8x1xf32>
    %cst_585 = arith.constant 1.000000e+00 : f32
    %2190 = arith.subf %1, %cst_585 : f32
    %cst_586 = arith.constant 0.000000e+00 : f32
    %2191 = vector.broadcast %cst_586 : f32 to vector<8x1xf32>
    %2192 = arith.maximumf %2191, %2189 : vector<8x1xf32>
    %2193 = vector.broadcast %2190 : f32 to vector<8x1xf32>
    %2194 = arith.minimumf %2193, %2192 : vector<8x1xf32>
    %2195 = arith.subf %2186, %2170 : vector<8x1xf32>
    %cst_587 = arith.constant 1.000000e+00 : f32
    %2196 = vector.broadcast %cst_587 : f32 to vector<8x1xf32>
    %2197 = arith.addf %2195, %2196 : vector<8x1xf32>
    %2198 = arith.subf %2194, %2178 : vector<8x1xf32>
    %cst_588 = arith.constant 1.000000e+00 : f32
    %2199 = vector.broadcast %cst_588 : f32 to vector<8x1xf32>
    %2200 = arith.addf %2198, %2199 : vector<8x1xf32>
    %2201 = arith.mulf %2197, %2200 : vector<8x1xf32>
    %2202 = vector.broadcast %2170 : vector<8x1xf32> to vector<8x128xf32>
    %2203 = vector.broadcast %47 : vector<1x128xf32> to vector<8x128xf32>
    %2204 = arith.maximumf %2202, %2203 : vector<8x128xf32>
    %2205 = vector.broadcast %2178 : vector<8x1xf32> to vector<8x128xf32>
    %2206 = vector.broadcast %55 : vector<1x128xf32> to vector<8x128xf32>
    %2207 = arith.maximumf %2205, %2206 : vector<8x128xf32>
    %2208 = vector.broadcast %2186 : vector<8x1xf32> to vector<8x128xf32>
    %2209 = vector.broadcast %63 : vector<1x128xf32> to vector<8x128xf32>
    %2210 = arith.minimumf %2208, %2209 : vector<8x128xf32>
    %2211 = vector.broadcast %2194 : vector<8x1xf32> to vector<8x128xf32>
    %2212 = vector.broadcast %71 : vector<1x128xf32> to vector<8x128xf32>
    %2213 = arith.minimumf %2211, %2212 : vector<8x128xf32>
    %2214 = arith.subf %2210, %2204 : vector<8x128xf32>
    %cst_589 = arith.constant 1.000000e+00 : f32
    %2215 = vector.broadcast %cst_589 : f32 to vector<8x128xf32>
    %2216 = arith.addf %2214, %2215 : vector<8x128xf32>
    %cst_590 = arith.constant 0.000000e+00 : f32
    %2217 = vector.broadcast %cst_590 : f32 to vector<8x128xf32>
    %2218 = arith.maximumf %2216, %2217 : vector<8x128xf32>
    %2219 = arith.subf %2213, %2207 : vector<8x128xf32>
    %cst_591 = arith.constant 1.000000e+00 : f32
    %2220 = vector.broadcast %cst_591 : f32 to vector<8x128xf32>
    %2221 = arith.addf %2219, %2220 : vector<8x128xf32>
    %cst_592 = arith.constant 0.000000e+00 : f32
    %2222 = vector.broadcast %cst_592 : f32 to vector<8x128xf32>
    %2223 = arith.maximumf %2221, %2222 : vector<8x128xf32>
    %2224 = arith.mulf %2218, %2223 : vector<8x128xf32>
    %2225 = vector.broadcast %2201 : vector<8x1xf32> to vector<8x128xf32>
    %2226 = vector.broadcast %78 : vector<1x128xf32> to vector<8x128xf32>
    %2227 = arith.addf %2225, %2226 : vector<8x128xf32>
    %2228 = arith.subf %2227, %2224 : vector<8x128xf32>
    %2229 = tpu.iota {dimensions = array<i32: 0>} : vector<8x128xi32>
    %c80_i32 = arith.constant 80 : i32
    %2230 = vector.broadcast %c80_i32 : i32 to vector<8x128xi32>
    %2231 = arith.addi %2230, %2229 : vector<8x128xi32>
    %2232 = tpu.iota {dimensions = array<i32: 1>} : vector<8x128xi32>
    %2233 = arith.cmpi sgt, %2232, %2231 : vector<8x128xi32>
    %cst_593 = arith.constant 0.699999988 : f32
    %2234 = vector.broadcast %cst_593 : f32 to vector<8x128xf32>
    %2235 = arith.mulf %2234, %2228 : vector<8x128xf32>
    %2236 = arith.cmpf ogt, %2224, %2235 : vector<8x128xf32>
    %2237 = arith.andi %2233, %2236 : vector<8x128xi1>
    %cst_594 = arith.constant 1.000000e+00 : f32
    %cst_595 = arith.constant 0.000000e+00 : f32
    %2238 = vector.broadcast %cst_594 : f32 to vector<8x128xf32>
    %2239 = vector.broadcast %cst_595 : f32 to vector<8x128xf32>
    %2240 = arith.select %2237, %2238, %2239 : vector<8x128xi1>, vector<8x128xf32>
    %c80_i32_596 = arith.constant 80 : i32
    %2241 = vector.broadcast %c80_i32_596 : i32 to vector<1x128xi32>
    %2242 = arith.cmpi eq, %91, %2241 : vector<1x128xi32>
    %cst_597 = arith.constant 0.000000e+00 : f32
    %2243 = vector.broadcast %cst_597 : f32 to vector<1x128xf32>
    %2244 = arith.select %2242, %2132, %2243 : vector<1x128xi1>, vector<1x128xf32>
    %2245 = vector.shape_cast %2244 : vector<1x128xf32> to vector<1x1x128xf32>
    %cst_598 = arith.constant dense<0xFF800000> : vector<1xf32>
    %2246 = vector.multi_reduction <maximumf>, %2245, %cst_598 [1, 2] : vector<1x1x128xf32> to vector<1xf32>
    %2247 = vector.shape_cast %2246 : vector<1xf32> to vector<1x1x1xf32>
    %2248 = vector.extract %2247[0, 0, 0] : f32 from vector<1x1x1xf32>
    %2249 = vector.extract_strided_slice %2240 {offsets = [0, 0], sizes = [1, 128], strides = [1, 1]} : vector<8x128xf32> to vector<1x128xf32>
    %cst_599 = arith.constant 0.000000e+00 : f32
    %2250 = arith.cmpf ogt, %2248, %cst_599 : f32
    %2251 = arith.maximumf %2132, %2249 : vector<1x128xf32>
    %2252 = arith.select %2250, %2132, %2251 : vector<1x128xf32>
    %c81_i32 = arith.constant 81 : i32
    %2253 = vector.broadcast %c81_i32 : i32 to vector<1x128xi32>
    %2254 = arith.cmpi eq, %91, %2253 : vector<1x128xi32>
    %cst_600 = arith.constant 0.000000e+00 : f32
    %2255 = vector.broadcast %cst_600 : f32 to vector<1x128xf32>
    %2256 = arith.select %2254, %2252, %2255 : vector<1x128xi1>, vector<1x128xf32>
    %2257 = vector.shape_cast %2256 : vector<1x128xf32> to vector<1x1x128xf32>
    %cst_601 = arith.constant dense<0xFF800000> : vector<1xf32>
    %2258 = vector.multi_reduction <maximumf>, %2257, %cst_601 [1, 2] : vector<1x1x128xf32> to vector<1xf32>
    %2259 = vector.shape_cast %2258 : vector<1xf32> to vector<1x1x1xf32>
    %2260 = vector.extract %2259[0, 0, 0] : f32 from vector<1x1x1xf32>
    %2261 = vector.extract_strided_slice %2240 {offsets = [1, 0], sizes = [1, 128], strides = [1, 1]} : vector<8x128xf32> to vector<1x128xf32>
    %cst_602 = arith.constant 0.000000e+00 : f32
    %2262 = arith.cmpf ogt, %2260, %cst_602 : f32
    %2263 = arith.maximumf %2252, %2261 : vector<1x128xf32>
    %2264 = arith.select %2262, %2252, %2263 : vector<1x128xf32>
    %c82_i32 = arith.constant 82 : i32
    %2265 = vector.broadcast %c82_i32 : i32 to vector<1x128xi32>
    %2266 = arith.cmpi eq, %91, %2265 : vector<1x128xi32>
    %cst_603 = arith.constant 0.000000e+00 : f32
    %2267 = vector.broadcast %cst_603 : f32 to vector<1x128xf32>
    %2268 = arith.select %2266, %2264, %2267 : vector<1x128xi1>, vector<1x128xf32>
    %2269 = vector.shape_cast %2268 : vector<1x128xf32> to vector<1x1x128xf32>
    %cst_604 = arith.constant dense<0xFF800000> : vector<1xf32>
    %2270 = vector.multi_reduction <maximumf>, %2269, %cst_604 [1, 2] : vector<1x1x128xf32> to vector<1xf32>
    %2271 = vector.shape_cast %2270 : vector<1xf32> to vector<1x1x1xf32>
    %2272 = vector.extract %2271[0, 0, 0] : f32 from vector<1x1x1xf32>
    %2273 = vector.extract_strided_slice %2240 {offsets = [2, 0], sizes = [1, 128], strides = [1, 1]} : vector<8x128xf32> to vector<1x128xf32>
    %cst_605 = arith.constant 0.000000e+00 : f32
    %2274 = arith.cmpf ogt, %2272, %cst_605 : f32
    %2275 = arith.maximumf %2264, %2273 : vector<1x128xf32>
    %2276 = arith.select %2274, %2264, %2275 : vector<1x128xf32>
    %c83_i32 = arith.constant 83 : i32
    %2277 = vector.broadcast %c83_i32 : i32 to vector<1x128xi32>
    %2278 = arith.cmpi eq, %91, %2277 : vector<1x128xi32>
    %cst_606 = arith.constant 0.000000e+00 : f32
    %2279 = vector.broadcast %cst_606 : f32 to vector<1x128xf32>
    %2280 = arith.select %2278, %2276, %2279 : vector<1x128xi1>, vector<1x128xf32>
    %2281 = vector.shape_cast %2280 : vector<1x128xf32> to vector<1x1x128xf32>
    %cst_607 = arith.constant dense<0xFF800000> : vector<1xf32>
    %2282 = vector.multi_reduction <maximumf>, %2281, %cst_607 [1, 2] : vector<1x1x128xf32> to vector<1xf32>
    %2283 = vector.shape_cast %2282 : vector<1xf32> to vector<1x1x1xf32>
    %2284 = vector.extract %2283[0, 0, 0] : f32 from vector<1x1x1xf32>
    %2285 = vector.extract_strided_slice %2240 {offsets = [3, 0], sizes = [1, 128], strides = [1, 1]} : vector<8x128xf32> to vector<1x128xf32>
    %cst_608 = arith.constant 0.000000e+00 : f32
    %2286 = arith.cmpf ogt, %2284, %cst_608 : f32
    %2287 = arith.maximumf %2276, %2285 : vector<1x128xf32>
    %2288 = arith.select %2286, %2276, %2287 : vector<1x128xf32>
    %c84_i32 = arith.constant 84 : i32
    %2289 = vector.broadcast %c84_i32 : i32 to vector<1x128xi32>
    %2290 = arith.cmpi eq, %91, %2289 : vector<1x128xi32>
    %cst_609 = arith.constant 0.000000e+00 : f32
    %2291 = vector.broadcast %cst_609 : f32 to vector<1x128xf32>
    %2292 = arith.select %2290, %2288, %2291 : vector<1x128xi1>, vector<1x128xf32>
    %2293 = vector.shape_cast %2292 : vector<1x128xf32> to vector<1x1x128xf32>
    %cst_610 = arith.constant dense<0xFF800000> : vector<1xf32>
    %2294 = vector.multi_reduction <maximumf>, %2293, %cst_610 [1, 2] : vector<1x1x128xf32> to vector<1xf32>
    %2295 = vector.shape_cast %2294 : vector<1xf32> to vector<1x1x1xf32>
    %2296 = vector.extract %2295[0, 0, 0] : f32 from vector<1x1x1xf32>
    %2297 = vector.extract_strided_slice %2240 {offsets = [4, 0], sizes = [1, 128], strides = [1, 1]} : vector<8x128xf32> to vector<1x128xf32>
    %cst_611 = arith.constant 0.000000e+00 : f32
    %2298 = arith.cmpf ogt, %2296, %cst_611 : f32
    %2299 = arith.maximumf %2288, %2297 : vector<1x128xf32>
    %2300 = arith.select %2298, %2288, %2299 : vector<1x128xf32>
    %c85_i32 = arith.constant 85 : i32
    %2301 = vector.broadcast %c85_i32 : i32 to vector<1x128xi32>
    %2302 = arith.cmpi eq, %91, %2301 : vector<1x128xi32>
    %cst_612 = arith.constant 0.000000e+00 : f32
    %2303 = vector.broadcast %cst_612 : f32 to vector<1x128xf32>
    %2304 = arith.select %2302, %2300, %2303 : vector<1x128xi1>, vector<1x128xf32>
    %2305 = vector.shape_cast %2304 : vector<1x128xf32> to vector<1x1x128xf32>
    %cst_613 = arith.constant dense<0xFF800000> : vector<1xf32>
    %2306 = vector.multi_reduction <maximumf>, %2305, %cst_613 [1, 2] : vector<1x1x128xf32> to vector<1xf32>
    %2307 = vector.shape_cast %2306 : vector<1xf32> to vector<1x1x1xf32>
    %2308 = vector.extract %2307[0, 0, 0] : f32 from vector<1x1x1xf32>
    %2309 = vector.extract_strided_slice %2240 {offsets = [5, 0], sizes = [1, 128], strides = [1, 1]} : vector<8x128xf32> to vector<1x128xf32>
    %cst_614 = arith.constant 0.000000e+00 : f32
    %2310 = arith.cmpf ogt, %2308, %cst_614 : f32
    %2311 = arith.maximumf %2300, %2309 : vector<1x128xf32>
    %2312 = arith.select %2310, %2300, %2311 : vector<1x128xf32>
    %c86_i32 = arith.constant 86 : i32
    %2313 = vector.broadcast %c86_i32 : i32 to vector<1x128xi32>
    %2314 = arith.cmpi eq, %91, %2313 : vector<1x128xi32>
    %cst_615 = arith.constant 0.000000e+00 : f32
    %2315 = vector.broadcast %cst_615 : f32 to vector<1x128xf32>
    %2316 = arith.select %2314, %2312, %2315 : vector<1x128xi1>, vector<1x128xf32>
    %2317 = vector.shape_cast %2316 : vector<1x128xf32> to vector<1x1x128xf32>
    %cst_616 = arith.constant dense<0xFF800000> : vector<1xf32>
    %2318 = vector.multi_reduction <maximumf>, %2317, %cst_616 [1, 2] : vector<1x1x128xf32> to vector<1xf32>
    %2319 = vector.shape_cast %2318 : vector<1xf32> to vector<1x1x1xf32>
    %2320 = vector.extract %2319[0, 0, 0] : f32 from vector<1x1x1xf32>
    %2321 = vector.extract_strided_slice %2240 {offsets = [6, 0], sizes = [1, 128], strides = [1, 1]} : vector<8x128xf32> to vector<1x128xf32>
    %cst_617 = arith.constant 0.000000e+00 : f32
    %2322 = arith.cmpf ogt, %2320, %cst_617 : f32
    %2323 = arith.maximumf %2312, %2321 : vector<1x128xf32>
    %2324 = arith.select %2322, %2312, %2323 : vector<1x128xf32>
    %c87_i32 = arith.constant 87 : i32
    %2325 = vector.broadcast %c87_i32 : i32 to vector<1x128xi32>
    %2326 = arith.cmpi eq, %91, %2325 : vector<1x128xi32>
    %cst_618 = arith.constant 0.000000e+00 : f32
    %2327 = vector.broadcast %cst_618 : f32 to vector<1x128xf32>
    %2328 = arith.select %2326, %2324, %2327 : vector<1x128xi1>, vector<1x128xf32>
    %2329 = vector.shape_cast %2328 : vector<1x128xf32> to vector<1x1x128xf32>
    %cst_619 = arith.constant dense<0xFF800000> : vector<1xf32>
    %2330 = vector.multi_reduction <maximumf>, %2329, %cst_619 [1, 2] : vector<1x1x128xf32> to vector<1xf32>
    %2331 = vector.shape_cast %2330 : vector<1xf32> to vector<1x1x1xf32>
    %2332 = vector.extract %2331[0, 0, 0] : f32 from vector<1x1x1xf32>
    %2333 = vector.extract_strided_slice %2240 {offsets = [7, 0], sizes = [1, 128], strides = [1, 1]} : vector<8x128xf32> to vector<1x128xf32>
    %cst_620 = arith.constant 0.000000e+00 : f32
    %2334 = arith.cmpf ogt, %2332, %cst_620 : f32
    %2335 = arith.maximumf %2324, %2333 : vector<1x128xf32>
    %2336 = arith.select %2334, %2324, %2335 : vector<1x128xf32>
    %c0_621 = arith.constant 0 : index
    %c88 = arith.constant 88 : index
    %c0_622 = arith.constant 0 : index
    %2337 = vector.load %arg3[%c0_621, %c88, %c0_622] : memref<1x128x8xf32, #tpu.memory_space<vmem>>, vector<1x8x8xf32>
    %2338 = vector.shape_cast %2337 : vector<1x8x8xf32> to vector<8x8xf32>
    %2339 = vector.extract_strided_slice %2338 {offsets = [0, 0], sizes = [8, 1], strides = [1, 1]} : vector<8x8xf32> to vector<8x1xf32>
    %2340 = vector.extract_strided_slice %2338 {offsets = [0, 1], sizes = [8, 1], strides = [1, 1]} : vector<8x8xf32> to vector<8x1xf32>
    %2341 = vector.extract_strided_slice %2338 {offsets = [0, 2], sizes = [8, 1], strides = [1, 1]} : vector<8x8xf32> to vector<8x1xf32>
    %2342 = vector.extract_strided_slice %2338 {offsets = [0, 3], sizes = [8, 1], strides = [1, 1]} : vector<8x8xf32> to vector<8x1xf32>
    %2343 = vector.extract_strided_slice %2338 {offsets = [0, 4], sizes = [8, 1], strides = [1, 1]} : vector<8x8xf32> to vector<8x1xf32>
    %2344 = vector.extract_strided_slice %2338 {offsets = [0, 5], sizes = [8, 1], strides = [1, 1]} : vector<8x8xf32> to vector<8x1xf32>
    %2345 = vector.extract_strided_slice %2338 {offsets = [0, 6], sizes = [8, 1], strides = [1, 1]} : vector<8x8xf32> to vector<8x1xf32>
    %2346 = vector.extract_strided_slice %2338 {offsets = [0, 7], sizes = [8, 1], strides = [1, 1]} : vector<8x8xf32> to vector<8x1xf32>
    %2347 = arith.subf %2341, %2339 : vector<8x1xf32>
    %cst_623 = arith.constant 1.000000e+00 : f32
    %2348 = vector.broadcast %cst_623 : f32 to vector<8x1xf32>
    %2349 = arith.addf %2347, %2348 : vector<8x1xf32>
    %2350 = arith.subf %2342, %2340 : vector<8x1xf32>
    %cst_624 = arith.constant 1.000000e+00 : f32
    %2351 = vector.broadcast %cst_624 : f32 to vector<8x1xf32>
    %2352 = arith.addf %2350, %2351 : vector<8x1xf32>
    %cst_625 = arith.constant 5.000000e-01 : f32
    %2353 = vector.broadcast %cst_625 : f32 to vector<8x1xf32>
    %2354 = arith.mulf %2353, %2349 : vector<8x1xf32>
    %2355 = arith.addf %2339, %2354 : vector<8x1xf32>
    %cst_626 = arith.constant 5.000000e-01 : f32
    %2356 = vector.broadcast %cst_626 : f32 to vector<8x1xf32>
    %2357 = arith.mulf %2356, %2352 : vector<8x1xf32>
    %2358 = arith.addf %2340, %2357 : vector<8x1xf32>
    %2359 = arith.mulf %2343, %2349 : vector<8x1xf32>
    %2360 = arith.addf %2359, %2355 : vector<8x1xf32>
    %2361 = arith.mulf %2344, %2352 : vector<8x1xf32>
    %2362 = arith.addf %2361, %2358 : vector<8x1xf32>
    %2363 = math.exp %2345 : vector<8x1xf32>
    %2364 = arith.mulf %2363, %2349 : vector<8x1xf32>
    %2365 = math.exp %2346 : vector<8x1xf32>
    %2366 = arith.mulf %2365, %2352 : vector<8x1xf32>
    %cst_627 = arith.constant 5.000000e-01 : f32
    %2367 = vector.broadcast %cst_627 : f32 to vector<8x1xf32>
    %2368 = arith.mulf %2367, %2364 : vector<8x1xf32>
    %2369 = arith.subf %2360, %2368 : vector<8x1xf32>
    %cst_628 = arith.constant 1.000000e+00 : f32
    %2370 = arith.subf %3, %cst_628 : f32
    %cst_629 = arith.constant 0.000000e+00 : f32
    %2371 = vector.broadcast %cst_629 : f32 to vector<8x1xf32>
    %2372 = arith.maximumf %2371, %2369 : vector<8x1xf32>
    %2373 = vector.broadcast %2370 : f32 to vector<8x1xf32>
    %2374 = arith.minimumf %2373, %2372 : vector<8x1xf32>
    %cst_630 = arith.constant 5.000000e-01 : f32
    %2375 = vector.broadcast %cst_630 : f32 to vector<8x1xf32>
    %2376 = arith.mulf %2375, %2366 : vector<8x1xf32>
    %2377 = arith.subf %2362, %2376 : vector<8x1xf32>
    %cst_631 = arith.constant 1.000000e+00 : f32
    %2378 = arith.subf %1, %cst_631 : f32
    %cst_632 = arith.constant 0.000000e+00 : f32
    %2379 = vector.broadcast %cst_632 : f32 to vector<8x1xf32>
    %2380 = arith.maximumf %2379, %2377 : vector<8x1xf32>
    %2381 = vector.broadcast %2378 : f32 to vector<8x1xf32>
    %2382 = arith.minimumf %2381, %2380 : vector<8x1xf32>
    %cst_633 = arith.constant 5.000000e-01 : f32
    %2383 = vector.broadcast %cst_633 : f32 to vector<8x1xf32>
    %2384 = arith.mulf %2383, %2364 : vector<8x1xf32>
    %2385 = arith.addf %2360, %2384 : vector<8x1xf32>
    %cst_634 = arith.constant 1.000000e+00 : f32
    %2386 = arith.subf %3, %cst_634 : f32
    %cst_635 = arith.constant 0.000000e+00 : f32
    %2387 = vector.broadcast %cst_635 : f32 to vector<8x1xf32>
    %2388 = arith.maximumf %2387, %2385 : vector<8x1xf32>
    %2389 = vector.broadcast %2386 : f32 to vector<8x1xf32>
    %2390 = arith.minimumf %2389, %2388 : vector<8x1xf32>
    %cst_636 = arith.constant 5.000000e-01 : f32
    %2391 = vector.broadcast %cst_636 : f32 to vector<8x1xf32>
    %2392 = arith.mulf %2391, %2366 : vector<8x1xf32>
    %2393 = arith.addf %2362, %2392 : vector<8x1xf32>
    %cst_637 = arith.constant 1.000000e+00 : f32
    %2394 = arith.subf %1, %cst_637 : f32
    %cst_638 = arith.constant 0.000000e+00 : f32
    %2395 = vector.broadcast %cst_638 : f32 to vector<8x1xf32>
    %2396 = arith.maximumf %2395, %2393 : vector<8x1xf32>
    %2397 = vector.broadcast %2394 : f32 to vector<8x1xf32>
    %2398 = arith.minimumf %2397, %2396 : vector<8x1xf32>
    %2399 = arith.subf %2390, %2374 : vector<8x1xf32>
    %cst_639 = arith.constant 1.000000e+00 : f32
    %2400 = vector.broadcast %cst_639 : f32 to vector<8x1xf32>
    %2401 = arith.addf %2399, %2400 : vector<8x1xf32>
    %2402 = arith.subf %2398, %2382 : vector<8x1xf32>
    %cst_640 = arith.constant 1.000000e+00 : f32
    %2403 = vector.broadcast %cst_640 : f32 to vector<8x1xf32>
    %2404 = arith.addf %2402, %2403 : vector<8x1xf32>
    %2405 = arith.mulf %2401, %2404 : vector<8x1xf32>
    %2406 = vector.broadcast %2374 : vector<8x1xf32> to vector<8x128xf32>
    %2407 = vector.broadcast %47 : vector<1x128xf32> to vector<8x128xf32>
    %2408 = arith.maximumf %2406, %2407 : vector<8x128xf32>
    %2409 = vector.broadcast %2382 : vector<8x1xf32> to vector<8x128xf32>
    %2410 = vector.broadcast %55 : vector<1x128xf32> to vector<8x128xf32>
    %2411 = arith.maximumf %2409, %2410 : vector<8x128xf32>
    %2412 = vector.broadcast %2390 : vector<8x1xf32> to vector<8x128xf32>
    %2413 = vector.broadcast %63 : vector<1x128xf32> to vector<8x128xf32>
    %2414 = arith.minimumf %2412, %2413 : vector<8x128xf32>
    %2415 = vector.broadcast %2398 : vector<8x1xf32> to vector<8x128xf32>
    %2416 = vector.broadcast %71 : vector<1x128xf32> to vector<8x128xf32>
    %2417 = arith.minimumf %2415, %2416 : vector<8x128xf32>
    %2418 = arith.subf %2414, %2408 : vector<8x128xf32>
    %cst_641 = arith.constant 1.000000e+00 : f32
    %2419 = vector.broadcast %cst_641 : f32 to vector<8x128xf32>
    %2420 = arith.addf %2418, %2419 : vector<8x128xf32>
    %cst_642 = arith.constant 0.000000e+00 : f32
    %2421 = vector.broadcast %cst_642 : f32 to vector<8x128xf32>
    %2422 = arith.maximumf %2420, %2421 : vector<8x128xf32>
    %2423 = arith.subf %2417, %2411 : vector<8x128xf32>
    %cst_643 = arith.constant 1.000000e+00 : f32
    %2424 = vector.broadcast %cst_643 : f32 to vector<8x128xf32>
    %2425 = arith.addf %2423, %2424 : vector<8x128xf32>
    %cst_644 = arith.constant 0.000000e+00 : f32
    %2426 = vector.broadcast %cst_644 : f32 to vector<8x128xf32>
    %2427 = arith.maximumf %2425, %2426 : vector<8x128xf32>
    %2428 = arith.mulf %2422, %2427 : vector<8x128xf32>
    %2429 = vector.broadcast %2405 : vector<8x1xf32> to vector<8x128xf32>
    %2430 = vector.broadcast %78 : vector<1x128xf32> to vector<8x128xf32>
    %2431 = arith.addf %2429, %2430 : vector<8x128xf32>
    %2432 = arith.subf %2431, %2428 : vector<8x128xf32>
    %2433 = tpu.iota {dimensions = array<i32: 0>} : vector<8x128xi32>
    %c88_i32 = arith.constant 88 : i32
    %2434 = vector.broadcast %c88_i32 : i32 to vector<8x128xi32>
    %2435 = arith.addi %2434, %2433 : vector<8x128xi32>
    %2436 = tpu.iota {dimensions = array<i32: 1>} : vector<8x128xi32>
    %2437 = arith.cmpi sgt, %2436, %2435 : vector<8x128xi32>
    %cst_645 = arith.constant 0.699999988 : f32
    %2438 = vector.broadcast %cst_645 : f32 to vector<8x128xf32>
    %2439 = arith.mulf %2438, %2432 : vector<8x128xf32>
    %2440 = arith.cmpf ogt, %2428, %2439 : vector<8x128xf32>
    %2441 = arith.andi %2437, %2440 : vector<8x128xi1>
    %cst_646 = arith.constant 1.000000e+00 : f32
    %cst_647 = arith.constant 0.000000e+00 : f32
    %2442 = vector.broadcast %cst_646 : f32 to vector<8x128xf32>
    %2443 = vector.broadcast %cst_647 : f32 to vector<8x128xf32>
    %2444 = arith.select %2441, %2442, %2443 : vector<8x128xi1>, vector<8x128xf32>
    %c88_i32_648 = arith.constant 88 : i32
    %2445 = vector.broadcast %c88_i32_648 : i32 to vector<1x128xi32>
    %2446 = arith.cmpi eq, %91, %2445 : vector<1x128xi32>
    %cst_649 = arith.constant 0.000000e+00 : f32
    %2447 = vector.broadcast %cst_649 : f32 to vector<1x128xf32>
    %2448 = arith.select %2446, %2336, %2447 : vector<1x128xi1>, vector<1x128xf32>
    %2449 = vector.shape_cast %2448 : vector<1x128xf32> to vector<1x1x128xf32>
    %cst_650 = arith.constant dense<0xFF800000> : vector<1xf32>
    %2450 = vector.multi_reduction <maximumf>, %2449, %cst_650 [1, 2] : vector<1x1x128xf32> to vector<1xf32>
    %2451 = vector.shape_cast %2450 : vector<1xf32> to vector<1x1x1xf32>
    %2452 = vector.extract %2451[0, 0, 0] : f32 from vector<1x1x1xf32>
    %2453 = vector.extract_strided_slice %2444 {offsets = [0, 0], sizes = [1, 128], strides = [1, 1]} : vector<8x128xf32> to vector<1x128xf32>
    %cst_651 = arith.constant 0.000000e+00 : f32
    %2454 = arith.cmpf ogt, %2452, %cst_651 : f32
    %2455 = arith.maximumf %2336, %2453 : vector<1x128xf32>
    %2456 = arith.select %2454, %2336, %2455 : vector<1x128xf32>
    %c89_i32 = arith.constant 89 : i32
    %2457 = vector.broadcast %c89_i32 : i32 to vector<1x128xi32>
    %2458 = arith.cmpi eq, %91, %2457 : vector<1x128xi32>
    %cst_652 = arith.constant 0.000000e+00 : f32
    %2459 = vector.broadcast %cst_652 : f32 to vector<1x128xf32>
    %2460 = arith.select %2458, %2456, %2459 : vector<1x128xi1>, vector<1x128xf32>
    %2461 = vector.shape_cast %2460 : vector<1x128xf32> to vector<1x1x128xf32>
    %cst_653 = arith.constant dense<0xFF800000> : vector<1xf32>
    %2462 = vector.multi_reduction <maximumf>, %2461, %cst_653 [1, 2] : vector<1x1x128xf32> to vector<1xf32>
    %2463 = vector.shape_cast %2462 : vector<1xf32> to vector<1x1x1xf32>
    %2464 = vector.extract %2463[0, 0, 0] : f32 from vector<1x1x1xf32>
    %2465 = vector.extract_strided_slice %2444 {offsets = [1, 0], sizes = [1, 128], strides = [1, 1]} : vector<8x128xf32> to vector<1x128xf32>
    %cst_654 = arith.constant 0.000000e+00 : f32
    %2466 = arith.cmpf ogt, %2464, %cst_654 : f32
    %2467 = arith.maximumf %2456, %2465 : vector<1x128xf32>
    %2468 = arith.select %2466, %2456, %2467 : vector<1x128xf32>
    %c90_i32 = arith.constant 90 : i32
    %2469 = vector.broadcast %c90_i32 : i32 to vector<1x128xi32>
    %2470 = arith.cmpi eq, %91, %2469 : vector<1x128xi32>
    %cst_655 = arith.constant 0.000000e+00 : f32
    %2471 = vector.broadcast %cst_655 : f32 to vector<1x128xf32>
    %2472 = arith.select %2470, %2468, %2471 : vector<1x128xi1>, vector<1x128xf32>
    %2473 = vector.shape_cast %2472 : vector<1x128xf32> to vector<1x1x128xf32>
    %cst_656 = arith.constant dense<0xFF800000> : vector<1xf32>
    %2474 = vector.multi_reduction <maximumf>, %2473, %cst_656 [1, 2] : vector<1x1x128xf32> to vector<1xf32>
    %2475 = vector.shape_cast %2474 : vector<1xf32> to vector<1x1x1xf32>
    %2476 = vector.extract %2475[0, 0, 0] : f32 from vector<1x1x1xf32>
    %2477 = vector.extract_strided_slice %2444 {offsets = [2, 0], sizes = [1, 128], strides = [1, 1]} : vector<8x128xf32> to vector<1x128xf32>
    %cst_657 = arith.constant 0.000000e+00 : f32
    %2478 = arith.cmpf ogt, %2476, %cst_657 : f32
    %2479 = arith.maximumf %2468, %2477 : vector<1x128xf32>
    %2480 = arith.select %2478, %2468, %2479 : vector<1x128xf32>
    %c91_i32 = arith.constant 91 : i32
    %2481 = vector.broadcast %c91_i32 : i32 to vector<1x128xi32>
    %2482 = arith.cmpi eq, %91, %2481 : vector<1x128xi32>
    %cst_658 = arith.constant 0.000000e+00 : f32
    %2483 = vector.broadcast %cst_658 : f32 to vector<1x128xf32>
    %2484 = arith.select %2482, %2480, %2483 : vector<1x128xi1>, vector<1x128xf32>
    %2485 = vector.shape_cast %2484 : vector<1x128xf32> to vector<1x1x128xf32>
    %cst_659 = arith.constant dense<0xFF800000> : vector<1xf32>
    %2486 = vector.multi_reduction <maximumf>, %2485, %cst_659 [1, 2] : vector<1x1x128xf32> to vector<1xf32>
    %2487 = vector.shape_cast %2486 : vector<1xf32> to vector<1x1x1xf32>
    %2488 = vector.extract %2487[0, 0, 0] : f32 from vector<1x1x1xf32>
    %2489 = vector.extract_strided_slice %2444 {offsets = [3, 0], sizes = [1, 128], strides = [1, 1]} : vector<8x128xf32> to vector<1x128xf32>
    %cst_660 = arith.constant 0.000000e+00 : f32
    %2490 = arith.cmpf ogt, %2488, %cst_660 : f32
    %2491 = arith.maximumf %2480, %2489 : vector<1x128xf32>
    %2492 = arith.select %2490, %2480, %2491 : vector<1x128xf32>
    %c92_i32 = arith.constant 92 : i32
    %2493 = vector.broadcast %c92_i32 : i32 to vector<1x128xi32>
    %2494 = arith.cmpi eq, %91, %2493 : vector<1x128xi32>
    %cst_661 = arith.constant 0.000000e+00 : f32
    %2495 = vector.broadcast %cst_661 : f32 to vector<1x128xf32>
    %2496 = arith.select %2494, %2492, %2495 : vector<1x128xi1>, vector<1x128xf32>
    %2497 = vector.shape_cast %2496 : vector<1x128xf32> to vector<1x1x128xf32>
    %cst_662 = arith.constant dense<0xFF800000> : vector<1xf32>
    %2498 = vector.multi_reduction <maximumf>, %2497, %cst_662 [1, 2] : vector<1x1x128xf32> to vector<1xf32>
    %2499 = vector.shape_cast %2498 : vector<1xf32> to vector<1x1x1xf32>
    %2500 = vector.extract %2499[0, 0, 0] : f32 from vector<1x1x1xf32>
    %2501 = vector.extract_strided_slice %2444 {offsets = [4, 0], sizes = [1, 128], strides = [1, 1]} : vector<8x128xf32> to vector<1x128xf32>
    %cst_663 = arith.constant 0.000000e+00 : f32
    %2502 = arith.cmpf ogt, %2500, %cst_663 : f32
    %2503 = arith.maximumf %2492, %2501 : vector<1x128xf32>
    %2504 = arith.select %2502, %2492, %2503 : vector<1x128xf32>
    %c93_i32 = arith.constant 93 : i32
    %2505 = vector.broadcast %c93_i32 : i32 to vector<1x128xi32>
    %2506 = arith.cmpi eq, %91, %2505 : vector<1x128xi32>
    %cst_664 = arith.constant 0.000000e+00 : f32
    %2507 = vector.broadcast %cst_664 : f32 to vector<1x128xf32>
    %2508 = arith.select %2506, %2504, %2507 : vector<1x128xi1>, vector<1x128xf32>
    %2509 = vector.shape_cast %2508 : vector<1x128xf32> to vector<1x1x128xf32>
    %cst_665 = arith.constant dense<0xFF800000> : vector<1xf32>
    %2510 = vector.multi_reduction <maximumf>, %2509, %cst_665 [1, 2] : vector<1x1x128xf32> to vector<1xf32>
    %2511 = vector.shape_cast %2510 : vector<1xf32> to vector<1x1x1xf32>
    %2512 = vector.extract %2511[0, 0, 0] : f32 from vector<1x1x1xf32>
    %2513 = vector.extract_strided_slice %2444 {offsets = [5, 0], sizes = [1, 128], strides = [1, 1]} : vector<8x128xf32> to vector<1x128xf32>
    %cst_666 = arith.constant 0.000000e+00 : f32
    %2514 = arith.cmpf ogt, %2512, %cst_666 : f32
    %2515 = arith.maximumf %2504, %2513 : vector<1x128xf32>
    %2516 = arith.select %2514, %2504, %2515 : vector<1x128xf32>
    %c94_i32 = arith.constant 94 : i32
    %2517 = vector.broadcast %c94_i32 : i32 to vector<1x128xi32>
    %2518 = arith.cmpi eq, %91, %2517 : vector<1x128xi32>
    %cst_667 = arith.constant 0.000000e+00 : f32
    %2519 = vector.broadcast %cst_667 : f32 to vector<1x128xf32>
    %2520 = arith.select %2518, %2516, %2519 : vector<1x128xi1>, vector<1x128xf32>
    %2521 = vector.shape_cast %2520 : vector<1x128xf32> to vector<1x1x128xf32>
    %cst_668 = arith.constant dense<0xFF800000> : vector<1xf32>
    %2522 = vector.multi_reduction <maximumf>, %2521, %cst_668 [1, 2] : vector<1x1x128xf32> to vector<1xf32>
    %2523 = vector.shape_cast %2522 : vector<1xf32> to vector<1x1x1xf32>
    %2524 = vector.extract %2523[0, 0, 0] : f32 from vector<1x1x1xf32>
    %2525 = vector.extract_strided_slice %2444 {offsets = [6, 0], sizes = [1, 128], strides = [1, 1]} : vector<8x128xf32> to vector<1x128xf32>
    %cst_669 = arith.constant 0.000000e+00 : f32
    %2526 = arith.cmpf ogt, %2524, %cst_669 : f32
    %2527 = arith.maximumf %2516, %2525 : vector<1x128xf32>
    %2528 = arith.select %2526, %2516, %2527 : vector<1x128xf32>
    %c95_i32 = arith.constant 95 : i32
    %2529 = vector.broadcast %c95_i32 : i32 to vector<1x128xi32>
    %2530 = arith.cmpi eq, %91, %2529 : vector<1x128xi32>
    %cst_670 = arith.constant 0.000000e+00 : f32
    %2531 = vector.broadcast %cst_670 : f32 to vector<1x128xf32>
    %2532 = arith.select %2530, %2528, %2531 : vector<1x128xi1>, vector<1x128xf32>
    %2533 = vector.shape_cast %2532 : vector<1x128xf32> to vector<1x1x128xf32>
    %cst_671 = arith.constant dense<0xFF800000> : vector<1xf32>
    %2534 = vector.multi_reduction <maximumf>, %2533, %cst_671 [1, 2] : vector<1x1x128xf32> to vector<1xf32>
    %2535 = vector.shape_cast %2534 : vector<1xf32> to vector<1x1x1xf32>
    %2536 = vector.extract %2535[0, 0, 0] : f32 from vector<1x1x1xf32>
    %2537 = vector.extract_strided_slice %2444 {offsets = [7, 0], sizes = [1, 128], strides = [1, 1]} : vector<8x128xf32> to vector<1x128xf32>
    %cst_672 = arith.constant 0.000000e+00 : f32
    %2538 = arith.cmpf ogt, %2536, %cst_672 : f32
    %2539 = arith.maximumf %2528, %2537 : vector<1x128xf32>
    %2540 = arith.select %2538, %2528, %2539 : vector<1x128xf32>
    %c0_673 = arith.constant 0 : index
    %c96 = arith.constant 96 : index
    %c0_674 = arith.constant 0 : index
    %2541 = vector.load %arg3[%c0_673, %c96, %c0_674] : memref<1x128x8xf32, #tpu.memory_space<vmem>>, vector<1x8x8xf32>
    %2542 = vector.shape_cast %2541 : vector<1x8x8xf32> to vector<8x8xf32>
    %2543 = vector.extract_strided_slice %2542 {offsets = [0, 0], sizes = [8, 1], strides = [1, 1]} : vector<8x8xf32> to vector<8x1xf32>
    %2544 = vector.extract_strided_slice %2542 {offsets = [0, 1], sizes = [8, 1], strides = [1, 1]} : vector<8x8xf32> to vector<8x1xf32>
    %2545 = vector.extract_strided_slice %2542 {offsets = [0, 2], sizes = [8, 1], strides = [1, 1]} : vector<8x8xf32> to vector<8x1xf32>
    %2546 = vector.extract_strided_slice %2542 {offsets = [0, 3], sizes = [8, 1], strides = [1, 1]} : vector<8x8xf32> to vector<8x1xf32>
    %2547 = vector.extract_strided_slice %2542 {offsets = [0, 4], sizes = [8, 1], strides = [1, 1]} : vector<8x8xf32> to vector<8x1xf32>
    %2548 = vector.extract_strided_slice %2542 {offsets = [0, 5], sizes = [8, 1], strides = [1, 1]} : vector<8x8xf32> to vector<8x1xf32>
    %2549 = vector.extract_strided_slice %2542 {offsets = [0, 6], sizes = [8, 1], strides = [1, 1]} : vector<8x8xf32> to vector<8x1xf32>
    %2550 = vector.extract_strided_slice %2542 {offsets = [0, 7], sizes = [8, 1], strides = [1, 1]} : vector<8x8xf32> to vector<8x1xf32>
    %2551 = arith.subf %2545, %2543 : vector<8x1xf32>
    %cst_675 = arith.constant 1.000000e+00 : f32
    %2552 = vector.broadcast %cst_675 : f32 to vector<8x1xf32>
    %2553 = arith.addf %2551, %2552 : vector<8x1xf32>
    %2554 = arith.subf %2546, %2544 : vector<8x1xf32>
    %cst_676 = arith.constant 1.000000e+00 : f32
    %2555 = vector.broadcast %cst_676 : f32 to vector<8x1xf32>
    %2556 = arith.addf %2554, %2555 : vector<8x1xf32>
    %cst_677 = arith.constant 5.000000e-01 : f32
    %2557 = vector.broadcast %cst_677 : f32 to vector<8x1xf32>
    %2558 = arith.mulf %2557, %2553 : vector<8x1xf32>
    %2559 = arith.addf %2543, %2558 : vector<8x1xf32>
    %cst_678 = arith.constant 5.000000e-01 : f32
    %2560 = vector.broadcast %cst_678 : f32 to vector<8x1xf32>
    %2561 = arith.mulf %2560, %2556 : vector<8x1xf32>
    %2562 = arith.addf %2544, %2561 : vector<8x1xf32>
    %2563 = arith.mulf %2547, %2553 : vector<8x1xf32>
    %2564 = arith.addf %2563, %2559 : vector<8x1xf32>
    %2565 = arith.mulf %2548, %2556 : vector<8x1xf32>
    %2566 = arith.addf %2565, %2562 : vector<8x1xf32>
    %2567 = math.exp %2549 : vector<8x1xf32>
    %2568 = arith.mulf %2567, %2553 : vector<8x1xf32>
    %2569 = math.exp %2550 : vector<8x1xf32>
    %2570 = arith.mulf %2569, %2556 : vector<8x1xf32>
    %cst_679 = arith.constant 5.000000e-01 : f32
    %2571 = vector.broadcast %cst_679 : f32 to vector<8x1xf32>
    %2572 = arith.mulf %2571, %2568 : vector<8x1xf32>
    %2573 = arith.subf %2564, %2572 : vector<8x1xf32>
    %cst_680 = arith.constant 1.000000e+00 : f32
    %2574 = arith.subf %3, %cst_680 : f32
    %cst_681 = arith.constant 0.000000e+00 : f32
    %2575 = vector.broadcast %cst_681 : f32 to vector<8x1xf32>
    %2576 = arith.maximumf %2575, %2573 : vector<8x1xf32>
    %2577 = vector.broadcast %2574 : f32 to vector<8x1xf32>
    %2578 = arith.minimumf %2577, %2576 : vector<8x1xf32>
    %cst_682 = arith.constant 5.000000e-01 : f32
    %2579 = vector.broadcast %cst_682 : f32 to vector<8x1xf32>
    %2580 = arith.mulf %2579, %2570 : vector<8x1xf32>
    %2581 = arith.subf %2566, %2580 : vector<8x1xf32>
    %cst_683 = arith.constant 1.000000e+00 : f32
    %2582 = arith.subf %1, %cst_683 : f32
    %cst_684 = arith.constant 0.000000e+00 : f32
    %2583 = vector.broadcast %cst_684 : f32 to vector<8x1xf32>
    %2584 = arith.maximumf %2583, %2581 : vector<8x1xf32>
    %2585 = vector.broadcast %2582 : f32 to vector<8x1xf32>
    %2586 = arith.minimumf %2585, %2584 : vector<8x1xf32>
    %cst_685 = arith.constant 5.000000e-01 : f32
    %2587 = vector.broadcast %cst_685 : f32 to vector<8x1xf32>
    %2588 = arith.mulf %2587, %2568 : vector<8x1xf32>
    %2589 = arith.addf %2564, %2588 : vector<8x1xf32>
    %cst_686 = arith.constant 1.000000e+00 : f32
    %2590 = arith.subf %3, %cst_686 : f32
    %cst_687 = arith.constant 0.000000e+00 : f32
    %2591 = vector.broadcast %cst_687 : f32 to vector<8x1xf32>
    %2592 = arith.maximumf %2591, %2589 : vector<8x1xf32>
    %2593 = vector.broadcast %2590 : f32 to vector<8x1xf32>
    %2594 = arith.minimumf %2593, %2592 : vector<8x1xf32>
    %cst_688 = arith.constant 5.000000e-01 : f32
    %2595 = vector.broadcast %cst_688 : f32 to vector<8x1xf32>
    %2596 = arith.mulf %2595, %2570 : vector<8x1xf32>
    %2597 = arith.addf %2566, %2596 : vector<8x1xf32>
    %cst_689 = arith.constant 1.000000e+00 : f32
    %2598 = arith.subf %1, %cst_689 : f32
    %cst_690 = arith.constant 0.000000e+00 : f32
    %2599 = vector.broadcast %cst_690 : f32 to vector<8x1xf32>
    %2600 = arith.maximumf %2599, %2597 : vector<8x1xf32>
    %2601 = vector.broadcast %2598 : f32 to vector<8x1xf32>
    %2602 = arith.minimumf %2601, %2600 : vector<8x1xf32>
    %2603 = arith.subf %2594, %2578 : vector<8x1xf32>
    %cst_691 = arith.constant 1.000000e+00 : f32
    %2604 = vector.broadcast %cst_691 : f32 to vector<8x1xf32>
    %2605 = arith.addf %2603, %2604 : vector<8x1xf32>
    %2606 = arith.subf %2602, %2586 : vector<8x1xf32>
    %cst_692 = arith.constant 1.000000e+00 : f32
    %2607 = vector.broadcast %cst_692 : f32 to vector<8x1xf32>
    %2608 = arith.addf %2606, %2607 : vector<8x1xf32>
    %2609 = arith.mulf %2605, %2608 : vector<8x1xf32>
    %2610 = vector.broadcast %2578 : vector<8x1xf32> to vector<8x128xf32>
    %2611 = vector.broadcast %47 : vector<1x128xf32> to vector<8x128xf32>
    %2612 = arith.maximumf %2610, %2611 : vector<8x128xf32>
    %2613 = vector.broadcast %2586 : vector<8x1xf32> to vector<8x128xf32>
    %2614 = vector.broadcast %55 : vector<1x128xf32> to vector<8x128xf32>
    %2615 = arith.maximumf %2613, %2614 : vector<8x128xf32>
    %2616 = vector.broadcast %2594 : vector<8x1xf32> to vector<8x128xf32>
    %2617 = vector.broadcast %63 : vector<1x128xf32> to vector<8x128xf32>
    %2618 = arith.minimumf %2616, %2617 : vector<8x128xf32>
    %2619 = vector.broadcast %2602 : vector<8x1xf32> to vector<8x128xf32>
    %2620 = vector.broadcast %71 : vector<1x128xf32> to vector<8x128xf32>
    %2621 = arith.minimumf %2619, %2620 : vector<8x128xf32>
    %2622 = arith.subf %2618, %2612 : vector<8x128xf32>
    %cst_693 = arith.constant 1.000000e+00 : f32
    %2623 = vector.broadcast %cst_693 : f32 to vector<8x128xf32>
    %2624 = arith.addf %2622, %2623 : vector<8x128xf32>
    %cst_694 = arith.constant 0.000000e+00 : f32
    %2625 = vector.broadcast %cst_694 : f32 to vector<8x128xf32>
    %2626 = arith.maximumf %2624, %2625 : vector<8x128xf32>
    %2627 = arith.subf %2621, %2615 : vector<8x128xf32>
    %cst_695 = arith.constant 1.000000e+00 : f32
    %2628 = vector.broadcast %cst_695 : f32 to vector<8x128xf32>
    %2629 = arith.addf %2627, %2628 : vector<8x128xf32>
    %cst_696 = arith.constant 0.000000e+00 : f32
    %2630 = vector.broadcast %cst_696 : f32 to vector<8x128xf32>
    %2631 = arith.maximumf %2629, %2630 : vector<8x128xf32>
    %2632 = arith.mulf %2626, %2631 : vector<8x128xf32>
    %2633 = vector.broadcast %2609 : vector<8x1xf32> to vector<8x128xf32>
    %2634 = vector.broadcast %78 : vector<1x128xf32> to vector<8x128xf32>
    %2635 = arith.addf %2633, %2634 : vector<8x128xf32>
    %2636 = arith.subf %2635, %2632 : vector<8x128xf32>
    %2637 = tpu.iota {dimensions = array<i32: 0>} : vector<8x128xi32>
    %c96_i32 = arith.constant 96 : i32
    %2638 = vector.broadcast %c96_i32 : i32 to vector<8x128xi32>
    %2639 = arith.addi %2638, %2637 : vector<8x128xi32>
    %2640 = tpu.iota {dimensions = array<i32: 1>} : vector<8x128xi32>
    %2641 = arith.cmpi sgt, %2640, %2639 : vector<8x128xi32>
    %cst_697 = arith.constant 0.699999988 : f32
    %2642 = vector.broadcast %cst_697 : f32 to vector<8x128xf32>
    %2643 = arith.mulf %2642, %2636 : vector<8x128xf32>
    %2644 = arith.cmpf ogt, %2632, %2643 : vector<8x128xf32>
    %2645 = arith.andi %2641, %2644 : vector<8x128xi1>
    %cst_698 = arith.constant 1.000000e+00 : f32
    %cst_699 = arith.constant 0.000000e+00 : f32
    %2646 = vector.broadcast %cst_698 : f32 to vector<8x128xf32>
    %2647 = vector.broadcast %cst_699 : f32 to vector<8x128xf32>
    %2648 = arith.select %2645, %2646, %2647 : vector<8x128xi1>, vector<8x128xf32>
    %c96_i32_700 = arith.constant 96 : i32
    %2649 = vector.broadcast %c96_i32_700 : i32 to vector<1x128xi32>
    %2650 = arith.cmpi eq, %91, %2649 : vector<1x128xi32>
    %cst_701 = arith.constant 0.000000e+00 : f32
    %2651 = vector.broadcast %cst_701 : f32 to vector<1x128xf32>
    %2652 = arith.select %2650, %2540, %2651 : vector<1x128xi1>, vector<1x128xf32>
    %2653 = vector.shape_cast %2652 : vector<1x128xf32> to vector<1x1x128xf32>
    %cst_702 = arith.constant dense<0xFF800000> : vector<1xf32>
    %2654 = vector.multi_reduction <maximumf>, %2653, %cst_702 [1, 2] : vector<1x1x128xf32> to vector<1xf32>
    %2655 = vector.shape_cast %2654 : vector<1xf32> to vector<1x1x1xf32>
    %2656 = vector.extract %2655[0, 0, 0] : f32 from vector<1x1x1xf32>
    %2657 = vector.extract_strided_slice %2648 {offsets = [0, 0], sizes = [1, 128], strides = [1, 1]} : vector<8x128xf32> to vector<1x128xf32>
    %cst_703 = arith.constant 0.000000e+00 : f32
    %2658 = arith.cmpf ogt, %2656, %cst_703 : f32
    %2659 = arith.maximumf %2540, %2657 : vector<1x128xf32>
    %2660 = arith.select %2658, %2540, %2659 : vector<1x128xf32>
    %c97_i32 = arith.constant 97 : i32
    %2661 = vector.broadcast %c97_i32 : i32 to vector<1x128xi32>
    %2662 = arith.cmpi eq, %91, %2661 : vector<1x128xi32>
    %cst_704 = arith.constant 0.000000e+00 : f32
    %2663 = vector.broadcast %cst_704 : f32 to vector<1x128xf32>
    %2664 = arith.select %2662, %2660, %2663 : vector<1x128xi1>, vector<1x128xf32>
    %2665 = vector.shape_cast %2664 : vector<1x128xf32> to vector<1x1x128xf32>
    %cst_705 = arith.constant dense<0xFF800000> : vector<1xf32>
    %2666 = vector.multi_reduction <maximumf>, %2665, %cst_705 [1, 2] : vector<1x1x128xf32> to vector<1xf32>
    %2667 = vector.shape_cast %2666 : vector<1xf32> to vector<1x1x1xf32>
    %2668 = vector.extract %2667[0, 0, 0] : f32 from vector<1x1x1xf32>
    %2669 = vector.extract_strided_slice %2648 {offsets = [1, 0], sizes = [1, 128], strides = [1, 1]} : vector<8x128xf32> to vector<1x128xf32>
    %cst_706 = arith.constant 0.000000e+00 : f32
    %2670 = arith.cmpf ogt, %2668, %cst_706 : f32
    %2671 = arith.maximumf %2660, %2669 : vector<1x128xf32>
    %2672 = arith.select %2670, %2660, %2671 : vector<1x128xf32>
    %c98_i32 = arith.constant 98 : i32
    %2673 = vector.broadcast %c98_i32 : i32 to vector<1x128xi32>
    %2674 = arith.cmpi eq, %91, %2673 : vector<1x128xi32>
    %cst_707 = arith.constant 0.000000e+00 : f32
    %2675 = vector.broadcast %cst_707 : f32 to vector<1x128xf32>
    %2676 = arith.select %2674, %2672, %2675 : vector<1x128xi1>, vector<1x128xf32>
    %2677 = vector.shape_cast %2676 : vector<1x128xf32> to vector<1x1x128xf32>
    %cst_708 = arith.constant dense<0xFF800000> : vector<1xf32>
    %2678 = vector.multi_reduction <maximumf>, %2677, %cst_708 [1, 2] : vector<1x1x128xf32> to vector<1xf32>
    %2679 = vector.shape_cast %2678 : vector<1xf32> to vector<1x1x1xf32>
    %2680 = vector.extract %2679[0, 0, 0] : f32 from vector<1x1x1xf32>
    %2681 = vector.extract_strided_slice %2648 {offsets = [2, 0], sizes = [1, 128], strides = [1, 1]} : vector<8x128xf32> to vector<1x128xf32>
    %cst_709 = arith.constant 0.000000e+00 : f32
    %2682 = arith.cmpf ogt, %2680, %cst_709 : f32
    %2683 = arith.maximumf %2672, %2681 : vector<1x128xf32>
    %2684 = arith.select %2682, %2672, %2683 : vector<1x128xf32>
    %c99_i32 = arith.constant 99 : i32
    %2685 = vector.broadcast %c99_i32 : i32 to vector<1x128xi32>
    %2686 = arith.cmpi eq, %91, %2685 : vector<1x128xi32>
    %cst_710 = arith.constant 0.000000e+00 : f32
    %2687 = vector.broadcast %cst_710 : f32 to vector<1x128xf32>
    %2688 = arith.select %2686, %2684, %2687 : vector<1x128xi1>, vector<1x128xf32>
    %2689 = vector.shape_cast %2688 : vector<1x128xf32> to vector<1x1x128xf32>
    %cst_711 = arith.constant dense<0xFF800000> : vector<1xf32>
    %2690 = vector.multi_reduction <maximumf>, %2689, %cst_711 [1, 2] : vector<1x1x128xf32> to vector<1xf32>
    %2691 = vector.shape_cast %2690 : vector<1xf32> to vector<1x1x1xf32>
    %2692 = vector.extract %2691[0, 0, 0] : f32 from vector<1x1x1xf32>
    %2693 = vector.extract_strided_slice %2648 {offsets = [3, 0], sizes = [1, 128], strides = [1, 1]} : vector<8x128xf32> to vector<1x128xf32>
    %cst_712 = arith.constant 0.000000e+00 : f32
    %2694 = arith.cmpf ogt, %2692, %cst_712 : f32
    %2695 = arith.maximumf %2684, %2693 : vector<1x128xf32>
    %2696 = arith.select %2694, %2684, %2695 : vector<1x128xf32>
    %c100_i32 = arith.constant 100 : i32
    %2697 = vector.broadcast %c100_i32 : i32 to vector<1x128xi32>
    %2698 = arith.cmpi eq, %91, %2697 : vector<1x128xi32>
    %cst_713 = arith.constant 0.000000e+00 : f32
    %2699 = vector.broadcast %cst_713 : f32 to vector<1x128xf32>
    %2700 = arith.select %2698, %2696, %2699 : vector<1x128xi1>, vector<1x128xf32>
    %2701 = vector.shape_cast %2700 : vector<1x128xf32> to vector<1x1x128xf32>
    %cst_714 = arith.constant dense<0xFF800000> : vector<1xf32>
    %2702 = vector.multi_reduction <maximumf>, %2701, %cst_714 [1, 2] : vector<1x1x128xf32> to vector<1xf32>
    %2703 = vector.shape_cast %2702 : vector<1xf32> to vector<1x1x1xf32>
    %2704 = vector.extract %2703[0, 0, 0] : f32 from vector<1x1x1xf32>
    %2705 = vector.extract_strided_slice %2648 {offsets = [4, 0], sizes = [1, 128], strides = [1, 1]} : vector<8x128xf32> to vector<1x128xf32>
    %cst_715 = arith.constant 0.000000e+00 : f32
    %2706 = arith.cmpf ogt, %2704, %cst_715 : f32
    %2707 = arith.maximumf %2696, %2705 : vector<1x128xf32>
    %2708 = arith.select %2706, %2696, %2707 : vector<1x128xf32>
    %c101_i32 = arith.constant 101 : i32
    %2709 = vector.broadcast %c101_i32 : i32 to vector<1x128xi32>
    %2710 = arith.cmpi eq, %91, %2709 : vector<1x128xi32>
    %cst_716 = arith.constant 0.000000e+00 : f32
    %2711 = vector.broadcast %cst_716 : f32 to vector<1x128xf32>
    %2712 = arith.select %2710, %2708, %2711 : vector<1x128xi1>, vector<1x128xf32>
    %2713 = vector.shape_cast %2712 : vector<1x128xf32> to vector<1x1x128xf32>
    %cst_717 = arith.constant dense<0xFF800000> : vector<1xf32>
    %2714 = vector.multi_reduction <maximumf>, %2713, %cst_717 [1, 2] : vector<1x1x128xf32> to vector<1xf32>
    %2715 = vector.shape_cast %2714 : vector<1xf32> to vector<1x1x1xf32>
    %2716 = vector.extract %2715[0, 0, 0] : f32 from vector<1x1x1xf32>
    %2717 = vector.extract_strided_slice %2648 {offsets = [5, 0], sizes = [1, 128], strides = [1, 1]} : vector<8x128xf32> to vector<1x128xf32>
    %cst_718 = arith.constant 0.000000e+00 : f32
    %2718 = arith.cmpf ogt, %2716, %cst_718 : f32
    %2719 = arith.maximumf %2708, %2717 : vector<1x128xf32>
    %2720 = arith.select %2718, %2708, %2719 : vector<1x128xf32>
    %c102_i32 = arith.constant 102 : i32
    %2721 = vector.broadcast %c102_i32 : i32 to vector<1x128xi32>
    %2722 = arith.cmpi eq, %91, %2721 : vector<1x128xi32>
    %cst_719 = arith.constant 0.000000e+00 : f32
    %2723 = vector.broadcast %cst_719 : f32 to vector<1x128xf32>
    %2724 = arith.select %2722, %2720, %2723 : vector<1x128xi1>, vector<1x128xf32>
    %2725 = vector.shape_cast %2724 : vector<1x128xf32> to vector<1x1x128xf32>
    %cst_720 = arith.constant dense<0xFF800000> : vector<1xf32>
    %2726 = vector.multi_reduction <maximumf>, %2725, %cst_720 [1, 2] : vector<1x1x128xf32> to vector<1xf32>
    %2727 = vector.shape_cast %2726 : vector<1xf32> to vector<1x1x1xf32>
    %2728 = vector.extract %2727[0, 0, 0] : f32 from vector<1x1x1xf32>
    %2729 = vector.extract_strided_slice %2648 {offsets = [6, 0], sizes = [1, 128], strides = [1, 1]} : vector<8x128xf32> to vector<1x128xf32>
    %cst_721 = arith.constant 0.000000e+00 : f32
    %2730 = arith.cmpf ogt, %2728, %cst_721 : f32
    %2731 = arith.maximumf %2720, %2729 : vector<1x128xf32>
    %2732 = arith.select %2730, %2720, %2731 : vector<1x128xf32>
    %c103_i32 = arith.constant 103 : i32
    %2733 = vector.broadcast %c103_i32 : i32 to vector<1x128xi32>
    %2734 = arith.cmpi eq, %91, %2733 : vector<1x128xi32>
    %cst_722 = arith.constant 0.000000e+00 : f32
    %2735 = vector.broadcast %cst_722 : f32 to vector<1x128xf32>
    %2736 = arith.select %2734, %2732, %2735 : vector<1x128xi1>, vector<1x128xf32>
    %2737 = vector.shape_cast %2736 : vector<1x128xf32> to vector<1x1x128xf32>
    %cst_723 = arith.constant dense<0xFF800000> : vector<1xf32>
    %2738 = vector.multi_reduction <maximumf>, %2737, %cst_723 [1, 2] : vector<1x1x128xf32> to vector<1xf32>
    %2739 = vector.shape_cast %2738 : vector<1xf32> to vector<1x1x1xf32>
    %2740 = vector.extract %2739[0, 0, 0] : f32 from vector<1x1x1xf32>
    %2741 = vector.extract_strided_slice %2648 {offsets = [7, 0], sizes = [1, 128], strides = [1, 1]} : vector<8x128xf32> to vector<1x128xf32>
    %cst_724 = arith.constant 0.000000e+00 : f32
    %2742 = arith.cmpf ogt, %2740, %cst_724 : f32
    %2743 = arith.maximumf %2732, %2741 : vector<1x128xf32>
    %2744 = arith.select %2742, %2732, %2743 : vector<1x128xf32>
    %c0_725 = arith.constant 0 : index
    %c104 = arith.constant 104 : index
    %c0_726 = arith.constant 0 : index
    %2745 = vector.load %arg3[%c0_725, %c104, %c0_726] : memref<1x128x8xf32, #tpu.memory_space<vmem>>, vector<1x8x8xf32>
    %2746 = vector.shape_cast %2745 : vector<1x8x8xf32> to vector<8x8xf32>
    %2747 = vector.extract_strided_slice %2746 {offsets = [0, 0], sizes = [8, 1], strides = [1, 1]} : vector<8x8xf32> to vector<8x1xf32>
    %2748 = vector.extract_strided_slice %2746 {offsets = [0, 1], sizes = [8, 1], strides = [1, 1]} : vector<8x8xf32> to vector<8x1xf32>
    %2749 = vector.extract_strided_slice %2746 {offsets = [0, 2], sizes = [8, 1], strides = [1, 1]} : vector<8x8xf32> to vector<8x1xf32>
    %2750 = vector.extract_strided_slice %2746 {offsets = [0, 3], sizes = [8, 1], strides = [1, 1]} : vector<8x8xf32> to vector<8x1xf32>
    %2751 = vector.extract_strided_slice %2746 {offsets = [0, 4], sizes = [8, 1], strides = [1, 1]} : vector<8x8xf32> to vector<8x1xf32>
    %2752 = vector.extract_strided_slice %2746 {offsets = [0, 5], sizes = [8, 1], strides = [1, 1]} : vector<8x8xf32> to vector<8x1xf32>
    %2753 = vector.extract_strided_slice %2746 {offsets = [0, 6], sizes = [8, 1], strides = [1, 1]} : vector<8x8xf32> to vector<8x1xf32>
    %2754 = vector.extract_strided_slice %2746 {offsets = [0, 7], sizes = [8, 1], strides = [1, 1]} : vector<8x8xf32> to vector<8x1xf32>
    %2755 = arith.subf %2749, %2747 : vector<8x1xf32>
    %cst_727 = arith.constant 1.000000e+00 : f32
    %2756 = vector.broadcast %cst_727 : f32 to vector<8x1xf32>
    %2757 = arith.addf %2755, %2756 : vector<8x1xf32>
    %2758 = arith.subf %2750, %2748 : vector<8x1xf32>
    %cst_728 = arith.constant 1.000000e+00 : f32
    %2759 = vector.broadcast %cst_728 : f32 to vector<8x1xf32>
    %2760 = arith.addf %2758, %2759 : vector<8x1xf32>
    %cst_729 = arith.constant 5.000000e-01 : f32
    %2761 = vector.broadcast %cst_729 : f32 to vector<8x1xf32>
    %2762 = arith.mulf %2761, %2757 : vector<8x1xf32>
    %2763 = arith.addf %2747, %2762 : vector<8x1xf32>
    %cst_730 = arith.constant 5.000000e-01 : f32
    %2764 = vector.broadcast %cst_730 : f32 to vector<8x1xf32>
    %2765 = arith.mulf %2764, %2760 : vector<8x1xf32>
    %2766 = arith.addf %2748, %2765 : vector<8x1xf32>
    %2767 = arith.mulf %2751, %2757 : vector<8x1xf32>
    %2768 = arith.addf %2767, %2763 : vector<8x1xf32>
    %2769 = arith.mulf %2752, %2760 : vector<8x1xf32>
    %2770 = arith.addf %2769, %2766 : vector<8x1xf32>
    %2771 = math.exp %2753 : vector<8x1xf32>
    %2772 = arith.mulf %2771, %2757 : vector<8x1xf32>
    %2773 = math.exp %2754 : vector<8x1xf32>
    %2774 = arith.mulf %2773, %2760 : vector<8x1xf32>
    %cst_731 = arith.constant 5.000000e-01 : f32
    %2775 = vector.broadcast %cst_731 : f32 to vector<8x1xf32>
    %2776 = arith.mulf %2775, %2772 : vector<8x1xf32>
    %2777 = arith.subf %2768, %2776 : vector<8x1xf32>
    %cst_732 = arith.constant 1.000000e+00 : f32
    %2778 = arith.subf %3, %cst_732 : f32
    %cst_733 = arith.constant 0.000000e+00 : f32
    %2779 = vector.broadcast %cst_733 : f32 to vector<8x1xf32>
    %2780 = arith.maximumf %2779, %2777 : vector<8x1xf32>
    %2781 = vector.broadcast %2778 : f32 to vector<8x1xf32>
    %2782 = arith.minimumf %2781, %2780 : vector<8x1xf32>
    %cst_734 = arith.constant 5.000000e-01 : f32
    %2783 = vector.broadcast %cst_734 : f32 to vector<8x1xf32>
    %2784 = arith.mulf %2783, %2774 : vector<8x1xf32>
    %2785 = arith.subf %2770, %2784 : vector<8x1xf32>
    %cst_735 = arith.constant 1.000000e+00 : f32
    %2786 = arith.subf %1, %cst_735 : f32
    %cst_736 = arith.constant 0.000000e+00 : f32
    %2787 = vector.broadcast %cst_736 : f32 to vector<8x1xf32>
    %2788 = arith.maximumf %2787, %2785 : vector<8x1xf32>
    %2789 = vector.broadcast %2786 : f32 to vector<8x1xf32>
    %2790 = arith.minimumf %2789, %2788 : vector<8x1xf32>
    %cst_737 = arith.constant 5.000000e-01 : f32
    %2791 = vector.broadcast %cst_737 : f32 to vector<8x1xf32>
    %2792 = arith.mulf %2791, %2772 : vector<8x1xf32>
    %2793 = arith.addf %2768, %2792 : vector<8x1xf32>
    %cst_738 = arith.constant 1.000000e+00 : f32
    %2794 = arith.subf %3, %cst_738 : f32
    %cst_739 = arith.constant 0.000000e+00 : f32
    %2795 = vector.broadcast %cst_739 : f32 to vector<8x1xf32>
    %2796 = arith.maximumf %2795, %2793 : vector<8x1xf32>
    %2797 = vector.broadcast %2794 : f32 to vector<8x1xf32>
    %2798 = arith.minimumf %2797, %2796 : vector<8x1xf32>
    %cst_740 = arith.constant 5.000000e-01 : f32
    %2799 = vector.broadcast %cst_740 : f32 to vector<8x1xf32>
    %2800 = arith.mulf %2799, %2774 : vector<8x1xf32>
    %2801 = arith.addf %2770, %2800 : vector<8x1xf32>
    %cst_741 = arith.constant 1.000000e+00 : f32
    %2802 = arith.subf %1, %cst_741 : f32
    %cst_742 = arith.constant 0.000000e+00 : f32
    %2803 = vector.broadcast %cst_742 : f32 to vector<8x1xf32>
    %2804 = arith.maximumf %2803, %2801 : vector<8x1xf32>
    %2805 = vector.broadcast %2802 : f32 to vector<8x1xf32>
    %2806 = arith.minimumf %2805, %2804 : vector<8x1xf32>
    %2807 = arith.subf %2798, %2782 : vector<8x1xf32>
    %cst_743 = arith.constant 1.000000e+00 : f32
    %2808 = vector.broadcast %cst_743 : f32 to vector<8x1xf32>
    %2809 = arith.addf %2807, %2808 : vector<8x1xf32>
    %2810 = arith.subf %2806, %2790 : vector<8x1xf32>
    %cst_744 = arith.constant 1.000000e+00 : f32
    %2811 = vector.broadcast %cst_744 : f32 to vector<8x1xf32>
    %2812 = arith.addf %2810, %2811 : vector<8x1xf32>
    %2813 = arith.mulf %2809, %2812 : vector<8x1xf32>
    %2814 = vector.broadcast %2782 : vector<8x1xf32> to vector<8x128xf32>
    %2815 = vector.broadcast %47 : vector<1x128xf32> to vector<8x128xf32>
    %2816 = arith.maximumf %2814, %2815 : vector<8x128xf32>
    %2817 = vector.broadcast %2790 : vector<8x1xf32> to vector<8x128xf32>
    %2818 = vector.broadcast %55 : vector<1x128xf32> to vector<8x128xf32>
    %2819 = arith.maximumf %2817, %2818 : vector<8x128xf32>
    %2820 = vector.broadcast %2798 : vector<8x1xf32> to vector<8x128xf32>
    %2821 = vector.broadcast %63 : vector<1x128xf32> to vector<8x128xf32>
    %2822 = arith.minimumf %2820, %2821 : vector<8x128xf32>
    %2823 = vector.broadcast %2806 : vector<8x1xf32> to vector<8x128xf32>
    %2824 = vector.broadcast %71 : vector<1x128xf32> to vector<8x128xf32>
    %2825 = arith.minimumf %2823, %2824 : vector<8x128xf32>
    %2826 = arith.subf %2822, %2816 : vector<8x128xf32>
    %cst_745 = arith.constant 1.000000e+00 : f32
    %2827 = vector.broadcast %cst_745 : f32 to vector<8x128xf32>
    %2828 = arith.addf %2826, %2827 : vector<8x128xf32>
    %cst_746 = arith.constant 0.000000e+00 : f32
    %2829 = vector.broadcast %cst_746 : f32 to vector<8x128xf32>
    %2830 = arith.maximumf %2828, %2829 : vector<8x128xf32>
    %2831 = arith.subf %2825, %2819 : vector<8x128xf32>
    %cst_747 = arith.constant 1.000000e+00 : f32
    %2832 = vector.broadcast %cst_747 : f32 to vector<8x128xf32>
    %2833 = arith.addf %2831, %2832 : vector<8x128xf32>
    %cst_748 = arith.constant 0.000000e+00 : f32
    %2834 = vector.broadcast %cst_748 : f32 to vector<8x128xf32>
    %2835 = arith.maximumf %2833, %2834 : vector<8x128xf32>
    %2836 = arith.mulf %2830, %2835 : vector<8x128xf32>
    %2837 = vector.broadcast %2813 : vector<8x1xf32> to vector<8x128xf32>
    %2838 = vector.broadcast %78 : vector<1x128xf32> to vector<8x128xf32>
    %2839 = arith.addf %2837, %2838 : vector<8x128xf32>
    %2840 = arith.subf %2839, %2836 : vector<8x128xf32>
    %2841 = tpu.iota {dimensions = array<i32: 0>} : vector<8x128xi32>
    %c104_i32 = arith.constant 104 : i32
    %2842 = vector.broadcast %c104_i32 : i32 to vector<8x128xi32>
    %2843 = arith.addi %2842, %2841 : vector<8x128xi32>
    %2844 = tpu.iota {dimensions = array<i32: 1>} : vector<8x128xi32>
    %2845 = arith.cmpi sgt, %2844, %2843 : vector<8x128xi32>
    %cst_749 = arith.constant 0.699999988 : f32
    %2846 = vector.broadcast %cst_749 : f32 to vector<8x128xf32>
    %2847 = arith.mulf %2846, %2840 : vector<8x128xf32>
    %2848 = arith.cmpf ogt, %2836, %2847 : vector<8x128xf32>
    %2849 = arith.andi %2845, %2848 : vector<8x128xi1>
    %cst_750 = arith.constant 1.000000e+00 : f32
    %cst_751 = arith.constant 0.000000e+00 : f32
    %2850 = vector.broadcast %cst_750 : f32 to vector<8x128xf32>
    %2851 = vector.broadcast %cst_751 : f32 to vector<8x128xf32>
    %2852 = arith.select %2849, %2850, %2851 : vector<8x128xi1>, vector<8x128xf32>
    %c104_i32_752 = arith.constant 104 : i32
    %2853 = vector.broadcast %c104_i32_752 : i32 to vector<1x128xi32>
    %2854 = arith.cmpi eq, %91, %2853 : vector<1x128xi32>
    %cst_753 = arith.constant 0.000000e+00 : f32
    %2855 = vector.broadcast %cst_753 : f32 to vector<1x128xf32>
    %2856 = arith.select %2854, %2744, %2855 : vector<1x128xi1>, vector<1x128xf32>
    %2857 = vector.shape_cast %2856 : vector<1x128xf32> to vector<1x1x128xf32>
    %cst_754 = arith.constant dense<0xFF800000> : vector<1xf32>
    %2858 = vector.multi_reduction <maximumf>, %2857, %cst_754 [1, 2] : vector<1x1x128xf32> to vector<1xf32>
    %2859 = vector.shape_cast %2858 : vector<1xf32> to vector<1x1x1xf32>
    %2860 = vector.extract %2859[0, 0, 0] : f32 from vector<1x1x1xf32>
    %2861 = vector.extract_strided_slice %2852 {offsets = [0, 0], sizes = [1, 128], strides = [1, 1]} : vector<8x128xf32> to vector<1x128xf32>
    %cst_755 = arith.constant 0.000000e+00 : f32
    %2862 = arith.cmpf ogt, %2860, %cst_755 : f32
    %2863 = arith.maximumf %2744, %2861 : vector<1x128xf32>
    %2864 = arith.select %2862, %2744, %2863 : vector<1x128xf32>
    %c105_i32 = arith.constant 105 : i32
    %2865 = vector.broadcast %c105_i32 : i32 to vector<1x128xi32>
    %2866 = arith.cmpi eq, %91, %2865 : vector<1x128xi32>
    %cst_756 = arith.constant 0.000000e+00 : f32
    %2867 = vector.broadcast %cst_756 : f32 to vector<1x128xf32>
    %2868 = arith.select %2866, %2864, %2867 : vector<1x128xi1>, vector<1x128xf32>
    %2869 = vector.shape_cast %2868 : vector<1x128xf32> to vector<1x1x128xf32>
    %cst_757 = arith.constant dense<0xFF800000> : vector<1xf32>
    %2870 = vector.multi_reduction <maximumf>, %2869, %cst_757 [1, 2] : vector<1x1x128xf32> to vector<1xf32>
    %2871 = vector.shape_cast %2870 : vector<1xf32> to vector<1x1x1xf32>
    %2872 = vector.extract %2871[0, 0, 0] : f32 from vector<1x1x1xf32>
    %2873 = vector.extract_strided_slice %2852 {offsets = [1, 0], sizes = [1, 128], strides = [1, 1]} : vector<8x128xf32> to vector<1x128xf32>
    %cst_758 = arith.constant 0.000000e+00 : f32
    %2874 = arith.cmpf ogt, %2872, %cst_758 : f32
    %2875 = arith.maximumf %2864, %2873 : vector<1x128xf32>
    %2876 = arith.select %2874, %2864, %2875 : vector<1x128xf32>
    %c106_i32 = arith.constant 106 : i32
    %2877 = vector.broadcast %c106_i32 : i32 to vector<1x128xi32>
    %2878 = arith.cmpi eq, %91, %2877 : vector<1x128xi32>
    %cst_759 = arith.constant 0.000000e+00 : f32
    %2879 = vector.broadcast %cst_759 : f32 to vector<1x128xf32>
    %2880 = arith.select %2878, %2876, %2879 : vector<1x128xi1>, vector<1x128xf32>
    %2881 = vector.shape_cast %2880 : vector<1x128xf32> to vector<1x1x128xf32>
    %cst_760 = arith.constant dense<0xFF800000> : vector<1xf32>
    %2882 = vector.multi_reduction <maximumf>, %2881, %cst_760 [1, 2] : vector<1x1x128xf32> to vector<1xf32>
    %2883 = vector.shape_cast %2882 : vector<1xf32> to vector<1x1x1xf32>
    %2884 = vector.extract %2883[0, 0, 0] : f32 from vector<1x1x1xf32>
    %2885 = vector.extract_strided_slice %2852 {offsets = [2, 0], sizes = [1, 128], strides = [1, 1]} : vector<8x128xf32> to vector<1x128xf32>
    %cst_761 = arith.constant 0.000000e+00 : f32
    %2886 = arith.cmpf ogt, %2884, %cst_761 : f32
    %2887 = arith.maximumf %2876, %2885 : vector<1x128xf32>
    %2888 = arith.select %2886, %2876, %2887 : vector<1x128xf32>
    %c107_i32 = arith.constant 107 : i32
    %2889 = vector.broadcast %c107_i32 : i32 to vector<1x128xi32>
    %2890 = arith.cmpi eq, %91, %2889 : vector<1x128xi32>
    %cst_762 = arith.constant 0.000000e+00 : f32
    %2891 = vector.broadcast %cst_762 : f32 to vector<1x128xf32>
    %2892 = arith.select %2890, %2888, %2891 : vector<1x128xi1>, vector<1x128xf32>
    %2893 = vector.shape_cast %2892 : vector<1x128xf32> to vector<1x1x128xf32>
    %cst_763 = arith.constant dense<0xFF800000> : vector<1xf32>
    %2894 = vector.multi_reduction <maximumf>, %2893, %cst_763 [1, 2] : vector<1x1x128xf32> to vector<1xf32>
    %2895 = vector.shape_cast %2894 : vector<1xf32> to vector<1x1x1xf32>
    %2896 = vector.extract %2895[0, 0, 0] : f32 from vector<1x1x1xf32>
    %2897 = vector.extract_strided_slice %2852 {offsets = [3, 0], sizes = [1, 128], strides = [1, 1]} : vector<8x128xf32> to vector<1x128xf32>
    %cst_764 = arith.constant 0.000000e+00 : f32
    %2898 = arith.cmpf ogt, %2896, %cst_764 : f32
    %2899 = arith.maximumf %2888, %2897 : vector<1x128xf32>
    %2900 = arith.select %2898, %2888, %2899 : vector<1x128xf32>
    %c108_i32 = arith.constant 108 : i32
    %2901 = vector.broadcast %c108_i32 : i32 to vector<1x128xi32>
    %2902 = arith.cmpi eq, %91, %2901 : vector<1x128xi32>
    %cst_765 = arith.constant 0.000000e+00 : f32
    %2903 = vector.broadcast %cst_765 : f32 to vector<1x128xf32>
    %2904 = arith.select %2902, %2900, %2903 : vector<1x128xi1>, vector<1x128xf32>
    %2905 = vector.shape_cast %2904 : vector<1x128xf32> to vector<1x1x128xf32>
    %cst_766 = arith.constant dense<0xFF800000> : vector<1xf32>
    %2906 = vector.multi_reduction <maximumf>, %2905, %cst_766 [1, 2] : vector<1x1x128xf32> to vector<1xf32>
    %2907 = vector.shape_cast %2906 : vector<1xf32> to vector<1x1x1xf32>
    %2908 = vector.extract %2907[0, 0, 0] : f32 from vector<1x1x1xf32>
    %2909 = vector.extract_strided_slice %2852 {offsets = [4, 0], sizes = [1, 128], strides = [1, 1]} : vector<8x128xf32> to vector<1x128xf32>
    %cst_767 = arith.constant 0.000000e+00 : f32
    %2910 = arith.cmpf ogt, %2908, %cst_767 : f32
    %2911 = arith.maximumf %2900, %2909 : vector<1x128xf32>
    %2912 = arith.select %2910, %2900, %2911 : vector<1x128xf32>
    %c109_i32 = arith.constant 109 : i32
    %2913 = vector.broadcast %c109_i32 : i32 to vector<1x128xi32>
    %2914 = arith.cmpi eq, %91, %2913 : vector<1x128xi32>
    %cst_768 = arith.constant 0.000000e+00 : f32
    %2915 = vector.broadcast %cst_768 : f32 to vector<1x128xf32>
    %2916 = arith.select %2914, %2912, %2915 : vector<1x128xi1>, vector<1x128xf32>
    %2917 = vector.shape_cast %2916 : vector<1x128xf32> to vector<1x1x128xf32>
    %cst_769 = arith.constant dense<0xFF800000> : vector<1xf32>
    %2918 = vector.multi_reduction <maximumf>, %2917, %cst_769 [1, 2] : vector<1x1x128xf32> to vector<1xf32>
    %2919 = vector.shape_cast %2918 : vector<1xf32> to vector<1x1x1xf32>
    %2920 = vector.extract %2919[0, 0, 0] : f32 from vector<1x1x1xf32>
    %2921 = vector.extract_strided_slice %2852 {offsets = [5, 0], sizes = [1, 128], strides = [1, 1]} : vector<8x128xf32> to vector<1x128xf32>
    %cst_770 = arith.constant 0.000000e+00 : f32
    %2922 = arith.cmpf ogt, %2920, %cst_770 : f32
    %2923 = arith.maximumf %2912, %2921 : vector<1x128xf32>
    %2924 = arith.select %2922, %2912, %2923 : vector<1x128xf32>
    %c110_i32 = arith.constant 110 : i32
    %2925 = vector.broadcast %c110_i32 : i32 to vector<1x128xi32>
    %2926 = arith.cmpi eq, %91, %2925 : vector<1x128xi32>
    %cst_771 = arith.constant 0.000000e+00 : f32
    %2927 = vector.broadcast %cst_771 : f32 to vector<1x128xf32>
    %2928 = arith.select %2926, %2924, %2927 : vector<1x128xi1>, vector<1x128xf32>
    %2929 = vector.shape_cast %2928 : vector<1x128xf32> to vector<1x1x128xf32>
    %cst_772 = arith.constant dense<0xFF800000> : vector<1xf32>
    %2930 = vector.multi_reduction <maximumf>, %2929, %cst_772 [1, 2] : vector<1x1x128xf32> to vector<1xf32>
    %2931 = vector.shape_cast %2930 : vector<1xf32> to vector<1x1x1xf32>
    %2932 = vector.extract %2931[0, 0, 0] : f32 from vector<1x1x1xf32>
    %2933 = vector.extract_strided_slice %2852 {offsets = [6, 0], sizes = [1, 128], strides = [1, 1]} : vector<8x128xf32> to vector<1x128xf32>
    %cst_773 = arith.constant 0.000000e+00 : f32
    %2934 = arith.cmpf ogt, %2932, %cst_773 : f32
    %2935 = arith.maximumf %2924, %2933 : vector<1x128xf32>
    %2936 = arith.select %2934, %2924, %2935 : vector<1x128xf32>
    %c111_i32 = arith.constant 111 : i32
    %2937 = vector.broadcast %c111_i32 : i32 to vector<1x128xi32>
    %2938 = arith.cmpi eq, %91, %2937 : vector<1x128xi32>
    %cst_774 = arith.constant 0.000000e+00 : f32
    %2939 = vector.broadcast %cst_774 : f32 to vector<1x128xf32>
    %2940 = arith.select %2938, %2936, %2939 : vector<1x128xi1>, vector<1x128xf32>
    %2941 = vector.shape_cast %2940 : vector<1x128xf32> to vector<1x1x128xf32>
    %cst_775 = arith.constant dense<0xFF800000> : vector<1xf32>
    %2942 = vector.multi_reduction <maximumf>, %2941, %cst_775 [1, 2] : vector<1x1x128xf32> to vector<1xf32>
    %2943 = vector.shape_cast %2942 : vector<1xf32> to vector<1x1x1xf32>
    %2944 = vector.extract %2943[0, 0, 0] : f32 from vector<1x1x1xf32>
    %2945 = vector.extract_strided_slice %2852 {offsets = [7, 0], sizes = [1, 128], strides = [1, 1]} : vector<8x128xf32> to vector<1x128xf32>
    %cst_776 = arith.constant 0.000000e+00 : f32
    %2946 = arith.cmpf ogt, %2944, %cst_776 : f32
    %2947 = arith.maximumf %2936, %2945 : vector<1x128xf32>
    %2948 = arith.select %2946, %2936, %2947 : vector<1x128xf32>
    %c0_777 = arith.constant 0 : index
    %c112 = arith.constant 112 : index
    %c0_778 = arith.constant 0 : index
    %2949 = vector.load %arg3[%c0_777, %c112, %c0_778] : memref<1x128x8xf32, #tpu.memory_space<vmem>>, vector<1x8x8xf32>
    %2950 = vector.shape_cast %2949 : vector<1x8x8xf32> to vector<8x8xf32>
    %2951 = vector.extract_strided_slice %2950 {offsets = [0, 0], sizes = [8, 1], strides = [1, 1]} : vector<8x8xf32> to vector<8x1xf32>
    %2952 = vector.extract_strided_slice %2950 {offsets = [0, 1], sizes = [8, 1], strides = [1, 1]} : vector<8x8xf32> to vector<8x1xf32>
    %2953 = vector.extract_strided_slice %2950 {offsets = [0, 2], sizes = [8, 1], strides = [1, 1]} : vector<8x8xf32> to vector<8x1xf32>
    %2954 = vector.extract_strided_slice %2950 {offsets = [0, 3], sizes = [8, 1], strides = [1, 1]} : vector<8x8xf32> to vector<8x1xf32>
    %2955 = vector.extract_strided_slice %2950 {offsets = [0, 4], sizes = [8, 1], strides = [1, 1]} : vector<8x8xf32> to vector<8x1xf32>
    %2956 = vector.extract_strided_slice %2950 {offsets = [0, 5], sizes = [8, 1], strides = [1, 1]} : vector<8x8xf32> to vector<8x1xf32>
    %2957 = vector.extract_strided_slice %2950 {offsets = [0, 6], sizes = [8, 1], strides = [1, 1]} : vector<8x8xf32> to vector<8x1xf32>
    %2958 = vector.extract_strided_slice %2950 {offsets = [0, 7], sizes = [8, 1], strides = [1, 1]} : vector<8x8xf32> to vector<8x1xf32>
    %2959 = arith.subf %2953, %2951 : vector<8x1xf32>
    %cst_779 = arith.constant 1.000000e+00 : f32
    %2960 = vector.broadcast %cst_779 : f32 to vector<8x1xf32>
    %2961 = arith.addf %2959, %2960 : vector<8x1xf32>
    %2962 = arith.subf %2954, %2952 : vector<8x1xf32>
    %cst_780 = arith.constant 1.000000e+00 : f32
    %2963 = vector.broadcast %cst_780 : f32 to vector<8x1xf32>
    %2964 = arith.addf %2962, %2963 : vector<8x1xf32>
    %cst_781 = arith.constant 5.000000e-01 : f32
    %2965 = vector.broadcast %cst_781 : f32 to vector<8x1xf32>
    %2966 = arith.mulf %2965, %2961 : vector<8x1xf32>
    %2967 = arith.addf %2951, %2966 : vector<8x1xf32>
    %cst_782 = arith.constant 5.000000e-01 : f32
    %2968 = vector.broadcast %cst_782 : f32 to vector<8x1xf32>
    %2969 = arith.mulf %2968, %2964 : vector<8x1xf32>
    %2970 = arith.addf %2952, %2969 : vector<8x1xf32>
    %2971 = arith.mulf %2955, %2961 : vector<8x1xf32>
    %2972 = arith.addf %2971, %2967 : vector<8x1xf32>
    %2973 = arith.mulf %2956, %2964 : vector<8x1xf32>
    %2974 = arith.addf %2973, %2970 : vector<8x1xf32>
    %2975 = math.exp %2957 : vector<8x1xf32>
    %2976 = arith.mulf %2975, %2961 : vector<8x1xf32>
    %2977 = math.exp %2958 : vector<8x1xf32>
    %2978 = arith.mulf %2977, %2964 : vector<8x1xf32>
    %cst_783 = arith.constant 5.000000e-01 : f32
    %2979 = vector.broadcast %cst_783 : f32 to vector<8x1xf32>
    %2980 = arith.mulf %2979, %2976 : vector<8x1xf32>
    %2981 = arith.subf %2972, %2980 : vector<8x1xf32>
    %cst_784 = arith.constant 1.000000e+00 : f32
    %2982 = arith.subf %3, %cst_784 : f32
    %cst_785 = arith.constant 0.000000e+00 : f32
    %2983 = vector.broadcast %cst_785 : f32 to vector<8x1xf32>
    %2984 = arith.maximumf %2983, %2981 : vector<8x1xf32>
    %2985 = vector.broadcast %2982 : f32 to vector<8x1xf32>
    %2986 = arith.minimumf %2985, %2984 : vector<8x1xf32>
    %cst_786 = arith.constant 5.000000e-01 : f32
    %2987 = vector.broadcast %cst_786 : f32 to vector<8x1xf32>
    %2988 = arith.mulf %2987, %2978 : vector<8x1xf32>
    %2989 = arith.subf %2974, %2988 : vector<8x1xf32>
    %cst_787 = arith.constant 1.000000e+00 : f32
    %2990 = arith.subf %1, %cst_787 : f32
    %cst_788 = arith.constant 0.000000e+00 : f32
    %2991 = vector.broadcast %cst_788 : f32 to vector<8x1xf32>
    %2992 = arith.maximumf %2991, %2989 : vector<8x1xf32>
    %2993 = vector.broadcast %2990 : f32 to vector<8x1xf32>
    %2994 = arith.minimumf %2993, %2992 : vector<8x1xf32>
    %cst_789 = arith.constant 5.000000e-01 : f32
    %2995 = vector.broadcast %cst_789 : f32 to vector<8x1xf32>
    %2996 = arith.mulf %2995, %2976 : vector<8x1xf32>
    %2997 = arith.addf %2972, %2996 : vector<8x1xf32>
    %cst_790 = arith.constant 1.000000e+00 : f32
    %2998 = arith.subf %3, %cst_790 : f32
    %cst_791 = arith.constant 0.000000e+00 : f32
    %2999 = vector.broadcast %cst_791 : f32 to vector<8x1xf32>
    %3000 = arith.maximumf %2999, %2997 : vector<8x1xf32>
    %3001 = vector.broadcast %2998 : f32 to vector<8x1xf32>
    %3002 = arith.minimumf %3001, %3000 : vector<8x1xf32>
    %cst_792 = arith.constant 5.000000e-01 : f32
    %3003 = vector.broadcast %cst_792 : f32 to vector<8x1xf32>
    %3004 = arith.mulf %3003, %2978 : vector<8x1xf32>
    %3005 = arith.addf %2974, %3004 : vector<8x1xf32>
    %cst_793 = arith.constant 1.000000e+00 : f32
    %3006 = arith.subf %1, %cst_793 : f32
    %cst_794 = arith.constant 0.000000e+00 : f32
    %3007 = vector.broadcast %cst_794 : f32 to vector<8x1xf32>
    %3008 = arith.maximumf %3007, %3005 : vector<8x1xf32>
    %3009 = vector.broadcast %3006 : f32 to vector<8x1xf32>
    %3010 = arith.minimumf %3009, %3008 : vector<8x1xf32>
    %3011 = arith.subf %3002, %2986 : vector<8x1xf32>
    %cst_795 = arith.constant 1.000000e+00 : f32
    %3012 = vector.broadcast %cst_795 : f32 to vector<8x1xf32>
    %3013 = arith.addf %3011, %3012 : vector<8x1xf32>
    %3014 = arith.subf %3010, %2994 : vector<8x1xf32>
    %cst_796 = arith.constant 1.000000e+00 : f32
    %3015 = vector.broadcast %cst_796 : f32 to vector<8x1xf32>
    %3016 = arith.addf %3014, %3015 : vector<8x1xf32>
    %3017 = arith.mulf %3013, %3016 : vector<8x1xf32>
    %3018 = vector.broadcast %2986 : vector<8x1xf32> to vector<8x128xf32>
    %3019 = vector.broadcast %47 : vector<1x128xf32> to vector<8x128xf32>
    %3020 = arith.maximumf %3018, %3019 : vector<8x128xf32>
    %3021 = vector.broadcast %2994 : vector<8x1xf32> to vector<8x128xf32>
    %3022 = vector.broadcast %55 : vector<1x128xf32> to vector<8x128xf32>
    %3023 = arith.maximumf %3021, %3022 : vector<8x128xf32>
    %3024 = vector.broadcast %3002 : vector<8x1xf32> to vector<8x128xf32>
    %3025 = vector.broadcast %63 : vector<1x128xf32> to vector<8x128xf32>
    %3026 = arith.minimumf %3024, %3025 : vector<8x128xf32>
    %3027 = vector.broadcast %3010 : vector<8x1xf32> to vector<8x128xf32>
    %3028 = vector.broadcast %71 : vector<1x128xf32> to vector<8x128xf32>
    %3029 = arith.minimumf %3027, %3028 : vector<8x128xf32>
    %3030 = arith.subf %3026, %3020 : vector<8x128xf32>
    %cst_797 = arith.constant 1.000000e+00 : f32
    %3031 = vector.broadcast %cst_797 : f32 to vector<8x128xf32>
    %3032 = arith.addf %3030, %3031 : vector<8x128xf32>
    %cst_798 = arith.constant 0.000000e+00 : f32
    %3033 = vector.broadcast %cst_798 : f32 to vector<8x128xf32>
    %3034 = arith.maximumf %3032, %3033 : vector<8x128xf32>
    %3035 = arith.subf %3029, %3023 : vector<8x128xf32>
    %cst_799 = arith.constant 1.000000e+00 : f32
    %3036 = vector.broadcast %cst_799 : f32 to vector<8x128xf32>
    %3037 = arith.addf %3035, %3036 : vector<8x128xf32>
    %cst_800 = arith.constant 0.000000e+00 : f32
    %3038 = vector.broadcast %cst_800 : f32 to vector<8x128xf32>
    %3039 = arith.maximumf %3037, %3038 : vector<8x128xf32>
    %3040 = arith.mulf %3034, %3039 : vector<8x128xf32>
    %3041 = vector.broadcast %3017 : vector<8x1xf32> to vector<8x128xf32>
    %3042 = vector.broadcast %78 : vector<1x128xf32> to vector<8x128xf32>
    %3043 = arith.addf %3041, %3042 : vector<8x128xf32>
    %3044 = arith.subf %3043, %3040 : vector<8x128xf32>
    %3045 = tpu.iota {dimensions = array<i32: 0>} : vector<8x128xi32>
    %c112_i32 = arith.constant 112 : i32
    %3046 = vector.broadcast %c112_i32 : i32 to vector<8x128xi32>
    %3047 = arith.addi %3046, %3045 : vector<8x128xi32>
    %3048 = tpu.iota {dimensions = array<i32: 1>} : vector<8x128xi32>
    %3049 = arith.cmpi sgt, %3048, %3047 : vector<8x128xi32>
    %cst_801 = arith.constant 0.699999988 : f32
    %3050 = vector.broadcast %cst_801 : f32 to vector<8x128xf32>
    %3051 = arith.mulf %3050, %3044 : vector<8x128xf32>
    %3052 = arith.cmpf ogt, %3040, %3051 : vector<8x128xf32>
    %3053 = arith.andi %3049, %3052 : vector<8x128xi1>
    %cst_802 = arith.constant 1.000000e+00 : f32
    %cst_803 = arith.constant 0.000000e+00 : f32
    %3054 = vector.broadcast %cst_802 : f32 to vector<8x128xf32>
    %3055 = vector.broadcast %cst_803 : f32 to vector<8x128xf32>
    %3056 = arith.select %3053, %3054, %3055 : vector<8x128xi1>, vector<8x128xf32>
    %c112_i32_804 = arith.constant 112 : i32
    %3057 = vector.broadcast %c112_i32_804 : i32 to vector<1x128xi32>
    %3058 = arith.cmpi eq, %91, %3057 : vector<1x128xi32>
    %cst_805 = arith.constant 0.000000e+00 : f32
    %3059 = vector.broadcast %cst_805 : f32 to vector<1x128xf32>
    %3060 = arith.select %3058, %2948, %3059 : vector<1x128xi1>, vector<1x128xf32>
    %3061 = vector.shape_cast %3060 : vector<1x128xf32> to vector<1x1x128xf32>
    %cst_806 = arith.constant dense<0xFF800000> : vector<1xf32>
    %3062 = vector.multi_reduction <maximumf>, %3061, %cst_806 [1, 2] : vector<1x1x128xf32> to vector<1xf32>
    %3063 = vector.shape_cast %3062 : vector<1xf32> to vector<1x1x1xf32>
    %3064 = vector.extract %3063[0, 0, 0] : f32 from vector<1x1x1xf32>
    %3065 = vector.extract_strided_slice %3056 {offsets = [0, 0], sizes = [1, 128], strides = [1, 1]} : vector<8x128xf32> to vector<1x128xf32>
    %cst_807 = arith.constant 0.000000e+00 : f32
    %3066 = arith.cmpf ogt, %3064, %cst_807 : f32
    %3067 = arith.maximumf %2948, %3065 : vector<1x128xf32>
    %3068 = arith.select %3066, %2948, %3067 : vector<1x128xf32>
    %c113_i32 = arith.constant 113 : i32
    %3069 = vector.broadcast %c113_i32 : i32 to vector<1x128xi32>
    %3070 = arith.cmpi eq, %91, %3069 : vector<1x128xi32>
    %cst_808 = arith.constant 0.000000e+00 : f32
    %3071 = vector.broadcast %cst_808 : f32 to vector<1x128xf32>
    %3072 = arith.select %3070, %3068, %3071 : vector<1x128xi1>, vector<1x128xf32>
    %3073 = vector.shape_cast %3072 : vector<1x128xf32> to vector<1x1x128xf32>
    %cst_809 = arith.constant dense<0xFF800000> : vector<1xf32>
    %3074 = vector.multi_reduction <maximumf>, %3073, %cst_809 [1, 2] : vector<1x1x128xf32> to vector<1xf32>
    %3075 = vector.shape_cast %3074 : vector<1xf32> to vector<1x1x1xf32>
    %3076 = vector.extract %3075[0, 0, 0] : f32 from vector<1x1x1xf32>
    %3077 = vector.extract_strided_slice %3056 {offsets = [1, 0], sizes = [1, 128], strides = [1, 1]} : vector<8x128xf32> to vector<1x128xf32>
    %cst_810 = arith.constant 0.000000e+00 : f32
    %3078 = arith.cmpf ogt, %3076, %cst_810 : f32
    %3079 = arith.maximumf %3068, %3077 : vector<1x128xf32>
    %3080 = arith.select %3078, %3068, %3079 : vector<1x128xf32>
    %c114_i32 = arith.constant 114 : i32
    %3081 = vector.broadcast %c114_i32 : i32 to vector<1x128xi32>
    %3082 = arith.cmpi eq, %91, %3081 : vector<1x128xi32>
    %cst_811 = arith.constant 0.000000e+00 : f32
    %3083 = vector.broadcast %cst_811 : f32 to vector<1x128xf32>
    %3084 = arith.select %3082, %3080, %3083 : vector<1x128xi1>, vector<1x128xf32>
    %3085 = vector.shape_cast %3084 : vector<1x128xf32> to vector<1x1x128xf32>
    %cst_812 = arith.constant dense<0xFF800000> : vector<1xf32>
    %3086 = vector.multi_reduction <maximumf>, %3085, %cst_812 [1, 2] : vector<1x1x128xf32> to vector<1xf32>
    %3087 = vector.shape_cast %3086 : vector<1xf32> to vector<1x1x1xf32>
    %3088 = vector.extract %3087[0, 0, 0] : f32 from vector<1x1x1xf32>
    %3089 = vector.extract_strided_slice %3056 {offsets = [2, 0], sizes = [1, 128], strides = [1, 1]} : vector<8x128xf32> to vector<1x128xf32>
    %cst_813 = arith.constant 0.000000e+00 : f32
    %3090 = arith.cmpf ogt, %3088, %cst_813 : f32
    %3091 = arith.maximumf %3080, %3089 : vector<1x128xf32>
    %3092 = arith.select %3090, %3080, %3091 : vector<1x128xf32>
    %c115_i32 = arith.constant 115 : i32
    %3093 = vector.broadcast %c115_i32 : i32 to vector<1x128xi32>
    %3094 = arith.cmpi eq, %91, %3093 : vector<1x128xi32>
    %cst_814 = arith.constant 0.000000e+00 : f32
    %3095 = vector.broadcast %cst_814 : f32 to vector<1x128xf32>
    %3096 = arith.select %3094, %3092, %3095 : vector<1x128xi1>, vector<1x128xf32>
    %3097 = vector.shape_cast %3096 : vector<1x128xf32> to vector<1x1x128xf32>
    %cst_815 = arith.constant dense<0xFF800000> : vector<1xf32>
    %3098 = vector.multi_reduction <maximumf>, %3097, %cst_815 [1, 2] : vector<1x1x128xf32> to vector<1xf32>
    %3099 = vector.shape_cast %3098 : vector<1xf32> to vector<1x1x1xf32>
    %3100 = vector.extract %3099[0, 0, 0] : f32 from vector<1x1x1xf32>
    %3101 = vector.extract_strided_slice %3056 {offsets = [3, 0], sizes = [1, 128], strides = [1, 1]} : vector<8x128xf32> to vector<1x128xf32>
    %cst_816 = arith.constant 0.000000e+00 : f32
    %3102 = arith.cmpf ogt, %3100, %cst_816 : f32
    %3103 = arith.maximumf %3092, %3101 : vector<1x128xf32>
    %3104 = arith.select %3102, %3092, %3103 : vector<1x128xf32>
    %c116_i32 = arith.constant 116 : i32
    %3105 = vector.broadcast %c116_i32 : i32 to vector<1x128xi32>
    %3106 = arith.cmpi eq, %91, %3105 : vector<1x128xi32>
    %cst_817 = arith.constant 0.000000e+00 : f32
    %3107 = vector.broadcast %cst_817 : f32 to vector<1x128xf32>
    %3108 = arith.select %3106, %3104, %3107 : vector<1x128xi1>, vector<1x128xf32>
    %3109 = vector.shape_cast %3108 : vector<1x128xf32> to vector<1x1x128xf32>
    %cst_818 = arith.constant dense<0xFF800000> : vector<1xf32>
    %3110 = vector.multi_reduction <maximumf>, %3109, %cst_818 [1, 2] : vector<1x1x128xf32> to vector<1xf32>
    %3111 = vector.shape_cast %3110 : vector<1xf32> to vector<1x1x1xf32>
    %3112 = vector.extract %3111[0, 0, 0] : f32 from vector<1x1x1xf32>
    %3113 = vector.extract_strided_slice %3056 {offsets = [4, 0], sizes = [1, 128], strides = [1, 1]} : vector<8x128xf32> to vector<1x128xf32>
    %cst_819 = arith.constant 0.000000e+00 : f32
    %3114 = arith.cmpf ogt, %3112, %cst_819 : f32
    %3115 = arith.maximumf %3104, %3113 : vector<1x128xf32>
    %3116 = arith.select %3114, %3104, %3115 : vector<1x128xf32>
    %c117_i32 = arith.constant 117 : i32
    %3117 = vector.broadcast %c117_i32 : i32 to vector<1x128xi32>
    %3118 = arith.cmpi eq, %91, %3117 : vector<1x128xi32>
    %cst_820 = arith.constant 0.000000e+00 : f32
    %3119 = vector.broadcast %cst_820 : f32 to vector<1x128xf32>
    %3120 = arith.select %3118, %3116, %3119 : vector<1x128xi1>, vector<1x128xf32>
    %3121 = vector.shape_cast %3120 : vector<1x128xf32> to vector<1x1x128xf32>
    %cst_821 = arith.constant dense<0xFF800000> : vector<1xf32>
    %3122 = vector.multi_reduction <maximumf>, %3121, %cst_821 [1, 2] : vector<1x1x128xf32> to vector<1xf32>
    %3123 = vector.shape_cast %3122 : vector<1xf32> to vector<1x1x1xf32>
    %3124 = vector.extract %3123[0, 0, 0] : f32 from vector<1x1x1xf32>
    %3125 = vector.extract_strided_slice %3056 {offsets = [5, 0], sizes = [1, 128], strides = [1, 1]} : vector<8x128xf32> to vector<1x128xf32>
    %cst_822 = arith.constant 0.000000e+00 : f32
    %3126 = arith.cmpf ogt, %3124, %cst_822 : f32
    %3127 = arith.maximumf %3116, %3125 : vector<1x128xf32>
    %3128 = arith.select %3126, %3116, %3127 : vector<1x128xf32>
    %c118_i32 = arith.constant 118 : i32
    %3129 = vector.broadcast %c118_i32 : i32 to vector<1x128xi32>
    %3130 = arith.cmpi eq, %91, %3129 : vector<1x128xi32>
    %cst_823 = arith.constant 0.000000e+00 : f32
    %3131 = vector.broadcast %cst_823 : f32 to vector<1x128xf32>
    %3132 = arith.select %3130, %3128, %3131 : vector<1x128xi1>, vector<1x128xf32>
    %3133 = vector.shape_cast %3132 : vector<1x128xf32> to vector<1x1x128xf32>
    %cst_824 = arith.constant dense<0xFF800000> : vector<1xf32>
    %3134 = vector.multi_reduction <maximumf>, %3133, %cst_824 [1, 2] : vector<1x1x128xf32> to vector<1xf32>
    %3135 = vector.shape_cast %3134 : vector<1xf32> to vector<1x1x1xf32>
    %3136 = vector.extract %3135[0, 0, 0] : f32 from vector<1x1x1xf32>
    %3137 = vector.extract_strided_slice %3056 {offsets = [6, 0], sizes = [1, 128], strides = [1, 1]} : vector<8x128xf32> to vector<1x128xf32>
    %cst_825 = arith.constant 0.000000e+00 : f32
    %3138 = arith.cmpf ogt, %3136, %cst_825 : f32
    %3139 = arith.maximumf %3128, %3137 : vector<1x128xf32>
    %3140 = arith.select %3138, %3128, %3139 : vector<1x128xf32>
    %c119_i32 = arith.constant 119 : i32
    %3141 = vector.broadcast %c119_i32 : i32 to vector<1x128xi32>
    %3142 = arith.cmpi eq, %91, %3141 : vector<1x128xi32>
    %cst_826 = arith.constant 0.000000e+00 : f32
    %3143 = vector.broadcast %cst_826 : f32 to vector<1x128xf32>
    %3144 = arith.select %3142, %3140, %3143 : vector<1x128xi1>, vector<1x128xf32>
    %3145 = vector.shape_cast %3144 : vector<1x128xf32> to vector<1x1x128xf32>
    %cst_827 = arith.constant dense<0xFF800000> : vector<1xf32>
    %3146 = vector.multi_reduction <maximumf>, %3145, %cst_827 [1, 2] : vector<1x1x128xf32> to vector<1xf32>
    %3147 = vector.shape_cast %3146 : vector<1xf32> to vector<1x1x1xf32>
    %3148 = vector.extract %3147[0, 0, 0] : f32 from vector<1x1x1xf32>
    %3149 = vector.extract_strided_slice %3056 {offsets = [7, 0], sizes = [1, 128], strides = [1, 1]} : vector<8x128xf32> to vector<1x128xf32>
    %cst_828 = arith.constant 0.000000e+00 : f32
    %3150 = arith.cmpf ogt, %3148, %cst_828 : f32
    %3151 = arith.maximumf %3140, %3149 : vector<1x128xf32>
    %3152 = arith.select %3150, %3140, %3151 : vector<1x128xf32>
    %c0_829 = arith.constant 0 : index
    %c120 = arith.constant 120 : index
    %c0_830 = arith.constant 0 : index
    %3153 = vector.load %arg3[%c0_829, %c120, %c0_830] : memref<1x128x8xf32, #tpu.memory_space<vmem>>, vector<1x8x8xf32>
    %3154 = vector.shape_cast %3153 : vector<1x8x8xf32> to vector<8x8xf32>
    %3155 = vector.extract_strided_slice %3154 {offsets = [0, 0], sizes = [8, 1], strides = [1, 1]} : vector<8x8xf32> to vector<8x1xf32>
    %3156 = vector.extract_strided_slice %3154 {offsets = [0, 1], sizes = [8, 1], strides = [1, 1]} : vector<8x8xf32> to vector<8x1xf32>
    %3157 = vector.extract_strided_slice %3154 {offsets = [0, 2], sizes = [8, 1], strides = [1, 1]} : vector<8x8xf32> to vector<8x1xf32>
    %3158 = vector.extract_strided_slice %3154 {offsets = [0, 3], sizes = [8, 1], strides = [1, 1]} : vector<8x8xf32> to vector<8x1xf32>
    %3159 = vector.extract_strided_slice %3154 {offsets = [0, 4], sizes = [8, 1], strides = [1, 1]} : vector<8x8xf32> to vector<8x1xf32>
    %3160 = vector.extract_strided_slice %3154 {offsets = [0, 5], sizes = [8, 1], strides = [1, 1]} : vector<8x8xf32> to vector<8x1xf32>
    %3161 = vector.extract_strided_slice %3154 {offsets = [0, 6], sizes = [8, 1], strides = [1, 1]} : vector<8x8xf32> to vector<8x1xf32>
    %3162 = vector.extract_strided_slice %3154 {offsets = [0, 7], sizes = [8, 1], strides = [1, 1]} : vector<8x8xf32> to vector<8x1xf32>
    %3163 = arith.subf %3157, %3155 : vector<8x1xf32>
    %cst_831 = arith.constant 1.000000e+00 : f32
    %3164 = vector.broadcast %cst_831 : f32 to vector<8x1xf32>
    %3165 = arith.addf %3163, %3164 : vector<8x1xf32>
    %3166 = arith.subf %3158, %3156 : vector<8x1xf32>
    %cst_832 = arith.constant 1.000000e+00 : f32
    %3167 = vector.broadcast %cst_832 : f32 to vector<8x1xf32>
    %3168 = arith.addf %3166, %3167 : vector<8x1xf32>
    %cst_833 = arith.constant 5.000000e-01 : f32
    %3169 = vector.broadcast %cst_833 : f32 to vector<8x1xf32>
    %3170 = arith.mulf %3169, %3165 : vector<8x1xf32>
    %3171 = arith.addf %3155, %3170 : vector<8x1xf32>
    %cst_834 = arith.constant 5.000000e-01 : f32
    %3172 = vector.broadcast %cst_834 : f32 to vector<8x1xf32>
    %3173 = arith.mulf %3172, %3168 : vector<8x1xf32>
    %3174 = arith.addf %3156, %3173 : vector<8x1xf32>
    %3175 = arith.mulf %3159, %3165 : vector<8x1xf32>
    %3176 = arith.addf %3175, %3171 : vector<8x1xf32>
    %3177 = arith.mulf %3160, %3168 : vector<8x1xf32>
    %3178 = arith.addf %3177, %3174 : vector<8x1xf32>
    %3179 = math.exp %3161 : vector<8x1xf32>
    %3180 = arith.mulf %3179, %3165 : vector<8x1xf32>
    %3181 = math.exp %3162 : vector<8x1xf32>
    %3182 = arith.mulf %3181, %3168 : vector<8x1xf32>
    %cst_835 = arith.constant 5.000000e-01 : f32
    %3183 = vector.broadcast %cst_835 : f32 to vector<8x1xf32>
    %3184 = arith.mulf %3183, %3180 : vector<8x1xf32>
    %3185 = arith.subf %3176, %3184 : vector<8x1xf32>
    %cst_836 = arith.constant 1.000000e+00 : f32
    %3186 = arith.subf %3, %cst_836 : f32
    %cst_837 = arith.constant 0.000000e+00 : f32
    %3187 = vector.broadcast %cst_837 : f32 to vector<8x1xf32>
    %3188 = arith.maximumf %3187, %3185 : vector<8x1xf32>
    %3189 = vector.broadcast %3186 : f32 to vector<8x1xf32>
    %3190 = arith.minimumf %3189, %3188 : vector<8x1xf32>
    %cst_838 = arith.constant 5.000000e-01 : f32
    %3191 = vector.broadcast %cst_838 : f32 to vector<8x1xf32>
    %3192 = arith.mulf %3191, %3182 : vector<8x1xf32>
    %3193 = arith.subf %3178, %3192 : vector<8x1xf32>
    %cst_839 = arith.constant 1.000000e+00 : f32
    %3194 = arith.subf %1, %cst_839 : f32
    %cst_840 = arith.constant 0.000000e+00 : f32
    %3195 = vector.broadcast %cst_840 : f32 to vector<8x1xf32>
    %3196 = arith.maximumf %3195, %3193 : vector<8x1xf32>
    %3197 = vector.broadcast %3194 : f32 to vector<8x1xf32>
    %3198 = arith.minimumf %3197, %3196 : vector<8x1xf32>
    %cst_841 = arith.constant 5.000000e-01 : f32
    %3199 = vector.broadcast %cst_841 : f32 to vector<8x1xf32>
    %3200 = arith.mulf %3199, %3180 : vector<8x1xf32>
    %3201 = arith.addf %3176, %3200 : vector<8x1xf32>
    %cst_842 = arith.constant 1.000000e+00 : f32
    %3202 = arith.subf %3, %cst_842 : f32
    %cst_843 = arith.constant 0.000000e+00 : f32
    %3203 = vector.broadcast %cst_843 : f32 to vector<8x1xf32>
    %3204 = arith.maximumf %3203, %3201 : vector<8x1xf32>
    %3205 = vector.broadcast %3202 : f32 to vector<8x1xf32>
    %3206 = arith.minimumf %3205, %3204 : vector<8x1xf32>
    %cst_844 = arith.constant 5.000000e-01 : f32
    %3207 = vector.broadcast %cst_844 : f32 to vector<8x1xf32>
    %3208 = arith.mulf %3207, %3182 : vector<8x1xf32>
    %3209 = arith.addf %3178, %3208 : vector<8x1xf32>
    %cst_845 = arith.constant 1.000000e+00 : f32
    %3210 = arith.subf %1, %cst_845 : f32
    %cst_846 = arith.constant 0.000000e+00 : f32
    %3211 = vector.broadcast %cst_846 : f32 to vector<8x1xf32>
    %3212 = arith.maximumf %3211, %3209 : vector<8x1xf32>
    %3213 = vector.broadcast %3210 : f32 to vector<8x1xf32>
    %3214 = arith.minimumf %3213, %3212 : vector<8x1xf32>
    %3215 = arith.subf %3206, %3190 : vector<8x1xf32>
    %cst_847 = arith.constant 1.000000e+00 : f32
    %3216 = vector.broadcast %cst_847 : f32 to vector<8x1xf32>
    %3217 = arith.addf %3215, %3216 : vector<8x1xf32>
    %3218 = arith.subf %3214, %3198 : vector<8x1xf32>
    %cst_848 = arith.constant 1.000000e+00 : f32
    %3219 = vector.broadcast %cst_848 : f32 to vector<8x1xf32>
    %3220 = arith.addf %3218, %3219 : vector<8x1xf32>
    %3221 = arith.mulf %3217, %3220 : vector<8x1xf32>
    %3222 = vector.broadcast %3190 : vector<8x1xf32> to vector<8x128xf32>
    %3223 = vector.broadcast %47 : vector<1x128xf32> to vector<8x128xf32>
    %3224 = arith.maximumf %3222, %3223 : vector<8x128xf32>
    %3225 = vector.broadcast %3198 : vector<8x1xf32> to vector<8x128xf32>
    %3226 = vector.broadcast %55 : vector<1x128xf32> to vector<8x128xf32>
    %3227 = arith.maximumf %3225, %3226 : vector<8x128xf32>
    %3228 = vector.broadcast %3206 : vector<8x1xf32> to vector<8x128xf32>
    %3229 = vector.broadcast %63 : vector<1x128xf32> to vector<8x128xf32>
    %3230 = arith.minimumf %3228, %3229 : vector<8x128xf32>
    %3231 = vector.broadcast %3214 : vector<8x1xf32> to vector<8x128xf32>
    %3232 = vector.broadcast %71 : vector<1x128xf32> to vector<8x128xf32>
    %3233 = arith.minimumf %3231, %3232 : vector<8x128xf32>
    %3234 = arith.subf %3230, %3224 : vector<8x128xf32>
    %cst_849 = arith.constant 1.000000e+00 : f32
    %3235 = vector.broadcast %cst_849 : f32 to vector<8x128xf32>
    %3236 = arith.addf %3234, %3235 : vector<8x128xf32>
    %cst_850 = arith.constant 0.000000e+00 : f32
    %3237 = vector.broadcast %cst_850 : f32 to vector<8x128xf32>
    %3238 = arith.maximumf %3236, %3237 : vector<8x128xf32>
    %3239 = arith.subf %3233, %3227 : vector<8x128xf32>
    %cst_851 = arith.constant 1.000000e+00 : f32
    %3240 = vector.broadcast %cst_851 : f32 to vector<8x128xf32>
    %3241 = arith.addf %3239, %3240 : vector<8x128xf32>
    %cst_852 = arith.constant 0.000000e+00 : f32
    %3242 = vector.broadcast %cst_852 : f32 to vector<8x128xf32>
    %3243 = arith.maximumf %3241, %3242 : vector<8x128xf32>
    %3244 = arith.mulf %3238, %3243 : vector<8x128xf32>
    %3245 = vector.broadcast %3221 : vector<8x1xf32> to vector<8x128xf32>
    %3246 = vector.broadcast %78 : vector<1x128xf32> to vector<8x128xf32>
    %3247 = arith.addf %3245, %3246 : vector<8x128xf32>
    %3248 = arith.subf %3247, %3244 : vector<8x128xf32>
    %3249 = tpu.iota {dimensions = array<i32: 0>} : vector<8x128xi32>
    %c120_i32 = arith.constant 120 : i32
    %3250 = vector.broadcast %c120_i32 : i32 to vector<8x128xi32>
    %3251 = arith.addi %3250, %3249 : vector<8x128xi32>
    %3252 = tpu.iota {dimensions = array<i32: 1>} : vector<8x128xi32>
    %3253 = arith.cmpi sgt, %3252, %3251 : vector<8x128xi32>
    %cst_853 = arith.constant 0.699999988 : f32
    %3254 = vector.broadcast %cst_853 : f32 to vector<8x128xf32>
    %3255 = arith.mulf %3254, %3248 : vector<8x128xf32>
    %3256 = arith.cmpf ogt, %3244, %3255 : vector<8x128xf32>
    %3257 = arith.andi %3253, %3256 : vector<8x128xi1>
    %cst_854 = arith.constant 1.000000e+00 : f32
    %cst_855 = arith.constant 0.000000e+00 : f32
    %3258 = vector.broadcast %cst_854 : f32 to vector<8x128xf32>
    %3259 = vector.broadcast %cst_855 : f32 to vector<8x128xf32>
    %3260 = arith.select %3257, %3258, %3259 : vector<8x128xi1>, vector<8x128xf32>
    %c120_i32_856 = arith.constant 120 : i32
    %3261 = vector.broadcast %c120_i32_856 : i32 to vector<1x128xi32>
    %3262 = arith.cmpi eq, %91, %3261 : vector<1x128xi32>
    %cst_857 = arith.constant 0.000000e+00 : f32
    %3263 = vector.broadcast %cst_857 : f32 to vector<1x128xf32>
    %3264 = arith.select %3262, %3152, %3263 : vector<1x128xi1>, vector<1x128xf32>
    %3265 = vector.shape_cast %3264 : vector<1x128xf32> to vector<1x1x128xf32>
    %cst_858 = arith.constant dense<0xFF800000> : vector<1xf32>
    %3266 = vector.multi_reduction <maximumf>, %3265, %cst_858 [1, 2] : vector<1x1x128xf32> to vector<1xf32>
    %3267 = vector.shape_cast %3266 : vector<1xf32> to vector<1x1x1xf32>
    %3268 = vector.extract %3267[0, 0, 0] : f32 from vector<1x1x1xf32>
    %3269 = vector.extract_strided_slice %3260 {offsets = [0, 0], sizes = [1, 128], strides = [1, 1]} : vector<8x128xf32> to vector<1x128xf32>
    %cst_859 = arith.constant 0.000000e+00 : f32
    %3270 = arith.cmpf ogt, %3268, %cst_859 : f32
    %3271 = arith.maximumf %3152, %3269 : vector<1x128xf32>
    %3272 = arith.select %3270, %3152, %3271 : vector<1x128xf32>
    %c121_i32 = arith.constant 121 : i32
    %3273 = vector.broadcast %c121_i32 : i32 to vector<1x128xi32>
    %3274 = arith.cmpi eq, %91, %3273 : vector<1x128xi32>
    %cst_860 = arith.constant 0.000000e+00 : f32
    %3275 = vector.broadcast %cst_860 : f32 to vector<1x128xf32>
    %3276 = arith.select %3274, %3272, %3275 : vector<1x128xi1>, vector<1x128xf32>
    %3277 = vector.shape_cast %3276 : vector<1x128xf32> to vector<1x1x128xf32>
    %cst_861 = arith.constant dense<0xFF800000> : vector<1xf32>
    %3278 = vector.multi_reduction <maximumf>, %3277, %cst_861 [1, 2] : vector<1x1x128xf32> to vector<1xf32>
    %3279 = vector.shape_cast %3278 : vector<1xf32> to vector<1x1x1xf32>
    %3280 = vector.extract %3279[0, 0, 0] : f32 from vector<1x1x1xf32>
    %3281 = vector.extract_strided_slice %3260 {offsets = [1, 0], sizes = [1, 128], strides = [1, 1]} : vector<8x128xf32> to vector<1x128xf32>
    %cst_862 = arith.constant 0.000000e+00 : f32
    %3282 = arith.cmpf ogt, %3280, %cst_862 : f32
    %3283 = arith.maximumf %3272, %3281 : vector<1x128xf32>
    %3284 = arith.select %3282, %3272, %3283 : vector<1x128xf32>
    %c122_i32 = arith.constant 122 : i32
    %3285 = vector.broadcast %c122_i32 : i32 to vector<1x128xi32>
    %3286 = arith.cmpi eq, %91, %3285 : vector<1x128xi32>
    %cst_863 = arith.constant 0.000000e+00 : f32
    %3287 = vector.broadcast %cst_863 : f32 to vector<1x128xf32>
    %3288 = arith.select %3286, %3284, %3287 : vector<1x128xi1>, vector<1x128xf32>
    %3289 = vector.shape_cast %3288 : vector<1x128xf32> to vector<1x1x128xf32>
    %cst_864 = arith.constant dense<0xFF800000> : vector<1xf32>
    %3290 = vector.multi_reduction <maximumf>, %3289, %cst_864 [1, 2] : vector<1x1x128xf32> to vector<1xf32>
    %3291 = vector.shape_cast %3290 : vector<1xf32> to vector<1x1x1xf32>
    %3292 = vector.extract %3291[0, 0, 0] : f32 from vector<1x1x1xf32>
    %3293 = vector.extract_strided_slice %3260 {offsets = [2, 0], sizes = [1, 128], strides = [1, 1]} : vector<8x128xf32> to vector<1x128xf32>
    %cst_865 = arith.constant 0.000000e+00 : f32
    %3294 = arith.cmpf ogt, %3292, %cst_865 : f32
    %3295 = arith.maximumf %3284, %3293 : vector<1x128xf32>
    %3296 = arith.select %3294, %3284, %3295 : vector<1x128xf32>
    %c123_i32 = arith.constant 123 : i32
    %3297 = vector.broadcast %c123_i32 : i32 to vector<1x128xi32>
    %3298 = arith.cmpi eq, %91, %3297 : vector<1x128xi32>
    %cst_866 = arith.constant 0.000000e+00 : f32
    %3299 = vector.broadcast %cst_866 : f32 to vector<1x128xf32>
    %3300 = arith.select %3298, %3296, %3299 : vector<1x128xi1>, vector<1x128xf32>
    %3301 = vector.shape_cast %3300 : vector<1x128xf32> to vector<1x1x128xf32>
    %cst_867 = arith.constant dense<0xFF800000> : vector<1xf32>
    %3302 = vector.multi_reduction <maximumf>, %3301, %cst_867 [1, 2] : vector<1x1x128xf32> to vector<1xf32>
    %3303 = vector.shape_cast %3302 : vector<1xf32> to vector<1x1x1xf32>
    %3304 = vector.extract %3303[0, 0, 0] : f32 from vector<1x1x1xf32>
    %3305 = vector.extract_strided_slice %3260 {offsets = [3, 0], sizes = [1, 128], strides = [1, 1]} : vector<8x128xf32> to vector<1x128xf32>
    %cst_868 = arith.constant 0.000000e+00 : f32
    %3306 = arith.cmpf ogt, %3304, %cst_868 : f32
    %3307 = arith.maximumf %3296, %3305 : vector<1x128xf32>
    %3308 = arith.select %3306, %3296, %3307 : vector<1x128xf32>
    %c124_i32 = arith.constant 124 : i32
    %3309 = vector.broadcast %c124_i32 : i32 to vector<1x128xi32>
    %3310 = arith.cmpi eq, %91, %3309 : vector<1x128xi32>
    %cst_869 = arith.constant 0.000000e+00 : f32
    %3311 = vector.broadcast %cst_869 : f32 to vector<1x128xf32>
    %3312 = arith.select %3310, %3308, %3311 : vector<1x128xi1>, vector<1x128xf32>
    %3313 = vector.shape_cast %3312 : vector<1x128xf32> to vector<1x1x128xf32>
    %cst_870 = arith.constant dense<0xFF800000> : vector<1xf32>
    %3314 = vector.multi_reduction <maximumf>, %3313, %cst_870 [1, 2] : vector<1x1x128xf32> to vector<1xf32>
    %3315 = vector.shape_cast %3314 : vector<1xf32> to vector<1x1x1xf32>
    %3316 = vector.extract %3315[0, 0, 0] : f32 from vector<1x1x1xf32>
    %3317 = vector.extract_strided_slice %3260 {offsets = [4, 0], sizes = [1, 128], strides = [1, 1]} : vector<8x128xf32> to vector<1x128xf32>
    %cst_871 = arith.constant 0.000000e+00 : f32
    %3318 = arith.cmpf ogt, %3316, %cst_871 : f32
    %3319 = arith.maximumf %3308, %3317 : vector<1x128xf32>
    %3320 = arith.select %3318, %3308, %3319 : vector<1x128xf32>
    %c125_i32 = arith.constant 125 : i32
    %3321 = vector.broadcast %c125_i32 : i32 to vector<1x128xi32>
    %3322 = arith.cmpi eq, %91, %3321 : vector<1x128xi32>
    %cst_872 = arith.constant 0.000000e+00 : f32
    %3323 = vector.broadcast %cst_872 : f32 to vector<1x128xf32>
    %3324 = arith.select %3322, %3320, %3323 : vector<1x128xi1>, vector<1x128xf32>
    %3325 = vector.shape_cast %3324 : vector<1x128xf32> to vector<1x1x128xf32>
    %cst_873 = arith.constant dense<0xFF800000> : vector<1xf32>
    %3326 = vector.multi_reduction <maximumf>, %3325, %cst_873 [1, 2] : vector<1x1x128xf32> to vector<1xf32>
    %3327 = vector.shape_cast %3326 : vector<1xf32> to vector<1x1x1xf32>
    %3328 = vector.extract %3327[0, 0, 0] : f32 from vector<1x1x1xf32>
    %3329 = vector.extract_strided_slice %3260 {offsets = [5, 0], sizes = [1, 128], strides = [1, 1]} : vector<8x128xf32> to vector<1x128xf32>
    %cst_874 = arith.constant 0.000000e+00 : f32
    %3330 = arith.cmpf ogt, %3328, %cst_874 : f32
    %3331 = arith.maximumf %3320, %3329 : vector<1x128xf32>
    %3332 = arith.select %3330, %3320, %3331 : vector<1x128xf32>
    %c126_i32 = arith.constant 126 : i32
    %3333 = vector.broadcast %c126_i32 : i32 to vector<1x128xi32>
    %3334 = arith.cmpi eq, %91, %3333 : vector<1x128xi32>
    %cst_875 = arith.constant 0.000000e+00 : f32
    %3335 = vector.broadcast %cst_875 : f32 to vector<1x128xf32>
    %3336 = arith.select %3334, %3332, %3335 : vector<1x128xi1>, vector<1x128xf32>
    %3337 = vector.shape_cast %3336 : vector<1x128xf32> to vector<1x1x128xf32>
    %cst_876 = arith.constant dense<0xFF800000> : vector<1xf32>
    %3338 = vector.multi_reduction <maximumf>, %3337, %cst_876 [1, 2] : vector<1x1x128xf32> to vector<1xf32>
    %3339 = vector.shape_cast %3338 : vector<1xf32> to vector<1x1x1xf32>
    %3340 = vector.extract %3339[0, 0, 0] : f32 from vector<1x1x1xf32>
    %3341 = vector.extract_strided_slice %3260 {offsets = [6, 0], sizes = [1, 128], strides = [1, 1]} : vector<8x128xf32> to vector<1x128xf32>
    %cst_877 = arith.constant 0.000000e+00 : f32
    %3342 = arith.cmpf ogt, %3340, %cst_877 : f32
    %3343 = arith.maximumf %3332, %3341 : vector<1x128xf32>
    %3344 = arith.select %3342, %3332, %3343 : vector<1x128xf32>
    %c127_i32 = arith.constant 127 : i32
    %3345 = vector.broadcast %c127_i32 : i32 to vector<1x128xi32>
    %3346 = arith.cmpi eq, %91, %3345 : vector<1x128xi32>
    %cst_878 = arith.constant 0.000000e+00 : f32
    %3347 = vector.broadcast %cst_878 : f32 to vector<1x128xf32>
    %3348 = arith.select %3346, %3344, %3347 : vector<1x128xi1>, vector<1x128xf32>
    %3349 = vector.shape_cast %3348 : vector<1x128xf32> to vector<1x1x128xf32>
    %cst_879 = arith.constant dense<0xFF800000> : vector<1xf32>
    %3350 = vector.multi_reduction <maximumf>, %3349, %cst_879 [1, 2] : vector<1x1x128xf32> to vector<1xf32>
    %3351 = vector.shape_cast %3350 : vector<1xf32> to vector<1x1x1xf32>
    %3352 = vector.extract %3351[0, 0, 0] : f32 from vector<1x1x1xf32>
    %3353 = vector.extract_strided_slice %3260 {offsets = [7, 0], sizes = [1, 128], strides = [1, 1]} : vector<8x128xf32> to vector<1x128xf32>
    %cst_880 = arith.constant 0.000000e+00 : f32
    %3354 = arith.cmpf ogt, %3352, %cst_880 : f32
    %3355 = arith.maximumf %3344, %3353 : vector<1x128xf32>
    %3356 = arith.select %3354, %3344, %3355 : vector<1x128xf32>
    %cst_881 = arith.constant 1.000000e+00 : f32
    %3357 = vector.broadcast %cst_881 : f32 to vector<1x128xf32>
    %3358 = arith.subf %3357, %3356 : vector<1x128xf32>
    %c0_882 = arith.constant 0 : index
    %c0_883 = arith.constant 0 : index
    %c0_884 = arith.constant 0 : index
    %3359 = vector.load %arg5[%c0_882, %c0_883, %c0_884] : memref<1x1x128xf32, #tpu.memory_space<vmem>>, vector<1x1x128xf32>
    %3360 = vector.shape_cast %3359 : vector<1x1x128xf32> to vector<1x128xf32>
    %3361 = vector.shape_cast %3358 : vector<1x128xf32> to vector<1x1x128xf32>
    tpu.vector_store %arg5[%c0_882, %c0_883, %c0_884], %3361 {strides = array<i32>} : memref<1x1x128xf32, #tpu.memory_space<vmem>>, vector<1x1x128xf32>,
    return
  }
  func.func @transform_0(%arg0: i32) -> (i32, i32) {
    %c0_i32 = arith.constant 0 : i32
    %c0_i32_0 = arith.constant 0 : i32
    %c0_i32_1 = arith.constant 0 : i32
    return %c0_i32, %c0_i32_0 : i32, i32
  }
  func.func @transform_1(%arg0: i32) -> (i32, i32, i32) {
    %c0_i32 = arith.constant 0 : i32
    %c0_i32_0 = arith.constant 0 : i32
    %c0_i32_1 = arith.constant 0 : i32
    return %arg0, %c0_i32, %c0_i32_0 : i32, i32, i32
  }
  func.func @transform_2(%arg0: i32) -> (i32, i32, i32) {
    %c0_i32 = arith.constant 0 : i32
    %c0_i32_0 = arith.constant 0 : i32
    %c0_i32_1 = arith.constant 0 : i32
    return %arg0, %c0_i32, %c0_i32_0 : i32, i32, i32
  }
  func.func @transform_3(%arg0: i32) -> (i32, i32, i32) {
    %c0_i32 = arith.constant 0 : i32
    %c0_i32_0 = arith.constant 0 : i32
    %c0_i32_1 = arith.constant 0 : i32
    return %arg0, %c0_i32, %c0_i32_0 : i32, i32, i32
  }
  func.func @transform_4(%arg0: i32) -> (i32, i32, i32) {
    %c0_i32 = arith.constant 0 : i32
    %c0_i32_0 = arith.constant 0 : i32
    %c0_i32_1 = arith.constant 0 : i32
    return %arg0, %c0_i32, %c0_i32_0 : i32, i32, i32
  }
}

</mosaic_0001>

<llo_original>
// kernel: tpu_custom_call.1
$region0: #{tpu_custom_call.1}
  #allocation0 [shape = 'u32[]', space=smem, size = 0x4, offset = 0x4, fixed_abs, tag = 'smem constant byte address 0x4 - core index']
  #allocation1 [shape = 'u32[72,128]{1,0:T(1,128)}', space=vmem, size = 0x9000, scoped, tag = 'internal scratch']
  %s0 = inlined_call_operand.vmem [shape: f32[2,3], index: 0, kind: input, shape index: {}]
  %s1 = inlined_call_operand.vmem [shape: f32[2,8,128], index: 1, kind: input, shape index: {}]
  %s2 = inlined_call_operand.vmem [shape: f32[2,128,8], index: 2, kind: input, shape index: {}]
  %s3 = inlined_call_operand.hbm [shape: f32[2,4,128], index: 3, kind: output, shape index: {0}]
  %s4 = inlined_call_operand.hbm [shape: f32[2,1,128], index: 4, kind: output, shape index: {1}]
  %5 = xla_tuple %s3, %s4
  %s6 = sld [smem:[#allocation0]]
  $region57: #{tpu_custom_call.1} parent=0
    _
  %s8 = ssub.s32 1, %s6
  %s9 = scalar_select 0, %s8, %s6
  $region1: #{tpu_custom_call.1} parent=0
    #allocation2 [shape = 'u8[1024]{0}', space=smem, size = 0x400, scoped, tag = 'input window, operand 0, single buffered']
    #allocation3 [shape = 's32[2]{0}', space=sflag, size = 0x8, scoped, tag = 'scoped memory for tpu_custom_call.1']
    #allocation4 [shape = 's32[2]{0}', space=sflag, size = 0x8, scoped, tag = 'scoped memory for tpu_custom_call.1']
    #allocation5 [shape = 'u8[4096]{0}', space=vmem, size = 0x1000, scoped, tag = 'output window, operand 0']
    #allocation6 [shape = 'u8[1024]{0}', space=vmem, size = 0x400, scoped, tag = 'output window, operand 1']
    #allocation7 [shape = 's32[2]{0}', space=sflag, size = 0x8, scoped, tag = 'scoped memory for tpu_custom_call.1']
    %10 = vsyncpa [#allocation4], 0
    %11 = vsyncpa [#allocation3], 0
    %s12 = scalar_lea.sflag [#allocation3], 1
    %13 = vsyncpa %s12, 0
    %14 = vsyncpa [#allocation7], 0
    %s15 = scalar_lea.sflag [#allocation7], 1
    %16 = vsyncpa %s15, 0
    loop: start=0, step=1, limit=4
    $region2: #{tpu_custom_call.1} parent=1 // loop_pre_header
      _
    $region3: #{tpu_custom_call.1} parent=1 // loop_header
      %s18 = sphi 0, %s22
      %p19 = scmp.ge.s32.totalorder %s18, 4
      %s26 = sphi 0, %s26
      %s28 = sphi 0, %s26
      %s29 = sphi 0, %s28
      %s43 = sphi 0, %s29
      %s49 = sphi 0, %s51
      %s52 = sphi 0, %s49
      %s53 = sphi 0, %s52
      %s69 = sphi 0, %s53
      %s75 = sphi 0, %s77
      %s78 = sphi 0, %s75
      %s79 = sphi 0, %s78
      %s95 = sphi 0, %s79
      %s101 = sphi 0, %s103
      %s104 = sphi 0, %s101
      %s105 = sphi 0, %s104
      %s121 = sphi 0, %s105
      %s127 = sphi 0, %s129
      %s130 = sphi 0, %s127
      %s131 = sphi 0, %s130
      %s147 = sphi 0, %s131
    $region4: #{tpu_custom_call.1} parent=1 // loop_header_branch
      %21 = sbr.rel (%p19) target = $region8
    $region5: #{tpu_custom_call.1} parent=1 // loop_body
      %s23 = ssub.s32 %s18, 1
      %s24 = ssub.s32 %s18, 2
      %s25 = sadd.s32 %s18, 1
      %s27 = sadd.s32 %s26, 1
      %p30 = scmp.eq.s32.totalorder %s18, 1
      %p31 = scmp.ne.s32.totalorder %s26, %s28
      %p32 = scmp.eq.s32.totalorder %s18, 0
      %p33 = por %p31, %p32
      %p34 = scmp.ne.s32.totalorder %s26, %s28
      %p35 = scmp.eq.s32.totalorder %s23, 1
      %p36 = por %p34, %p35
      %p37 = scmp.ne.s32.totalorder %s28, %s29
      %p38 = scmp.eq.s32.totalorder %s23, 0
      %p39 = por %p37, %p38
      %p40 = scmp.ne.s32.totalorder %s28, %s29
      %p41 = scmp.eq.s32.totalorder %s24, 1
      %p42 = por %p40, %p41
      %p44 = scmp.ne.s32.totalorder %s29, %s43
      %p45 = scmp.eq.s32.totalorder %s24, 0
      %p46 = por %p44, %p45
      %s47 = ssub.s32 %s18, %s25
      %p48 = scmp.eq.s32.totalorder %s47, 0
      %s50 = sadd.s32 %s49, 1
      %s51 = scalar_select %p48, %s49, %s50
      %p54 = pneg %p48
      %p55 = scmp.eq.s32.totalorder %s18, 1
      %p56 = por %p54, %p55
      %p57 = scmp.ne.s32.totalorder %s49, %s52
      %p58 = scmp.eq.s32.totalorder %s18, 0
      %p59 = por %p57, %p58
      %p60 = scmp.ne.s32.totalorder %s49, %s52
      %p61 = scmp.eq.s32.totalorder %s23, 1
      %p62 = por %p60, %p61
      %p63 = scmp.ne.s32.totalorder %s52, %s53
      %p64 = scmp.eq.s32.totalorder %s23, 0
      %p65 = por %p63, %p64
      %p66 = scmp.ne.s32.totalorder %s52, %s53
      %p67 = scmp.eq.s32.totalorder %s24, 1
      %p68 = por %p66, %p67
      %p70 = scmp.ne.s32.totalorder %s53, %s69
      %p71 = scmp.eq.s32.totalorder %s24, 0
      %p72 = por %p70, %p71
      %s73 = ssub.s32 %s18, %s25
      %p74 = scmp.eq.s32.totalorder %s73, 0
      %s76 = sadd.s32 %s75, 1
      %s77 = scalar_select %p74, %s75, %s76
      %p80 = pneg %p74
      %p81 = scmp.eq.s32.totalorder %s18, 1
      %p82 = por %p80, %p81
      %p83 = scmp.ne.s32.totalorder %s75, %s78
      %p84 = scmp.eq.s32.totalorder %s18, 0
      %p85 = por %p83, %p84
      %p86 = scmp.ne.s32.totalorder %s75, %s78
      %p87 = scmp.eq.s32.totalorder %s23, 1
      %p88 = por %p86, %p87
      %p89 = scmp.ne.s32.totalorder %s78, %s79
      %p90 = scmp.eq.s32.totalorder %s23, 0
      %p91 = por %p89, %p90
      %p92 = scmp.ne.s32.totalorder %s78, %s79
      %p93 = scmp.eq.s32.totalorder %s24, 1
      %p94 = por %p92, %p93
      %p96 = scmp.ne.s32.totalorder %s79, %s95
      %p97 = scmp.eq.s32.totalorder %s24, 0
      %p98 = por %p96, %p97
      %s99 = ssub.s32 %s18, %s25
      %p100 = scmp.eq.s32.totalorder %s99, 0
      %s102 = sadd.s32 %s101, 1
      %s103 = scalar_select %p100, %s101, %s102
      %p106 = pneg %p100
      %p107 = scmp.eq.s32.totalorder %s18, 1
      %p108 = por %p106, %p107
      %p109 = scmp.ne.s32.totalorder %s101, %s104
      %p110 = scmp.eq.s32.totalorder %s18, 0
      %p111 = por %p109, %p110
      %p112 = scmp.ne.s32.totalorder %s101, %s104
      %p113 = scmp.eq.s32.totalorder %s23, 1
      %p114 = por %p112, %p113
      %p115 = scmp.ne.s32.totalorder %s104, %s105
      %p116 = scmp.eq.s32.totalorder %s23, 0
      %p117 = por %p115, %p116
      %p118 = scmp.ne.s32.totalorder %s104, %s105
      %p119 = scmp.eq.s32.totalorder %s24, 1
      %p120 = por %p118, %p119
      %p122 = scmp.ne.s32.totalorder %s105, %s121
      %p123 = scmp.eq.s32.totalorder %s24, 0
      %p124 = por %p122, %p123
      %s125 = ssub.s32 %s18, %s25
      %p126 = scmp.eq.s32.totalorder %s125, 0
      %s128 = sadd.s32 %s127, 1
      %s129 = scalar_select %p126, %s127, %s128
      %p132 = pneg %p126
      %p133 = scmp.eq.s32.totalorder %s18, 1
      %p134 = por %p132, %p133
      %p135 = scmp.ne.s32.totalorder %s127, %s130
      %p136 = scmp.eq.s32.totalorder %s18, 0
      %p137 = por %p135, %p136
      %p138 = scmp.ne.s32.totalorder %s127, %s130
      %p139 = scmp.eq.s32.totalorder %s23, 1
      %p140 = por %p138, %p139
      %p141 = scmp.ne.s32.totalorder %s130, %s131
      %p142 = scmp.eq.s32.totalorder %s23, 0
      %p143 = por %p141, %p142
      %p144 = scmp.ne.s32.totalorder %s130, %s131
      %p145 = scmp.eq.s32.totalorder %s24, 1
      %p146 = por %p144, %p145
      %p148 = scmp.ne.s32.totalorder %s131, %s147
      %p149 = scmp.eq.s32.totalorder %s24, 0
      %p150 = por %p148, %p149
      %p151 = scmp.le.s32.totalorder 1, %s18
      %p152 = scmp.lt.s32.totalorder %s18, 3
      %p153 = pnand %p151, %p152
      %p154 = pneg %p153
      // Predicated region
      $region9: #{tpu_custom_call.1} parent=5 // pred_check
        _
      $region10: #{tpu_custom_call.1} parent=5 // pred_check_branch
        %156 = sbr.rel (%p153) target = $region12
      $region11: #{tpu_custom_call.1} parent=5 // pred_region
        %s157 = ssub.s32 %s18, 1
        // Predicated region
        $region13: #{tpu_custom_call.1} parent=11 // pred_check
          %p158 = pneg %p39
        $region14: #{tpu_custom_call.1} parent=11 // pred_check_branch
          %160 = sbr.rel (%p158) target = $region16
        $region15: #{tpu_custom_call.1} parent=11 // pred_region
          %162 = vsyncadd [#allocation4], 0
          %s164 = sshll.u32 %s0, 4
          %s165 = int_to_ptr.vmem [resolvable:$true] %s164
          %167 = dma.vmem_to_smem %s165, 32, [#allocation2], [#allocation4]
        $region16: #{tpu_custom_call.1} parent=11 // pred_fallthru
          _
      $region12: #{tpu_custom_call.1} parent=5 // pred_fallthru
        _
      %p168 = scmp.lt.s32.totalorder %s18, 2
      // Predicated region
      $region17: #{tpu_custom_call.1} parent=5 // pred_check
        %p169 = pneg %p168
      $region18: #{tpu_custom_call.1} parent=5 // pred_check_branch
        %171 = sbr.rel (%p169) target = $region20
      $region19: #{tpu_custom_call.1} parent=5 // pred_region
        // Predicated region
        $region21: #{tpu_custom_call.1} parent=19 // pred_check
          %p172 = pneg %p59
        $region22: #{tpu_custom_call.1} parent=19 // pred_check_branch
          %174 = sbr.rel (%p172) target = $region24
        $region23: #{tpu_custom_call.1} parent=19 // pred_region
          %p175 = scmp.lt.s32.totalorder %s18, 1
          %s176 = scalar_select %p175, %s18, 1
          %s177 = smul.addr %s176, 8
          %s178 = scalar_lea.vmem %s1, %s177
        $region24: #{tpu_custom_call.1} parent=19 // pred_fallthru
          _
        // Predicated region
        $region25: #{tpu_custom_call.1} parent=19 // pred_check
          %p179 = pneg %p85
        $region26: #{tpu_custom_call.1} parent=19 // pred_check_branch
          %181 = sbr.rel (%p179) target = $region28
        $region27: #{tpu_custom_call.1} parent=19 // pred_region
          %p182 = scmp.lt.s32.totalorder %s18, 1
          %s183 = scalar_select %p182, %s18, 1
          %s184 = smul.addr %s183, 16
          %s185 = smul.addr %s184, 8
          %s186 = scalar_lea.vmem %s2, %s185
        $region28: #{tpu_custom_call.1} parent=19 // pred_fallthru
          _
      $region20: #{tpu_custom_call.1} parent=5 // pred_fallthru
        _
      %p187 = scmp.le.s32.totalorder 1, %s18
      %p188 = scmp.lt.s32.totalorder %s18, 3
      %p189 = pnand %p187, %p188
      %p190 = pneg %p189
      // Predicated region
      $region29: #{tpu_custom_call.1} parent=5 // pred_check
        _
      $region30: #{tpu_custom_call.1} parent=5 // pred_check_branch
        %192 = sbr.rel (%p189) target = $region32
      $region31: #{tpu_custom_call.1} parent=5 // pred_region
        %s193 = ssub.s32 %s18, 1
        // Predicated region
        $region33: #{tpu_custom_call.1} parent=31 // pred_check
          %p194 = pneg %p39
        $region34: #{tpu_custom_call.1} parent=31 // pred_check_branch
          %196 = sbr.rel (%p194) target = $region36
        $region35: #{tpu_custom_call.1} parent=31 // pred_region
          %198 = dma.done [#allocation4], 32
        $region36: #{tpu_custom_call.1} parent=31 // pred_fallthru
          _
        %199 = sfence
        %p200 = pneg %p39
        %p201 = pneg %p36
        %p202 = scmp.lt.s32.totalorder %s23, 1
        %s203 = scalar_select %p202, %s23, 1
        %s204 = smul.addr %s203, 8
        %s205 = scalar_lea.vmem %s1, %s204
        %p206 = pneg %p65
        %p207 = pneg %p62
        %p208 = scmp.lt.s32.totalorder %s23, 1
        %s209 = scalar_select %p208, %s23, 1
        %s210 = smul.addr %s209, 16
        %s211 = smul.addr %s210, 8
        %s212 = scalar_lea.vmem %s2, %s211
        %p213 = pneg %p91
        %p214 = pneg %p88
        %p215 = pneg %p117
        %p216 = pneg %p114
        %s217 = sand.u32 %s104, 1
        %s218 = scalar_lea.sflag [#allocation3], %s217
        %s219 = sand.u32 %s104, 1
        %s220 = smul.addr %s219, 4
        %s221 = scalar_lea.vmem [#allocation5], %s220
        %p222 = pneg %p143
        %p223 = pneg %p140
        %s224 = sand.u32 %s130, 1
        %s225 = scalar_lea.sflag [#allocation7], %s224
        %s226 = sand.u32 %s130, 1
        %s227 = scalar_lea.vmem [#allocation6], %s226
        %p228 = scmp.lt.s32.totalorder %s23, 1
        %s229 = scalar_select %p228, %s23, 1
        %s230 = smul.addr %s229, 8
        %s231 = scalar_lea.vmem %s1, %s230
        %p232 = scmp.lt.s32.totalorder %s23, 1
        %s233 = scalar_select %p232, %s23, 1
        %s234 = smul.addr %s233, 16
        %s235 = smul.addr %s234, 8
        %s236 = scalar_lea.vmem %s2, %s235
        %s237 = smul.u32 %s23, 128
        %s238 = sld [smem:[#allocation2 + %s237]]
        %s239 = sadd.s32 %s237, 1
        %s240 = sld [smem:[#allocation2 + %s239]]
        %v241 = vld [vmem:[%s231] sm:$0x1]
        %v242 = vld [vmem:[%s231 + $0x1] sm:$0x1]
        %v243 = vld [vmem:[%s231 + $0x2] sm:$0x1]
        %v244 = vld [vmem:[%s231 + $0x3] sm:$0x1]
        %v245 = vld [vmem:[%s231 + $0x4] sm:$0x1]
        %v246 = vld [vmem:[%s231 + $0x5] sm:$0x1]
        %v247 = vld [vmem:[%s231 + $0x6] sm:$0x1]
        %v248 = vld [vmem:[%s231 + $0x7] sm:$0x1]
        %v249 = vsub.f32 %v243, %v241
        %v250 = vadd.f32 %v249, 1.0
        %v251 = vsub.f32 %v244, %v242
        %v252 = vadd.f32 %v251, 1.0
        %v253 = vmul.f32 %v250, 0.5
        %v254 = vadd.f32 %v241, %v253
        %v255 = vmul.f32 %v252, 0.5
        %v256 = vadd.f32 %v242, %v255
        %v257 = vmul.f32 %v245, %v250
        %v258 = vadd.f32 %v257, %v254
        %v259 = vmul.f32 %v246, %v252
        %v260 = vadd.f32 %v259, %v256
        %v261 = vmul.f32 %v247, 1.442695
        %v262 = vpow.pop %v261
        %v263 = vmul.f32 %v262, %v250
        %v264 = vmul.f32 %v248, 1.442695
        %v265 = vpow.pop %v264
        %v266 = vmul.f32 %v265, %v252
        %v267 = vmul.f32 %v263, 0.5
        %v268 = vsub.f32 %v258, %v267
        %s269 = ssub.f32 %s240, 1.0
        %v270 = vmax.f32 %v268, 0.0
        %v271 = vstv %s269
        %v272 = vmin.f32 %v271, %v270
        %v273 = vmul.f32 %v266, 0.5
        %v274 = vsub.f32 %v260, %v273
        %s275 = ssub.f32 %s238, 1.0
        %v276 = vmax.f32 %v274, 0.0
        %v277 = vstv %s275
        %v278 = vmin.f32 %v277, %v276
        %v279 = vadd.f32 %v258, %v267
        %v280 = vmax.f32 %v279, 0.0
        %v281 = vmin.f32 %v271, %v280
        %v282 = vadd.f32 %v260, %v273
        %v283 = vmax.f32 %v282, 0.0
        %v284 = vmin.f32 %v277, %v283
        %v285 = vsub.f32 %v281, %v272
        %v286 = vadd.f32 %v285, 1.0
        %v287 = vsub.f32 %v284, %v278
        %v288 = vadd.f32 %v287, 1.0
        %v289 = vmul.f32 %v286, %v288
        %290 = vst [vmem:[%s221] sm:$0x1] %v272
        %291 = vst [vmem:[%s221 + $0x1] sm:$0x1] %v278
        %292 = vst [vmem:[%s221 + $0x2] sm:$0x1] %v281
        %293 = vst [vmem:[%s221 + $0x3] sm:$0x1] %v284
        %v294 = vlaneseq
        %v295 = vand.u32 %v294, 127
        %v296 = vld [vmem:[%s236] sm:$0xff]
        %298 = vrot.lane.b32.xlu0 %v296, 2
        %v299 = vpop.permute.xlu0 %298
        %v301 = vsub.f32 %v296, %v299
        %v302 = vadd.f32 %v301, 1.0
        %v303 = vmul.f32 %v302, 0.5
        %305 = vrot.lane.b32.xlu0 %v303, 126
        %v306 = vpop.permute.xlu0 %305
        %v308 = vadd.f32 %v296, %v306
        %310 = vrot.lane.b32.xlu0 %v302, 2
        %v311 = vpop.permute.xlu0 %310
        %v313 = vmul.f32 %v296, %v311
        %315 = vrot.lane.b32.xlu0 %v308, 4
        %v316 = vpop.permute.xlu0 %315
        %v318 = vadd.f32 %v313, %v316
        %v319 = vmul.f32 %v296, 1.442695
        %v320 = vpow.pop %v319
        %321 = vrot.lane.b32.xlu0 %v302, 4
        %v322 = vpop.permute.xlu0 %321
        %v324 = vmul.f32 %v320, %v322
        %v325 = vmul.f32 %v324, 0.5
        %327 = vrot.lane.b32.xlu0 %v325, 126
        %v328 = vpop.permute.xlu0 %327
        %v330 = vsub.f32 %v318, %v328
        %v331 = vmax.f32 %v330, 0.0
        %v332 = vmin.f32 %v271, %v331
        %v333 = vmin.f32 %v277, %v331
        %v334 = vadd.f32 %v318, %v328
        %v335 = vmax.f32 %v334, 0.0
        %v336 = vmin.f32 %v271, %v335
        %v337 = vmin.f32 %v277, %v335
        %v338 = vsub.f32 %v336, %v332
        %v339 = vadd.f32 %v338, 1.0
        %v340 = vsub.f32 %v337, %v333
        %v341 = vadd.f32 %v340, 1.0
        %343 = vrot.lane.b32.xlu0 %v341, 127
        %v344 = vpop.permute.xlu0 %343
        %v346 = vmul.f32 %v339, %v344
        %348 = vset.pattern.permute.xlu0 4
        %349 = vperm.xlu0 %348, %v332
        %v350 = vpop.permute.xlu0 %349
        %v352 = vperm.slane %v272, 0
        %v353 = vmax.f32 %v350, %v352
        %355 = vset.pattern.permute.xlu0 5
        %356 = vperm.xlu0 %355, %v333
        %v357 = vpop.permute.xlu0 %356
        %v359 = vperm.slane %v278, 0
        %v360 = vmax.f32 %v357, %v359
        %362 = vset.pattern.permute.xlu0 4
        %363 = vperm.xlu0 %362, %v336
        %v364 = vpop.permute.xlu0 %363
        %v366 = vperm.slane %v281, 0
        %v367 = vmin.f32 %v364, %v366
        %369 = vset.pattern.permute.xlu0 5
        %370 = vperm.xlu0 %369, %v337
        %v371 = vpop.permute.xlu0 %370
        %v373 = vperm.slane %v284, 0
        %v374 = vmin.f32 %v371, %v373
        %v375 = vsub.f32 %v367, %v353
        %v376 = vadd.f32 %v375, 1.0
        %v377 = vmax.f32 %v376, 0.0
        %v378 = vsub.f32 %v374, %v360
        %v379 = vadd.f32 %v378, 1.0
        %v380 = vmax.f32 %v379, 0.0
        %v381 = vmul.f32 %v377, %v380
        %383 = vset.pattern.permute.xlu0 4
        %384 = vperm.xlu0 %383, %v346
        %v385 = vpop.permute.xlu0 %384
        %v387 = vperm.slane %v289, 0
        %v388 = vadd.f32 %v385, %v387
        %v389 = vsub.f32 %v388, %v381
        %v390 = vlaneseq
        %v391 = vshrl.u32 %v390, 7
        %vm392 = vcmp.gt.s32.totalorder %v295, %v391
        %v393 = vmul.f32 %v389, 0.7
        %vm394 = vcmp.gt.f32.partialorder %v381, %v393
        %vm395 = vmand %vm392, %vm394
        %v396 = vsel %vm395, 1.0, 0.0
        %p397 = scmp.gt.f32.partialorder 0.0, 0.0
        %v398 = vmax.f32 %v396, 0.0
        %s399 = scalar_select %p397, 1, 0
        %v400 = vstv %s399
        %vm401 = vcmp.eq.s32.totalorder %v400, 1
        %v402 = vsel %vm401, 0.0, %v398
        %vm403 = vcmp.eq.s32.totalorder %v295, 1
        %v404 = vsel %vm403, %v402, 0.0
        %vm405 = vcmask 1040384
        %v406 = vsel %vm405, %v404, -inf
        %407 = vmax.xlane.f32.xlu0 %v406
        %v408 = vpop.xlane.xlu0 %407
        %v409 = vrot.slane %v408, 4
        %v410 = vmax.f32 %v408, %v409
        %v411 = vrot.slane %v410, 2
        %v412 = vmax.f32 %v410, %v411
        %v413 = vrot.slane %v412, 1
        %v414 = vmax.f32 %v412, %v413
        %s415 = vtos %v414
        %p416 = scmp.gt.f32.partialorder %s415, 0.0
        %v418 = vrot.slane %v396, 1
        %v420 = vmax.f32 %v402, %v418
        %s421 = scalar_select %p416, 1, 0
        %v422 = vstv %s421
        %vm423 = vcmp.eq.s32.totalorder %v422, 1
        %v424 = vsel %vm423, %v402, %v420
        %vm425 = vcmp.eq.s32.totalorder %v295, 2
        %v426 = vsel %vm425, %v424, 0.0
        %v427 = vsel %vm405, %v426, -inf
        %428 = vmax.xlane.f32.xlu0 %v427
        %v429 = vpop.xlane.xlu0 %428
        %v430 = vrot.slane %v429, 4
        %v431 = vmax.f32 %v429, %v430
        %v432 = vrot.slane %v431, 2
        %v433 = vmax.f32 %v431, %v432
        %v434 = vrot.slane %v433, 1
        %v435 = vmax.f32 %v433, %v434
        %s436 = vtos %v435
        %p437 = scmp.gt.f32.partialorder %s436, 0.0
        %v438 = vrot.slane %v396, 2
        %v440 = vmax.f32 %v424, %v438
        %s441 = scalar_select %p437, 1, 0
        %v442 = vstv %s441
        %vm443 = vcmp.eq.s32.totalorder %v442, 1
        %v444 = vsel %vm443, %v424, %v440
        %vm445 = vcmp.eq.s32.totalorder %v295, 3
        %v446 = vsel %vm445, %v444, 0.0
        %v447 = vsel %vm405, %v446, -inf
        %448 = vmax.xlane.f32.xlu0 %v447
        %v449 = vpop.xlane.xlu0 %448
        %v450 = vrot.slane %v449, 4
        %v451 = vmax.f32 %v449, %v450
        %v452 = vrot.slane %v451, 2
        %v453 = vmax.f32 %v451, %v452
        %v454 = vrot.slane %v453, 1
        %v455 = vmax.f32 %v453, %v454
        %s456 = vtos %v455
        %p457 = scmp.gt.f32.partialorder %s456, 0.0
        %v458 = vrot.slane %v396, 3
        %v460 = vmax.f32 %v444, %v458
        %s461 = scalar_select %p457, 1, 0
        %v462 = vstv %s461
        %vm463 = vcmp.eq.s32.totalorder %v462, 1
        %v464 = vsel %vm463, %v444, %v460
        %vm465 = vcmp.eq.s32.totalorder %v295, 4
        %v466 = vsel %vm465, %v464, 0.0
        %v467 = vsel %vm405, %v466, -inf
        %468 = vmax.xlane.f32.xlu0 %v467
        %v469 = vpop.xlane.xlu0 %468
        %v470 = vrot.slane %v469, 4
        %v471 = vmax.f32 %v469, %v470
        %v472 = vrot.slane %v471, 2
        %v473 = vmax.f32 %v471, %v472
        %v474 = vrot.slane %v473, 1
        %v475 = vmax.f32 %v473, %v474
        %s476 = vtos %v475
        %p477 = scmp.gt.f32.partialorder %s476, 0.0
        %v478 = vrot.slane %v396, 4
        %v480 = vmax.f32 %v464, %v478
        %s481 = scalar_select %p477, 1, 0
        %v482 = vstv %s481
        %vm483 = vcmp.eq.s32.totalorder %v482, 1
        %v484 = vsel %vm483, %v464, %v480
        %vm485 = vcmp.eq.s32.totalorder %v295, 5
        %v486 = vsel %vm485, %v484, 0.0
        %v487 = vsel %vm405, %v486, -inf
        %488 = vmax.xlane.f32.xlu0 %v487
        %v489 = vpop.xlane.xlu0 %488
        %v490 = vrot.slane %v489, 4
        %v491 = vmax.f32 %v489, %v490
        %v492 = vrot.slane %v491, 2
        %v493 = vmax.f32 %v491, %v492
        %v494 = vrot.slane %v493, 1
        %v495 = vmax.f32 %v493, %v494
        %s496 = vtos %v495
        %p497 = scmp.gt.f32.partialorder %s496, 0.0
        %v498 = vrot.slane %v396, 5
        %v500 = vmax.f32 %v484, %v498
        %s501 = scalar_select %p497, 1, 0
        %v502 = vstv %s501
        %vm503 = vcmp.eq.s32.totalorder %v502, 1
        %v504 = vsel %vm503, %v484, %v500
        %vm505 = vcmp.eq.s32.totalorder %v295, 6
        %v506 = vsel %vm505, %v504, 0.0
        %v507 = vsel %vm405, %v506, -inf
        %508 = vmax.xlane.f32.xlu0 %v507
        %v509 = vpop.xlane.xlu0 %508
        %v510 = vrot.slane %v509, 4
        %v511 = vmax.f32 %v509, %v510
        %v512 = vrot.slane %v511, 2
        %v513 = vmax.f32 %v511, %v512
        %v514 = vrot.slane %v513, 1
        %v515 = vmax.f32 %v513, %v514
        %s516 = vtos %v515
        %p517 = scmp.gt.f32.partialorder %s516, 0.0
        %v518 = vrot.slane %v396, 6
        %v520 = vmax.f32 %v504, %v518
        %s521 = scalar_select %p517, 1, 0
        %v522 = vstv %s521
        %vm523 = vcmp.eq.s32.totalorder %v522, 1
        %v524 = vsel %vm523, %v504, %v520
        %vm525 = vcmp.eq.s32.totalorder %v295, 7
        %v526 = vsel %vm525, %v524, 0.0
        %v527 = vsel %vm405, %v526, -inf
        %528 = vmax.xlane.f32.xlu0 %v527
        %v529 = vpop.xlane.xlu0 %528
        %v530 = vrot.slane %v529, 4
        %v531 = vmax.f32 %v529, %v530
        %v532 = vrot.slane %v531, 2
        %v533 = vmax.f32 %v531, %v532
        %v534 = vrot.slane %v533, 1
        %v535 = vmax.f32 %v533, %v534
        %s536 = vtos %v535
        %p537 = scmp.gt.f32.partialorder %s536, 0.0
        %v538 = vrot.slane %v396, 7
        %v540 = vmax.f32 %v524, %v538
        %s541 = scalar_select %p537, 1, 0
        %v542 = vstv %s541
        %vm543 = vcmp.eq.s32.totalorder %v542, 1
        %v544 = vsel %vm543, %v524, %v540
        %v545 = vld [vmem:[%s236 + $0x8] sm:$0xff]
        %547 = vrot.lane.b32.xlu0 %v545, 2
        %v548 = vpop.permute.xlu0 %547
        %v550 = vsub.f32 %v545, %v548
        %v551 = vadd.f32 %v550, 1.0
        %v552 = vmul.f32 %v551, 0.5
        %554 = vrot.lane.b32.xlu0 %v552, 126
        %v555 = vpop.permute.xlu0 %554
        %v557 = vadd.f32 %v545, %v555
        %559 = vrot.lane.b32.xlu0 %v551, 2
        %v560 = vpop.permute.xlu0 %559
        %v562 = vmul.f32 %v545, %v560
        %564 = vrot.lane.b32.xlu0 %v557, 4
        %v565 = vpop.permute.xlu0 %564
        %v567 = vadd.f32 %v562, %v565
        %v568 = vmul.f32 %v545, 1.442695
        %v569 = vpow.pop %v568
        %570 = vrot.lane.b32.xlu0 %v551, 4
        %v571 = vpop.permute.xlu0 %570
        %v573 = vmul.f32 %v569, %v571
        %v574 = vmul.f32 %v573, 0.5
        %576 = vrot.lane.b32.xlu0 %v574, 126
        %v577 = vpop.permute.xlu0 %576
        %v579 = vsub.f32 %v567, %v577
        %v580 = vmax.f32 %v579, 0.0
        %v581 = vmin.f32 %v271, %v580
        %v582 = vmin.f32 %v277, %v580
        %v583 = vadd.f32 %v567, %v577
        %v584 = vmax.f32 %v583, 0.0
        %v585 = vmin.f32 %v271, %v584
        %v586 = vmin.f32 %v277, %v584
        %v587 = vsub.f32 %v585, %v581
        %v588 = vadd.f32 %v587, 1.0
        %v589 = vsub.f32 %v586, %v582
        %v590 = vadd.f32 %v589, 1.0
        %592 = vrot.lane.b32.xlu0 %v590, 127
        %v593 = vpop.permute.xlu0 %592
        %v595 = vmul.f32 %v588, %v593
        %597 = vset.pattern.permute.xlu0 4
        %598 = vperm.xlu0 %597, %v581
        %v599 = vpop.permute.xlu0 %598
        %v601 = vmax.f32 %v599, %v352
        %603 = vset.pattern.permute.xlu0 5
        %604 = vperm.xlu0 %603, %v582
        %v605 = vpop.permute.xlu0 %604
        %v607 = vmax.f32 %v605, %v359
        %609 = vset.pattern.permute.xlu0 4
        %610 = vperm.xlu0 %609, %v585
        %v611 = vpop.permute.xlu0 %610
        %v613 = vmin.f32 %v611, %v366
        %615 = vset.pattern.permute.xlu0 5
        %616 = vperm.xlu0 %615, %v586
        %v617 = vpop.permute.xlu0 %616
        %v619 = vmin.f32 %v617, %v373
        %v620 = vsub.f32 %v613, %v601
        %v621 = vadd.f32 %v620, 1.0
        %v622 = vmax.f32 %v621, 0.0
        %v623 = vsub.f32 %v619, %v607
        %v624 = vadd.f32 %v623, 1.0
        %v625 = vmax.f32 %v624, 0.0
        %v626 = vmul.f32 %v622, %v625
        %628 = vset.pattern.permute.xlu0 4
        %629 = vperm.xlu0 %628, %v595
        %v630 = vpop.permute.xlu0 %629
        %v632 = vadd.f32 %v630, %v387
        %v633 = vsub.f32 %v632, %v626
        %v634 = vadd.s32 %v391, 8
        %vm635 = vcmp.gt.s32.totalorder %v295, %v634
        %v636 = vmul.f32 %v633, 0.7
        %vm637 = vcmp.gt.f32.partialorder %v626, %v636
        %vm638 = vmand %vm635, %vm637
        %v639 = vsel %vm638, 1.0, 0.0
        %vm640 = vcmp.eq.s32.totalorder %v295, 8
        %v641 = vsel %vm640, %v544, 0.0
        %v642 = vsel %vm405, %v641, -inf
        %643 = vmax.xlane.f32.xlu0 %v642
        %v644 = vpop.xlane.xlu0 %643
        %v645 = vrot.slane %v644, 4
        %v646 = vmax.f32 %v644, %v645
        %v647 = vrot.slane %v646, 2
        %v648 = vmax.f32 %v646, %v647
        %v649 = vrot.slane %v648, 1
        %v650 = vmax.f32 %v648, %v649
        %s651 = vtos %v650
        %p652 = scmp.gt.f32.partialorder %s651, 0.0
        %v653 = vmax.f32 %v544, %v639
        %s654 = scalar_select %p652, 1, 0
        %v655 = vstv %s654
        %vm656 = vcmp.eq.s32.totalorder %v655, 1
        %v657 = vsel %vm656, %v544, %v653
        %vm658 = vcmp.eq.s32.totalorder %v295, 9
        %v659 = vsel %vm658, %v657, 0.0
        %v660 = vsel %vm405, %v659, -inf
        %661 = vmax.xlane.f32.xlu0 %v660
        %v662 = vpop.xlane.xlu0 %661
        %v663 = vrot.slane %v662, 4
        %v664 = vmax.f32 %v662, %v663
        %v665 = vrot.slane %v664, 2
        %v666 = vmax.f32 %v664, %v665
        %v667 = vrot.slane %v666, 1
        %v668 = vmax.f32 %v666, %v667
        %s669 = vtos %v668
        %p670 = scmp.gt.f32.partialorder %s669, 0.0
        %v672 = vrot.slane %v639, 1
        %v674 = vmax.f32 %v657, %v672
        %s675 = scalar_select %p670, 1, 0
        %v676 = vstv %s675
        %vm677 = vcmp.eq.s32.totalorder %v676, 1
        %v678 = vsel %vm677, %v657, %v674
        %vm679 = vcmp.eq.s32.totalorder %v295, 10
        %v680 = vsel %vm679, %v678, 0.0
        %v681 = vsel %vm405, %v680, -inf
        %682 = vmax.xlane.f32.xlu0 %v681
        %v683 = vpop.xlane.xlu0 %682
        %v684 = vrot.slane %v683, 4
        %v685 = vmax.f32 %v683, %v684
        %v686 = vrot.slane %v685, 2
        %v687 = vmax.f32 %v685, %v686
        %v688 = vrot.slane %v687, 1
        %v689 = vmax.f32 %v687, %v688
        %s690 = vtos %v689
        %p691 = scmp.gt.f32.partialorder %s690, 0.0
        %v692 = vrot.slane %v639, 2
        %v694 = vmax.f32 %v678, %v692
        %s695 = scalar_select %p691, 1, 0
        %v696 = vstv %s695
        %vm697 = vcmp.eq.s32.totalorder %v696, 1
        %v698 = vsel %vm697, %v678, %v694
        %vm699 = vcmp.eq.s32.totalorder %v295, 11
        %v700 = vsel %vm699, %v698, 0.0
        %v701 = vsel %vm405, %v700, -inf
        %702 = vmax.xlane.f32.xlu0 %v701
        %v703 = vpop.xlane.xlu0 %702
        %v704 = vrot.slane %v703, 4
        %v705 = vmax.f32 %v703, %v704
        %v706 = vrot.slane %v705, 2
        %v707 = vmax.f32 %v705, %v706
        %v708 = vrot.slane %v707, 1
        %v709 = vmax.f32 %v707, %v708
        %s710 = vtos %v709
        %p711 = scmp.gt.f32.partialorder %s710, 0.0
        %v712 = vrot.slane %v639, 3
        %v714 = vmax.f32 %v698, %v712
        %s715 = scalar_select %p711, 1, 0
        %v716 = vstv %s715
        %vm717 = vcmp.eq.s32.totalorder %v716, 1
        %v718 = vsel %vm717, %v698, %v714
        %vm719 = vcmp.eq.s32.totalorder %v295, 12
        %v720 = vsel %vm719, %v718, 0.0
        %v721 = vsel %vm405, %v720, -inf
        %722 = vmax.xlane.f32.xlu0 %v721
        %v723 = vpop.xlane.xlu0 %722
        %v724 = vrot.slane %v723, 4
        %v725 = vmax.f32 %v723, %v724
        %v726 = vrot.slane %v725, 2
        %v727 = vmax.f32 %v725, %v726
        %v728 = vrot.slane %v727, 1
        %v729 = vmax.f32 %v727, %v728
        %s730 = vtos %v729
        %p731 = scmp.gt.f32.partialorder %s730, 0.0
        %v732 = vrot.slane %v639, 4
        %v734 = vmax.f32 %v718, %v732
        %s735 = scalar_select %p731, 1, 0
        %v736 = vstv %s735
        %vm737 = vcmp.eq.s32.totalorder %v736, 1
        %v738 = vsel %vm737, %v718, %v734
        %vm739 = vcmp.eq.s32.totalorder %v295, 13
        %v740 = vsel %vm739, %v738, 0.0
        %v741 = vsel %vm405, %v740, -inf
        %742 = vmax.xlane.f32.xlu0 %v741
        %v743 = vpop.xlane.xlu0 %742
        %v744 = vrot.slane %v743, 4
        %v745 = vmax.f32 %v743, %v744
        %v746 = vrot.slane %v745, 2
        %v747 = vmax.f32 %v745, %v746
        %v748 = vrot.slane %v747, 1
        %v749 = vmax.f32 %v747, %v748
        %s750 = vtos %v749
        %p751 = scmp.gt.f32.partialorder %s750, 0.0
        %v752 = vrot.slane %v639, 5
        %v754 = vmax.f32 %v738, %v752
        %s755 = scalar_select %p751, 1, 0
        %v756 = vstv %s755
        %vm757 = vcmp.eq.s32.totalorder %v756, 1
        %v758 = vsel %vm757, %v738, %v754
        %vm759 = vcmp.eq.s32.totalorder %v295, 14
        %v760 = vsel %vm759, %v758, 0.0
        %v761 = vsel %vm405, %v760, -inf
        %762 = vmax.xlane.f32.xlu0 %v761
        %v763 = vpop.xlane.xlu0 %762
        %v764 = vrot.slane %v763, 4
        %v765 = vmax.f32 %v763, %v764
        %v766 = vrot.slane %v765, 2
        %v767 = vmax.f32 %v765, %v766
        %v768 = vrot.slane %v767, 1
        %v769 = vmax.f32 %v767, %v768
        %s770 = vtos %v769
        %p771 = scmp.gt.f32.partialorder %s770, 0.0
        %v772 = vrot.slane %v639, 6
        %v774 = vmax.f32 %v758, %v772
        %s775 = scalar_select %p771, 1, 0
        %v776 = vstv %s775
        %vm777 = vcmp.eq.s32.totalorder %v776, 1
        %v778 = vsel %vm777, %v758, %v774
        %vm779 = vcmp.eq.s32.totalorder %v295, 15
        %v780 = vsel %vm779, %v778, 0.0
        %v781 = vsel %vm405, %v780, -inf
        %782 = vmax.xlane.f32.xlu0 %v781
        %v783 = vpop.xlane.xlu0 %782
        %v784 = vrot.slane %v783, 4
        %v785 = vmax.f32 %v783, %v784
        %v786 = vrot.slane %v785, 2
        %v787 = vmax.f32 %v785, %v786
        %v788 = vrot.slane %v787, 1
        %v789 = vmax.f32 %v787, %v788
        %s790 = vtos %v789
        %p791 = scmp.gt.f32.partialorder %s790, 0.0
        %v792 = vrot.slane %v639, 7
        %v794 = vmax.f32 %v778, %v792
        %s795 = scalar_select %p791, 1, 0
        %v796 = vstv %s795
        %vm797 = vcmp.eq.s32.totalorder %v796, 1
        %v798 = vsel %vm797, %v778, %v794
        %v799 = vld [vmem:[%s236 + $0x10] sm:$0xff]
        %801 = vrot.lane.b32.xlu0 %v799, 2
        %v802 = vpop.permute.xlu0 %801
        %v804 = vsub.f32 %v799, %v802
        %v805 = vadd.f32 %v804, 1.0
        %v806 = vmul.f32 %v805, 0.5
        %808 = vrot.lane.b32.xlu0 %v806, 126
        %v809 = vpop.permute.xlu0 %808
        %v811 = vadd.f32 %v799, %v809
        %813 = vrot.lane.b32.xlu0 %v805, 2
        %v814 = vpop.permute.xlu0 %813
        %v816 = vmul.f32 %v799, %v814
        %818 = vrot.lane.b32.xlu0 %v811, 4
        %v819 = vpop.permute.xlu0 %818
        %v821 = vadd.f32 %v816, %v819
        %v822 = vmul.f32 %v799, 1.442695
        %v823 = vpow.pop %v822
        %824 = vrot.lane.b32.xlu0 %v805, 4
        %v825 = vpop.permute.xlu0 %824
        %v827 = vmul.f32 %v823, %v825
        %v828 = vmul.f32 %v827, 0.5
        %830 = vrot.lane.b32.xlu0 %v828, 126
        %v831 = vpop.permute.xlu0 %830
        %v833 = vsub.f32 %v821, %v831
        %v834 = vmax.f32 %v833, 0.0
        %v835 = vmin.f32 %v271, %v834
        %v836 = vmin.f32 %v277, %v834
        %v837 = vadd.f32 %v821, %v831
        %v838 = vmax.f32 %v837, 0.0
        %v839 = vmin.f32 %v271, %v838
        %v840 = vmin.f32 %v277, %v838
        %v841 = vsub.f32 %v839, %v835
        %v842 = vadd.f32 %v841, 1.0
        %v843 = vsub.f32 %v840, %v836
        %v844 = vadd.f32 %v843, 1.0
        %846 = vrot.lane.b32.xlu0 %v844, 127
        %v847 = vpop.permute.xlu0 %846
        %v849 = vmul.f32 %v842, %v847
        %851 = vset.pattern.permute.xlu0 4
        %852 = vperm.xlu0 %851, %v835
        %v853 = vpop.permute.xlu0 %852
        %v855 = vmax.f32 %v853, %v352
        %857 = vset.pattern.permute.xlu0 5
        %858 = vperm.xlu0 %857, %v836
        %v859 = vpop.permute.xlu0 %858
        %v861 = vmax.f32 %v859, %v359
        %863 = vset.pattern.permute.xlu0 4
        %864 = vperm.xlu0 %863, %v839
        %v865 = vpop.permute.xlu0 %864
        %v867 = vmin.f32 %v865, %v366
        %869 = vset.pattern.permute.xlu0 5
        %870 = vperm.xlu0 %869, %v840
        %v871 = vpop.permute.xlu0 %870
        %v873 = vmin.f32 %v871, %v373
        %v874 = vsub.f32 %v867, %v855
        %v875 = vadd.f32 %v874, 1.0
        %v876 = vmax.f32 %v875, 0.0
        %v877 = vsub.f32 %v873, %v861
        %v878 = vadd.f32 %v877, 1.0
        %v879 = vmax.f32 %v878, 0.0
        %v880 = vmul.f32 %v876, %v879
        %882 = vset.pattern.permute.xlu0 4
        %883 = vperm.xlu0 %882, %v849
        %v884 = vpop.permute.xlu0 %883
        %v886 = vadd.f32 %v884, %v387
        %v887 = vsub.f32 %v886, %v880
        %v888 = vadd.s32 %v391, 16
        %vm889 = vcmp.gt.s32.totalorder %v295, %v888
        %v890 = vmul.f32 %v887, 0.7
        %vm891 = vcmp.gt.f32.partialorder %v880, %v890
        %vm892 = vmand %vm889, %vm891
        %v893 = vsel %vm892, 1.0, 0.0
        %vm894 = vcmp.eq.s32.totalorder %v295, 16
        %v895 = vsel %vm894, %v798, 0.0
        %v896 = vsel %vm405, %v895, -inf
        %897 = vmax.xlane.f32.xlu0 %v896
        %v898 = vpop.xlane.xlu0 %897
        %v899 = vrot.slane %v898, 4
        %v900 = vmax.f32 %v898, %v899
        %v901 = vrot.slane %v900, 2
        %v902 = vmax.f32 %v900, %v901
        %v903 = vrot.slane %v902, 1
        %v904 = vmax.f32 %v902, %v903
        %s905 = vtos %v904
        %p906 = scmp.gt.f32.partialorder %s905, 0.0
        %v907 = vmax.f32 %v798, %v893
        %s908 = scalar_select %p906, 1, 0
        %v909 = vstv %s908
        %vm910 = vcmp.eq.s32.totalorder %v909, 1
        %v911 = vsel %vm910, %v798, %v907
        %vm912 = vcmp.eq.s32.totalorder %v295, 17
        %v913 = vsel %vm912, %v911, 0.0
        %v914 = vsel %vm405, %v913, -inf
        %915 = vmax.xlane.f32.xlu0 %v914
        %v916 = vpop.xlane.xlu0 %915
        %v917 = vrot.slane %v916, 4
        %v918 = vmax.f32 %v916, %v917
        %v919 = vrot.slane %v918, 2
        %v920 = vmax.f32 %v918, %v919
        %v921 = vrot.slane %v920, 1
        %v922 = vmax.f32 %v920, %v921
        %s923 = vtos %v922
        %p924 = scmp.gt.f32.partialorder %s923, 0.0
        %v926 = vrot.slane %v893, 1
        %v928 = vmax.f32 %v911, %v926
        %s929 = scalar_select %p924, 1, 0
        %v930 = vstv %s929
        %vm931 = vcmp.eq.s32.totalorder %v930, 1
        %v932 = vsel %vm931, %v911, %v928
        %vm933 = vcmp.eq.s32.totalorder %v295, 18
        %v934 = vsel %vm933, %v932, 0.0
        %v935 = vsel %vm405, %v934, -inf
        %936 = vmax.xlane.f32.xlu0 %v935
        %v937 = vpop.xlane.xlu0 %936
        %v938 = vrot.slane %v937, 4
        %v939 = vmax.f32 %v937, %v938
        %v940 = vrot.slane %v939, 2
        %v941 = vmax.f32 %v939, %v940
        %v942 = vrot.slane %v941, 1
        %v943 = vmax.f32 %v941, %v942
        %s944 = vtos %v943
        %p945 = scmp.gt.f32.partialorder %s944, 0.0
        %v946 = vrot.slane %v893, 2
        %v948 = vmax.f32 %v932, %v946
        %s949 = scalar_select %p945, 1, 0
        %v950 = vstv %s949
        %vm951 = vcmp.eq.s32.totalorder %v950, 1
        %v952 = vsel %vm951, %v932, %v948
        %vm953 = vcmp.eq.s32.totalorder %v295, 19
        %v954 = vsel %vm953, %v952, 0.0
        %v955 = vsel %vm405, %v954, -inf
        %956 = vmax.xlane.f32.xlu0 %v955
        %v957 = vpop.xlane.xlu0 %956
        %v958 = vrot.slane %v957, 4
        %v959 = vmax.f32 %v957, %v958
        %v960 = vrot.slane %v959, 2
        %v961 = vmax.f32 %v959, %v960
        %v962 = vrot.slane %v961, 1
        %v963 = vmax.f32 %v961, %v962
        %s964 = vtos %v963
        %p965 = scmp.gt.f32.partialorder %s964, 0.0
        %v966 = vrot.slane %v893, 3
        %v968 = vmax.f32 %v952, %v966
        %s969 = scalar_select %p965, 1, 0
        %v970 = vstv %s969
        %vm971 = vcmp.eq.s32.totalorder %v970, 1
        %v972 = vsel %vm971, %v952, %v968
        %vm973 = vcmp.eq.s32.totalorder %v295, 20
        %v974 = vsel %vm973, %v972, 0.0
        %v975 = vsel %vm405, %v974, -inf
        %976 = vmax.xlane.f32.xlu0 %v975
        %v977 = vpop.xlane.xlu0 %976
        %v978 = vrot.slane %v977, 4
        %v979 = vmax.f32 %v977, %v978
        %v980 = vrot.slane %v979, 2
        %v981 = vmax.f32 %v979, %v980
        %v982 = vrot.slane %v981, 1
        %v983 = vmax.f32 %v981, %v982
        %s984 = vtos %v983
        %p985 = scmp.gt.f32.partialorder %s984, 0.0
        %v986 = vrot.slane %v893, 4
        %v988 = vmax.f32 %v972, %v986
        %s989 = scalar_select %p985, 1, 0
        %v990 = vstv %s989
        %vm991 = vcmp.eq.s32.totalorder %v990, 1
        %v992 = vsel %vm991, %v972, %v988
        %vm993 = vcmp.eq.s32.totalorder %v295, 21
        %v994 = vsel %vm993, %v992, 0.0
        %v995 = vsel %vm405, %v994, -inf
        %996 = vmax.xlane.f32.xlu0 %v995
        %v997 = vpop.xlane.xlu0 %996
        %v998 = vrot.slane %v997, 4
        %v999 = vmax.f32 %v997, %v998
        %v1000 = vrot.slane %v999, 2
        %v1001 = vmax.f32 %v999, %v1000
        %v1002 = vrot.slane %v1001, 1
        %v1003 = vmax.f32 %v1001, %v1002
        %s1004 = vtos %v1003
        %p1005 = scmp.gt.f32.partialorder %s1004, 0.0
        %v1006 = vrot.slane %v893, 5
        %v1008 = vmax.f32 %v992, %v1006
        %s1009 = scalar_select %p1005, 1, 0
        %v1010 = vstv %s1009
        %vm1011 = vcmp.eq.s32.totalorder %v1010, 1
        %v1012 = vsel %vm1011, %v992, %v1008
        %vm1013 = vcmp.eq.s32.totalorder %v295, 22
        %v1014 = vsel %vm1013, %v1012, 0.0
        %v1015 = vsel %vm405, %v1014, -inf
        %1016 = vmax.xlane.f32.xlu0 %v1015
        %v1017 = vpop.xlane.xlu0 %1016
        %v1018 = vrot.slane %v1017, 4
        %v1019 = vmax.f32 %v1017, %v1018
        %v1020 = vrot.slane %v1019, 2
        %v1021 = vmax.f32 %v1019, %v1020
        %v1022 = vrot.slane %v1021, 1
        %v1023 = vmax.f32 %v1021, %v1022
        %s1024 = vtos %v1023
        %p1025 = scmp.gt.f32.partialorder %s1024, 0.0
        %v1026 = vrot.slane %v893, 6
        %v1028 = vmax.f32 %v1012, %v1026
        %s1029 = scalar_select %p1025, 1, 0
        %v1030 = vstv %s1029
        %vm1031 = vcmp.eq.s32.totalorder %v1030, 1
        %v1032 = vsel %vm1031, %v1012, %v1028
        %vm1033 = vcmp.eq.s32.totalorder %v295, 23
        %v1034 = vsel %vm1033, %v1032, 0.0
        %v1035 = vsel %vm405, %v1034, -inf
        %1036 = vmax.xlane.f32.xlu0 %v1035
        %v1037 = vpop.xlane.xlu0 %1036
        %v1038 = vrot.slane %v1037, 4
        %v1039 = vmax.f32 %v1037, %v1038
        %v1040 = vrot.slane %v1039, 2
        %v1041 = vmax.f32 %v1039, %v1040
        %v1042 = vrot.slane %v1041, 1
        %v1043 = vmax.f32 %v1041, %v1042
        %s1044 = vtos %v1043
        %p1045 = scmp.gt.f32.partialorder %s1044, 0.0
        %v1046 = vrot.slane %v893, 7
        %v1048 = vmax.f32 %v1032, %v1046
        %s1049 = scalar_select %p1045, 1, 0
        %v1050 = vstv %s1049
        %vm1051 = vcmp.eq.s32.totalorder %v1050, 1
        %v1052 = vsel %vm1051, %v1032, %v1048
        %v1053 = vld [vmem:[%s236 + $0x18] sm:$0xff]
        %1055 = vrot.lane.b32.xlu0 %v1053, 2
        %v1056 = vpop.permute.xlu0 %1055
        %v1058 = vsub.f32 %v1053, %v1056
        %v1059 = vadd.f32 %v1058, 1.0
        %v1060 = vmul.f32 %v1059, 0.5
        %1062 = vrot.lane.b32.xlu0 %v1060, 126
        %v1063 = vpop.permute.xlu0 %1062
        %v1065 = vadd.f32 %v1053, %v1063
        %1067 = vrot.lane.b32.xlu0 %v1059, 2
        %v1068 = vpop.permute.xlu0 %1067
        %v1070 = vmul.f32 %v1053, %v1068
        %1072 = vrot.lane.b32.xlu0 %v1065, 4
        %v1073 = vpop.permute.xlu0 %1072
        %v1075 = vadd.f32 %v1070, %v1073
        %v1076 = vmul.f32 %v1053, 1.442695
        %v1077 = vpow.pop %v1076
        %1078 = vrot.lane.b32.xlu0 %v1059, 4
        %v1079 = vpop.permute.xlu0 %1078
        %v1081 = vmul.f32 %v1077, %v1079
        %v1082 = vmul.f32 %v1081, 0.5
        %1084 = vrot.lane.b32.xlu0 %v1082, 126
        %v1085 = vpop.permute.xlu0 %1084
        %v1087 = vsub.f32 %v1075, %v1085
        %v1088 = vmax.f32 %v1087, 0.0
        %v1089 = vmin.f32 %v271, %v1088
        %v1090 = vmin.f32 %v277, %v1088
        %v1091 = vadd.f32 %v1075, %v1085
        %v1092 = vmax.f32 %v1091, 0.0
        %v1093 = vmin.f32 %v271, %v1092
        %v1094 = vmin.f32 %v277, %v1092
        %v1095 = vsub.f32 %v1093, %v1089
        %v1096 = vadd.f32 %v1095, 1.0
        %v1097 = vsub.f32 %v1094, %v1090
        %v1098 = vadd.f32 %v1097, 1.0
        %1100 = vrot.lane.b32.xlu0 %v1098, 127
        %v1101 = vpop.permute.xlu0 %1100
        %v1103 = vmul.f32 %v1096, %v1101
        %1105 = vset.pattern.permute.xlu0 4
        %1106 = vperm.xlu0 %1105, %v1089
        %v1107 = vpop.permute.xlu0 %1106
        %v1109 = vmax.f32 %v1107, %v352
        %1111 = vset.pattern.permute.xlu0 5
        %1112 = vperm.xlu0 %1111, %v1090
        %v1113 = vpop.permute.xlu0 %1112
        %v1115 = vmax.f32 %v1113, %v359
        %1117 = vset.pattern.permute.xlu0 4
        %1118 = vperm.xlu0 %1117, %v1093
        %v1119 = vpop.permute.xlu0 %1118
        %v1121 = vmin.f32 %v1119, %v366
        %1123 = vset.pattern.permute.xlu0 5
        %1124 = vperm.xlu0 %1123, %v1094
        %v1125 = vpop.permute.xlu0 %1124
        %v1127 = vmin.f32 %v1125, %v373
        %v1128 = vsub.f32 %v1121, %v1109
        %v1129 = vadd.f32 %v1128, 1.0
        %v1130 = vmax.f32 %v1129, 0.0
        %v1131 = vsub.f32 %v1127, %v1115
        %v1132 = vadd.f32 %v1131, 1.0
        %v1133 = vmax.f32 %v1132, 0.0
        %v1134 = vmul.f32 %v1130, %v1133
        %1136 = vset.pattern.permute.xlu0 4
        %1137 = vperm.xlu0 %1136, %v1103
        %v1138 = vpop.permute.xlu0 %1137
        %v1140 = vadd.f32 %v1138, %v387
        %v1141 = vsub.f32 %v1140, %v1134
        %v1142 = vadd.s32 %v391, 24
        %vm1143 = vcmp.gt.s32.totalorder %v295, %v1142
        %v1144 = vmul.f32 %v1141, 0.7
        %vm1145 = vcmp.gt.f32.partialorder %v1134, %v1144
        %vm1146 = vmand %vm1143, %vm1145
        %v1147 = vsel %vm1146, 1.0, 0.0
        %vm1148 = vcmp.eq.s32.totalorder %v295, 24
        %v1149 = vsel %vm1148, %v1052, 0.0
        %v1150 = vsel %vm405, %v1149, -inf
        %1151 = vmax.xlane.f32.xlu0 %v1150
        %v1152 = vpop.xlane.xlu0 %1151
        %v1153 = vrot.slane %v1152, 4
        %v1154 = vmax.f32 %v1152, %v1153
        %v1155 = vrot.slane %v1154, 2
        %v1156 = vmax.f32 %v1154, %v1155
        %v1157 = vrot.slane %v1156, 1
        %v1158 = vmax.f32 %v1156, %v1157
        %s1159 = vtos %v1158
        %p1160 = scmp.gt.f32.partialorder %s1159, 0.0
        %v1161 = vmax.f32 %v1052, %v1147
        %s1162 = scalar_select %p1160, 1, 0
        %v1163 = vstv %s1162
        %vm1164 = vcmp.eq.s32.totalorder %v1163, 1
        %v1165 = vsel %vm1164, %v1052, %v1161
        %vm1166 = vcmp.eq.s32.totalorder %v295, 25
        %v1167 = vsel %vm1166, %v1165, 0.0
        %v1168 = vsel %vm405, %v1167, -inf
        %1169 = vmax.xlane.f32.xlu0 %v1168
        %v1170 = vpop.xlane.xlu0 %1169
        %v1171 = vrot.slane %v1170, 4
        %v1172 = vmax.f32 %v1170, %v1171
        %v1173 = vrot.slane %v1172, 2
        %v1174 = vmax.f32 %v1172, %v1173
        %v1175 = vrot.slane %v1174, 1
        %v1176 = vmax.f32 %v1174, %v1175
        %s1177 = vtos %v1176
        %p1178 = scmp.gt.f32.partialorder %s1177, 0.0
        %v1180 = vrot.slane %v1147, 1
        %v1182 = vmax.f32 %v1165, %v1180
        %s1183 = scalar_select %p1178, 1, 0
        %v1184 = vstv %s1183
        %vm1185 = vcmp.eq.s32.totalorder %v1184, 1
        %v1186 = vsel %vm1185, %v1165, %v1182
        %vm1187 = vcmp.eq.s32.totalorder %v295, 26
        %v1188 = vsel %vm1187, %v1186, 0.0
        %v1189 = vsel %vm405, %v1188, -inf
        %1190 = vmax.xlane.f32.xlu0 %v1189
        %v1191 = vpop.xlane.xlu0 %1190
        %v1192 = vrot.slane %v1191, 4
        %v1193 = vmax.f32 %v1191, %v1192
        %v1194 = vrot.slane %v1193, 2
        %v1195 = vmax.f32 %v1193, %v1194
        %v1196 = vrot.slane %v1195, 1
        %v1197 = vmax.f32 %v1195, %v1196
        %s1198 = vtos %v1197
        %p1199 = scmp.gt.f32.partialorder %s1198, 0.0
        %v1200 = vrot.slane %v1147, 2
        %v1202 = vmax.f32 %v1186, %v1200
        %s1203 = scalar_select %p1199, 1, 0
        %v1204 = vstv %s1203
        %vm1205 = vcmp.eq.s32.totalorder %v1204, 1
        %v1206 = vsel %vm1205, %v1186, %v1202
        %vm1207 = vcmp.eq.s32.totalorder %v295, 27
        %v1208 = vsel %vm1207, %v1206, 0.0
        %v1209 = vsel %vm405, %v1208, -inf
        %1210 = vmax.xlane.f32.xlu0 %v1209
        %v1211 = vpop.xlane.xlu0 %1210
        %v1212 = vrot.slane %v1211, 4
        %v1213 = vmax.f32 %v1211, %v1212
        %v1214 = vrot.slane %v1213, 2
        %v1215 = vmax.f32 %v1213, %v1214
        %v1216 = vrot.slane %v1215, 1
        %v1217 = vmax.f32 %v1215, %v1216
        %s1218 = vtos %v1217
        %p1219 = scmp.gt.f32.partialorder %s1218, 0.0
        %v1220 = vrot.slane %v1147, 3
        %v1222 = vmax.f32 %v1206, %v1220
        %s1223 = scalar_select %p1219, 1, 0
        %v1224 = vstv %s1223
        %vm1225 = vcmp.eq.s32.totalorder %v1224, 1
        %v1226 = vsel %vm1225, %v1206, %v1222
        %vm1227 = vcmp.eq.s32.totalorder %v295, 28
        %v1228 = vsel %vm1227, %v1226, 0.0
        %v1229 = vsel %vm405, %v1228, -inf
        %1230 = vmax.xlane.f32.xlu0 %v1229
        %v1231 = vpop.xlane.xlu0 %1230
        %v1232 = vrot.slane %v1231, 4
        %v1233 = vmax.f32 %v1231, %v1232
        %v1234 = vrot.slane %v1233, 2
        %v1235 = vmax.f32 %v1233, %v1234
        %v1236 = vrot.slane %v1235, 1
        %v1237 = vmax.f32 %v1235, %v1236
        %s1238 = vtos %v1237
        %p1239 = scmp.gt.f32.partialorder %s1238, 0.0
        %v1240 = vrot.slane %v1147, 4
        %v1242 = vmax.f32 %v1226, %v1240
        %s1243 = scalar_select %p1239, 1, 0
        %v1244 = vstv %s1243
        %vm1245 = vcmp.eq.s32.totalorder %v1244, 1
        %v1246 = vsel %vm1245, %v1226, %v1242
        %vm1247 = vcmp.eq.s32.totalorder %v295, 29
        %v1248 = vsel %vm1247, %v1246, 0.0
        %v1249 = vsel %vm405, %v1248, -inf
        %1250 = vmax.xlane.f32.xlu0 %v1249
        %v1251 = vpop.xlane.xlu0 %1250
        %v1252 = vrot.slane %v1251, 4
        %v1253 = vmax.f32 %v1251, %v1252
        %v1254 = vrot.slane %v1253, 2
        %v1255 = vmax.f32 %v1253, %v1254
        %v1256 = vrot.slane %v1255, 1
        %v1257 = vmax.f32 %v1255, %v1256
        %s1258 = vtos %v1257
        %p1259 = scmp.gt.f32.partialorder %s1258, 0.0
        %v1260 = vrot.slane %v1147, 5
        %v1262 = vmax.f32 %v1246, %v1260
        %s1263 = scalar_select %p1259, 1, 0
        %v1264 = vstv %s1263
        %vm1265 = vcmp.eq.s32.totalorder %v1264, 1
        %v1266 = vsel %vm1265, %v1246, %v1262
        %vm1267 = vcmp.eq.s32.totalorder %v295, 30
        %v1268 = vsel %vm1267, %v1266, 0.0
        %v1269 = vsel %vm405, %v1268, -inf
        %1270 = vmax.xlane.f32.xlu0 %v1269
        %v1271 = vpop.xlane.xlu0 %1270
        %v1272 = vrot.slane %v1271, 4
        %v1273 = vmax.f32 %v1271, %v1272
        %v1274 = vrot.slane %v1273, 2
        %v1275 = vmax.f32 %v1273, %v1274
        %v1276 = vrot.slane %v1275, 1
        %v1277 = vmax.f32 %v1275, %v1276
        %s1278 = vtos %v1277
        %p1279 = scmp.gt.f32.partialorder %s1278, 0.0
        %v1280 = vrot.slane %v1147, 6
        %v1282 = vmax.f32 %v1266, %v1280
        %s1283 = scalar_select %p1279, 1, 0
        %v1284 = vstv %s1283
        %vm1285 = vcmp.eq.s32.totalorder %v1284, 1
        %v1286 = vsel %vm1285, %v1266, %v1282
        %vm1287 = vcmp.eq.s32.totalorder %v295, 31
        %v1288 = vsel %vm1287, %v1286, 0.0
        %v1289 = vsel %vm405, %v1288, -inf
        %1290 = vmax.xlane.f32.xlu0 %v1289
        %v1291 = vpop.xlane.xlu0 %1290
        %v1292 = vrot.slane %v1291, 4
        %v1293 = vmax.f32 %v1291, %v1292
        %v1294 = vrot.slane %v1293, 2
        %v1295 = vmax.f32 %v1293, %v1294
        %v1296 = vrot.slane %v1295, 1
        %v1297 = vmax.f32 %v1295, %v1296
        %s1298 = vtos %v1297
        %p1299 = scmp.gt.f32.partialorder %s1298, 0.0
        %v1300 = vrot.slane %v1147, 7
        %v1302 = vmax.f32 %v1286, %v1300
        %s1303 = scalar_select %p1299, 1, 0
        %v1304 = vstv %s1303
        %vm1305 = vcmp.eq.s32.totalorder %v1304, 1
        %v1306 = vsel %vm1305, %v1286, %v1302
        %v1307 = vld [vmem:[%s236 + $0x20] sm:$0xff]
        %1309 = vrot.lane.b32.xlu0 %v1307, 2
        %v1310 = vpop.permute.xlu0 %1309
        %v1312 = vsub.f32 %v1307, %v1310
        %v1313 = vadd.f32 %v1312, 1.0
        %v1314 = vmul.f32 %v1313, 0.5
        %1316 = vrot.lane.b32.xlu0 %v1314, 126
        %v1317 = vpop.permute.xlu0 %1316
        %v1319 = vadd.f32 %v1307, %v1317
        %1321 = vrot.lane.b32.xlu0 %v1313, 2
        %v1322 = vpop.permute.xlu0 %1321
        %v1324 = vmul.f32 %v1307, %v1322
        %1326 = vrot.lane.b32.xlu0 %v1319, 4
        %v1327 = vpop.permute.xlu0 %1326
        %v1329 = vadd.f32 %v1324, %v1327
        %v1330 = vmul.f32 %v1307, 1.442695
        %v1331 = vpow.pop %v1330
        %1332 = vrot.lane.b32.xlu0 %v1313, 4
        %v1333 = vpop.permute.xlu0 %1332
        %v1335 = vmul.f32 %v1331, %v1333
        %v1336 = vmul.f32 %v1335, 0.5
        %1338 = vrot.lane.b32.xlu0 %v1336, 126
        %v1339 = vpop.permute.xlu0 %1338
        %v1341 = vsub.f32 %v1329, %v1339
        %v1342 = vmax.f32 %v1341, 0.0
        %v1343 = vmin.f32 %v271, %v1342
        %v1344 = vmin.f32 %v277, %v1342
        %v1345 = vadd.f32 %v1329, %v1339
        %v1346 = vmax.f32 %v1345, 0.0
        %v1347 = vmin.f32 %v271, %v1346
        %v1348 = vmin.f32 %v277, %v1346
        %v1349 = vsub.f32 %v1347, %v1343
        %v1350 = vadd.f32 %v1349, 1.0
        %v1351 = vsub.f32 %v1348, %v1344
        %v1352 = vadd.f32 %v1351, 1.0
        %1354 = vrot.lane.b32.xlu0 %v1352, 127
        %v1355 = vpop.permute.xlu0 %1354
        %v1357 = vmul.f32 %v1350, %v1355
        %1359 = vset.pattern.permute.xlu0 4
        %1360 = vperm.xlu0 %1359, %v1343
        %v1361 = vpop.permute.xlu0 %1360
        %v1363 = vmax.f32 %v1361, %v352
        %1365 = vset.pattern.permute.xlu0 5
        %1366 = vperm.xlu0 %1365, %v1344
        %v1367 = vpop.permute.xlu0 %1366
        %v1369 = vmax.f32 %v1367, %v359
        %1371 = vset.pattern.permute.xlu0 4
        %1372 = vperm.xlu0 %1371, %v1347
        %v1373 = vpop.permute.xlu0 %1372
        %v1375 = vmin.f32 %v1373, %v366
        %1377 = vset.pattern.permute.xlu0 5
        %1378 = vperm.xlu0 %1377, %v1348
        %v1379 = vpop.permute.xlu0 %1378
        %v1381 = vmin.f32 %v1379, %v373
        %v1382 = vsub.f32 %v1375, %v1363
        %v1383 = vadd.f32 %v1382, 1.0
        %v1384 = vmax.f32 %v1383, 0.0
        %v1385 = vsub.f32 %v1381, %v1369
        %v1386 = vadd.f32 %v1385, 1.0
        %v1387 = vmax.f32 %v1386, 0.0
        %v1388 = vmul.f32 %v1384, %v1387
        %1390 = vset.pattern.permute.xlu0 4
        %1391 = vperm.xlu0 %1390, %v1357
        %v1392 = vpop.permute.xlu0 %1391
        %v1394 = vadd.f32 %v1392, %v387
        %v1395 = vsub.f32 %v1394, %v1388
        %v1396 = vadd.s32 %v391, 32
        %vm1397 = vcmp.gt.s32.totalorder %v295, %v1396
        %v1398 = vmul.f32 %v1395, 0.7
        %vm1399 = vcmp.gt.f32.partialorder %v1388, %v1398
        %vm1400 = vmand %vm1397, %vm1399
        %v1401 = vsel %vm1400, 1.0, 0.0
        %vm1402 = vcmp.eq.s32.totalorder %v295, 32
        %v1403 = vsel %vm1402, %v1306, 0.0
        %v1404 = vsel %vm405, %v1403, -inf
        %1405 = vmax.xlane.f32.xlu0 %v1404
        %v1406 = vpop.xlane.xlu0 %1405
        %v1407 = vrot.slane %v1406, 4
        %v1408 = vmax.f32 %v1406, %v1407
        %v1409 = vrot.slane %v1408, 2
        %v1410 = vmax.f32 %v1408, %v1409
        %v1411 = vrot.slane %v1410, 1
        %v1412 = vmax.f32 %v1410, %v1411
        %s1413 = vtos %v1412
        %p1414 = scmp.gt.f32.partialorder %s1413, 0.0
        %v1415 = vmax.f32 %v1306, %v1401
        %s1416 = scalar_select %p1414, 1, 0
        %v1417 = vstv %s1416
        %vm1418 = vcmp.eq.s32.totalorder %v1417, 1
        %v1419 = vsel %vm1418, %v1306, %v1415
        %vm1420 = vcmp.eq.s32.totalorder %v295, 33
        %v1421 = vsel %vm1420, %v1419, 0.0
        %v1422 = vsel %vm405, %v1421, -inf
        %1423 = vmax.xlane.f32.xlu0 %v1422
        %v1424 = vpop.xlane.xlu0 %1423
        %v1425 = vrot.slane %v1424, 4
        %v1426 = vmax.f32 %v1424, %v1425
        %v1427 = vrot.slane %v1426, 2
        %v1428 = vmax.f32 %v1426, %v1427
        %v1429 = vrot.slane %v1428, 1
        %v1430 = vmax.f32 %v1428, %v1429
        %s1431 = vtos %v1430
        %p1432 = scmp.gt.f32.partialorder %s1431, 0.0
        %v1434 = vrot.slane %v1401, 1
        %v1436 = vmax.f32 %v1419, %v1434
        %s1437 = scalar_select %p1432, 1, 0
        %v1438 = vstv %s1437
        %vm1439 = vcmp.eq.s32.totalorder %v1438, 1
        %v1440 = vsel %vm1439, %v1419, %v1436
        %vm1441 = vcmp.eq.s32.totalorder %v295, 34
        %v1442 = vsel %vm1441, %v1440, 0.0
        %v1443 = vsel %vm405, %v1442, -inf
        %1444 = vmax.xlane.f32.xlu0 %v1443
        %v1445 = vpop.xlane.xlu0 %1444
        %v1446 = vrot.slane %v1445, 4
        %v1447 = vmax.f32 %v1445, %v1446
        %v1448 = vrot.slane %v1447, 2
        %v1449 = vmax.f32 %v1447, %v1448
        %v1450 = vrot.slane %v1449, 1
        %v1451 = vmax.f32 %v1449, %v1450
        %s1452 = vtos %v1451
        %p1453 = scmp.gt.f32.partialorder %s1452, 0.0
        %v1454 = vrot.slane %v1401, 2
        %v1456 = vmax.f32 %v1440, %v1454
        %s1457 = scalar_select %p1453, 1, 0
        %v1458 = vstv %s1457
        %vm1459 = vcmp.eq.s32.totalorder %v1458, 1
        %v1460 = vsel %vm1459, %v1440, %v1456
        %vm1461 = vcmp.eq.s32.totalorder %v295, 35
        %v1462 = vsel %vm1461, %v1460, 0.0
        %v1463 = vsel %vm405, %v1462, -inf
        %1464 = vmax.xlane.f32.xlu0 %v1463
        %v1465 = vpop.xlane.xlu0 %1464
        %v1466 = vrot.slane %v1465, 4
        %v1467 = vmax.f32 %v1465, %v1466
        %v1468 = vrot.slane %v1467, 2
        %v1469 = vmax.f32 %v1467, %v1468
        %v1470 = vrot.slane %v1469, 1
        %v1471 = vmax.f32 %v1469, %v1470
        %s1472 = vtos %v1471
        %p1473 = scmp.gt.f32.partialorder %s1472, 0.0
        %v1474 = vrot.slane %v1401, 3
        %v1476 = vmax.f32 %v1460, %v1474
        %s1477 = scalar_select %p1473, 1, 0
        %v1478 = vstv %s1477
        %vm1479 = vcmp.eq.s32.totalorder %v1478, 1
        %v1480 = vsel %vm1479, %v1460, %v1476
        %vm1481 = vcmp.eq.s32.totalorder %v295, 36
        %v1482 = vsel %vm1481, %v1480, 0.0
        %v1483 = vsel %vm405, %v1482, -inf
        %1484 = vmax.xlane.f32.xlu0 %v1483
        %v1485 = vpop.xlane.xlu0 %1484
        %v1486 = vrot.slane %v1485, 4
        %v1487 = vmax.f32 %v1485, %v1486
        %v1488 = vrot.slane %v1487, 2
        %v1489 = vmax.f32 %v1487, %v1488
        %v1490 = vrot.slane %v1489, 1
        %v1491 = vmax.f32 %v1489, %v1490
        %s1492 = vtos %v1491
        %p1493 = scmp.gt.f32.partialorder %s1492, 0.0
        %v1494 = vrot.slane %v1401, 4
        %v1496 = vmax.f32 %v1480, %v1494
        %s1497 = scalar_select %p1493, 1, 0
        %v1498 = vstv %s1497
        %vm1499 = vcmp.eq.s32.totalorder %v1498, 1
        %v1500 = vsel %vm1499, %v1480, %v1496
        %vm1501 = vcmp.eq.s32.totalorder %v295, 37
        %v1502 = vsel %vm1501, %v1500, 0.0
        %v1503 = vsel %vm405, %v1502, -inf
        %1504 = vmax.xlane.f32.xlu0 %v1503
        %v1505 = vpop.xlane.xlu0 %1504
        %v1506 = vrot.slane %v1505, 4
        %v1507 = vmax.f32 %v1505, %v1506
        %v1508 = vrot.slane %v1507, 2
        %v1509 = vmax.f32 %v1507, %v1508
        %v1510 = vrot.slane %v1509, 1
        %v1511 = vmax.f32 %v1509, %v1510
        %s1512 = vtos %v1511
        %p1513 = scmp.gt.f32.partialorder %s1512, 0.0
        %v1514 = vrot.slane %v1401, 5
        %v1516 = vmax.f32 %v1500, %v1514
        %s1517 = scalar_select %p1513, 1, 0
        %v1518 = vstv %s1517
        %vm1519 = vcmp.eq.s32.totalorder %v1518, 1
        %v1520 = vsel %vm1519, %v1500, %v1516
        %vm1521 = vcmp.eq.s32.totalorder %v295, 38
        %v1522 = vsel %vm1521, %v1520, 0.0
        %v1523 = vsel %vm405, %v1522, -inf
        %1524 = vmax.xlane.f32.xlu0 %v1523
        %v1525 = vpop.xlane.xlu0 %1524
        %v1526 = vrot.slane %v1525, 4
        %v1527 = vmax.f32 %v1525, %v1526
        %v1528 = vrot.slane %v1527, 2
        %v1529 = vmax.f32 %v1527, %v1528
        %v1530 = vrot.slane %v1529, 1
        %v1531 = vmax.f32 %v1529, %v1530
        %s1532 = vtos %v1531
        %p1533 = scmp.gt.f32.partialorder %s1532, 0.0
        %v1534 = vrot.slane %v1401, 6
        %v1536 = vmax.f32 %v1520, %v1534
        %s1537 = scalar_select %p1533, 1, 0
        %v1538 = vstv %s1537
        %vm1539 = vcmp.eq.s32.totalorder %v1538, 1
        %v1540 = vsel %vm1539, %v1520, %v1536
        %vm1541 = vcmp.eq.s32.totalorder %v295, 39
        %v1542 = vsel %vm1541, %v1540, 0.0
        %v1543 = vsel %vm405, %v1542, -inf
        %1544 = vmax.xlane.f32.xlu0 %v1543
        %v1545 = vpop.xlane.xlu0 %1544
        %v1546 = vrot.slane %v1545, 4
        %v1547 = vmax.f32 %v1545, %v1546
        %v1548 = vrot.slane %v1547, 2
        %v1549 = vmax.f32 %v1547, %v1548
        %v1550 = vrot.slane %v1549, 1
        %v1551 = vmax.f32 %v1549, %v1550
        %s1552 = vtos %v1551
        %p1553 = scmp.gt.f32.partialorder %s1552, 0.0
        %v1554 = vrot.slane %v1401, 7
        %v1556 = vmax.f32 %v1540, %v1554
        %s1557 = scalar_select %p1553, 1, 0
        %v1558 = vstv %s1557
        %vm1559 = vcmp.eq.s32.totalorder %v1558, 1
        %v1560 = vsel %vm1559, %v1540, %v1556
        %v1561 = vld [vmem:[%s236 + $0x28] sm:$0xff]
        %1563 = vrot.lane.b32.xlu0 %v1561, 2
        %v1564 = vpop.permute.xlu0 %1563
        %v1566 = vsub.f32 %v1561, %v1564
        %v1567 = vadd.f32 %v1566, 1.0
        %v1568 = vmul.f32 %v1567, 0.5
        %1570 = vrot.lane.b32.xlu0 %v1568, 126
        %v1571 = vpop.permute.xlu0 %1570
        %v1573 = vadd.f32 %v1561, %v1571
        %1575 = vrot.lane.b32.xlu0 %v1567, 2
        %v1576 = vpop.permute.xlu0 %1575
        %v1578 = vmul.f32 %v1561, %v1576
        %1580 = vrot.lane.b32.xlu0 %v1573, 4
        %v1581 = vpop.permute.xlu0 %1580
        %v1583 = vadd.f32 %v1578, %v1581
        %v1584 = vmul.f32 %v1561, 1.442695
        %v1585 = vpow.pop %v1584
        %1586 = vrot.lane.b32.xlu0 %v1567, 4
        %v1587 = vpop.permute.xlu0 %1586
        %v1589 = vmul.f32 %v1585, %v1587
        %v1590 = vmul.f32 %v1589, 0.5
        %1592 = vrot.lane.b32.xlu0 %v1590, 126
        %v1593 = vpop.permute.xlu0 %1592
        %v1595 = vsub.f32 %v1583, %v1593
        %v1596 = vmax.f32 %v1595, 0.0
        %v1597 = vmin.f32 %v271, %v1596
        %v1598 = vmin.f32 %v277, %v1596
        %v1599 = vadd.f32 %v1583, %v1593
        %v1600 = vmax.f32 %v1599, 0.0
        %v1601 = vmin.f32 %v271, %v1600
        %v1602 = vmin.f32 %v277, %v1600
        %v1603 = vsub.f32 %v1601, %v1597
        %v1604 = vadd.f32 %v1603, 1.0
        %v1605 = vsub.f32 %v1602, %v1598
        %v1606 = vadd.f32 %v1605, 1.0
        %1608 = vrot.lane.b32.xlu0 %v1606, 127
        %v1609 = vpop.permute.xlu0 %1608
        %v1611 = vmul.f32 %v1604, %v1609
        %1613 = vset.pattern.permute.xlu0 4
        %1614 = vperm.xlu0 %1613, %v1597
        %v1615 = vpop.permute.xlu0 %1614
        %v1617 = vmax.f32 %v1615, %v352
        %1619 = vset.pattern.permute.xlu0 5
        %1620 = vperm.xlu0 %1619, %v1598
        %v1621 = vpop.permute.xlu0 %1620
        %v1623 = vmax.f32 %v1621, %v359
        %1625 = vset.pattern.permute.xlu0 4
        %1626 = vperm.xlu0 %1625, %v1601
        %v1627 = vpop.permute.xlu0 %1626
        %v1629 = vmin.f32 %v1627, %v366
        %1631 = vset.pattern.permute.xlu0 5
        %1632 = vperm.xlu0 %1631, %v1602
        %v1633 = vpop.permute.xlu0 %1632
        %v1635 = vmin.f32 %v1633, %v373
        %v1636 = vsub.f32 %v1629, %v1617
        %v1637 = vadd.f32 %v1636, 1.0
        %v1638 = vmax.f32 %v1637, 0.0
        %v1639 = vsub.f32 %v1635, %v1623
        %v1640 = vadd.f32 %v1639, 1.0
        %v1641 = vmax.f32 %v1640, 0.0
        %v1642 = vmul.f32 %v1638, %v1641
        %1644 = vset.pattern.permute.xlu0 4
        %1645 = vperm.xlu0 %1644, %v1611
        %v1646 = vpop.permute.xlu0 %1645
        %v1648 = vadd.f32 %v1646, %v387
        %v1649 = vsub.f32 %v1648, %v1642
        %v1650 = vadd.s32 %v391, 40
        %vm1651 = vcmp.gt.s32.totalorder %v295, %v1650
        %v1652 = vmul.f32 %v1649, 0.7
        %vm1653 = vcmp.gt.f32.partialorder %v1642, %v1652
        %vm1654 = vmand %vm1651, %vm1653
        %v1655 = vsel %vm1654, 1.0, 0.0
        %vm1656 = vcmp.eq.s32.totalorder %v295, 40
        %v1657 = vsel %vm1656, %v1560, 0.0
        %v1658 = vsel %vm405, %v1657, -inf
        %1659 = vmax.xlane.f32.xlu0 %v1658
        %v1660 = vpop.xlane.xlu0 %1659
        %v1661 = vrot.slane %v1660, 4
        %v1662 = vmax.f32 %v1660, %v1661
        %v1663 = vrot.slane %v1662, 2
        %v1664 = vmax.f32 %v1662, %v1663
        %v1665 = vrot.slane %v1664, 1
        %v1666 = vmax.f32 %v1664, %v1665
        %s1667 = vtos %v1666
        %p1668 = scmp.gt.f32.partialorder %s1667, 0.0
        %v1669 = vmax.f32 %v1560, %v1655
        %s1670 = scalar_select %p1668, 1, 0
        %v1671 = vstv %s1670
        %vm1672 = vcmp.eq.s32.totalorder %v1671, 1
        %v1673 = vsel %vm1672, %v1560, %v1669
        %vm1674 = vcmp.eq.s32.totalorder %v295, 41
        %v1675 = vsel %vm1674, %v1673, 0.0
        %v1676 = vsel %vm405, %v1675, -inf
        %1677 = vmax.xlane.f32.xlu0 %v1676
        %v1678 = vpop.xlane.xlu0 %1677
        %v1679 = vrot.slane %v1678, 4
        %v1680 = vmax.f32 %v1678, %v1679
        %v1681 = vrot.slane %v1680, 2
        %v1682 = vmax.f32 %v1680, %v1681
        %v1683 = vrot.slane %v1682, 1
        %v1684 = vmax.f32 %v1682, %v1683
        %s1685 = vtos %v1684
        %p1686 = scmp.gt.f32.partialorder %s1685, 0.0
        %v1688 = vrot.slane %v1655, 1
        %v1690 = vmax.f32 %v1673, %v1688
        %s1691 = scalar_select %p1686, 1, 0
        %v1692 = vstv %s1691
        %vm1693 = vcmp.eq.s32.totalorder %v1692, 1
        %v1694 = vsel %vm1693, %v1673, %v1690
        %vm1695 = vcmp.eq.s32.totalorder %v295, 42
        %v1696 = vsel %vm1695, %v1694, 0.0
        %v1697 = vsel %vm405, %v1696, -inf
        %1698 = vmax.xlane.f32.xlu0 %v1697
        %v1699 = vpop.xlane.xlu0 %1698
        %v1700 = vrot.slane %v1699, 4
        %v1701 = vmax.f32 %v1699, %v1700
        %v1702 = vrot.slane %v1701, 2
        %v1703 = vmax.f32 %v1701, %v1702
        %v1704 = vrot.slane %v1703, 1
        %v1705 = vmax.f32 %v1703, %v1704
        %s1706 = vtos %v1705
        %p1707 = scmp.gt.f32.partialorder %s1706, 0.0
        %v1708 = vrot.slane %v1655, 2
        %v1710 = vmax.f32 %v1694, %v1708
        %s1711 = scalar_select %p1707, 1, 0
        %v1712 = vstv %s1711
        %vm1713 = vcmp.eq.s32.totalorder %v1712, 1
        %v1714 = vsel %vm1713, %v1694, %v1710
        %vm1715 = vcmp.eq.s32.totalorder %v295, 43
        %v1716 = vsel %vm1715, %v1714, 0.0
        %v1717 = vsel %vm405, %v1716, -inf
        %1718 = vmax.xlane.f32.xlu0 %v1717
        %v1719 = vpop.xlane.xlu0 %1718
        %v1720 = vrot.slane %v1719, 4
        %v1721 = vmax.f32 %v1719, %v1720
        %v1722 = vrot.slane %v1721, 2
        %v1723 = vmax.f32 %v1721, %v1722
        %v1724 = vrot.slane %v1723, 1
        %v1725 = vmax.f32 %v1723, %v1724
        %s1726 = vtos %v1725
        %p1727 = scmp.gt.f32.partialorder %s1726, 0.0
        %v1728 = vrot.slane %v1655, 3
        %v1730 = vmax.f32 %v1714, %v1728
        %s1731 = scalar_select %p1727, 1, 0
        %v1732 = vstv %s1731
        %vm1733 = vcmp.eq.s32.totalorder %v1732, 1
        %v1734 = vsel %vm1733, %v1714, %v1730
        %vm1735 = vcmp.eq.s32.totalorder %v295, 44
        %v1736 = vsel %vm1735, %v1734, 0.0
        %v1737 = vsel %vm405, %v1736, -inf
        %1738 = vmax.xlane.f32.xlu0 %v1737
        %v1739 = vpop.xlane.xlu0 %1738
        %v1740 = vrot.slane %v1739, 4
        %v1741 = vmax.f32 %v1739, %v1740
        %v1742 = vrot.slane %v1741, 2
        %v1743 = vmax.f32 %v1741, %v1742
        %v1744 = vrot.slane %v1743, 1
        %v1745 = vmax.f32 %v1743, %v1744
        %s1746 = vtos %v1745
        %p1747 = scmp.gt.f32.partialorder %s1746, 0.0
        %v1748 = vrot.slane %v1655, 4
        %v1750 = vmax.f32 %v1734, %v1748
        %s1751 = scalar_select %p1747, 1, 0
        %v1752 = vstv %s1751
        %vm1753 = vcmp.eq.s32.totalorder %v1752, 1
        %v1754 = vsel %vm1753, %v1734, %v1750
        %vm1755 = vcmp.eq.s32.totalorder %v295, 45
        %v1756 = vsel %vm1755, %v1754, 0.0
        %v1757 = vsel %vm405, %v1756, -inf
        %1758 = vmax.xlane.f32.xlu0 %v1757
        %v1759 = vpop.xlane.xlu0 %1758
        %v1760 = vrot.slane %v1759, 4
        %v1761 = vmax.f32 %v1759, %v1760
        %v1762 = vrot.slane %v1761, 2
        %v1763 = vmax.f32 %v1761, %v1762
        %v1764 = vrot.slane %v1763, 1
        %v1765 = vmax.f32 %v1763, %v1764
        %s1766 = vtos %v1765
        %p1767 = scmp.gt.f32.partialorder %s1766, 0.0
        %v1768 = vrot.slane %v1655, 5
        %v1770 = vmax.f32 %v1754, %v1768
        %s1771 = scalar_select %p1767, 1, 0
        %v1772 = vstv %s1771
        %vm1773 = vcmp.eq.s32.totalorder %v1772, 1
        %v1774 = vsel %vm1773, %v1754, %v1770
        %vm1775 = vcmp.eq.s32.totalorder %v295, 46
        %v1776 = vsel %vm1775, %v1774, 0.0
        %v1777 = vsel %vm405, %v1776, -inf
        %1778 = vmax.xlane.f32.xlu0 %v1777
        %v1779 = vpop.xlane.xlu0 %1778
        %v1780 = vrot.slane %v1779, 4
        %v1781 = vmax.f32 %v1779, %v1780
        %v1782 = vrot.slane %v1781, 2
        %v1783 = vmax.f32 %v1781, %v1782
        %v1784 = vrot.slane %v1783, 1
        %v1785 = vmax.f32 %v1783, %v1784
        %s1786 = vtos %v1785
        %p1787 = scmp.gt.f32.partialorder %s1786, 0.0
        %v1788 = vrot.slane %v1655, 6
        %v1790 = vmax.f32 %v1774, %v1788
        %s1791 = scalar_select %p1787, 1, 0
        %v1792 = vstv %s1791
        %vm1793 = vcmp.eq.s32.totalorder %v1792, 1
        %v1794 = vsel %vm1793, %v1774, %v1790
        %vm1795 = vcmp.eq.s32.totalorder %v295, 47
        %v1796 = vsel %vm1795, %v1794, 0.0
        %v1797 = vsel %vm405, %v1796, -inf
        %1798 = vmax.xlane.f32.xlu0 %v1797
        %v1799 = vpop.xlane.xlu0 %1798
        %v1800 = vrot.slane %v1799, 4
        %v1801 = vmax.f32 %v1799, %v1800
        %v1802 = vrot.slane %v1801, 2
        %v1803 = vmax.f32 %v1801, %v1802
        %v1804 = vrot.slane %v1803, 1
        %v1805 = vmax.f32 %v1803, %v1804
        %s1806 = vtos %v1805
        %p1807 = scmp.gt.f32.partialorder %s1806, 0.0
        %v1808 = vrot.slane %v1655, 7
        %v1810 = vmax.f32 %v1794, %v1808
        %s1811 = scalar_select %p1807, 1, 0
        %v1812 = vstv %s1811
        %vm1813 = vcmp.eq.s32.totalorder %v1812, 1
        %v1814 = vsel %vm1813, %v1794, %v1810
        %v1815 = vld [vmem:[%s236 + $0x30] sm:$0xff]
        %1817 = vrot.lane.b32.xlu0 %v1815, 2
        %v1818 = vpop.permute.xlu0 %1817
        %v1820 = vsub.f32 %v1815, %v1818
        %v1821 = vadd.f32 %v1820, 1.0
        %v1822 = vmul.f32 %v1821, 0.5
        %1824 = vrot.lane.b32.xlu0 %v1822, 126
        %v1825 = vpop.permute.xlu0 %1824
        %v1827 = vadd.f32 %v1815, %v1825
        %1829 = vrot.lane.b32.xlu0 %v1821, 2
        %v1830 = vpop.permute.xlu0 %1829
        %v1832 = vmul.f32 %v1815, %v1830
        %1834 = vrot.lane.b32.xlu0 %v1827, 4
        %v1835 = vpop.permute.xlu0 %1834
        %v1837 = vadd.f32 %v1832, %v1835
        %v1838 = vmul.f32 %v1815, 1.442695
        %v1839 = vpow.pop %v1838
        %1840 = vrot.lane.b32.xlu0 %v1821, 4
        %v1841 = vpop.permute.xlu0 %1840
        %v1843 = vmul.f32 %v1839, %v1841
        %v1844 = vmul.f32 %v1843, 0.5
        %1846 = vrot.lane.b32.xlu0 %v1844, 126
        %v1847 = vpop.permute.xlu0 %1846
        %v1849 = vsub.f32 %v1837, %v1847
        %v1850 = vmax.f32 %v1849, 0.0
        %v1851 = vmin.f32 %v271, %v1850
        %v1852 = vmin.f32 %v277, %v1850
        %v1853 = vadd.f32 %v1837, %v1847
        %v1854 = vmax.f32 %v1853, 0.0
        %v1855 = vmin.f32 %v271, %v1854
        %v1856 = vmin.f32 %v277, %v1854
        %v1857 = vsub.f32 %v1855, %v1851
        %v1858 = vadd.f32 %v1857, 1.0
        %v1859 = vsub.f32 %v1856, %v1852
        %v1860 = vadd.f32 %v1859, 1.0
        %1862 = vrot.lane.b32.xlu0 %v1860, 127
        %v1863 = vpop.permute.xlu0 %1862
        %v1865 = vmul.f32 %v1858, %v1863
        %1867 = vset.pattern.permute.xlu0 4
        %1868 = vperm.xlu0 %1867, %v1851
        %v1869 = vpop.permute.xlu0 %1868
        %v1871 = vmax.f32 %v1869, %v352
        %1873 = vset.pattern.permute.xlu0 5
        %1874 = vperm.xlu0 %1873, %v1852
        %v1875 = vpop.permute.xlu0 %1874
        %v1877 = vmax.f32 %v1875, %v359
        %1879 = vset.pattern.permute.xlu0 4
        %1880 = vperm.xlu0 %1879, %v1855
        %v1881 = vpop.permute.xlu0 %1880
        %v1883 = vmin.f32 %v1881, %v366
        %1885 = vset.pattern.permute.xlu0 5
        %1886 = vperm.xlu0 %1885, %v1856
        %v1887 = vpop.permute.xlu0 %1886
        %v1889 = vmin.f32 %v1887, %v373
        %v1890 = vsub.f32 %v1883, %v1871
        %v1891 = vadd.f32 %v1890, 1.0
        %v1892 = vmax.f32 %v1891, 0.0
        %v1893 = vsub.f32 %v1889, %v1877
        %v1894 = vadd.f32 %v1893, 1.0
        %v1895 = vmax.f32 %v1894, 0.0
        %v1896 = vmul.f32 %v1892, %v1895
        %1898 = vset.pattern.permute.xlu0 4
        %1899 = vperm.xlu0 %1898, %v1865
        %v1900 = vpop.permute.xlu0 %1899
        %v1902 = vadd.f32 %v1900, %v387
        %v1903 = vsub.f32 %v1902, %v1896
        %v1904 = vadd.s32 %v391, 48
        %vm1905 = vcmp.gt.s32.totalorder %v295, %v1904
        %v1906 = vmul.f32 %v1903, 0.7
        %vm1907 = vcmp.gt.f32.partialorder %v1896, %v1906
        %vm1908 = vmand %vm1905, %vm1907
        %v1909 = vsel %vm1908, 1.0, 0.0
        %vm1910 = vcmp.eq.s32.totalorder %v295, 48
        %v1911 = vsel %vm1910, %v1814, 0.0
        %v1912 = vsel %vm405, %v1911, -inf
        %1913 = vmax.xlane.f32.xlu0 %v1912
        %v1914 = vpop.xlane.xlu0 %1913
        %v1915 = vrot.slane %v1914, 4
        %v1916 = vmax.f32 %v1914, %v1915
        %v1917 = vrot.slane %v1916, 2
        %v1918 = vmax.f32 %v1916, %v1917
        %v1919 = vrot.slane %v1918, 1
        %v1920 = vmax.f32 %v1918, %v1919
        %s1921 = vtos %v1920
        %p1922 = scmp.gt.f32.partialorder %s1921, 0.0
        %v1923 = vmax.f32 %v1814, %v1909
        %s1924 = scalar_select %p1922, 1, 0
        %v1925 = vstv %s1924
        %vm1926 = vcmp.eq.s32.totalorder %v1925, 1
        %v1927 = vsel %vm1926, %v1814, %v1923
        %vm1928 = vcmp.eq.s32.totalorder %v295, 49
        %v1929 = vsel %vm1928, %v1927, 0.0
        %v1930 = vsel %vm405, %v1929, -inf
        %1931 = vmax.xlane.f32.xlu0 %v1930
        %v1932 = vpop.xlane.xlu0 %1931
        %v1933 = vrot.slane %v1932, 4
        %v1934 = vmax.f32 %v1932, %v1933
        %v1935 = vrot.slane %v1934, 2
        %v1936 = vmax.f32 %v1934, %v1935
        %v1937 = vrot.slane %v1936, 1
        %v1938 = vmax.f32 %v1936, %v1937
        %s1939 = vtos %v1938
        %p1940 = scmp.gt.f32.partialorder %s1939, 0.0
        %v1942 = vrot.slane %v1909, 1
        %v1944 = vmax.f32 %v1927, %v1942
        %s1945 = scalar_select %p1940, 1, 0
        %v1946 = vstv %s1945
        %vm1947 = vcmp.eq.s32.totalorder %v1946, 1
        %v1948 = vsel %vm1947, %v1927, %v1944
        %vm1949 = vcmp.eq.s32.totalorder %v295, 50
        %v1950 = vsel %vm1949, %v1948, 0.0
        %v1951 = vsel %vm405, %v1950, -inf
        %1952 = vmax.xlane.f32.xlu0 %v1951
        %v1953 = vpop.xlane.xlu0 %1952
        %v1954 = vrot.slane %v1953, 4
        %v1955 = vmax.f32 %v1953, %v1954
        %v1956 = vrot.slane %v1955, 2
        %v1957 = vmax.f32 %v1955, %v1956
        %v1958 = vrot.slane %v1957, 1
        %v1959 = vmax.f32 %v1957, %v1958
        %s1960 = vtos %v1959
        %p1961 = scmp.gt.f32.partialorder %s1960, 0.0
        %v1962 = vrot.slane %v1909, 2
        %v1964 = vmax.f32 %v1948, %v1962
        %s1965 = scalar_select %p1961, 1, 0
        %v1966 = vstv %s1965
        %vm1967 = vcmp.eq.s32.totalorder %v1966, 1
        %v1968 = vsel %vm1967, %v1948, %v1964
        %vm1969 = vcmp.eq.s32.totalorder %v295, 51
        %v1970 = vsel %vm1969, %v1968, 0.0
        %v1971 = vsel %vm405, %v1970, -inf
        %1972 = vmax.xlane.f32.xlu0 %v1971
        %v1973 = vpop.xlane.xlu0 %1972
        %v1974 = vrot.slane %v1973, 4
        %v1975 = vmax.f32 %v1973, %v1974
        %v1976 = vrot.slane %v1975, 2
        %v1977 = vmax.f32 %v1975, %v1976
        %v1978 = vrot.slane %v1977, 1
        %v1979 = vmax.f32 %v1977, %v1978
        %s1980 = vtos %v1979
        %p1981 = scmp.gt.f32.partialorder %s1980, 0.0
        %v1982 = vrot.slane %v1909, 3
        %v1984 = vmax.f32 %v1968, %v1982
        %s1985 = scalar_select %p1981, 1, 0
        %v1986 = vstv %s1985
        %vm1987 = vcmp.eq.s32.totalorder %v1986, 1
        %v1988 = vsel %vm1987, %v1968, %v1984
        %vm1989 = vcmp.eq.s32.totalorder %v295, 52
        %v1990 = vsel %vm1989, %v1988, 0.0
        %v1991 = vsel %vm405, %v1990, -inf
        %1992 = vmax.xlane.f32.xlu0 %v1991
        %v1993 = vpop.xlane.xlu0 %1992
        %v1994 = vrot.slane %v1993, 4
        %v1995 = vmax.f32 %v1993, %v1994
        %v1996 = vrot.slane %v1995, 2
        %v1997 = vmax.f32 %v1995, %v1996
        %v1998 = vrot.slane %v1997, 1
        %v1999 = vmax.f32 %v1997, %v1998
        %s2000 = vtos %v1999
        %p2001 = scmp.gt.f32.partialorder %s2000, 0.0
        %v2002 = vrot.slane %v1909, 4
        %v2004 = vmax.f32 %v1988, %v2002
        %s2005 = scalar_select %p2001, 1, 0
        %v2006 = vstv %s2005
        %vm2007 = vcmp.eq.s32.totalorder %v2006, 1
        %v2008 = vsel %vm2007, %v1988, %v2004
        %vm2009 = vcmp.eq.s32.totalorder %v295, 53
        %v2010 = vsel %vm2009, %v2008, 0.0
        %v2011 = vsel %vm405, %v2010, -inf
        %2012 = vmax.xlane.f32.xlu0 %v2011
        %v2013 = vpop.xlane.xlu0 %2012
        %v2014 = vrot.slane %v2013, 4
        %v2015 = vmax.f32 %v2013, %v2014
        %v2016 = vrot.slane %v2015, 2
        %v2017 = vmax.f32 %v2015, %v2016
        %v2018 = vrot.slane %v2017, 1
        %v2019 = vmax.f32 %v2017, %v2018
        %s2020 = vtos %v2019
        %p2021 = scmp.gt.f32.partialorder %s2020, 0.0
        %v2022 = vrot.slane %v1909, 5
        %v2024 = vmax.f32 %v2008, %v2022
        %s2025 = scalar_select %p2021, 1, 0
        %v2026 = vstv %s2025
        %vm2027 = vcmp.eq.s32.totalorder %v2026, 1
        %v2028 = vsel %vm2027, %v2008, %v2024
        %vm2029 = vcmp.eq.s32.totalorder %v295, 54
        %v2030 = vsel %vm2029, %v2028, 0.0
        %v2031 = vsel %vm405, %v2030, -inf
        %2032 = vmax.xlane.f32.xlu0 %v2031
        %v2033 = vpop.xlane.xlu0 %2032
        %v2034 = vrot.slane %v2033, 4
        %v2035 = vmax.f32 %v2033, %v2034
        %v2036 = vrot.slane %v2035, 2
        %v2037 = vmax.f32 %v2035, %v2036
        %v2038 = vrot.slane %v2037, 1
        %v2039 = vmax.f32 %v2037, %v2038
        %s2040 = vtos %v2039
        %p2041 = scmp.gt.f32.partialorder %s2040, 0.0
        %v2042 = vrot.slane %v1909, 6
        %v2044 = vmax.f32 %v2028, %v2042
        %s2045 = scalar_select %p2041, 1, 0
        %v2046 = vstv %s2045
        %vm2047 = vcmp.eq.s32.totalorder %v2046, 1
        %v2048 = vsel %vm2047, %v2028, %v2044
        %vm2049 = vcmp.eq.s32.totalorder %v295, 55
        %v2050 = vsel %vm2049, %v2048, 0.0
        %v2051 = vsel %vm405, %v2050, -inf
        %2052 = vmax.xlane.f32.xlu0 %v2051
        %v2053 = vpop.xlane.xlu0 %2052
        %v2054 = vrot.slane %v2053, 4
        %v2055 = vmax.f32 %v2053, %v2054
        %v2056 = vrot.slane %v2055, 2
        %v2057 = vmax.f32 %v2055, %v2056
        %v2058 = vrot.slane %v2057, 1
        %v2059 = vmax.f32 %v2057, %v2058
        %s2060 = vtos %v2059
        %p2061 = scmp.gt.f32.partialorder %s2060, 0.0
        %v2062 = vrot.slane %v1909, 7
        %v2064 = vmax.f32 %v2048, %v2062
        %s2065 = scalar_select %p2061, 1, 0
        %v2066 = vstv %s2065
        %vm2067 = vcmp.eq.s32.totalorder %v2066, 1
        %v2068 = vsel %vm2067, %v2048, %v2064
        %v2069 = vld [vmem:[%s236 + $0x38] sm:$0xff]
        %2071 = vrot.lane.b32.xlu0 %v2069, 2
        %v2072 = vpop.permute.xlu0 %2071
        %v2074 = vsub.f32 %v2069, %v2072
        %v2075 = vadd.f32 %v2074, 1.0
        %v2076 = vmul.f32 %v2075, 0.5
        %2078 = vrot.lane.b32.xlu0 %v2076, 126
        %v2079 = vpop.permute.xlu0 %2078
        %v2081 = vadd.f32 %v2069, %v2079
        %2083 = vrot.lane.b32.xlu0 %v2075, 2
        %v2084 = vpop.permute.xlu0 %2083
        %v2086 = vmul.f32 %v2069, %v2084
        %2088 = vrot.lane.b32.xlu0 %v2081, 4
        %v2089 = vpop.permute.xlu0 %2088
        %v2091 = vadd.f32 %v2086, %v2089
        %v2092 = vmul.f32 %v2069, 1.442695
        %v2093 = vpow.pop %v2092
        %2094 = vrot.lane.b32.xlu0 %v2075, 4
        %v2095 = vpop.permute.xlu0 %2094
        %v2097 = vmul.f32 %v2093, %v2095
        %v2098 = vmul.f32 %v2097, 0.5
        %2100 = vrot.lane.b32.xlu0 %v2098, 126
        %v2101 = vpop.permute.xlu0 %2100
        %v2103 = vsub.f32 %v2091, %v2101
        %v2104 = vmax.f32 %v2103, 0.0
        %v2105 = vmin.f32 %v271, %v2104
        %v2106 = vmin.f32 %v277, %v2104
        %v2107 = vadd.f32 %v2091, %v2101
        %v2108 = vmax.f32 %v2107, 0.0
        %v2109 = vmin.f32 %v271, %v2108
        %v2110 = vmin.f32 %v277, %v2108
        %v2111 = vsub.f32 %v2109, %v2105
        %v2112 = vadd.f32 %v2111, 1.0
        %v2113 = vsub.f32 %v2110, %v2106
        %v2114 = vadd.f32 %v2113, 1.0
        %2116 = vrot.lane.b32.xlu0 %v2114, 127
        %v2117 = vpop.permute.xlu0 %2116
        %v2119 = vmul.f32 %v2112, %v2117
        %2121 = vset.pattern.permute.xlu0 4
        %2122 = vperm.xlu0 %2121, %v2105
        %v2123 = vpop.permute.xlu0 %2122
        %v2125 = vmax.f32 %v2123, %v352
        %2127 = vset.pattern.permute.xlu0 5
        %2128 = vperm.xlu0 %2127, %v2106
        %v2129 = vpop.permute.xlu0 %2128
        %v2131 = vmax.f32 %v2129, %v359
        %2133 = vset.pattern.permute.xlu0 4
        %2134 = vperm.xlu0 %2133, %v2109
        %v2135 = vpop.permute.xlu0 %2134
        %v2137 = vmin.f32 %v2135, %v366
        %2139 = vset.pattern.permute.xlu0 5
        %2140 = vperm.xlu0 %2139, %v2110
        %v2141 = vpop.permute.xlu0 %2140
        %v2143 = vmin.f32 %v2141, %v373
        %v2144 = vsub.f32 %v2137, %v2125
        %v2145 = vadd.f32 %v2144, 1.0
        %v2146 = vmax.f32 %v2145, 0.0
        %v2147 = vsub.f32 %v2143, %v2131
        %v2148 = vadd.f32 %v2147, 1.0
        %v2149 = vmax.f32 %v2148, 0.0
        %v2150 = vmul.f32 %v2146, %v2149
        %2152 = vset.pattern.permute.xlu0 4
        %2153 = vperm.xlu0 %2152, %v2119
        %v2154 = vpop.permute.xlu0 %2153
        %v2156 = vadd.f32 %v2154, %v387
        %v2157 = vsub.f32 %v2156, %v2150
        %v2158 = vadd.s32 %v391, 56
        %vm2159 = vcmp.gt.s32.totalorder %v295, %v2158
        %v2160 = vmul.f32 %v2157, 0.7
        %vm2161 = vcmp.gt.f32.partialorder %v2150, %v2160
        %vm2162 = vmand %vm2159, %vm2161
        %v2163 = vsel %vm2162, 1.0, 0.0
        %vm2164 = vcmp.eq.s32.totalorder %v295, 56
        %v2165 = vsel %vm2164, %v2068, 0.0
        %v2166 = vsel %vm405, %v2165, -inf
        %2167 = vmax.xlane.f32.xlu0 %v2166
        %v2168 = vpop.xlane.xlu0 %2167
        %v2169 = vrot.slane %v2168, 4
        %v2170 = vmax.f32 %v2168, %v2169
        %v2171 = vrot.slane %v2170, 2
        %v2172 = vmax.f32 %v2170, %v2171
        %v2173 = vrot.slane %v2172, 1
        %v2174 = vmax.f32 %v2172, %v2173
        %s2175 = vtos %v2174
        %p2176 = scmp.gt.f32.partialorder %s2175, 0.0
        %v2177 = vmax.f32 %v2068, %v2163
        %s2178 = scalar_select %p2176, 1, 0
        %v2179 = vstv %s2178
        %vm2180 = vcmp.eq.s32.totalorder %v2179, 1
        %v2181 = vsel %vm2180, %v2068, %v2177
        %vm2182 = vcmp.eq.s32.totalorder %v295, 57
        %v2183 = vsel %vm2182, %v2181, 0.0
        %v2184 = vsel %vm405, %v2183, -inf
        %2185 = vmax.xlane.f32.xlu0 %v2184
        %v2186 = vpop.xlane.xlu0 %2185
        %v2187 = vrot.slane %v2186, 4
        %v2188 = vmax.f32 %v2186, %v2187
        %v2189 = vrot.slane %v2188, 2
        %v2190 = vmax.f32 %v2188, %v2189
        %v2191 = vrot.slane %v2190, 1
        %v2192 = vmax.f32 %v2190, %v2191
        %s2193 = vtos %v2192
        %p2194 = scmp.gt.f32.partialorder %s2193, 0.0
        %v2196 = vrot.slane %v2163, 1
        %v2198 = vmax.f32 %v2181, %v2196
        %s2199 = scalar_select %p2194, 1, 0
        %v2200 = vstv %s2199
        %vm2201 = vcmp.eq.s32.totalorder %v2200, 1
        %v2202 = vsel %vm2201, %v2181, %v2198
        %vm2203 = vcmp.eq.s32.totalorder %v295, 58
        %v2204 = vsel %vm2203, %v2202, 0.0
        %v2205 = vsel %vm405, %v2204, -inf
        %2206 = vmax.xlane.f32.xlu0 %v2205
        %v2207 = vpop.xlane.xlu0 %2206
        %v2208 = vrot.slane %v2207, 4
        %v2209 = vmax.f32 %v2207, %v2208
        %v2210 = vrot.slane %v2209, 2
        %v2211 = vmax.f32 %v2209, %v2210
        %v2212 = vrot.slane %v2211, 1
        %v2213 = vmax.f32 %v2211, %v2212
        %s2214 = vtos %v2213
        %p2215 = scmp.gt.f32.partialorder %s2214, 0.0
        %v2216 = vrot.slane %v2163, 2
        %v2218 = vmax.f32 %v2202, %v2216
        %s2219 = scalar_select %p2215, 1, 0
        %v2220 = vstv %s2219
        %vm2221 = vcmp.eq.s32.totalorder %v2220, 1
        %v2222 = vsel %vm2221, %v2202, %v2218
        %vm2223 = vcmp.eq.s32.totalorder %v295, 59
        %v2224 = vsel %vm2223, %v2222, 0.0
        %v2225 = vsel %vm405, %v2224, -inf
        %2226 = vmax.xlane.f32.xlu0 %v2225
        %v2227 = vpop.xlane.xlu0 %2226
        %v2228 = vrot.slane %v2227, 4
        %v2229 = vmax.f32 %v2227, %v2228
        %v2230 = vrot.slane %v2229, 2
        %v2231 = vmax.f32 %v2229, %v2230
        %v2232 = vrot.slane %v2231, 1
        %v2233 = vmax.f32 %v2231, %v2232
        %s2234 = vtos %v2233
        %p2235 = scmp.gt.f32.partialorder %s2234, 0.0
        %v2236 = vrot.slane %v2163, 3
        %v2238 = vmax.f32 %v2222, %v2236
        %s2239 = scalar_select %p2235, 1, 0
        %v2240 = vstv %s2239
        %vm2241 = vcmp.eq.s32.totalorder %v2240, 1
        %v2242 = vsel %vm2241, %v2222, %v2238
        %vm2243 = vcmp.eq.s32.totalorder %v295, 60
        %v2244 = vsel %vm2243, %v2242, 0.0
        %v2245 = vsel %vm405, %v2244, -inf
        %2246 = vmax.xlane.f32.xlu0 %v2245
        %v2247 = vpop.xlane.xlu0 %2246
        %v2248 = vrot.slane %v2247, 4
        %v2249 = vmax.f32 %v2247, %v2248
        %v2250 = vrot.slane %v2249, 2
        %v2251 = vmax.f32 %v2249, %v2250
        %v2252 = vrot.slane %v2251, 1
        %v2253 = vmax.f32 %v2251, %v2252
        %s2254 = vtos %v2253
        %p2255 = scmp.gt.f32.partialorder %s2254, 0.0
        %v2256 = vrot.slane %v2163, 4
        %v2258 = vmax.f32 %v2242, %v2256
        %s2259 = scalar_select %p2255, 1, 0
        %v2260 = vstv %s2259
        %vm2261 = vcmp.eq.s32.totalorder %v2260, 1
        %v2262 = vsel %vm2261, %v2242, %v2258
        %vm2263 = vcmp.eq.s32.totalorder %v295, 61
        %v2264 = vsel %vm2263, %v2262, 0.0
        %v2265 = vsel %vm405, %v2264, -inf
        %2266 = vmax.xlane.f32.xlu0 %v2265
        %v2267 = vpop.xlane.xlu0 %2266
        %v2268 = vrot.slane %v2267, 4
        %v2269 = vmax.f32 %v2267, %v2268
        %v2270 = vrot.slane %v2269, 2
        %v2271 = vmax.f32 %v2269, %v2270
        %v2272 = vrot.slane %v2271, 1
        %v2273 = vmax.f32 %v2271, %v2272
        %s2274 = vtos %v2273
        %p2275 = scmp.gt.f32.partialorder %s2274, 0.0
        %v2276 = vrot.slane %v2163, 5
        %v2278 = vmax.f32 %v2262, %v2276
        %s2279 = scalar_select %p2275, 1, 0
        %v2280 = vstv %s2279
        %vm2281 = vcmp.eq.s32.totalorder %v2280, 1
        %v2282 = vsel %vm2281, %v2262, %v2278
        %vm2283 = vcmp.eq.s32.totalorder %v295, 62
        %v2284 = vsel %vm2283, %v2282, 0.0
        %v2285 = vsel %vm405, %v2284, -inf
        %2286 = vmax.xlane.f32.xlu0 %v2285
        %v2287 = vpop.xlane.xlu0 %2286
        %v2288 = vrot.slane %v2287, 4
        %v2289 = vmax.f32 %v2287, %v2288
        %v2290 = vrot.slane %v2289, 2
        %v2291 = vmax.f32 %v2289, %v2290
        %v2292 = vrot.slane %v2291, 1
        %v2293 = vmax.f32 %v2291, %v2292
        %s2294 = vtos %v2293
        %p2295 = scmp.gt.f32.partialorder %s2294, 0.0
        %v2296 = vrot.slane %v2163, 6
        %v2298 = vmax.f32 %v2282, %v2296
        %s2299 = scalar_select %p2295, 1, 0
        %v2300 = vstv %s2299
        %vm2301 = vcmp.eq.s32.totalorder %v2300, 1
        %v2302 = vsel %vm2301, %v2282, %v2298
        %vm2303 = vcmp.eq.s32.totalorder %v295, 63
        %v2304 = vsel %vm2303, %v2302, 0.0
        %v2305 = vsel %vm405, %v2304, -inf
        %2306 = vmax.xlane.f32.xlu0 %v2305
        %v2307 = vpop.xlane.xlu0 %2306
        %v2308 = vrot.slane %v2307, 4
        %v2309 = vmax.f32 %v2307, %v2308
        %v2310 = vrot.slane %v2309, 2
        %v2311 = vmax.f32 %v2309, %v2310
        %v2312 = vrot.slane %v2311, 1
        %v2313 = vmax.f32 %v2311, %v2312
        %s2314 = vtos %v2313
        %p2315 = scmp.gt.f32.partialorder %s2314, 0.0
        %v2316 = vrot.slane %v2163, 7
        %v2318 = vmax.f32 %v2302, %v2316
        %s2319 = scalar_select %p2315, 1, 0
        %v2320 = vstv %s2319
        %vm2321 = vcmp.eq.s32.totalorder %v2320, 1
        %v2322 = vsel %vm2321, %v2302, %v2318
        %v2323 = vld [vmem:[%s236 + $0x40] sm:$0xff]
        %2325 = vrot.lane.b32.xlu0 %v2323, 2
        %v2326 = vpop.permute.xlu0 %2325
        %v2328 = vsub.f32 %v2323, %v2326
        %v2329 = vadd.f32 %v2328, 1.0
        %v2330 = vmul.f32 %v2329, 0.5
        %2332 = vrot.lane.b32.xlu0 %v2330, 126
        %v2333 = vpop.permute.xlu0 %2332
        %v2335 = vadd.f32 %v2323, %v2333
        %2337 = vrot.lane.b32.xlu0 %v2329, 2
        %v2338 = vpop.permute.xlu0 %2337
        %v2340 = vmul.f32 %v2323, %v2338
        %2342 = vrot.lane.b32.xlu0 %v2335, 4
        %v2343 = vpop.permute.xlu0 %2342
        %v2345 = vadd.f32 %v2340, %v2343
        %v2346 = vmul.f32 %v2323, 1.442695
        %v2347 = vpow.pop %v2346
        %2348 = vrot.lane.b32.xlu0 %v2329, 4
        %v2349 = vpop.permute.xlu0 %2348
        %v2351 = vmul.f32 %v2347, %v2349
        %v2352 = vmul.f32 %v2351, 0.5
        %2354 = vrot.lane.b32.xlu0 %v2352, 126
        %v2355 = vpop.permute.xlu0 %2354
        %v2357 = vsub.f32 %v2345, %v2355
        %v2358 = vmax.f32 %v2357, 0.0
        %v2359 = vmin.f32 %v271, %v2358
        %v2360 = vmin.f32 %v277, %v2358
        %v2361 = vadd.f32 %v2345, %v2355
        %v2362 = vmax.f32 %v2361, 0.0
        %v2363 = vmin.f32 %v271, %v2362
        %v2364 = vmin.f32 %v277, %v2362
        %v2365 = vsub.f32 %v2363, %v2359
        %v2366 = vadd.f32 %v2365, 1.0
        %v2367 = vsub.f32 %v2364, %v2360
        %v2368 = vadd.f32 %v2367, 1.0
        %2370 = vrot.lane.b32.xlu0 %v2368, 127
        %v2371 = vpop.permute.xlu0 %2370
        %v2373 = vmul.f32 %v2366, %v2371
        %2375 = vset.pattern.permute.xlu0 4
        %2376 = vperm.xlu0 %2375, %v2359
        %v2377 = vpop.permute.xlu0 %2376
        %v2379 = vmax.f32 %v2377, %v352
        %2381 = vset.pattern.permute.xlu0 5
        %2382 = vperm.xlu0 %2381, %v2360
        %v2383 = vpop.permute.xlu0 %2382
        %v2385 = vmax.f32 %v2383, %v359
        %2387 = vset.pattern.permute.xlu0 4
        %2388 = vperm.xlu0 %2387, %v2363
        %v2389 = vpop.permute.xlu0 %2388
        %v2391 = vmin.f32 %v2389, %v366
        %2393 = vset.pattern.permute.xlu0 5
        %2394 = vperm.xlu0 %2393, %v2364
        %v2395 = vpop.permute.xlu0 %2394
        %v2397 = vmin.f32 %v2395, %v373
        %v2398 = vsub.f32 %v2391, %v2379
        %v2399 = vadd.f32 %v2398, 1.0
        %v2400 = vmax.f32 %v2399, 0.0
        %v2401 = vsub.f32 %v2397, %v2385
        %v2402 = vadd.f32 %v2401, 1.0
        %v2403 = vmax.f32 %v2402, 0.0
        %v2404 = vmul.f32 %v2400, %v2403
        %2406 = vset.pattern.permute.xlu0 4
        %2407 = vperm.xlu0 %2406, %v2373
        %v2408 = vpop.permute.xlu0 %2407
        %v2410 = vadd.f32 %v2408, %v387
        %v2411 = vsub.f32 %v2410, %v2404
        %v2412 = vadd.s32 %v391, 64
        %vm2413 = vcmp.gt.s32.totalorder %v295, %v2412
        %v2414 = vmul.f32 %v2411, 0.7
        %vm2415 = vcmp.gt.f32.partialorder %v2404, %v2414
        %vm2416 = vmand %vm2413, %vm2415
        %v2417 = vsel %vm2416, 1.0, 0.0
        %vm2418 = vcmp.eq.s32.totalorder %v295, 64
        %v2419 = vsel %vm2418, %v2322, 0.0
        %v2420 = vsel %vm405, %v2419, -inf
        %2421 = vmax.xlane.f32.xlu0 %v2420
        %v2422 = vpop.xlane.xlu0 %2421
        %v2423 = vrot.slane %v2422, 4
        %v2424 = vmax.f32 %v2422, %v2423
        %v2425 = vrot.slane %v2424, 2
        %v2426 = vmax.f32 %v2424, %v2425
        %v2427 = vrot.slane %v2426, 1
        %v2428 = vmax.f32 %v2426, %v2427
        %s2429 = vtos %v2428
        %p2430 = scmp.gt.f32.partialorder %s2429, 0.0
        %v2431 = vmax.f32 %v2322, %v2417
        %s2432 = scalar_select %p2430, 1, 0
        %v2433 = vstv %s2432
        %vm2434 = vcmp.eq.s32.totalorder %v2433, 1
        %v2435 = vsel %vm2434, %v2322, %v2431
        %vm2436 = vcmp.eq.s32.totalorder %v295, 65
        %v2437 = vsel %vm2436, %v2435, 0.0
        %v2438 = vsel %vm405, %v2437, -inf
        %2439 = vmax.xlane.f32.xlu0 %v2438
        %v2440 = vpop.xlane.xlu0 %2439
        %v2441 = vrot.slane %v2440, 4
        %v2442 = vmax.f32 %v2440, %v2441
        %v2443 = vrot.slane %v2442, 2
        %v2444 = vmax.f32 %v2442, %v2443
        %v2445 = vrot.slane %v2444, 1
        %v2446 = vmax.f32 %v2444, %v2445
        %s2447 = vtos %v2446
        %p2448 = scmp.gt.f32.partialorder %s2447, 0.0
        %v2450 = vrot.slane %v2417, 1
        %v2452 = vmax.f32 %v2435, %v2450
        %s2453 = scalar_select %p2448, 1, 0
        %v2454 = vstv %s2453
        %vm2455 = vcmp.eq.s32.totalorder %v2454, 1
        %v2456 = vsel %vm2455, %v2435, %v2452
        %vm2457 = vcmp.eq.s32.totalorder %v295, 66
        %v2458 = vsel %vm2457, %v2456, 0.0
        %v2459 = vsel %vm405, %v2458, -inf
        %2460 = vmax.xlane.f32.xlu0 %v2459
        %v2461 = vpop.xlane.xlu0 %2460
        %v2462 = vrot.slane %v2461, 4
        %v2463 = vmax.f32 %v2461, %v2462
        %v2464 = vrot.slane %v2463, 2
        %v2465 = vmax.f32 %v2463, %v2464
        %v2466 = vrot.slane %v2465, 1
        %v2467 = vmax.f32 %v2465, %v2466
        %s2468 = vtos %v2467
        %p2469 = scmp.gt.f32.partialorder %s2468, 0.0
        %v2470 = vrot.slane %v2417, 2
        %v2472 = vmax.f32 %v2456, %v2470
        %s2473 = scalar_select %p2469, 1, 0
        %v2474 = vstv %s2473
        %vm2475 = vcmp.eq.s32.totalorder %v2474, 1
        %v2476 = vsel %vm2475, %v2456, %v2472
        %vm2477 = vcmp.eq.s32.totalorder %v295, 67
        %v2478 = vsel %vm2477, %v2476, 0.0
        %v2479 = vsel %vm405, %v2478, -inf
        %2480 = vmax.xlane.f32.xlu0 %v2479
        %v2481 = vpop.xlane.xlu0 %2480
        %v2482 = vrot.slane %v2481, 4
        %v2483 = vmax.f32 %v2481, %v2482
        %v2484 = vrot.slane %v2483, 2
        %v2485 = vmax.f32 %v2483, %v2484
        %v2486 = vrot.slane %v2485, 1
        %v2487 = vmax.f32 %v2485, %v2486
        %s2488 = vtos %v2487
        %p2489 = scmp.gt.f32.partialorder %s2488, 0.0
        %v2490 = vrot.slane %v2417, 3
        %v2492 = vmax.f32 %v2476, %v2490
        %s2493 = scalar_select %p2489, 1, 0
        %v2494 = vstv %s2493
        %vm2495 = vcmp.eq.s32.totalorder %v2494, 1
        %v2496 = vsel %vm2495, %v2476, %v2492
        %vm2497 = vcmp.eq.s32.totalorder %v295, 68
        %v2498 = vsel %vm2497, %v2496, 0.0
        %v2499 = vsel %vm405, %v2498, -inf
        %2500 = vmax.xlane.f32.xlu0 %v2499
        %v2501 = vpop.xlane.xlu0 %2500
        %v2502 = vrot.slane %v2501, 4
        %v2503 = vmax.f32 %v2501, %v2502
        %v2504 = vrot.slane %v2503, 2
        %v2505 = vmax.f32 %v2503, %v2504
        %v2506 = vrot.slane %v2505, 1
        %v2507 = vmax.f32 %v2505, %v2506
        %s2508 = vtos %v2507
        %p2509 = scmp.gt.f32.partialorder %s2508, 0.0
        %v2510 = vrot.slane %v2417, 4
        %v2512 = vmax.f32 %v2496, %v2510
        %s2513 = scalar_select %p2509, 1, 0
        %v2514 = vstv %s2513
        %vm2515 = vcmp.eq.s32.totalorder %v2514, 1
        %v2516 = vsel %vm2515, %v2496, %v2512
        %vm2517 = vcmp.eq.s32.totalorder %v295, 69
        %v2518 = vsel %vm2517, %v2516, 0.0
        %v2519 = vsel %vm405, %v2518, -inf
        %2520 = vmax.xlane.f32.xlu0 %v2519
        %v2521 = vpop.xlane.xlu0 %2520
        %v2522 = vrot.slane %v2521, 4
        %v2523 = vmax.f32 %v2521, %v2522
        %v2524 = vrot.slane %v2523, 2
        %v2525 = vmax.f32 %v2523, %v2524
        %v2526 = vrot.slane %v2525, 1
        %v2527 = vmax.f32 %v2525, %v2526
        %s2528 = vtos %v2527
        %p2529 = scmp.gt.f32.partialorder %s2528, 0.0
        %v2530 = vrot.slane %v2417, 5
        %v2532 = vmax.f32 %v2516, %v2530
        %s2533 = scalar_select %p2529, 1, 0
        %v2534 = vstv %s2533
        %vm2535 = vcmp.eq.s32.totalorder %v2534, 1
        %v2536 = vsel %vm2535, %v2516, %v2532
        %vm2537 = vcmp.eq.s32.totalorder %v295, 70
        %v2538 = vsel %vm2537, %v2536, 0.0
        %v2539 = vsel %vm405, %v2538, -inf
        %2540 = vmax.xlane.f32.xlu0 %v2539
        %v2541 = vpop.xlane.xlu0 %2540
        %v2542 = vrot.slane %v2541, 4
        %v2543 = vmax.f32 %v2541, %v2542
        %v2544 = vrot.slane %v2543, 2
        %v2545 = vmax.f32 %v2543, %v2544
        %v2546 = vrot.slane %v2545, 1
        %v2547 = vmax.f32 %v2545, %v2546
        %s2548 = vtos %v2547
        %p2549 = scmp.gt.f32.partialorder %s2548, 0.0
        %v2550 = vrot.slane %v2417, 6
        %v2552 = vmax.f32 %v2536, %v2550
        %s2553 = scalar_select %p2549, 1, 0
        %v2554 = vstv %s2553
        %vm2555 = vcmp.eq.s32.totalorder %v2554, 1
        %v2556 = vsel %vm2555, %v2536, %v2552
        %vm2557 = vcmp.eq.s32.totalorder %v295, 71
        %v2558 = vsel %vm2557, %v2556, 0.0
        %v2559 = vsel %vm405, %v2558, -inf
        %2560 = vmax.xlane.f32.xlu0 %v2559
        %v2561 = vpop.xlane.xlu0 %2560
        %v2562 = vrot.slane %v2561, 4
        %v2563 = vmax.f32 %v2561, %v2562
        %v2564 = vrot.slane %v2563, 2
        %v2565 = vmax.f32 %v2563, %v2564
        %v2566 = vrot.slane %v2565, 1
        %v2567 = vmax.f32 %v2565, %v2566
        %s2568 = vtos %v2567
        %p2569 = scmp.gt.f32.partialorder %s2568, 0.0
        %v2570 = vrot.slane %v2417, 7
        %v2572 = vmax.f32 %v2556, %v2570
        %s2573 = scalar_select %p2569, 1, 0
        %v2574 = vstv %s2573
        %vm2575 = vcmp.eq.s32.totalorder %v2574, 1
        %v2576 = vsel %vm2575, %v2556, %v2572
        %v2577 = vld [vmem:[%s236 + $0x48] sm:$0xff]
        %2579 = vrot.lane.b32.xlu0 %v2577, 2
        %v2580 = vpop.permute.xlu0 %2579
        %v2582 = vsub.f32 %v2577, %v2580
        %v2583 = vadd.f32 %v2582, 1.0
        %v2584 = vmul.f32 %v2583, 0.5
        %2586 = vrot.lane.b32.xlu0 %v2584, 126
        %v2587 = vpop.permute.xlu0 %2586
        %v2589 = vadd.f32 %v2577, %v2587
        %2591 = vrot.lane.b32.xlu0 %v2583, 2
        %v2592 = vpop.permute.xlu0 %2591
        %v2594 = vmul.f32 %v2577, %v2592
        %2596 = vrot.lane.b32.xlu0 %v2589, 4
        %v2597 = vpop.permute.xlu0 %2596
        %v2599 = vadd.f32 %v2594, %v2597
        %v2600 = vmul.f32 %v2577, 1.442695
        %v2601 = vpow.pop %v2600
        %2602 = vrot.lane.b32.xlu0 %v2583, 4
        %v2603 = vpop.permute.xlu0 %2602
        %v2605 = vmul.f32 %v2601, %v2603
        %v2606 = vmul.f32 %v2605, 0.5
        %2608 = vrot.lane.b32.xlu0 %v2606, 126
        %v2609 = vpop.permute.xlu0 %2608
        %v2611 = vsub.f32 %v2599, %v2609
        %v2612 = vmax.f32 %v2611, 0.0
        %v2613 = vmin.f32 %v271, %v2612
        %v2614 = vmin.f32 %v277, %v2612
        %v2615 = vadd.f32 %v2599, %v2609
        %v2616 = vmax.f32 %v2615, 0.0
        %v2617 = vmin.f32 %v271, %v2616
        %v2618 = vmin.f32 %v277, %v2616
        %v2619 = vsub.f32 %v2617, %v2613
        %v2620 = vadd.f32 %v2619, 1.0
        %v2621 = vsub.f32 %v2618, %v2614
        %v2622 = vadd.f32 %v2621, 1.0
        %2624 = vrot.lane.b32.xlu0 %v2622, 127
        %v2625 = vpop.permute.xlu0 %2624
        %v2627 = vmul.f32 %v2620, %v2625
        %2629 = vset.pattern.permute.xlu0 4
        %2630 = vperm.xlu0 %2629, %v2613
        %v2631 = vpop.permute.xlu0 %2630
        %v2633 = vmax.f32 %v2631, %v352
        %2635 = vset.pattern.permute.xlu0 5
        %2636 = vperm.xlu0 %2635, %v2614
        %v2637 = vpop.permute.xlu0 %2636
        %v2639 = vmax.f32 %v2637, %v359
        %2641 = vset.pattern.permute.xlu0 4
        %2642 = vperm.xlu0 %2641, %v2617
        %v2643 = vpop.permute.xlu0 %2642
        %v2645 = vmin.f32 %v2643, %v366
        %2647 = vset.pattern.permute.xlu0 5
        %2648 = vperm.xlu0 %2647, %v2618
        %v2649 = vpop.permute.xlu0 %2648
        %v2651 = vmin.f32 %v2649, %v373
        %v2652 = vsub.f32 %v2645, %v2633
        %v2653 = vadd.f32 %v2652, 1.0
        %v2654 = vmax.f32 %v2653, 0.0
        %v2655 = vsub.f32 %v2651, %v2639
        %v2656 = vadd.f32 %v2655, 1.0
        %v2657 = vmax.f32 %v2656, 0.0
        %v2658 = vmul.f32 %v2654, %v2657
        %2660 = vset.pattern.permute.xlu0 4
        %2661 = vperm.xlu0 %2660, %v2627
        %v2662 = vpop.permute.xlu0 %2661
        %v2664 = vadd.f32 %v2662, %v387
        %v2665 = vsub.f32 %v2664, %v2658
        %v2666 = vadd.s32 %v391, 72
        %vm2667 = vcmp.gt.s32.totalorder %v295, %v2666
        %v2668 = vmul.f32 %v2665, 0.7
        %vm2669 = vcmp.gt.f32.partialorder %v2658, %v2668
        %vm2670 = vmand %vm2667, %vm2669
        %v2671 = vsel %vm2670, 1.0, 0.0
        %vm2672 = vcmp.eq.s32.totalorder %v295, 72
        %v2673 = vsel %vm2672, %v2576, 0.0
        %v2674 = vsel %vm405, %v2673, -inf
        %2675 = vmax.xlane.f32.xlu0 %v2674
        %v2676 = vpop.xlane.xlu0 %2675
        %v2677 = vrot.slane %v2676, 4
        %v2678 = vmax.f32 %v2676, %v2677
        %v2679 = vrot.slane %v2678, 2
        %v2680 = vmax.f32 %v2678, %v2679
        %v2681 = vrot.slane %v2680, 1
        %v2682 = vmax.f32 %v2680, %v2681
        %s2683 = vtos %v2682
        %p2684 = scmp.gt.f32.partialorder %s2683, 0.0
        %v2685 = vmax.f32 %v2576, %v2671
        %s2686 = scalar_select %p2684, 1, 0
        %v2687 = vstv %s2686
        %vm2688 = vcmp.eq.s32.totalorder %v2687, 1
        %v2689 = vsel %vm2688, %v2576, %v2685
        %vm2690 = vcmp.eq.s32.totalorder %v295, 73
        %v2691 = vsel %vm2690, %v2689, 0.0
        %v2692 = vsel %vm405, %v2691, -inf
        %2693 = vmax.xlane.f32.xlu0 %v2692
        %v2694 = vpop.xlane.xlu0 %2693
        %v2695 = vrot.slane %v2694, 4
        %v2696 = vmax.f32 %v2694, %v2695
        %v2697 = vrot.slane %v2696, 2
        %v2698 = vmax.f32 %v2696, %v2697
        %v2699 = vrot.slane %v2698, 1
        %v2700 = vmax.f32 %v2698, %v2699
        %s2701 = vtos %v2700
        %p2702 = scmp.gt.f32.partialorder %s2701, 0.0
        %v2704 = vrot.slane %v2671, 1
        %v2706 = vmax.f32 %v2689, %v2704
        %s2707 = scalar_select %p2702, 1, 0
        %v2708 = vstv %s2707
        %vm2709 = vcmp.eq.s32.totalorder %v2708, 1
        %v2710 = vsel %vm2709, %v2689, %v2706
        %vm2711 = vcmp.eq.s32.totalorder %v295, 74
        %v2712 = vsel %vm2711, %v2710, 0.0
        %v2713 = vsel %vm405, %v2712, -inf
        %2714 = vmax.xlane.f32.xlu0 %v2713
        %v2715 = vpop.xlane.xlu0 %2714
        %v2716 = vrot.slane %v2715, 4
        %v2717 = vmax.f32 %v2715, %v2716
        %v2718 = vrot.slane %v2717, 2
        %v2719 = vmax.f32 %v2717, %v2718
        %v2720 = vrot.slane %v2719, 1
        %v2721 = vmax.f32 %v2719, %v2720
        %s2722 = vtos %v2721
        %p2723 = scmp.gt.f32.partialorder %s2722, 0.0
        %v2724 = vrot.slane %v2671, 2
        %v2726 = vmax.f32 %v2710, %v2724
        %s2727 = scalar_select %p2723, 1, 0
        %v2728 = vstv %s2727
        %vm2729 = vcmp.eq.s32.totalorder %v2728, 1
        %v2730 = vsel %vm2729, %v2710, %v2726
        %vm2731 = vcmp.eq.s32.totalorder %v295, 75
        %v2732 = vsel %vm2731, %v2730, 0.0
        %v2733 = vsel %vm405, %v2732, -inf
        %2734 = vmax.xlane.f32.xlu0 %v2733
        %v2735 = vpop.xlane.xlu0 %2734
        %v2736 = vrot.slane %v2735, 4
        %v2737 = vmax.f32 %v2735, %v2736
        %v2738 = vrot.slane %v2737, 2
        %v2739 = vmax.f32 %v2737, %v2738
        %v2740 = vrot.slane %v2739, 1
        %v2741 = vmax.f32 %v2739, %v2740
        %s2742 = vtos %v2741
        %p2743 = scmp.gt.f32.partialorder %s2742, 0.0
        %v2744 = vrot.slane %v2671, 3
        %v2746 = vmax.f32 %v2730, %v2744
        %s2747 = scalar_select %p2743, 1, 0
        %v2748 = vstv %s2747
        %vm2749 = vcmp.eq.s32.totalorder %v2748, 1
        %v2750 = vsel %vm2749, %v2730, %v2746
        %vm2751 = vcmp.eq.s32.totalorder %v295, 76
        %v2752 = vsel %vm2751, %v2750, 0.0
        %v2753 = vsel %vm405, %v2752, -inf
        %2754 = vmax.xlane.f32.xlu0 %v2753
        %v2755 = vpop.xlane.xlu0 %2754
        %v2756 = vrot.slane %v2755, 4
        %v2757 = vmax.f32 %v2755, %v2756
        %v2758 = vrot.slane %v2757, 2
        %v2759 = vmax.f32 %v2757, %v2758
        %v2760 = vrot.slane %v2759, 1
        %v2761 = vmax.f32 %v2759, %v2760
        %s2762 = vtos %v2761
        %p2763 = scmp.gt.f32.partialorder %s2762, 0.0
        %v2764 = vrot.slane %v2671, 4
        %v2766 = vmax.f32 %v2750, %v2764
        %s2767 = scalar_select %p2763, 1, 0
        %v2768 = vstv %s2767
        %vm2769 = vcmp.eq.s32.totalorder %v2768, 1
        %v2770 = vsel %vm2769, %v2750, %v2766
        %vm2771 = vcmp.eq.s32.totalorder %v295, 77
        %v2772 = vsel %vm2771, %v2770, 0.0
        %v2773 = vsel %vm405, %v2772, -inf
        %2774 = vmax.xlane.f32.xlu0 %v2773
        %v2775 = vpop.xlane.xlu0 %2774
        %v2776 = vrot.slane %v2775, 4
        %v2777 = vmax.f32 %v2775, %v2776
        %v2778 = vrot.slane %v2777, 2
        %v2779 = vmax.f32 %v2777, %v2778
        %v2780 = vrot.slane %v2779, 1
        %v2781 = vmax.f32 %v2779, %v2780
        %s2782 = vtos %v2781
        %p2783 = scmp.gt.f32.partialorder %s2782, 0.0
        %v2784 = vrot.slane %v2671, 5
        %v2786 = vmax.f32 %v2770, %v2784
        %s2787 = scalar_select %p2783, 1, 0
        %v2788 = vstv %s2787
        %vm2789 = vcmp.eq.s32.totalorder %v2788, 1
        %v2790 = vsel %vm2789, %v2770, %v2786
        %vm2791 = vcmp.eq.s32.totalorder %v295, 78
        %v2792 = vsel %vm2791, %v2790, 0.0
        %v2793 = vsel %vm405, %v2792, -inf
        %2794 = vmax.xlane.f32.xlu0 %v2793
        %v2795 = vpop.xlane.xlu0 %2794
        %v2796 = vrot.slane %v2795, 4
        %v2797 = vmax.f32 %v2795, %v2796
        %v2798 = vrot.slane %v2797, 2
        %v2799 = vmax.f32 %v2797, %v2798
        %v2800 = vrot.slane %v2799, 1
        %v2801 = vmax.f32 %v2799, %v2800
        %s2802 = vtos %v2801
        %p2803 = scmp.gt.f32.partialorder %s2802, 0.0
        %v2804 = vrot.slane %v2671, 6
        %v2806 = vmax.f32 %v2790, %v2804
        %s2807 = scalar_select %p2803, 1, 0
        %v2808 = vstv %s2807
        %vm2809 = vcmp.eq.s32.totalorder %v2808, 1
        %v2810 = vsel %vm2809, %v2790, %v2806
        %vm2811 = vcmp.eq.s32.totalorder %v295, 79
        %v2812 = vsel %vm2811, %v2810, 0.0
        %v2813 = vsel %vm405, %v2812, -inf
        %2814 = vmax.xlane.f32.xlu0 %v2813
        %v2815 = vpop.xlane.xlu0 %2814
        %v2816 = vrot.slane %v2815, 4
        %v2817 = vmax.f32 %v2815, %v2816
        %v2818 = vrot.slane %v2817, 2
        %v2819 = vmax.f32 %v2817, %v2818
        %v2820 = vrot.slane %v2819, 1
        %v2821 = vmax.f32 %v2819, %v2820
        %s2822 = vtos %v2821
        %p2823 = scmp.gt.f32.partialorder %s2822, 0.0
        %v2824 = vrot.slane %v2671, 7
        %v2826 = vmax.f32 %v2810, %v2824
        %s2827 = scalar_select %p2823, 1, 0
        %v2828 = vstv %s2827
        %vm2829 = vcmp.eq.s32.totalorder %v2828, 1
        %v2830 = vsel %vm2829, %v2810, %v2826
        %v2831 = vld [vmem:[%s236 + $0x50] sm:$0xff]
        %2833 = vrot.lane.b32.xlu0 %v2831, 2
        %v2834 = vpop.permute.xlu0 %2833
        %v2836 = vsub.f32 %v2831, %v2834
        %v2837 = vadd.f32 %v2836, 1.0
        %v2838 = vmul.f32 %v2837, 0.5
        %2840 = vrot.lane.b32.xlu0 %v2838, 126
        %v2841 = vpop.permute.xlu0 %2840
        %v2843 = vadd.f32 %v2831, %v2841
        %2845 = vrot.lane.b32.xlu0 %v2837, 2
        %v2846 = vpop.permute.xlu0 %2845
        %v2848 = vmul.f32 %v2831, %v2846
        %2850 = vrot.lane.b32.xlu0 %v2843, 4
        %v2851 = vpop.permute.xlu0 %2850
        %v2853 = vadd.f32 %v2848, %v2851
        %v2854 = vmul.f32 %v2831, 1.442695
        %v2855 = vpow.pop %v2854
        %2856 = vrot.lane.b32.xlu0 %v2837, 4
        %v2857 = vpop.permute.xlu0 %2856
        %v2859 = vmul.f32 %v2855, %v2857
        %v2860 = vmul.f32 %v2859, 0.5
        %2862 = vrot.lane.b32.xlu0 %v2860, 126
        %v2863 = vpop.permute.xlu0 %2862
        %v2865 = vsub.f32 %v2853, %v2863
        %v2866 = vmax.f32 %v2865, 0.0
        %v2867 = vmin.f32 %v271, %v2866
        %v2868 = vmin.f32 %v277, %v2866
        %v2869 = vadd.f32 %v2853, %v2863
        %v2870 = vmax.f32 %v2869, 0.0
        %v2871 = vmin.f32 %v271, %v2870
        %v2872 = vmin.f32 %v277, %v2870
        %v2873 = vsub.f32 %v2871, %v2867
        %v2874 = vadd.f32 %v2873, 1.0
        %v2875 = vsub.f32 %v2872, %v2868
        %v2876 = vadd.f32 %v2875, 1.0
        %2878 = vrot.lane.b32.xlu0 %v2876, 127
        %v2879 = vpop.permute.xlu0 %2878
        %v2881 = vmul.f32 %v2874, %v2879
        %2883 = vset.pattern.permute.xlu0 4
        %2884 = vperm.xlu0 %2883, %v2867
        %v2885 = vpop.permute.xlu0 %2884
        %v2887 = vmax.f32 %v2885, %v352
        %2889 = vset.pattern.permute.xlu0 5
        %2890 = vperm.xlu0 %2889, %v2868
        %v2891 = vpop.permute.xlu0 %2890
        %v2893 = vmax.f32 %v2891, %v359
        %2895 = vset.pattern.permute.xlu0 4
        %2896 = vperm.xlu0 %2895, %v2871
        %v2897 = vpop.permute.xlu0 %2896
        %v2899 = vmin.f32 %v2897, %v366
        %2901 = vset.pattern.permute.xlu0 5
        %2902 = vperm.xlu0 %2901, %v2872
        %v2903 = vpop.permute.xlu0 %2902
        %v2905 = vmin.f32 %v2903, %v373
        %v2906 = vsub.f32 %v2899, %v2887
        %v2907 = vadd.f32 %v2906, 1.0
        %v2908 = vmax.f32 %v2907, 0.0
        %v2909 = vsub.f32 %v2905, %v2893
        %v2910 = vadd.f32 %v2909, 1.0
        %v2911 = vmax.f32 %v2910, 0.0
        %v2912 = vmul.f32 %v2908, %v2911
        %2914 = vset.pattern.permute.xlu0 4
        %2915 = vperm.xlu0 %2914, %v2881
        %v2916 = vpop.permute.xlu0 %2915
        %v2918 = vadd.f32 %v2916, %v387
        %v2919 = vsub.f32 %v2918, %v2912
        %v2920 = vadd.s32 %v391, 80
        %vm2921 = vcmp.gt.s32.totalorder %v295, %v2920
        %v2922 = vmul.f32 %v2919, 0.7
        %vm2923 = vcmp.gt.f32.partialorder %v2912, %v2922
        %vm2924 = vmand %vm2921, %vm2923
        %v2925 = vsel %vm2924, 1.0, 0.0
        %vm2926 = vcmp.eq.s32.totalorder %v295, 80
        %v2927 = vsel %vm2926, %v2830, 0.0
        %v2928 = vsel %vm405, %v2927, -inf
        %2929 = vmax.xlane.f32.xlu0 %v2928
        %v2930 = vpop.xlane.xlu0 %2929
        %v2931 = vrot.slane %v2930, 4
        %v2932 = vmax.f32 %v2930, %v2931
        %v2933 = vrot.slane %v2932, 2
        %v2934 = vmax.f32 %v2932, %v2933
        %v2935 = vrot.slane %v2934, 1
        %v2936 = vmax.f32 %v2934, %v2935
        %s2937 = vtos %v2936
        %p2938 = scmp.gt.f32.partialorder %s2937, 0.0
        %v2939 = vmax.f32 %v2830, %v2925
        %s2940 = scalar_select %p2938, 1, 0
        %v2941 = vstv %s2940
        %vm2942 = vcmp.eq.s32.totalorder %v2941, 1
        %v2943 = vsel %vm2942, %v2830, %v2939
        %vm2944 = vcmp.eq.s32.totalorder %v295, 81
        %v2945 = vsel %vm2944, %v2943, 0.0
        %v2946 = vsel %vm405, %v2945, -inf
        %2947 = vmax.xlane.f32.xlu0 %v2946
        %v2948 = vpop.xlane.xlu0 %2947
        %v2949 = vrot.slane %v2948, 4
        %v2950 = vmax.f32 %v2948, %v2949
        %v2951 = vrot.slane %v2950, 2
        %v2952 = vmax.f32 %v2950, %v2951
        %v2953 = vrot.slane %v2952, 1
        %v2954 = vmax.f32 %v2952, %v2953
        %s2955 = vtos %v2954
        %p2956 = scmp.gt.f32.partialorder %s2955, 0.0
        %v2958 = vrot.slane %v2925, 1
        %v2960 = vmax.f32 %v2943, %v2958
        %s2961 = scalar_select %p2956, 1, 0
        %v2962 = vstv %s2961
        %vm2963 = vcmp.eq.s32.totalorder %v2962, 1
        %v2964 = vsel %vm2963, %v2943, %v2960
        %vm2965 = vcmp.eq.s32.totalorder %v295, 82
        %v2966 = vsel %vm2965, %v2964, 0.0
        %v2967 = vsel %vm405, %v2966, -inf
        %2968 = vmax.xlane.f32.xlu0 %v2967
        %v2969 = vpop.xlane.xlu0 %2968
        %v2970 = vrot.slane %v2969, 4
        %v2971 = vmax.f32 %v2969, %v2970
        %v2972 = vrot.slane %v2971, 2
        %v2973 = vmax.f32 %v2971, %v2972
        %v2974 = vrot.slane %v2973, 1
        %v2975 = vmax.f32 %v2973, %v2974
        %s2976 = vtos %v2975
        %p2977 = scmp.gt.f32.partialorder %s2976, 0.0
        %v2978 = vrot.slane %v2925, 2
        %v2980 = vmax.f32 %v2964, %v2978
        %s2981 = scalar_select %p2977, 1, 0
        %v2982 = vstv %s2981
        %vm2983 = vcmp.eq.s32.totalorder %v2982, 1
        %v2984 = vsel %vm2983, %v2964, %v2980
        %vm2985 = vcmp.eq.s32.totalorder %v295, 83
        %v2986 = vsel %vm2985, %v2984, 0.0
        %v2987 = vsel %vm405, %v2986, -inf
        %2988 = vmax.xlane.f32.xlu0 %v2987
        %v2989 = vpop.xlane.xlu0 %2988
        %v2990 = vrot.slane %v2989, 4
        %v2991 = vmax.f32 %v2989, %v2990
        %v2992 = vrot.slane %v2991, 2
        %v2993 = vmax.f32 %v2991, %v2992
        %v2994 = vrot.slane %v2993, 1
        %v2995 = vmax.f32 %v2993, %v2994
        %s2996 = vtos %v2995
        %p2997 = scmp.gt.f32.partialorder %s2996, 0.0
        %v2998 = vrot.slane %v2925, 3
        %v3000 = vmax.f32 %v2984, %v2998
        %s3001 = scalar_select %p2997, 1, 0
        %v3002 = vstv %s3001
        %vm3003 = vcmp.eq.s32.totalorder %v3002, 1
        %v3004 = vsel %vm3003, %v2984, %v3000
        %vm3005 = vcmp.eq.s32.totalorder %v295, 84
        %v3006 = vsel %vm3005, %v3004, 0.0
        %v3007 = vsel %vm405, %v3006, -inf
        %3008 = vmax.xlane.f32.xlu0 %v3007
        %v3009 = vpop.xlane.xlu0 %3008
        %v3010 = vrot.slane %v3009, 4
        %v3011 = vmax.f32 %v3009, %v3010
        %v3012 = vrot.slane %v3011, 2
        %v3013 = vmax.f32 %v3011, %v3012
        %v3014 = vrot.slane %v3013, 1
        %v3015 = vmax.f32 %v3013, %v3014
        %s3016 = vtos %v3015
        %p3017 = scmp.gt.f32.partialorder %s3016, 0.0
        %v3018 = vrot.slane %v2925, 4
        %v3020 = vmax.f32 %v3004, %v3018
        %s3021 = scalar_select %p3017, 1, 0
        %v3022 = vstv %s3021
        %vm3023 = vcmp.eq.s32.totalorder %v3022, 1
        %v3024 = vsel %vm3023, %v3004, %v3020
        %vm3025 = vcmp.eq.s32.totalorder %v295, 85
        %v3026 = vsel %vm3025, %v3024, 0.0
        %v3027 = vsel %vm405, %v3026, -inf
        %3028 = vmax.xlane.f32.xlu0 %v3027
        %v3029 = vpop.xlane.xlu0 %3028
        %v3030 = vrot.slane %v3029, 4
        %v3031 = vmax.f32 %v3029, %v3030
        %v3032 = vrot.slane %v3031, 2
        %v3033 = vmax.f32 %v3031, %v3032
        %v3034 = vrot.slane %v3033, 1
        %v3035 = vmax.f32 %v3033, %v3034
        %s3036 = vtos %v3035
        %p3037 = scmp.gt.f32.partialorder %s3036, 0.0
        %v3038 = vrot.slane %v2925, 5
        %v3040 = vmax.f32 %v3024, %v3038
        %s3041 = scalar_select %p3037, 1, 0
        %v3042 = vstv %s3041
        %vm3043 = vcmp.eq.s32.totalorder %v3042, 1
        %v3044 = vsel %vm3043, %v3024, %v3040
        %vm3045 = vcmp.eq.s32.totalorder %v295, 86
        %v3046 = vsel %vm3045, %v3044, 0.0
        %v3047 = vsel %vm405, %v3046, -inf
        %3048 = vmax.xlane.f32.xlu0 %v3047
        %v3049 = vpop.xlane.xlu0 %3048
        %v3050 = vrot.slane %v3049, 4
        %v3051 = vmax.f32 %v3049, %v3050
        %v3052 = vrot.slane %v3051, 2
        %v3053 = vmax.f32 %v3051, %v3052
        %v3054 = vrot.slane %v3053, 1
        %v3055 = vmax.f32 %v3053, %v3054
        %s3056 = vtos %v3055
        %p3057 = scmp.gt.f32.partialorder %s3056, 0.0
        %v3058 = vrot.slane %v2925, 6
        %v3060 = vmax.f32 %v3044, %v3058
        %s3061 = scalar_select %p3057, 1, 0
        %v3062 = vstv %s3061
        %vm3063 = vcmp.eq.s32.totalorder %v3062, 1
        %v3064 = vsel %vm3063, %v3044, %v3060
        %vm3065 = vcmp.eq.s32.totalorder %v295, 87
        %v3066 = vsel %vm3065, %v3064, 0.0
        %v3067 = vsel %vm405, %v3066, -inf
        %3068 = vmax.xlane.f32.xlu0 %v3067
        %v3069 = vpop.xlane.xlu0 %3068
        %v3070 = vrot.slane %v3069, 4
        %v3071 = vmax.f32 %v3069, %v3070
        %v3072 = vrot.slane %v3071, 2
        %v3073 = vmax.f32 %v3071, %v3072
        %v3074 = vrot.slane %v3073, 1
        %v3075 = vmax.f32 %v3073, %v3074
        %s3076 = vtos %v3075
        %p3077 = scmp.gt.f32.partialorder %s3076, 0.0
        %v3078 = vrot.slane %v2925, 7
        %v3080 = vmax.f32 %v3064, %v3078
        %s3081 = scalar_select %p3077, 1, 0
        %v3082 = vstv %s3081
        %vm3083 = vcmp.eq.s32.totalorder %v3082, 1
        %v3084 = vsel %vm3083, %v3064, %v3080
        %v3085 = vld [vmem:[%s236 + $0x58] sm:$0xff]
        %3087 = vrot.lane.b32.xlu0 %v3085, 2
        %v3088 = vpop.permute.xlu0 %3087
        %v3090 = vsub.f32 %v3085, %v3088
        %v3091 = vadd.f32 %v3090, 1.0
        %v3092 = vmul.f32 %v3091, 0.5
        %3094 = vrot.lane.b32.xlu0 %v3092, 126
        %v3095 = vpop.permute.xlu0 %3094
        %v3097 = vadd.f32 %v3085, %v3095
        %3099 = vrot.lane.b32.xlu0 %v3091, 2
        %v3100 = vpop.permute.xlu0 %3099
        %v3102 = vmul.f32 %v3085, %v3100
        %3104 = vrot.lane.b32.xlu0 %v3097, 4
        %v3105 = vpop.permute.xlu0 %3104
        %v3107 = vadd.f32 %v3102, %v3105
        %v3108 = vmul.f32 %v3085, 1.442695
        %v3109 = vpow.pop %v3108
        %3110 = vrot.lane.b32.xlu0 %v3091, 4
        %v3111 = vpop.permute.xlu0 %3110
        %v3113 = vmul.f32 %v3109, %v3111
        %v3114 = vmul.f32 %v3113, 0.5
        %3116 = vrot.lane.b32.xlu0 %v3114, 126
        %v3117 = vpop.permute.xlu0 %3116
        %v3119 = vsub.f32 %v3107, %v3117
        %v3120 = vmax.f32 %v3119, 0.0
        %v3121 = vmin.f32 %v271, %v3120
        %v3122 = vmin.f32 %v277, %v3120
        %v3123 = vadd.f32 %v3107, %v3117
        %v3124 = vmax.f32 %v3123, 0.0
        %v3125 = vmin.f32 %v271, %v3124
        %v3126 = vmin.f32 %v277, %v3124
        %v3127 = vsub.f32 %v3125, %v3121
        %v3128 = vadd.f32 %v3127, 1.0
        %v3129 = vsub.f32 %v3126, %v3122
        %v3130 = vadd.f32 %v3129, 1.0
        %3132 = vrot.lane.b32.xlu0 %v3130, 127
        %v3133 = vpop.permute.xlu0 %3132
        %v3135 = vmul.f32 %v3128, %v3133
        %3137 = vset.pattern.permute.xlu0 4
        %3138 = vperm.xlu0 %3137, %v3121
        %v3139 = vpop.permute.xlu0 %3138
        %v3141 = vmax.f32 %v3139, %v352
        %3143 = vset.pattern.permute.xlu0 5
        %3144 = vperm.xlu0 %3143, %v3122
        %v3145 = vpop.permute.xlu0 %3144
        %v3147 = vmax.f32 %v3145, %v359
        %3149 = vset.pattern.permute.xlu0 4
        %3150 = vperm.xlu0 %3149, %v3125
        %v3151 = vpop.permute.xlu0 %3150
        %v3153 = vmin.f32 %v3151, %v366
        %3155 = vset.pattern.permute.xlu0 5
        %3156 = vperm.xlu0 %3155, %v3126
        %v3157 = vpop.permute.xlu0 %3156
        %v3159 = vmin.f32 %v3157, %v373
        %v3160 = vsub.f32 %v3153, %v3141
        %v3161 = vadd.f32 %v3160, 1.0
        %v3162 = vmax.f32 %v3161, 0.0
        %v3163 = vsub.f32 %v3159, %v3147
        %v3164 = vadd.f32 %v3163, 1.0
        %v3165 = vmax.f32 %v3164, 0.0
        %v3166 = vmul.f32 %v3162, %v3165
        %3168 = vset.pattern.permute.xlu0 4
        %3169 = vperm.xlu0 %3168, %v3135
        %v3170 = vpop.permute.xlu0 %3169
        %v3172 = vadd.f32 %v3170, %v387
        %v3173 = vsub.f32 %v3172, %v3166
        %v3174 = vadd.s32 %v391, 88
        %vm3175 = vcmp.gt.s32.totalorder %v295, %v3174
        %v3176 = vmul.f32 %v3173, 0.7
        %vm3177 = vcmp.gt.f32.partialorder %v3166, %v3176
        %vm3178 = vmand %vm3175, %vm3177
        %v3179 = vsel %vm3178, 1.0, 0.0
        %vm3180 = vcmp.eq.s32.totalorder %v295, 88
        %v3181 = vsel %vm3180, %v3084, 0.0
        %v3182 = vsel %vm405, %v3181, -inf
        %3183 = vmax.xlane.f32.xlu0 %v3182
        %v3184 = vpop.xlane.xlu0 %3183
        %v3185 = vrot.slane %v3184, 4
        %v3186 = vmax.f32 %v3184, %v3185
        %v3187 = vrot.slane %v3186, 2
        %v3188 = vmax.f32 %v3186, %v3187
        %v3189 = vrot.slane %v3188, 1
        %v3190 = vmax.f32 %v3188, %v3189
        %s3191 = vtos %v3190
        %p3192 = scmp.gt.f32.partialorder %s3191, 0.0
        %v3193 = vmax.f32 %v3084, %v3179
        %s3194 = scalar_select %p3192, 1, 0
        %v3195 = vstv %s3194
        %vm3196 = vcmp.eq.s32.totalorder %v3195, 1
        %v3197 = vsel %vm3196, %v3084, %v3193
        %vm3198 = vcmp.eq.s32.totalorder %v295, 89
        %v3199 = vsel %vm3198, %v3197, 0.0
        %v3200 = vsel %vm405, %v3199, -inf
        %3201 = vmax.xlane.f32.xlu0 %v3200
        %v3202 = vpop.xlane.xlu0 %3201
        %v3203 = vrot.slane %v3202, 4
        %v3204 = vmax.f32 %v3202, %v3203
        %v3205 = vrot.slane %v3204, 2
        %v3206 = vmax.f32 %v3204, %v3205
        %v3207 = vrot.slane %v3206, 1
        %v3208 = vmax.f32 %v3206, %v3207
        %s3209 = vtos %v3208
        %p3210 = scmp.gt.f32.partialorder %s3209, 0.0
        %v3212 = vrot.slane %v3179, 1
        %v3214 = vmax.f32 %v3197, %v3212
        %s3215 = scalar_select %p3210, 1, 0
        %v3216 = vstv %s3215
        %vm3217 = vcmp.eq.s32.totalorder %v3216, 1
        %v3218 = vsel %vm3217, %v3197, %v3214
        %vm3219 = vcmp.eq.s32.totalorder %v295, 90
        %v3220 = vsel %vm3219, %v3218, 0.0
        %v3221 = vsel %vm405, %v3220, -inf
        %3222 = vmax.xlane.f32.xlu0 %v3221
        %v3223 = vpop.xlane.xlu0 %3222
        %v3224 = vrot.slane %v3223, 4
        %v3225 = vmax.f32 %v3223, %v3224
        %v3226 = vrot.slane %v3225, 2
        %v3227 = vmax.f32 %v3225, %v3226
        %v3228 = vrot.slane %v3227, 1
        %v3229 = vmax.f32 %v3227, %v3228
        %s3230 = vtos %v3229
        %p3231 = scmp.gt.f32.partialorder %s3230, 0.0
        %v3232 = vrot.slane %v3179, 2
        %v3234 = vmax.f32 %v3218, %v3232
        %s3235 = scalar_select %p3231, 1, 0
        %v3236 = vstv %s3235
        %vm3237 = vcmp.eq.s32.totalorder %v3236, 1
        %v3238 = vsel %vm3237, %v3218, %v3234
        %vm3239 = vcmp.eq.s32.totalorder %v295, 91
        %v3240 = vsel %vm3239, %v3238, 0.0
        %v3241 = vsel %vm405, %v3240, -inf
        %3242 = vmax.xlane.f32.xlu0 %v3241
        %v3243 = vpop.xlane.xlu0 %3242
        %v3244 = vrot.slane %v3243, 4
        %v3245 = vmax.f32 %v3243, %v3244
        %v3246 = vrot.slane %v3245, 2
        %v3247 = vmax.f32 %v3245, %v3246
        %v3248 = vrot.slane %v3247, 1
        %v3249 = vmax.f32 %v3247, %v3248
        %s3250 = vtos %v3249
        %p3251 = scmp.gt.f32.partialorder %s3250, 0.0
        %v3252 = vrot.slane %v3179, 3
        %v3254 = vmax.f32 %v3238, %v3252
        %s3255 = scalar_select %p3251, 1, 0
        %v3256 = vstv %s3255
        %vm3257 = vcmp.eq.s32.totalorder %v3256, 1
        %v3258 = vsel %vm3257, %v3238, %v3254
        %vm3259 = vcmp.eq.s32.totalorder %v295, 92
        %v3260 = vsel %vm3259, %v3258, 0.0
        %v3261 = vsel %vm405, %v3260, -inf
        %3262 = vmax.xlane.f32.xlu0 %v3261
        %v3263 = vpop.xlane.xlu0 %3262
        %v3264 = vrot.slane %v3263, 4
        %v3265 = vmax.f32 %v3263, %v3264
        %v3266 = vrot.slane %v3265, 2
        %v3267 = vmax.f32 %v3265, %v3266
        %v3268 = vrot.slane %v3267, 1
        %v3269 = vmax.f32 %v3267, %v3268
        %s3270 = vtos %v3269
        %p3271 = scmp.gt.f32.partialorder %s3270, 0.0
        %v3272 = vrot.slane %v3179, 4
        %v3274 = vmax.f32 %v3258, %v3272
        %s3275 = scalar_select %p3271, 1, 0
        %v3276 = vstv %s3275
        %vm3277 = vcmp.eq.s32.totalorder %v3276, 1
        %v3278 = vsel %vm3277, %v3258, %v3274
        %vm3279 = vcmp.eq.s32.totalorder %v295, 93
        %v3280 = vsel %vm3279, %v3278, 0.0
        %v3281 = vsel %vm405, %v3280, -inf
        %3282 = vmax.xlane.f32.xlu0 %v3281
        %v3283 = vpop.xlane.xlu0 %3282
        %v3284 = vrot.slane %v3283, 4
        %v3285 = vmax.f32 %v3283, %v3284
        %v3286 = vrot.slane %v3285, 2
        %v3287 = vmax.f32 %v3285, %v3286
        %v3288 = vrot.slane %v3287, 1
        %v3289 = vmax.f32 %v3287, %v3288
        %s3290 = vtos %v3289
        %p3291 = scmp.gt.f32.partialorder %s3290, 0.0
        %v3292 = vrot.slane %v3179, 5
        %v3294 = vmax.f32 %v3278, %v3292
        %s3295 = scalar_select %p3291, 1, 0
        %v3296 = vstv %s3295
        %vm3297 = vcmp.eq.s32.totalorder %v3296, 1
        %v3298 = vsel %vm3297, %v3278, %v3294
        %vm3299 = vcmp.eq.s32.totalorder %v295, 94
        %v3300 = vsel %vm3299, %v3298, 0.0
        %v3301 = vsel %vm405, %v3300, -inf
        %3302 = vmax.xlane.f32.xlu0 %v3301
        %v3303 = vpop.xlane.xlu0 %3302
        %v3304 = vrot.slane %v3303, 4
        %v3305 = vmax.f32 %v3303, %v3304
        %v3306 = vrot.slane %v3305, 2
        %v3307 = vmax.f32 %v3305, %v3306
        %v3308 = vrot.slane %v3307, 1
        %v3309 = vmax.f32 %v3307, %v3308
        %s3310 = vtos %v3309
        %p3311 = scmp.gt.f32.partialorder %s3310, 0.0
        %v3312 = vrot.slane %v3179, 6
        %v3314 = vmax.f32 %v3298, %v3312
        %s3315 = scalar_select %p3311, 1, 0
        %v3316 = vstv %s3315
        %vm3317 = vcmp.eq.s32.totalorder %v3316, 1
        %v3318 = vsel %vm3317, %v3298, %v3314
        %vm3319 = vcmp.eq.s32.totalorder %v295, 95
        %v3320 = vsel %vm3319, %v3318, 0.0
        %v3321 = vsel %vm405, %v3320, -inf
        %3322 = vmax.xlane.f32.xlu0 %v3321
        %v3323 = vpop.xlane.xlu0 %3322
        %v3324 = vrot.slane %v3323, 4
        %v3325 = vmax.f32 %v3323, %v3324
        %v3326 = vrot.slane %v3325, 2
        %v3327 = vmax.f32 %v3325, %v3326
        %v3328 = vrot.slane %v3327, 1
        %v3329 = vmax.f32 %v3327, %v3328
        %s3330 = vtos %v3329
        %p3331 = scmp.gt.f32.partialorder %s3330, 0.0
        %v3332 = vrot.slane %v3179, 7
        %v3334 = vmax.f32 %v3318, %v3332
        %s3335 = scalar_select %p3331, 1, 0
        %v3336 = vstv %s3335
        %vm3337 = vcmp.eq.s32.totalorder %v3336, 1
        %v3338 = vsel %vm3337, %v3318, %v3334
        %v3339 = vld [vmem:[%s236 + $0x60] sm:$0xff]
        %3341 = vrot.lane.b32.xlu0 %v3339, 2
        %v3342 = vpop.permute.xlu0 %3341
        %v3344 = vsub.f32 %v3339, %v3342
        %v3345 = vadd.f32 %v3344, 1.0
        %v3346 = vmul.f32 %v3345, 0.5
        %3348 = vrot.lane.b32.xlu0 %v3346, 126
        %v3349 = vpop.permute.xlu0 %3348
        %v3351 = vadd.f32 %v3339, %v3349
        %3353 = vrot.lane.b32.xlu0 %v3345, 2
        %v3354 = vpop.permute.xlu0 %3353
        %v3356 = vmul.f32 %v3339, %v3354
        %3358 = vrot.lane.b32.xlu0 %v3351, 4
        %v3359 = vpop.permute.xlu0 %3358
        %v3361 = vadd.f32 %v3356, %v3359
        %v3362 = vmul.f32 %v3339, 1.442695
        %v3363 = vpow.pop %v3362
        %3364 = vrot.lane.b32.xlu0 %v3345, 4
        %v3365 = vpop.permute.xlu0 %3364
        %v3367 = vmul.f32 %v3363, %v3365
        %v3368 = vmul.f32 %v3367, 0.5
        %3370 = vrot.lane.b32.xlu0 %v3368, 126
        %v3371 = vpop.permute.xlu0 %3370
        %v3373 = vsub.f32 %v3361, %v3371
        %v3374 = vmax.f32 %v3373, 0.0
        %v3375 = vmin.f32 %v271, %v3374
        %v3376 = vmin.f32 %v277, %v3374
        %v3377 = vadd.f32 %v3361, %v3371
        %v3378 = vmax.f32 %v3377, 0.0
        %v3379 = vmin.f32 %v271, %v3378
        %v3380 = vmin.f32 %v277, %v3378
        %v3381 = vsub.f32 %v3379, %v3375
        %v3382 = vadd.f32 %v3381, 1.0
        %v3383 = vsub.f32 %v3380, %v3376
        %v3384 = vadd.f32 %v3383, 1.0
        %3386 = vrot.lane.b32.xlu0 %v3384, 127
        %v3387 = vpop.permute.xlu0 %3386
        %v3389 = vmul.f32 %v3382, %v3387
        %3391 = vset.pattern.permute.xlu0 4
        %3392 = vperm.xlu0 %3391, %v3375
        %v3393 = vpop.permute.xlu0 %3392
        %v3395 = vmax.f32 %v3393, %v352
        %3397 = vset.pattern.permute.xlu0 5
        %3398 = vperm.xlu0 %3397, %v3376
        %v3399 = vpop.permute.xlu0 %3398
        %v3401 = vmax.f32 %v3399, %v359
        %3403 = vset.pattern.permute.xlu0 4
        %3404 = vperm.xlu0 %3403, %v3379
        %v3405 = vpop.permute.xlu0 %3404
        %v3407 = vmin.f32 %v3405, %v366
        %3409 = vset.pattern.permute.xlu0 5
        %3410 = vperm.xlu0 %3409, %v3380
        %v3411 = vpop.permute.xlu0 %3410
        %v3413 = vmin.f32 %v3411, %v373
        %v3414 = vsub.f32 %v3407, %v3395
        %v3415 = vadd.f32 %v3414, 1.0
        %v3416 = vmax.f32 %v3415, 0.0
        %v3417 = vsub.f32 %v3413, %v3401
        %v3418 = vadd.f32 %v3417, 1.0
        %v3419 = vmax.f32 %v3418, 0.0
        %v3420 = vmul.f32 %v3416, %v3419
        %3422 = vset.pattern.permute.xlu0 4
        %3423 = vperm.xlu0 %3422, %v3389
        %v3424 = vpop.permute.xlu0 %3423
        %v3426 = vadd.f32 %v3424, %v387
        %v3427 = vsub.f32 %v3426, %v3420
        %v3428 = vadd.s32 %v391, 96
        %vm3429 = vcmp.gt.s32.totalorder %v295, %v3428
        %v3430 = vmul.f32 %v3427, 0.7
        %vm3431 = vcmp.gt.f32.partialorder %v3420, %v3430
        %vm3432 = vmand %vm3429, %vm3431
        %v3433 = vsel %vm3432, 1.0, 0.0
        %vm3434 = vcmp.eq.s32.totalorder %v295, 96
        %v3435 = vsel %vm3434, %v3338, 0.0
        %v3436 = vsel %vm405, %v3435, -inf
        %3437 = vmax.xlane.f32.xlu0 %v3436
        %v3438 = vpop.xlane.xlu0 %3437
        %v3439 = vrot.slane %v3438, 4
        %v3440 = vmax.f32 %v3438, %v3439
        %v3441 = vrot.slane %v3440, 2
        %v3442 = vmax.f32 %v3440, %v3441
        %v3443 = vrot.slane %v3442, 1
        %v3444 = vmax.f32 %v3442, %v3443
        %s3445 = vtos %v3444
        %p3446 = scmp.gt.f32.partialorder %s3445, 0.0
        %v3447 = vmax.f32 %v3338, %v3433
        %s3448 = scalar_select %p3446, 1, 0
        %v3449 = vstv %s3448
        %vm3450 = vcmp.eq.s32.totalorder %v3449, 1
        %v3451 = vsel %vm3450, %v3338, %v3447
        %vm3452 = vcmp.eq.s32.totalorder %v295, 97
        %v3453 = vsel %vm3452, %v3451, 0.0
        %v3454 = vsel %vm405, %v3453, -inf
        %3455 = vmax.xlane.f32.xlu0 %v3454
        %v3456 = vpop.xlane.xlu0 %3455
        %v3457 = vrot.slane %v3456, 4
        %v3458 = vmax.f32 %v3456, %v3457
        %v3459 = vrot.slane %v3458, 2
        %v3460 = vmax.f32 %v3458, %v3459
        %v3461 = vrot.slane %v3460, 1
        %v3462 = vmax.f32 %v3460, %v3461
        %s3463 = vtos %v3462
        %p3464 = scmp.gt.f32.partialorder %s3463, 0.0
        %v3466 = vrot.slane %v3433, 1
        %v3468 = vmax.f32 %v3451, %v3466
        %s3469 = scalar_select %p3464, 1, 0
        %v3470 = vstv %s3469
        %vm3471 = vcmp.eq.s32.totalorder %v3470, 1
        %v3472 = vsel %vm3471, %v3451, %v3468
        %vm3473 = vcmp.eq.s32.totalorder %v295, 98
        %v3474 = vsel %vm3473, %v3472, 0.0
        %v3475 = vsel %vm405, %v3474, -inf
        %3476 = vmax.xlane.f32.xlu0 %v3475
        %v3477 = vpop.xlane.xlu0 %3476
        %v3478 = vrot.slane %v3477, 4
        %v3479 = vmax.f32 %v3477, %v3478
        %v3480 = vrot.slane %v3479, 2
        %v3481 = vmax.f32 %v3479, %v3480
        %v3482 = vrot.slane %v3481, 1
        %v3483 = vmax.f32 %v3481, %v3482
        %s3484 = vtos %v3483
        %p3485 = scmp.gt.f32.partialorder %s3484, 0.0
        %v3486 = vrot.slane %v3433, 2
        %v3488 = vmax.f32 %v3472, %v3486
        %s3489 = scalar_select %p3485, 1, 0
        %v3490 = vstv %s3489
        %vm3491 = vcmp.eq.s32.totalorder %v3490, 1
        %v3492 = vsel %vm3491, %v3472, %v3488
        %vm3493 = vcmp.eq.s32.totalorder %v295, 99
        %v3494 = vsel %vm3493, %v3492, 0.0
        %v3495 = vsel %vm405, %v3494, -inf
        %3496 = vmax.xlane.f32.xlu0 %v3495
        %v3497 = vpop.xlane.xlu0 %3496
        %v3498 = vrot.slane %v3497, 4
        %v3499 = vmax.f32 %v3497, %v3498
        %v3500 = vrot.slane %v3499, 2
        %v3501 = vmax.f32 %v3499, %v3500
        %v3502 = vrot.slane %v3501, 1
        %v3503 = vmax.f32 %v3501, %v3502
        %s3504 = vtos %v3503
        %p3505 = scmp.gt.f32.partialorder %s3504, 0.0
        %v3506 = vrot.slane %v3433, 3
        %v3508 = vmax.f32 %v3492, %v3506
        %s3509 = scalar_select %p3505, 1, 0
        %v3510 = vstv %s3509
        %vm3511 = vcmp.eq.s32.totalorder %v3510, 1
        %v3512 = vsel %vm3511, %v3492, %v3508
        %vm3513 = vcmp.eq.s32.totalorder %v295, 100
        %v3514 = vsel %vm3513, %v3512, 0.0
        %v3515 = vsel %vm405, %v3514, -inf
        %3516 = vmax.xlane.f32.xlu0 %v3515
        %v3517 = vpop.xlane.xlu0 %3516
        %v3518 = vrot.slane %v3517, 4
        %v3519 = vmax.f32 %v3517, %v3518
        %v3520 = vrot.slane %v3519, 2
        %v3521 = vmax.f32 %v3519, %v3520
        %v3522 = vrot.slane %v3521, 1
        %v3523 = vmax.f32 %v3521, %v3522
        %s3524 = vtos %v3523
        %p3525 = scmp.gt.f32.partialorder %s3524, 0.0
        %v3526 = vrot.slane %v3433, 4
        %v3528 = vmax.f32 %v3512, %v3526
        %s3529 = scalar_select %p3525, 1, 0
        %v3530 = vstv %s3529
        %vm3531 = vcmp.eq.s32.totalorder %v3530, 1
        %v3532 = vsel %vm3531, %v3512, %v3528
        %vm3533 = vcmp.eq.s32.totalorder %v295, 101
        %v3534 = vsel %vm3533, %v3532, 0.0
        %v3535 = vsel %vm405, %v3534, -inf
        %3536 = vmax.xlane.f32.xlu0 %v3535
        %v3537 = vpop.xlane.xlu0 %3536
        %v3538 = vrot.slane %v3537, 4
        %v3539 = vmax.f32 %v3537, %v3538
        %v3540 = vrot.slane %v3539, 2
        %v3541 = vmax.f32 %v3539, %v3540
        %v3542 = vrot.slane %v3541, 1
        %v3543 = vmax.f32 %v3541, %v3542
        %s3544 = vtos %v3543
        %p3545 = scmp.gt.f32.partialorder %s3544, 0.0
        %v3546 = vrot.slane %v3433, 5
        %v3548 = vmax.f32 %v3532, %v3546
        %s3549 = scalar_select %p3545, 1, 0
        %v3550 = vstv %s3549
        %vm3551 = vcmp.eq.s32.totalorder %v3550, 1
        %v3552 = vsel %vm3551, %v3532, %v3548
        %vm3553 = vcmp.eq.s32.totalorder %v295, 102
        %v3554 = vsel %vm3553, %v3552, 0.0
        %v3555 = vsel %vm405, %v3554, -inf
        %3556 = vmax.xlane.f32.xlu0 %v3555
        %v3557 = vpop.xlane.xlu0 %3556
        %v3558 = vrot.slane %v3557, 4
        %v3559 = vmax.f32 %v3557, %v3558
        %v3560 = vrot.slane %v3559, 2
        %v3561 = vmax.f32 %v3559, %v3560
        %v3562 = vrot.slane %v3561, 1
        %v3563 = vmax.f32 %v3561, %v3562
        %s3564 = vtos %v3563
        %p3565 = scmp.gt.f32.partialorder %s3564, 0.0
        %v3566 = vrot.slane %v3433, 6
        %v3568 = vmax.f32 %v3552, %v3566
        %s3569 = scalar_select %p3565, 1, 0
        %v3570 = vstv %s3569
        %vm3571 = vcmp.eq.s32.totalorder %v3570, 1
        %v3572 = vsel %vm3571, %v3552, %v3568
        %vm3573 = vcmp.eq.s32.totalorder %v295, 103
        %v3574 = vsel %vm3573, %v3572, 0.0
        %v3575 = vsel %vm405, %v3574, -inf
        %3576 = vmax.xlane.f32.xlu0 %v3575
        %v3577 = vpop.xlane.xlu0 %3576
        %v3578 = vrot.slane %v3577, 4
        %v3579 = vmax.f32 %v3577, %v3578
        %v3580 = vrot.slane %v3579, 2
        %v3581 = vmax.f32 %v3579, %v3580
        %v3582 = vrot.slane %v3581, 1
        %v3583 = vmax.f32 %v3581, %v3582
        %s3584 = vtos %v3583
        %p3585 = scmp.gt.f32.partialorder %s3584, 0.0
        %v3586 = vrot.slane %v3433, 7
        %v3588 = vmax.f32 %v3572, %v3586
        %s3589 = scalar_select %p3585, 1, 0
        %v3590 = vstv %s3589
        %vm3591 = vcmp.eq.s32.totalorder %v3590, 1
        %v3592 = vsel %vm3591, %v3572, %v3588
        %v3593 = vld [vmem:[%s236 + $0x68] sm:$0xff]
        %3595 = vrot.lane.b32.xlu0 %v3593, 2
        %v3596 = vpop.permute.xlu0 %3595
        %v3598 = vsub.f32 %v3593, %v3596
        %v3599 = vadd.f32 %v3598, 1.0
        %v3600 = vmul.f32 %v3599, 0.5
        %3602 = vrot.lane.b32.xlu0 %v3600, 126
        %v3603 = vpop.permute.xlu0 %3602
        %v3605 = vadd.f32 %v3593, %v3603
        %3607 = vrot.lane.b32.xlu0 %v3599, 2
        %v3608 = vpop.permute.xlu0 %3607
        %v3610 = vmul.f32 %v3593, %v3608
        %3612 = vrot.lane.b32.xlu0 %v3605, 4
        %v3613 = vpop.permute.xlu0 %3612
        %v3615 = vadd.f32 %v3610, %v3613
        %v3616 = vmul.f32 %v3593, 1.442695
        %v3617 = vpow.pop %v3616
        %3618 = vrot.lane.b32.xlu0 %v3599, 4
        %v3619 = vpop.permute.xlu0 %3618
        %v3621 = vmul.f32 %v3617, %v3619
        %v3622 = vmul.f32 %v3621, 0.5
        %3624 = vrot.lane.b32.xlu0 %v3622, 126
        %v3625 = vpop.permute.xlu0 %3624
        %v3627 = vsub.f32 %v3615, %v3625
        %v3628 = vmax.f32 %v3627, 0.0
        %v3629 = vmin.f32 %v271, %v3628
        %v3630 = vmin.f32 %v277, %v3628
        %v3631 = vadd.f32 %v3615, %v3625
        %v3632 = vmax.f32 %v3631, 0.0
        %v3633 = vmin.f32 %v271, %v3632
        %v3634 = vmin.f32 %v277, %v3632
        %v3635 = vsub.f32 %v3633, %v3629
        %v3636 = vadd.f32 %v3635, 1.0
        %v3637 = vsub.f32 %v3634, %v3630
        %v3638 = vadd.f32 %v3637, 1.0
        %3640 = vrot.lane.b32.xlu0 %v3638, 127
        %v3641 = vpop.permute.xlu0 %3640
        %v3643 = vmul.f32 %v3636, %v3641
        %3645 = vset.pattern.permute.xlu0 4
        %3646 = vperm.xlu0 %3645, %v3629
        %v3647 = vpop.permute.xlu0 %3646
        %v3649 = vmax.f32 %v3647, %v352
        %3651 = vset.pattern.permute.xlu0 5
        %3652 = vperm.xlu0 %3651, %v3630
        %v3653 = vpop.permute.xlu0 %3652
        %v3655 = vmax.f32 %v3653, %v359
        %3657 = vset.pattern.permute.xlu0 4
        %3658 = vperm.xlu0 %3657, %v3633
        %v3659 = vpop.permute.xlu0 %3658
        %v3661 = vmin.f32 %v3659, %v366
        %3663 = vset.pattern.permute.xlu0 5
        %3664 = vperm.xlu0 %3663, %v3634
        %v3665 = vpop.permute.xlu0 %3664
        %v3667 = vmin.f32 %v3665, %v373
        %v3668 = vsub.f32 %v3661, %v3649
        %v3669 = vadd.f32 %v3668, 1.0
        %v3670 = vmax.f32 %v3669, 0.0
        %v3671 = vsub.f32 %v3667, %v3655
        %v3672 = vadd.f32 %v3671, 1.0
        %v3673 = vmax.f32 %v3672, 0.0
        %v3674 = vmul.f32 %v3670, %v3673
        %3676 = vset.pattern.permute.xlu0 4
        %3677 = vperm.xlu0 %3676, %v3643
        %v3678 = vpop.permute.xlu0 %3677
        %v3680 = vadd.f32 %v3678, %v387
        %v3681 = vsub.f32 %v3680, %v3674
        %v3682 = vadd.s32 %v391, 104
        %vm3683 = vcmp.gt.s32.totalorder %v295, %v3682
        %v3684 = vmul.f32 %v3681, 0.7
        %vm3685 = vcmp.gt.f32.partialorder %v3674, %v3684
        %vm3686 = vmand %vm3683, %vm3685
        %v3687 = vsel %vm3686, 1.0, 0.0
        %vm3688 = vcmp.eq.s32.totalorder %v295, 104
        %v3689 = vsel %vm3688, %v3592, 0.0
        %v3690 = vsel %vm405, %v3689, -inf
        %3691 = vmax.xlane.f32.xlu0 %v3690
        %v3692 = vpop.xlane.xlu0 %3691
        %v3693 = vrot.slane %v3692, 4
        %v3694 = vmax.f32 %v3692, %v3693
        %v3695 = vrot.slane %v3694, 2
        %v3696 = vmax.f32 %v3694, %v3695
        %v3697 = vrot.slane %v3696, 1
        %v3698 = vmax.f32 %v3696, %v3697
        %s3699 = vtos %v3698
        %p3700 = scmp.gt.f32.partialorder %s3699, 0.0
        %v3701 = vmax.f32 %v3592, %v3687
        %s3702 = scalar_select %p3700, 1, 0
        %v3703 = vstv %s3702
        %vm3704 = vcmp.eq.s32.totalorder %v3703, 1
        %v3705 = vsel %vm3704, %v3592, %v3701
        %vm3706 = vcmp.eq.s32.totalorder %v295, 105
        %v3707 = vsel %vm3706, %v3705, 0.0
        %v3708 = vsel %vm405, %v3707, -inf
        %3709 = vmax.xlane.f32.xlu0 %v3708
        %v3710 = vpop.xlane.xlu0 %3709
        %v3711 = vrot.slane %v3710, 4
        %v3712 = vmax.f32 %v3710, %v3711
        %v3713 = vrot.slane %v3712, 2
        %v3714 = vmax.f32 %v3712, %v3713
        %v3715 = vrot.slane %v3714, 1
        %v3716 = vmax.f32 %v3714, %v3715
        %s3717 = vtos %v3716
        %p3718 = scmp.gt.f32.partialorder %s3717, 0.0
        %v3720 = vrot.slane %v3687, 1
        %v3722 = vmax.f32 %v3705, %v3720
        %s3723 = scalar_select %p3718, 1, 0
        %v3724 = vstv %s3723
        %vm3725 = vcmp.eq.s32.totalorder %v3724, 1
        %v3726 = vsel %vm3725, %v3705, %v3722
        %vm3727 = vcmp.eq.s32.totalorder %v295, 106
        %v3728 = vsel %vm3727, %v3726, 0.0
        %v3729 = vsel %vm405, %v3728, -inf
        %3730 = vmax.xlane.f32.xlu0 %v3729
        %v3731 = vpop.xlane.xlu0 %3730
        %v3732 = vrot.slane %v3731, 4
        %v3733 = vmax.f32 %v3731, %v3732
        %v3734 = vrot.slane %v3733, 2
        %v3735 = vmax.f32 %v3733, %v3734
        %v3736 = vrot.slane %v3735, 1
        %v3737 = vmax.f32 %v3735, %v3736
        %s3738 = vtos %v3737
        %p3739 = scmp.gt.f32.partialorder %s3738, 0.0
        %v3740 = vrot.slane %v3687, 2
        %v3742 = vmax.f32 %v3726, %v3740
        %s3743 = scalar_select %p3739, 1, 0
        %v3744 = vstv %s3743
        %vm3745 = vcmp.eq.s32.totalorder %v3744, 1
        %v3746 = vsel %vm3745, %v3726, %v3742
        %vm3747 = vcmp.eq.s32.totalorder %v295, 107
        %v3748 = vsel %vm3747, %v3746, 0.0
        %v3749 = vsel %vm405, %v3748, -inf
        %3750 = vmax.xlane.f32.xlu0 %v3749
        %v3751 = vpop.xlane.xlu0 %3750
        %v3752 = vrot.slane %v3751, 4
        %v3753 = vmax.f32 %v3751, %v3752
        %v3754 = vrot.slane %v3753, 2
        %v3755 = vmax.f32 %v3753, %v3754
        %v3756 = vrot.slane %v3755, 1
        %v3757 = vmax.f32 %v3755, %v3756
        %s3758 = vtos %v3757
        %p3759 = scmp.gt.f32.partialorder %s3758, 0.0
        %v3760 = vrot.slane %v3687, 3
        %v3762 = vmax.f32 %v3746, %v3760
        %s3763 = scalar_select %p3759, 1, 0
        %v3764 = vstv %s3763
        %vm3765 = vcmp.eq.s32.totalorder %v3764, 1
        %v3766 = vsel %vm3765, %v3746, %v3762
        %vm3767 = vcmp.eq.s32.totalorder %v295, 108
        %v3768 = vsel %vm3767, %v3766, 0.0
        %v3769 = vsel %vm405, %v3768, -inf
        %3770 = vmax.xlane.f32.xlu0 %v3769
        %v3771 = vpop.xlane.xlu0 %3770
        %v3772 = vrot.slane %v3771, 4
        %v3773 = vmax.f32 %v3771, %v3772
        %v3774 = vrot.slane %v3773, 2
        %v3775 = vmax.f32 %v3773, %v3774
        %v3776 = vrot.slane %v3775, 1
        %v3777 = vmax.f32 %v3775, %v3776
        %s3778 = vtos %v3777
        %p3779 = scmp.gt.f32.partialorder %s3778, 0.0
        %v3780 = vrot.slane %v3687, 4
        %v3782 = vmax.f32 %v3766, %v3780
        %s3783 = scalar_select %p3779, 1, 0
        %v3784 = vstv %s3783
        %vm3785 = vcmp.eq.s32.totalorder %v3784, 1
        %v3786 = vsel %vm3785, %v3766, %v3782
        %vm3787 = vcmp.eq.s32.totalorder %v295, 109
        %v3788 = vsel %vm3787, %v3786, 0.0
        %v3789 = vsel %vm405, %v3788, -inf
        %3790 = vmax.xlane.f32.xlu0 %v3789
        %v3791 = vpop.xlane.xlu0 %3790
        %v3792 = vrot.slane %v3791, 4
        %v3793 = vmax.f32 %v3791, %v3792
        %v3794 = vrot.slane %v3793, 2
        %v3795 = vmax.f32 %v3793, %v3794
        %v3796 = vrot.slane %v3795, 1
        %v3797 = vmax.f32 %v3795, %v3796
        %s3798 = vtos %v3797
        %p3799 = scmp.gt.f32.partialorder %s3798, 0.0
        %v3800 = vrot.slane %v3687, 5
        %v3802 = vmax.f32 %v3786, %v3800
        %s3803 = scalar_select %p3799, 1, 0
        %v3804 = vstv %s3803
        %vm3805 = vcmp.eq.s32.totalorder %v3804, 1
        %v3806 = vsel %vm3805, %v3786, %v3802
        %vm3807 = vcmp.eq.s32.totalorder %v295, 110
        %v3808 = vsel %vm3807, %v3806, 0.0
        %v3809 = vsel %vm405, %v3808, -inf
        %3810 = vmax.xlane.f32.xlu0 %v3809
        %v3811 = vpop.xlane.xlu0 %3810
        %v3812 = vrot.slane %v3811, 4
        %v3813 = vmax.f32 %v3811, %v3812
        %v3814 = vrot.slane %v3813, 2
        %v3815 = vmax.f32 %v3813, %v3814
        %v3816 = vrot.slane %v3815, 1
        %v3817 = vmax.f32 %v3815, %v3816
        %s3818 = vtos %v3817
        %p3819 = scmp.gt.f32.partialorder %s3818, 0.0
        %v3820 = vrot.slane %v3687, 6
        %v3822 = vmax.f32 %v3806, %v3820
        %s3823 = scalar_select %p3819, 1, 0
        %v3824 = vstv %s3823
        %vm3825 = vcmp.eq.s32.totalorder %v3824, 1
        %v3826 = vsel %vm3825, %v3806, %v3822
        %vm3827 = vcmp.eq.s32.totalorder %v295, 111
        %v3828 = vsel %vm3827, %v3826, 0.0
        %v3829 = vsel %vm405, %v3828, -inf
        %3830 = vmax.xlane.f32.xlu0 %v3829
        %v3831 = vpop.xlane.xlu0 %3830
        %v3832 = vrot.slane %v3831, 4
        %v3833 = vmax.f32 %v3831, %v3832
        %v3834 = vrot.slane %v3833, 2
        %v3835 = vmax.f32 %v3833, %v3834
        %v3836 = vrot.slane %v3835, 1
        %v3837 = vmax.f32 %v3835, %v3836
        %s3838 = vtos %v3837
        %p3839 = scmp.gt.f32.partialorder %s3838, 0.0
        %v3840 = vrot.slane %v3687, 7
        %v3842 = vmax.f32 %v3826, %v3840
        %s3843 = scalar_select %p3839, 1, 0
        %v3844 = vstv %s3843
        %vm3845 = vcmp.eq.s32.totalorder %v3844, 1
        %v3846 = vsel %vm3845, %v3826, %v3842
        %v3847 = vld [vmem:[%s236 + $0x70] sm:$0xff]
        %3849 = vrot.lane.b32.xlu0 %v3847, 2
        %v3850 = vpop.permute.xlu0 %3849
        %v3852 = vsub.f32 %v3847, %v3850
        %v3853 = vadd.f32 %v3852, 1.0
        %v3854 = vmul.f32 %v3853, 0.5
        %3856 = vrot.lane.b32.xlu0 %v3854, 126
        %v3857 = vpop.permute.xlu0 %3856
        %v3859 = vadd.f32 %v3847, %v3857
        %3861 = vrot.lane.b32.xlu0 %v3853, 2
        %v3862 = vpop.permute.xlu0 %3861
        %v3864 = vmul.f32 %v3847, %v3862
        %3866 = vrot.lane.b32.xlu0 %v3859, 4
        %v3867 = vpop.permute.xlu0 %3866
        %v3869 = vadd.f32 %v3864, %v3867
        %v3870 = vmul.f32 %v3847, 1.442695
        %v3871 = vpow.pop %v3870
        %3872 = vrot.lane.b32.xlu0 %v3853, 4
        %v3873 = vpop.permute.xlu0 %3872
        %v3875 = vmul.f32 %v3871, %v3873
        %v3876 = vmul.f32 %v3875, 0.5
        %3878 = vrot.lane.b32.xlu0 %v3876, 126
        %v3879 = vpop.permute.xlu0 %3878
        %v3881 = vsub.f32 %v3869, %v3879
        %v3882 = vmax.f32 %v3881, 0.0
        %v3883 = vmin.f32 %v271, %v3882
        %v3884 = vmin.f32 %v277, %v3882
        %v3885 = vadd.f32 %v3869, %v3879
        %v3886 = vmax.f32 %v3885, 0.0
        %v3887 = vmin.f32 %v271, %v3886
        %v3888 = vmin.f32 %v277, %v3886
        %v3889 = vsub.f32 %v3887, %v3883
        %v3890 = vadd.f32 %v3889, 1.0
        %v3891 = vsub.f32 %v3888, %v3884
        %v3892 = vadd.f32 %v3891, 1.0
        %3894 = vrot.lane.b32.xlu0 %v3892, 127
        %v3895 = vpop.permute.xlu0 %3894
        %v3897 = vmul.f32 %v3890, %v3895
        %3899 = vset.pattern.permute.xlu0 4
        %3900 = vperm.xlu0 %3899, %v3883
        %v3901 = vpop.permute.xlu0 %3900
        %v3903 = vmax.f32 %v3901, %v352
        %3905 = vset.pattern.permute.xlu0 5
        %3906 = vperm.xlu0 %3905, %v3884
        %v3907 = vpop.permute.xlu0 %3906
        %v3909 = vmax.f32 %v3907, %v359
        %3911 = vset.pattern.permute.xlu0 4
        %3912 = vperm.xlu0 %3911, %v3887
        %v3913 = vpop.permute.xlu0 %3912
        %v3915 = vmin.f32 %v3913, %v366
        %3917 = vset.pattern.permute.xlu0 5
        %3918 = vperm.xlu0 %3917, %v3888
        %v3919 = vpop.permute.xlu0 %3918
        %v3921 = vmin.f32 %v3919, %v373
        %v3922 = vsub.f32 %v3915, %v3903
        %v3923 = vadd.f32 %v3922, 1.0
        %v3924 = vmax.f32 %v3923, 0.0
        %v3925 = vsub.f32 %v3921, %v3909
        %v3926 = vadd.f32 %v3925, 1.0
        %v3927 = vmax.f32 %v3926, 0.0
        %v3928 = vmul.f32 %v3924, %v3927
        %3930 = vset.pattern.permute.xlu0 4
        %3931 = vperm.xlu0 %3930, %v3897
        %v3932 = vpop.permute.xlu0 %3931
        %v3934 = vadd.f32 %v3932, %v387
        %v3935 = vsub.f32 %v3934, %v3928
        %v3936 = vadd.s32 %v391, 112
        %vm3937 = vcmp.gt.s32.totalorder %v295, %v3936
        %v3938 = vmul.f32 %v3935, 0.7
        %vm3939 = vcmp.gt.f32.partialorder %v3928, %v3938
        %vm3940 = vmand %vm3937, %vm3939
        %v3941 = vsel %vm3940, 1.0, 0.0
        %vm3942 = vcmp.eq.s32.totalorder %v295, 112
        %v3943 = vsel %vm3942, %v3846, 0.0
        %v3944 = vsel %vm405, %v3943, -inf
        %3945 = vmax.xlane.f32.xlu0 %v3944
        %v3946 = vpop.xlane.xlu0 %3945
        %v3947 = vrot.slane %v3946, 4
        %v3948 = vmax.f32 %v3946, %v3947
        %v3949 = vrot.slane %v3948, 2
        %v3950 = vmax.f32 %v3948, %v3949
        %v3951 = vrot.slane %v3950, 1
        %v3952 = vmax.f32 %v3950, %v3951
        %s3953 = vtos %v3952
        %p3954 = scmp.gt.f32.partialorder %s3953, 0.0
        %v3955 = vmax.f32 %v3846, %v3941
        %s3956 = scalar_select %p3954, 1, 0
        %v3957 = vstv %s3956
        %vm3958 = vcmp.eq.s32.totalorder %v3957, 1
        %v3959 = vsel %vm3958, %v3846, %v3955
        %vm3960 = vcmp.eq.s32.totalorder %v295, 113
        %v3961 = vsel %vm3960, %v3959, 0.0
        %v3962 = vsel %vm405, %v3961, -inf
        %3963 = vmax.xlane.f32.xlu0 %v3962
        %v3964 = vpop.xlane.xlu0 %3963
        %v3965 = vrot.slane %v3964, 4
        %v3966 = vmax.f32 %v3964, %v3965
        %v3967 = vrot.slane %v3966, 2
        %v3968 = vmax.f32 %v3966, %v3967
        %v3969 = vrot.slane %v3968, 1
        %v3970 = vmax.f32 %v3968, %v3969
        %s3971 = vtos %v3970
        %p3972 = scmp.gt.f32.partialorder %s3971, 0.0
        %v3974 = vrot.slane %v3941, 1
        %v3976 = vmax.f32 %v3959, %v3974
        %s3977 = scalar_select %p3972, 1, 0
        %v3978 = vstv %s3977
        %vm3979 = vcmp.eq.s32.totalorder %v3978, 1
        %v3980 = vsel %vm3979, %v3959, %v3976
        %vm3981 = vcmp.eq.s32.totalorder %v295, 114
        %v3982 = vsel %vm3981, %v3980, 0.0
        %v3983 = vsel %vm405, %v3982, -inf
        %3984 = vmax.xlane.f32.xlu0 %v3983
        %v3985 = vpop.xlane.xlu0 %3984
        %v3986 = vrot.slane %v3985, 4
        %v3987 = vmax.f32 %v3985, %v3986
        %v3988 = vrot.slane %v3987, 2
        %v3989 = vmax.f32 %v3987, %v3988
        %v3990 = vrot.slane %v3989, 1
        %v3991 = vmax.f32 %v3989, %v3990
        %s3992 = vtos %v3991
        %p3993 = scmp.gt.f32.partialorder %s3992, 0.0
        %v3994 = vrot.slane %v3941, 2
        %v3996 = vmax.f32 %v3980, %v3994
        %s3997 = scalar_select %p3993, 1, 0
        %v3998 = vstv %s3997
        %vm3999 = vcmp.eq.s32.totalorder %v3998, 1
        %v4000 = vsel %vm3999, %v3980, %v3996
        %vm4001 = vcmp.eq.s32.totalorder %v295, 115
        %v4002 = vsel %vm4001, %v4000, 0.0
        %v4003 = vsel %vm405, %v4002, -inf
        %4004 = vmax.xlane.f32.xlu0 %v4003
        %v4005 = vpop.xlane.xlu0 %4004
        %v4006 = vrot.slane %v4005, 4
        %v4007 = vmax.f32 %v4005, %v4006
        %v4008 = vrot.slane %v4007, 2
        %v4009 = vmax.f32 %v4007, %v4008
        %v4010 = vrot.slane %v4009, 1
        %v4011 = vmax.f32 %v4009, %v4010
        %s4012 = vtos %v4011
        %p4013 = scmp.gt.f32.partialorder %s4012, 0.0
        %v4014 = vrot.slane %v3941, 3
        %v4016 = vmax.f32 %v4000, %v4014
        %s4017 = scalar_select %p4013, 1, 0
        %v4018 = vstv %s4017
        %vm4019 = vcmp.eq.s32.totalorder %v4018, 1
        %v4020 = vsel %vm4019, %v4000, %v4016
        %vm4021 = vcmp.eq.s32.totalorder %v295, 116
        %v4022 = vsel %vm4021, %v4020, 0.0
        %v4023 = vsel %vm405, %v4022, -inf
        %4024 = vmax.xlane.f32.xlu0 %v4023
        %v4025 = vpop.xlane.xlu0 %4024
        %v4026 = vrot.slane %v4025, 4
        %v4027 = vmax.f32 %v4025, %v4026
        %v4028 = vrot.slane %v4027, 2
        %v4029 = vmax.f32 %v4027, %v4028
        %v4030 = vrot.slane %v4029, 1
        %v4031 = vmax.f32 %v4029, %v4030
        %s4032 = vtos %v4031
        %p4033 = scmp.gt.f32.partialorder %s4032, 0.0
        %v4034 = vrot.slane %v3941, 4
        %v4036 = vmax.f32 %v4020, %v4034
        %s4037 = scalar_select %p4033, 1, 0
        %v4038 = vstv %s4037
        %vm4039 = vcmp.eq.s32.totalorder %v4038, 1
        %v4040 = vsel %vm4039, %v4020, %v4036
        %vm4041 = vcmp.eq.s32.totalorder %v295, 117
        %v4042 = vsel %vm4041, %v4040, 0.0
        %v4043 = vsel %vm405, %v4042, -inf
        %4044 = vmax.xlane.f32.xlu0 %v4043
        %v4045 = vpop.xlane.xlu0 %4044
        %v4046 = vrot.slane %v4045, 4
        %v4047 = vmax.f32 %v4045, %v4046
        %v4048 = vrot.slane %v4047, 2
        %v4049 = vmax.f32 %v4047, %v4048
        %v4050 = vrot.slane %v4049, 1
        %v4051 = vmax.f32 %v4049, %v4050
        %s4052 = vtos %v4051
        %p4053 = scmp.gt.f32.partialorder %s4052, 0.0
        %v4054 = vrot.slane %v3941, 5
        %v4056 = vmax.f32 %v4040, %v4054
        %s4057 = scalar_select %p4053, 1, 0
        %v4058 = vstv %s4057
        %vm4059 = vcmp.eq.s32.totalorder %v4058, 1
        %v4060 = vsel %vm4059, %v4040, %v4056
        %vm4061 = vcmp.eq.s32.totalorder %v295, 118
        %v4062 = vsel %vm4061, %v4060, 0.0
        %v4063 = vsel %vm405, %v4062, -inf
        %4064 = vmax.xlane.f32.xlu0 %v4063
        %v4065 = vpop.xlane.xlu0 %4064
        %v4066 = vrot.slane %v4065, 4
        %v4067 = vmax.f32 %v4065, %v4066
        %v4068 = vrot.slane %v4067, 2
        %v4069 = vmax.f32 %v4067, %v4068
        %v4070 = vrot.slane %v4069, 1
        %v4071 = vmax.f32 %v4069, %v4070
        %s4072 = vtos %v4071
        %p4073 = scmp.gt.f32.partialorder %s4072, 0.0
        %v4074 = vrot.slane %v3941, 6
        %v4076 = vmax.f32 %v4060, %v4074
        %s4077 = scalar_select %p4073, 1, 0
        %v4078 = vstv %s4077
        %vm4079 = vcmp.eq.s32.totalorder %v4078, 1
        %v4080 = vsel %vm4079, %v4060, %v4076
        %vm4081 = vcmp.eq.s32.totalorder %v295, 119
        %v4082 = vsel %vm4081, %v4080, 0.0
        %v4083 = vsel %vm405, %v4082, -inf
        %4084 = vmax.xlane.f32.xlu0 %v4083
        %v4085 = vpop.xlane.xlu0 %4084
        %v4086 = vrot.slane %v4085, 4
        %v4087 = vmax.f32 %v4085, %v4086
        %v4088 = vrot.slane %v4087, 2
        %v4089 = vmax.f32 %v4087, %v4088
        %v4090 = vrot.slane %v4089, 1
        %v4091 = vmax.f32 %v4089, %v4090
        %s4092 = vtos %v4091
        %p4093 = scmp.gt.f32.partialorder %s4092, 0.0
        %v4094 = vrot.slane %v3941, 7
        %v4096 = vmax.f32 %v4080, %v4094
        %s4097 = scalar_select %p4093, 1, 0
        %v4098 = vstv %s4097
        %vm4099 = vcmp.eq.s32.totalorder %v4098, 1
        %v4100 = vsel %vm4099, %v4080, %v4096
        %v4101 = vld [vmem:[%s236 + $0x78] sm:$0xff]
        %4103 = vrot.lane.b32.xlu0 %v4101, 2
        %v4104 = vpop.permute.xlu0 %4103
        %v4106 = vsub.f32 %v4101, %v4104
        %v4107 = vadd.f32 %v4106, 1.0
        %v4108 = vmul.f32 %v4107, 0.5
        %4110 = vrot.lane.b32.xlu0 %v4108, 126
        %v4111 = vpop.permute.xlu0 %4110
        %v4113 = vadd.f32 %v4101, %v4111
        %4115 = vrot.lane.b32.xlu0 %v4107, 2
        %v4116 = vpop.permute.xlu0 %4115
        %v4118 = vmul.f32 %v4101, %v4116
        %4120 = vrot.lane.b32.xlu0 %v4113, 4
        %v4121 = vpop.permute.xlu0 %4120
        %v4123 = vadd.f32 %v4118, %v4121
        %v4124 = vmul.f32 %v4101, 1.442695
        %v4125 = vpow.pop %v4124
        %4126 = vrot.lane.b32.xlu0 %v4107, 4
        %v4127 = vpop.permute.xlu0 %4126
        %v4129 = vmul.f32 %v4125, %v4127
        %v4130 = vmul.f32 %v4129, 0.5
        %4132 = vrot.lane.b32.xlu0 %v4130, 126
        %v4133 = vpop.permute.xlu0 %4132
        %v4135 = vsub.f32 %v4123, %v4133
        %v4136 = vmax.f32 %v4135, 0.0
        %v4137 = vmin.f32 %v271, %v4136
        %v4138 = vmin.f32 %v277, %v4136
        %v4139 = vadd.f32 %v4123, %v4133
        %v4140 = vmax.f32 %v4139, 0.0
        %v4141 = vmin.f32 %v271, %v4140
        %v4142 = vmin.f32 %v277, %v4140
        %v4143 = vsub.f32 %v4141, %v4137
        %v4144 = vadd.f32 %v4143, 1.0
        %v4145 = vsub.f32 %v4142, %v4138
        %v4146 = vadd.f32 %v4145, 1.0
        %4148 = vrot.lane.b32.xlu0 %v4146, 127
        %v4149 = vpop.permute.xlu0 %4148
        %v4151 = vmul.f32 %v4144, %v4149
        %4153 = vset.pattern.permute.xlu0 4
        %4154 = vperm.xlu0 %4153, %v4137
        %v4155 = vpop.permute.xlu0 %4154
        %v4157 = vmax.f32 %v4155, %v352
        %4159 = vset.pattern.permute.xlu0 5
        %4160 = vperm.xlu0 %4159, %v4138
        %v4161 = vpop.permute.xlu0 %4160
        %v4163 = vmax.f32 %v4161, %v359
        %4165 = vset.pattern.permute.xlu0 4
        %4166 = vperm.xlu0 %4165, %v4141
        %v4167 = vpop.permute.xlu0 %4166
        %v4169 = vmin.f32 %v4167, %v366
        %4171 = vset.pattern.permute.xlu0 5
        %4172 = vperm.xlu0 %4171, %v4142
        %v4173 = vpop.permute.xlu0 %4172
        %v4175 = vmin.f32 %v4173, %v373
        %v4176 = vsub.f32 %v4169, %v4157
        %v4177 = vadd.f32 %v4176, 1.0
        %v4178 = vmax.f32 %v4177, 0.0
        %v4179 = vsub.f32 %v4175, %v4163
        %v4180 = vadd.f32 %v4179, 1.0
        %v4181 = vmax.f32 %v4180, 0.0
        %v4182 = vmul.f32 %v4178, %v4181
        %4184 = vset.pattern.permute.xlu0 4
        %4185 = vperm.xlu0 %4184, %v4151
        %v4186 = vpop.permute.xlu0 %4185
        %v4188 = vadd.f32 %v4186, %v387
        %v4189 = vsub.f32 %v4188, %v4182
        %v4190 = vadd.s32 %v391, 120
        %vm4191 = vcmp.gt.s32.totalorder %v295, %v4190
        %v4192 = vmul.f32 %v4189, 0.7
        %vm4193 = vcmp.gt.f32.partialorder %v4182, %v4192
        %vm4194 = vmand %vm4191, %vm4193
        %v4195 = vsel %vm4194, 1.0, 0.0
        %vm4196 = vcmp.eq.s32.totalorder %v295, 120
        %v4197 = vsel %vm4196, %v4100, 0.0
        %v4198 = vsel %vm405, %v4197, -inf
        %4199 = vmax.xlane.f32.xlu0 %v4198
        %v4200 = vpop.xlane.xlu0 %4199
        %v4201 = vrot.slane %v4200, 4
        %v4202 = vmax.f32 %v4200, %v4201
        %v4203 = vrot.slane %v4202, 2
        %v4204 = vmax.f32 %v4202, %v4203
        %v4205 = vrot.slane %v4204, 1
        %v4206 = vmax.f32 %v4204, %v4205
        %s4207 = vtos %v4206
        %p4208 = scmp.gt.f32.partialorder %s4207, 0.0
        %v4209 = vmax.f32 %v4100, %v4195
        %s4210 = scalar_select %p4208, 1, 0
        %v4211 = vstv %s4210
        %vm4212 = vcmp.eq.s32.totalorder %v4211, 1
        %v4213 = vsel %vm4212, %v4100, %v4209
        %vm4214 = vcmp.eq.s32.totalorder %v295, 121
        %v4215 = vsel %vm4214, %v4213, 0.0
        %v4216 = vsel %vm405, %v4215, -inf
        %4217 = vmax.xlane.f32.xlu0 %v4216
        %v4218 = vpop.xlane.xlu0 %4217
        %v4219 = vrot.slane %v4218, 4
        %v4220 = vmax.f32 %v4218, %v4219
        %v4221 = vrot.slane %v4220, 2
        %v4222 = vmax.f32 %v4220, %v4221
        %v4223 = vrot.slane %v4222, 1
        %v4224 = vmax.f32 %v4222, %v4223
        %s4225 = vtos %v4224
        %p4226 = scmp.gt.f32.partialorder %s4225, 0.0
        %v4228 = vrot.slane %v4195, 1
        %v4230 = vmax.f32 %v4213, %v4228
        %s4231 = scalar_select %p4226, 1, 0
        %v4232 = vstv %s4231
        %vm4233 = vcmp.eq.s32.totalorder %v4232, 1
        %v4234 = vsel %vm4233, %v4213, %v4230
        %vm4235 = vcmp.eq.s32.totalorder %v295, 122
        %v4236 = vsel %vm4235, %v4234, 0.0
        %v4237 = vsel %vm405, %v4236, -inf
        %4238 = vmax.xlane.f32.xlu0 %v4237
        %v4239 = vpop.xlane.xlu0 %4238
        %v4240 = vrot.slane %v4239, 4
        %v4241 = vmax.f32 %v4239, %v4240
        %v4242 = vrot.slane %v4241, 2
        %v4243 = vmax.f32 %v4241, %v4242
        %v4244 = vrot.slane %v4243, 1
        %v4245 = vmax.f32 %v4243, %v4244
        %s4246 = vtos %v4245
        %p4247 = scmp.gt.f32.partialorder %s4246, 0.0
        %v4248 = vrot.slane %v4195, 2
        %v4250 = vmax.f32 %v4234, %v4248
        %s4251 = scalar_select %p4247, 1, 0
        %v4252 = vstv %s4251
        %vm4253 = vcmp.eq.s32.totalorder %v4252, 1
        %v4254 = vsel %vm4253, %v4234, %v4250
        %vm4255 = vcmp.eq.s32.totalorder %v295, 123
        %v4256 = vsel %vm4255, %v4254, 0.0
        %v4257 = vsel %vm405, %v4256, -inf
        %4258 = vmax.xlane.f32.xlu0 %v4257
        %v4259 = vpop.xlane.xlu0 %4258
        %v4260 = vrot.slane %v4259, 4
        %v4261 = vmax.f32 %v4259, %v4260
        %v4262 = vrot.slane %v4261, 2
        %v4263 = vmax.f32 %v4261, %v4262
        %v4264 = vrot.slane %v4263, 1
        %v4265 = vmax.f32 %v4263, %v4264
        %s4266 = vtos %v4265
        %p4267 = scmp.gt.f32.partialorder %s4266, 0.0
        %v4268 = vrot.slane %v4195, 3
        %v4270 = vmax.f32 %v4254, %v4268
        %s4271 = scalar_select %p4267, 1, 0
        %v4272 = vstv %s4271
        %vm4273 = vcmp.eq.s32.totalorder %v4272, 1
        %v4274 = vsel %vm4273, %v4254, %v4270
        %vm4275 = vcmp.eq.s32.totalorder %v295, 124
        %v4276 = vsel %vm4275, %v4274, 0.0
        %v4277 = vsel %vm405, %v4276, -inf
        %4278 = vmax.xlane.f32.xlu0 %v4277
        %v4279 = vpop.xlane.xlu0 %4278
        %v4280 = vrot.slane %v4279, 4
        %v4281 = vmax.f32 %v4279, %v4280
        %v4282 = vrot.slane %v4281, 2
        %v4283 = vmax.f32 %v4281, %v4282
        %v4284 = vrot.slane %v4283, 1
        %v4285 = vmax.f32 %v4283, %v4284
        %s4286 = vtos %v4285
        %p4287 = scmp.gt.f32.partialorder %s4286, 0.0
        %v4288 = vrot.slane %v4195, 4
        %v4290 = vmax.f32 %v4274, %v4288
        %s4291 = scalar_select %p4287, 1, 0
        %v4292 = vstv %s4291
        %vm4293 = vcmp.eq.s32.totalorder %v4292, 1
        %v4294 = vsel %vm4293, %v4274, %v4290
        %vm4295 = vcmp.eq.s32.totalorder %v295, 125
        %v4296 = vsel %vm4295, %v4294, 0.0
        %v4297 = vsel %vm405, %v4296, -inf
        %4298 = vmax.xlane.f32.xlu0 %v4297
        %v4299 = vpop.xlane.xlu0 %4298
        %v4300 = vrot.slane %v4299, 4
        %v4301 = vmax.f32 %v4299, %v4300
        %v4302 = vrot.slane %v4301, 2
        %v4303 = vmax.f32 %v4301, %v4302
        %v4304 = vrot.slane %v4303, 1
        %v4305 = vmax.f32 %v4303, %v4304
        %s4306 = vtos %v4305
        %p4307 = scmp.gt.f32.partialorder %s4306, 0.0
        %v4308 = vrot.slane %v4195, 5
        %v4310 = vmax.f32 %v4294, %v4308
        %s4311 = scalar_select %p4307, 1, 0
        %v4312 = vstv %s4311
        %vm4313 = vcmp.eq.s32.totalorder %v4312, 1
        %v4314 = vsel %vm4313, %v4294, %v4310
        %vm4315 = vcmp.eq.s32.totalorder %v295, 126
        %v4316 = vsel %vm4315, %v4314, 0.0
        %v4317 = vsel %vm405, %v4316, -inf
        %4318 = vmax.xlane.f32.xlu0 %v4317
        %v4319 = vpop.xlane.xlu0 %4318
        %v4320 = vrot.slane %v4319, 4
        %v4321 = vmax.f32 %v4319, %v4320
        %v4322 = vrot.slane %v4321, 2
        %v4323 = vmax.f32 %v4321, %v4322
        %v4324 = vrot.slane %v4323, 1
        %v4325 = vmax.f32 %v4323, %v4324
        %s4326 = vtos %v4325
        %p4327 = scmp.gt.f32.partialorder %s4326, 0.0
        %v4328 = vrot.slane %v4195, 6
        %v4330 = vmax.f32 %v4314, %v4328
        %s4331 = scalar_select %p4327, 1, 0
        %v4332 = vstv %s4331
        %vm4333 = vcmp.eq.s32.totalorder %v4332, 1
        %v4334 = vsel %vm4333, %v4314, %v4330
        %vm4335 = vcmp.eq.s32.totalorder %v295, 127
        %v4336 = vsel %vm4335, %v4334, 0.0
        %v4337 = vsel %vm405, %v4336, -inf
        %4338 = vmax.xlane.f32.xlu0 %v4337
        %v4339 = vpop.xlane.xlu0 %4338
        %v4340 = vrot.slane %v4339, 4
        %v4341 = vmax.f32 %v4339, %v4340
        %v4342 = vrot.slane %v4341, 2
        %v4343 = vmax.f32 %v4341, %v4342
        %v4344 = vrot.slane %v4343, 1
        %v4345 = vmax.f32 %v4343, %v4344
        %s4346 = vtos %v4345
        %p4347 = scmp.gt.f32.partialorder %s4346, 0.0
        %v4348 = vrot.slane %v4195, 7
        %v4350 = vmax.f32 %v4334, %v4348
        %s4351 = scalar_select %p4347, 1, 0
        %v4352 = vstv %s4351
        %vm4353 = vcmp.eq.s32.totalorder %v4352, 1
        %v4354 = vsel %vm4353, %v4334, %v4350
        %v4355 = vsub.f32 1.0, %v4354
        %4356 = vst [vmem:[%s227] sm:$0x1] %v4355
        %s4357 = sand.u32 %s104, 1
        %s4358 = scalar_lea.sflag [#allocation3], %s4357
        %s4359 = sand.u32 %s104, 1
        %s4360 = smul.addr %s4359, 4
        %s4361 = scalar_lea.vmem [#allocation5], %s4360
        %s4362 = sand.u32 %s130, 1
        %s4363 = scalar_lea.sflag [#allocation7], %s4362
        %s4364 = sand.u32 %s130, 1
        %s4365 = scalar_lea.vmem [#allocation6], %s4364
        // Predicated region
        $region37: #{tpu_custom_call.1} parent=31 // pred_check
          %p4366 = pneg %p114
        $region38: #{tpu_custom_call.1} parent=31 // pred_check_branch
          %4368 = sbr.rel (%p4366) target = $region40
        $region39: #{tpu_custom_call.1} parent=31 // pred_region
          %4370 = vsyncadd %s4358, 0
          %s4371 = smul.addr %s23, 4
          %s4372 = scalar_lea.hbm %s3, %s4371
          %s4374 = sshll.u32 %s4361, 4
          %s4375 = int_to_ptr.vmem [resolvable:$true] %s4374
          %s4376 = sshll.u32 %s4372, 4
          %s4377 = int_to_ptr.hbm [resolvable:$true] %s4376
          %4379 = dma.vmem_to_hbm [thread:$0]  %s4375, 64, %s4377, %s4358
        $region40: #{tpu_custom_call.1} parent=31 // pred_fallthru
          _
        // Predicated region
        $region41: #{tpu_custom_call.1} parent=31 // pred_check
          %p4380 = pneg %p140
        $region42: #{tpu_custom_call.1} parent=31 // pred_check_branch
          %4382 = sbr.rel (%p4380) target = $region44
        $region43: #{tpu_custom_call.1} parent=31 // pred_region
          %4384 = vsyncadd %s4363, 0
          %s4385 = scalar_lea.hbm %s4, %s23
          %s4387 = sshll.u32 %s4365, 4
          %s4388 = int_to_ptr.vmem [resolvable:$true] %s4387
          %s4389 = sshll.u32 %s4385, 4
          %s4390 = int_to_ptr.hbm [resolvable:$true] %s4389
          %4392 = dma.vmem_to_hbm [thread:$0]  %s4388, 16, %s4390, %s4363
        $region44: #{tpu_custom_call.1} parent=31 // pred_fallthru
          _
      $region32: #{tpu_custom_call.1} parent=5 // pred_fallthru
        _
      %p4393 = scmp.le.s32.totalorder 2, %s18
      // Predicated region
      $region45: #{tpu_custom_call.1} parent=5 // pred_check
        %p4394 = pneg %p4393
      $region46: #{tpu_custom_call.1} parent=5 // pred_check_branch
        %4396 = sbr.rel (%p4394) target = $region48
      $region47: #{tpu_custom_call.1} parent=5 // pred_region
        %s4397 = ssub.s32 %s18, 2
        // Predicated region
        $region49: #{tpu_custom_call.1} parent=47 // pred_check
          %p4398 = pneg %p120
        $region50: #{tpu_custom_call.1} parent=47 // pred_check_branch
          %4400 = sbr.rel (%p4398) target = $region52
        $region51: #{tpu_custom_call.1} parent=47 // pred_region
          %s4401 = sand.u32 %s105, 1
          %s4402 = scalar_lea.sflag [#allocation3], %s4401
          %s4403 = sand.u32 %s105, 1
          %s4404 = smul.addr %s4403, 4
          %s4405 = scalar_lea.vmem [#allocation5], %s4404
          %4407 = dma.done %s4402, 64
        $region52: #{tpu_custom_call.1} parent=47 // pred_fallthru
          _
        // Predicated region
        $region53: #{tpu_custom_call.1} parent=47 // pred_check
          %p4408 = pneg %p146
        $region54: #{tpu_custom_call.1} parent=47 // pred_check_branch
          %4410 = sbr.rel (%p4408) target = $region56
        $region55: #{tpu_custom_call.1} parent=47 // pred_region
          %s4411 = sand.u32 %s131, 1
          %s4412 = scalar_lea.sflag [#allocation7], %s4411
          %s4413 = sand.u32 %s131, 1
          %s4414 = scalar_lea.vmem [#allocation6], %s4413
          %4416 = dma.done %s4412, 16
        $region56: #{tpu_custom_call.1} parent=47 // pred_fallthru
          _
      $region48: #{tpu_custom_call.1} parent=5 // pred_fallthru
        _
    $region6: #{tpu_custom_call.1} parent=1 // loop_footer
      %s22 = sadd.s32 1, %s18
    $region7: #{tpu_custom_call.1} parent=1 // loop_footer_branch
      %17 = sbr.rel target = $region3
    $region8: #{tpu_custom_call.1} parent=1 // loop_exit
      _
    %4417 = vsyncpa [#allocation3], 1
    %s4418 = scalar_lea.sflag [#allocation3], 1
    %4419 = vsyncpa %s4418, 1
    %4420 = vsyncpa [#allocation7], 1
    %s4421 = scalar_lea.sflag [#allocation7], 1
    %4422 = vsyncpa %s4421, 1
    %4423 = vsyncpa [#allocation4], 1
    %s4424 = scalar_lea.sflag [#allocation4], 1
    %4425 = vsyncpa %s4424, 1

</llo_original>
